<compile_context>
chip_gen: v6e
topology: v6e:2x2x1
jax: 0.10.0
libtpu: 0.0.40
codegen_flags: <defaults>
</compile_context>

<pallas_src>
import functools

import jax
import jax.numpy as jnp
from jax import lax
from jax.experimental import pallas as pl
from jax.experimental.pallas import tpu as pltpu


def _round_up(x, m):
    return (x + m - 1) // m * m


# ---------------------------------------------------------------------------
# Pallas kernel: fused 3x3x3 conv (27 shifted matmuls) + folded-BN bias + ReLU
# ---------------------------------------------------------------------------
def _conv3d_taps_kernel(x0_ref, x1_ref, x2_ref, w_ref, b_ref, o_ref, *,
                        H, W, apply_relu):
    # x{0,1,2}_ref: (1, 1, (H+3)*(W+2), Cin) bf16 -- padded depth slices d, d+1, d+2
    # w_ref:        (27, Cin, Cout_pad) bf16      -- BN-scale-folded conv weights
    # b_ref:        (1, Cout_pad) f32             -- folded conv-bias + BN shift
    # o_ref:        (1, 1, H*(W+2), Cout_pad)     -- output rows at padded-W pitch
    WP = W + 2
    HPW = H * WP
    cp = w_ref.shape[-1]

    acc = jnp.zeros((HPW, cp), jnp.float32)
    xs = (x0_ref, x1_ref, x2_ref)
    for kd in range(3):
        plane = xs[kd][0, 0]                                   # ((H+3)*WP, Cin) bf16
        for kh in range(3):
            for kw in range(3):
                off = kh * WP + kw
                tap = plane[off:off + HPW, :]                  # (HPW, Cin)
                acc = acc + jnp.dot(tap, w_ref[kd * 9 + kh * 3 + kw],
                                    preferred_element_type=jnp.float32)

    y = acc + b_ref[...]
    if apply_relu:
        y = jnp.maximum(y, 0.0)
    o_ref[0, 0] = y.astype(o_ref.dtype)


# ---------------------------------------------------------------------------
# One Conv3d(k=3,p=1) + BatchNorm3d(eval) + optional ReLU, NDHWC in / NDHWC out
# ---------------------------------------------------------------------------
def conv3d_bn_relu_ndhwc(x_ndhwc, w_oidhw, conv_bias, gamma, beta,
                         running_mean, running_var, *, eps=1e-5,
                         apply_relu=True, out_dtype=jnp.float32):
    n, d, h, w, cin = x_ndhwc.shape
    cout = w_oidhw.shape[0]
    cp = _round_up(cout, 128)          # lane-dense stores + full-width MXU columns
    wp = w + 2
    lp = (h + 3) * wp                  # padded (H,W) plane, flattened, + spare row
    hpw = h * wp

    # Fold eval-mode BatchNorm3d + conv bias into per-channel scale/bias.
    # TODO(synk): training-mode BatchNorm (batch statistics / running-stat updates)
    # is not implemented; only the eval-mode (inference) path is fused.
    scale = (gamma / jnp.sqrt(running_var + eps)).astype(jnp.float32)
    bias = ((conv_bias - running_mean) * scale + beta).astype(jnp.float32)

    # (Cout, Cin, kd, kh, kw) -> (27, Cin, Cout); fold BN scale into weight columns,
    # pad Cout -> Cout_pad, cast to bf16 for the MXU.
    w_taps = jnp.transpose(w_oidhw, (2, 3, 4, 1, 0)).reshape(27, cin, cout)
    w_taps = w_taps * scale[None, None, :]
    w_taps = jnp.pad(w_taps, ((0, 0), (0, 0), (0, cp - cout))).astype(jnp.bfloat16)
    bias_row = jnp.pad(bias, (0, cp - cout)).reshape(1, cp)

    # Halo-pad x (D +-1; H: +1 top / +2 bottom spare; W +-1) and flatten (H,W) so the
    # kernel can take the 27 taps as static row-slices of one contiguous block.
    xp = jnp.pad(x_ndhwc.astype(jnp.bfloat16),
                 ((0, 0), (1, 1), (1, 2), (1, 1), (0, 0)))
    xp = xp.reshape(n, d + 2, lp, cin)

    def x_spec(kd):
        return pl.BlockSpec((1, 1, lp, cin), lambda i, j, kd=kd: (i, j + kd, 0, 0))

    out = pl.pallas_call(
        functools.partial(_conv3d_taps_kernel, H=h, W=w, apply_relu=apply_relu),
        out_shape=jax.ShapeDtypeStruct((n, d, hpw, cp), out_dtype),
        grid=(n, d),
        in_specs=[
            x_spec(0), x_spec(1), x_spec(2),
            pl.BlockSpec((27, cin, cp), lambda i, j: (0, 0, 0)),
            pl.BlockSpec((1, cp), lambda i, j: (0, 0)),
        ],
        out_specs=pl.BlockSpec((1, 1, hpw, cp), lambda i, j: (i, j, 0, 0)),
        compiler_params=pltpu.CompilerParams(
            dimension_semantics=("parallel", "parallel")),
    )(xp, xp, xp, w_taps, bias_row)

    # Drop the right-halo columns and the channel padding; back to dense NDHWC.
    out = out.reshape(n, d, h, wp, cp)[:, :, :, :w, :cout]
    return out


# ---------------------------------------------------------------------------
# ConvBlock3D (block_type='duckv2'): repeat x [Conv3d -> BN -> ReLU]
# ---------------------------------------------------------------------------
def init_conv_block_3d_params(key, in_channels, out_channels, repeat=1):
    params = []
    cin = in_channels
    for _ in range(repeat):
        key, kw, kb, kg, kbe, krm, krv = jax.random.split(key, 7)
        w = jax.random.normal(kw, (out_channels, cin, 3, 3, 3), jnp.float32) * 0.1
        b = jax.random.normal(kb, (out_channels,), jnp.float32) * 0.1
        gamma = 1.0 + 0.1 * jax.random.normal(kg, (out_channels,), jnp.float32)
        beta = 0.1 * jax.random.normal(kbe, (out_channels,), jnp.float32)
        rmean = 0.1 * jax.random.normal(krm, (out_channels,), jnp.float32)
        rvar = 1.0 + 0.1 * jax.random.uniform(krv, (out_channels,), jnp.float32)
        params.append((w, b, gamma, beta, rmean, rvar))
        cin = out_channels
    return params


def _conv_block_3d_impl(x_ncdhw, params):
    # Keep activations NDHWC between repeats; NCDHW<->NDHWC only at the boundary.
    # Intermediate repeats write bf16 (half the HBM traffic); final repeat writes f32.
    x = jnp.transpose(x_ncdhw, (0, 2, 3, 4, 1)).astype(jnp.float32)
    n_layers = len(params)
    for li, (w, b, gamma, beta, rmean, rvar) in enumerate(params):
        last = li == n_layers - 1
        x = conv3d_bn_relu_ndhwc(
            x, w, b, gamma, beta, rmean, rvar, apply_relu=True,
            out_dtype=jnp.float32 if last else jnp.bfloat16)
    return jnp.transpose(x, (0, 4, 1, 2, 3))   # back to NCDHW, f32


conv_block_3d = jax.jit(_conv_block_3d_impl)


# ---------------------------------------------------------------------------
# Pure-JAX reference (lax conv, f32) for correctness checking
# ---------------------------------------------------------------------------
def _ref_block(x, w, b, gamma, beta, rmean, rvar, eps=1e-5):
    y = lax.conv_general_dilated(
        x, w, window_strides=(1, 1, 1), padding=((1, 1), (1, 1), (1, 1)),
        dimension_numbers=("NCDHW", "OIDHW", "NCDHW"))
    y = y + b.reshape(1, -1, 1, 1, 1)
    y = (y - rmean.reshape(1, -1, 1, 1, 1)) / jnp.sqrt(rvar.reshape(1, -1, 1, 1, 1) + eps)
    y = y * gamma.reshape(1, -1, 1, 1, 1) + beta.reshape(1, -1, 1, 1, 1)
    return jnp.maximum(y, 0.0)


def _ref_conv_block_3d(x, params):
    for (w, b, gamma, beta, rmean, rvar) in params:
        x = _ref_block(x, w, b, gamma, beta, rmean, rvar)
    return x


if __name__ == "__main__":
    key = jax.random.PRNGKey(0)
    kx, kp = jax.random.split(key)

    # Small shapes: batch=2, in_channels=4, out_channels=8, D=H=W=8 (NCDHW), repeat=2
    in_channels, out_channels, repeat = 4, 8, 2
    x = jax.random.normal(kx, (2, in_channels, 8, 8, 8), jnp.float32)
    params = init_conv_block_3d_params(kp, in_channels, out_channels, repeat=repeat)

    out = jax.block_until_ready(conv_block_3d(x, params))
    ref = jax.block_until_ready(_ref_conv_block_3d(x, params))

    assert out.shape == (2, out_channels, 8, 8, 8), out.shape
    max_err = float(jnp.max(jnp.abs(out - ref)))
    # bf16 activations/weights on the MXU + bf16 intermediate layer (f32 accumulation)
    # -> loosened tolerance vs the pure-f32 reference.
    assert jnp.allclose(out, ref, atol=5e-2, rtol=5e-2), max_err

    print("KERNEL_OK")
</pallas_src>

<mosaic_0001>
module attributes {stable_mosaic.version = 11 : i64} {
  func.func @_conv3d_taps_kernel(%arg0: i32, %arg1: i32, %arg2: memref<1x1x110x4xbf16, #tpu.memory_space<vmem>>, %arg3: memref<1x1x110x4xbf16, #tpu.memory_space<vmem>>, %arg4: memref<1x1x110x4xbf16, #tpu.memory_space<vmem>>, %arg5: memref<27x4x128xbf16, #tpu.memory_space<vmem>>, %arg6: memref<1x128xf32, #tpu.memory_space<vmem>>, %arg7: memref<1x1x80x128xbf16, #tpu.memory_space<vmem>>) attributes {dimension_semantics = [#tpu.dimension_semantics<parallel>, #tpu.dimension_semantics<parallel>], iteration_bounds = array<i64: 2, 8>, scalar_prefetch = 0 : i64, scratch_operands = 0 : i64, tpu.core_type = #tpu.core_type<tc>, window_params = [{transform_indices = @transform_0, window_bounds = array<i64: 1, 1, 110, 4>}, {transform_indices = @transform_1, window_bounds = array<i64: 1, 1, 110, 4>}, {transform_indices = @transform_2, window_bounds = array<i64: 1, 1, 110, 4>}, {pipeline_mode = #tpu.pipeline_mode<synchronous>, transform_indices = @transform_3, window_bounds = array<i64: 27, 4, 128>}, {pipeline_mode = #tpu.pipeline_mode<synchronous>, transform_indices = @transform_4, window_bounds = array<i64: 1, 128>}, {transform_indices = @transform_5, window_bounds = array<i64: 1, 1, 80, 128>}]} {
    %cst = arith.constant 0.000000e+00 : f32
    %0 = vector.broadcast %cst : f32 to vector<80x128xf32>
    %c0 = arith.constant 0 : index
    %c0_0 = arith.constant 0 : index
    %c0_1 = arith.constant 0 : index
    %c0_2 = arith.constant 0 : index
    %1 = vector.load %arg2[%c0, %c0_0, %c0_1, %c0_2] : memref<1x1x110x4xbf16, #tpu.memory_space<vmem>>, vector<1x1x110x4xbf16>
    %2 = vector.shape_cast %1 : vector<1x1x110x4xbf16> to vector<110x4xbf16>
    %3 = vector.extract_strided_slice %2 {offsets = [0, 0], sizes = [80, 4], strides = [1, 1]} : vector<110x4xbf16> to vector<80x4xbf16>
    %c0_3 = arith.constant 0 : index
    %c0_4 = arith.constant 0 : index
    %c0_5 = arith.constant 0 : index
    %4 = vector.load %arg5[%c0_3, %c0_4, %c0_5] : memref<27x4x128xbf16, #tpu.memory_space<vmem>>, vector<1x4x128xbf16>
    %5 = vector.shape_cast %4 : vector<1x4x128xbf16> to vector<4x128xbf16>
    %cst_6 = arith.constant dense<0.000000e+00> : vector<80x128xf32>
    %6 = tpu.matmul %3, %5, %cst_6 {dimension_numbers = #tpu.dot_dimension_numbers<[1], [0], [0], [1], [0, 0, 1, 1], [], []>} : vector<80x4xbf16>, vector<4x128xbf16>, vector<80x128xf32> -> vector<80x128xf32>
    %7 = arith.addf %0, %6 : vector<80x128xf32>
    %8 = vector.extract_strided_slice %2 {offsets = [1, 0], sizes = [80, 4], strides = [1, 1]} : vector<110x4xbf16> to vector<80x4xbf16>
    %c1 = arith.constant 1 : index
    %c0_7 = arith.constant 0 : index
    %c0_8 = arith.constant 0 : index
    %9 = vector.load %arg5[%c1, %c0_7, %c0_8] : memref<27x4x128xbf16, #tpu.memory_space<vmem>>, vector<1x4x128xbf16>
    %10 = vector.shape_cast %9 : vector<1x4x128xbf16> to vector<4x128xbf16>
    %cst_9 = arith.constant dense<0.000000e+00> : vector<80x128xf32>
    %11 = tpu.matmul %8, %10, %cst_9 {dimension_numbers = #tpu.dot_dimension_numbers<[1], [0], [0], [1], [0, 0, 1, 1], [], []>} : vector<80x4xbf16>, vector<4x128xbf16>, vector<80x128xf32> -> vector<80x128xf32>
    %12 = arith.addf %7, %11 : vector<80x128xf32>
    %13 = vector.extract_strided_slice %2 {offsets = [2, 0], sizes = [80, 4], strides = [1, 1]} : vector<110x4xbf16> to vector<80x4xbf16>
    %c2 = arith.constant 2 : index
    %c0_10 = arith.constant 0 : index
    %c0_11 = arith.constant 0 : index
    %14 = vector.load %arg5[%c2, %c0_10, %c0_11] : memref<27x4x128xbf16, #tpu.memory_space<vmem>>, vector<1x4x128xbf16>
    %15 = vector.shape_cast %14 : vector<1x4x128xbf16> to vector<4x128xbf16>
    %cst_12 = arith.constant dense<0.000000e+00> : vector<80x128xf32>
    %16 = tpu.matmul %13, %15, %cst_12 {dimension_numbers = #tpu.dot_dimension_numbers<[1], [0], [0], [1], [0, 0, 1, 1], [], []>} : vector<80x4xbf16>, vector<4x128xbf16>, vector<80x128xf32> -> vector<80x128xf32>
    %17 = arith.addf %12, %16 : vector<80x128xf32>
    %18 = vector.extract_strided_slice %2 {offsets = [10, 0], sizes = [80, 4], strides = [1, 1]} : vector<110x4xbf16> to vector<80x4xbf16>
    %c3 = arith.constant 3 : index
    %c0_13 = arith.constant 0 : index
    %c0_14 = arith.constant 0 : index
    %19 = vector.load %arg5[%c3, %c0_13, %c0_14] : memref<27x4x128xbf16, #tpu.memory_space<vmem>>, vector<1x4x128xbf16>
    %20 = vector.shape_cast %19 : vector<1x4x128xbf16> to vector<4x128xbf16>
    %cst_15 = arith.constant dense<0.000000e+00> : vector<80x128xf32>
    %21 = tpu.matmul %18, %20, %cst_15 {dimension_numbers = #tpu.dot_dimension_numbers<[1], [0], [0], [1], [0, 0, 1, 1], [], []>} : vector<80x4xbf16>, vector<4x128xbf16>, vector<80x128xf32> -> vector<80x128xf32>
    %22 = arith.addf %17, %21 : vector<80x128xf32>
    %23 = vector.extract_strided_slice %2 {offsets = [11, 0], sizes = [80, 4], strides = [1, 1]} : vector<110x4xbf16> to vector<80x4xbf16>
    %c4 = arith.constant 4 : index
    %c0_16 = arith.constant 0 : index
    %c0_17 = arith.constant 0 : index
    %24 = vector.load %arg5[%c4, %c0_16, %c0_17] : memref<27x4x128xbf16, #tpu.memory_space<vmem>>, vector<1x4x128xbf16>
    %25 = vector.shape_cast %24 : vector<1x4x128xbf16> to vector<4x128xbf16>
    %cst_18 = arith.constant dense<0.000000e+00> : vector<80x128xf32>
    %26 = tpu.matmul %23, %25, %cst_18 {dimension_numbers = #tpu.dot_dimension_numbers<[1], [0], [0], [1], [0, 0, 1, 1], [], []>} : vector<80x4xbf16>, vector<4x128xbf16>, vector<80x128xf32> -> vector<80x128xf32>
    %27 = arith.addf %22, %26 : vector<80x128xf32>
    %28 = vector.extract_strided_slice %2 {offsets = [12, 0], sizes = [80, 4], strides = [1, 1]} : vector<110x4xbf16> to vector<80x4xbf16>
    %c5 = arith.constant 5 : index
    %c0_19 = arith.constant 0 : index
    %c0_20 = arith.constant 0 : index
    %29 = vector.load %arg5[%c5, %c0_19, %c0_20] : memref<27x4x128xbf16, #tpu.memory_space<vmem>>, vector<1x4x128xbf16>
    %30 = vector.shape_cast %29 : vector<1x4x128xbf16> to vector<4x128xbf16>
    %cst_21 = arith.constant dense<0.000000e+00> : vector<80x128xf32>
    %31 = tpu.matmul %28, %30, %cst_21 {dimension_numbers = #tpu.dot_dimension_numbers<[1], [0], [0], [1], [0, 0, 1, 1], [], []>} : vector<80x4xbf16>, vector<4x128xbf16>, vector<80x128xf32> -> vector<80x128xf32>
    %32 = arith.addf %27, %31 : vector<80x128xf32>
    %33 = vector.extract_strided_slice %2 {offsets = [20, 0], sizes = [80, 4], strides = [1, 1]} : vector<110x4xbf16> to vector<80x4xbf16>
    %c6 = arith.constant 6 : index
    %c0_22 = arith.constant 0 : index
    %c0_23 = arith.constant 0 : index
    %34 = vector.load %arg5[%c6, %c0_22, %c0_23] : memref<27x4x128xbf16, #tpu.memory_space<vmem>>, vector<1x4x128xbf16>
    %35 = vector.shape_cast %34 : vector<1x4x128xbf16> to vector<4x128xbf16>
    %cst_24 = arith.constant dense<0.000000e+00> : vector<80x128xf32>
    %36 = tpu.matmul %33, %35, %cst_24 {dimension_numbers = #tpu.dot_dimension_numbers<[1], [0], [0], [1], [0, 0, 1, 1], [], []>} : vector<80x4xbf16>, vector<4x128xbf16>, vector<80x128xf32> -> vector<80x128xf32>
    %37 = arith.addf %32, %36 : vector<80x128xf32>
    %38 = vector.extract_strided_slice %2 {offsets = [21, 0], sizes = [80, 4], strides = [1, 1]} : vector<110x4xbf16> to vector<80x4xbf16>
    %c7 = arith.constant 7 : index
    %c0_25 = arith.constant 0 : index
    %c0_26 = arith.constant 0 : index
    %39 = vector.load %arg5[%c7, %c0_25, %c0_26] : memref<27x4x128xbf16, #tpu.memory_space<vmem>>, vector<1x4x128xbf16>
    %40 = vector.shape_cast %39 : vector<1x4x128xbf16> to vector<4x128xbf16>
    %cst_27 = arith.constant dense<0.000000e+00> : vector<80x128xf32>
    %41 = tpu.matmul %38, %40, %cst_27 {dimension_numbers = #tpu.dot_dimension_numbers<[1], [0], [0], [1], [0, 0, 1, 1], [], []>} : vector<80x4xbf16>, vector<4x128xbf16>, vector<80x128xf32> -> vector<80x128xf32>
    %42 = arith.addf %37, %41 : vector<80x128xf32>
    %43 = vector.extract_strided_slice %2 {offsets = [22, 0], sizes = [80, 4], strides = [1, 1]} : vector<110x4xbf16> to vector<80x4xbf16>
    %c8 = arith.constant 8 : index
    %c0_28 = arith.constant 0 : index
    %c0_29 = arith.constant 0 : index
    %44 = vector.load %arg5[%c8, %c0_28, %c0_29] : memref<27x4x128xbf16, #tpu.memory_space<vmem>>, vector<1x4x128xbf16>
    %45 = vector.shape_cast %44 : vector<1x4x128xbf16> to vector<4x128xbf16>
    %cst_30 = arith.constant dense<0.000000e+00> : vector<80x128xf32>
    %46 = tpu.matmul %43, %45, %cst_30 {dimension_numbers = #tpu.dot_dimension_numbers<[1], [0], [0], [1], [0, 0, 1, 1], [], []>} : vector<80x4xbf16>, vector<4x128xbf16>, vector<80x128xf32> -> vector<80x128xf32>
    %47 = arith.addf %42, %46 : vector<80x128xf32>
    %c0_31 = arith.constant 0 : index
    %c0_32 = arith.constant 0 : index
    %c0_33 = arith.constant 0 : index
    %c0_34 = arith.constant 0 : index
    %48 = vector.load %arg3[%c0_31, %c0_32, %c0_33, %c0_34] : memref<1x1x110x4xbf16, #tpu.memory_space<vmem>>, vector<1x1x110x4xbf16>
    %49 = vector.shape_cast %48 : vector<1x1x110x4xbf16> to vector<110x4xbf16>
    %50 = vector.extract_strided_slice %49 {offsets = [0, 0], sizes = [80, 4], strides = [1, 1]} : vector<110x4xbf16> to vector<80x4xbf16>
    %c9 = arith.constant 9 : index
    %c0_35 = arith.constant 0 : index
    %c0_36 = arith.constant 0 : index
    %51 = vector.load %arg5[%c9, %c0_35, %c0_36] : memref<27x4x128xbf16, #tpu.memory_space<vmem>>, vector<1x4x128xbf16>
    %52 = vector.shape_cast %51 : vector<1x4x128xbf16> to vector<4x128xbf16>
    %cst_37 = arith.constant dense<0.000000e+00> : vector<80x128xf32>
    %53 = tpu.matmul %50, %52, %cst_37 {dimension_numbers = #tpu.dot_dimension_numbers<[1], [0], [0], [1], [0, 0, 1, 1], [], []>} : vector<80x4xbf16>, vector<4x128xbf16>, vector<80x128xf32> -> vector<80x128xf32>
    %54 = arith.addf %47, %53 : vector<80x128xf32>
    %55 = vector.extract_strided_slice %49 {offsets = [1, 0], sizes = [80, 4], strides = [1, 1]} : vector<110x4xbf16> to vector<80x4xbf16>
    %c10 = arith.constant 10 : index
    %c0_38 = arith.constant 0 : index
    %c0_39 = arith.constant 0 : index
    %56 = vector.load %arg5[%c10, %c0_38, %c0_39] : memref<27x4x128xbf16, #tpu.memory_space<vmem>>, vector<1x4x128xbf16>
    %57 = vector.shape_cast %56 : vector<1x4x128xbf16> to vector<4x128xbf16>
    %cst_40 = arith.constant dense<0.000000e+00> : vector<80x128xf32>
    %58 = tpu.matmul %55, %57, %cst_40 {dimension_numbers = #tpu.dot_dimension_numbers<[1], [0], [0], [1], [0, 0, 1, 1], [], []>} : vector<80x4xbf16>, vector<4x128xbf16>, vector<80x128xf32> -> vector<80x128xf32>
    %59 = arith.addf %54, %58 : vector<80x128xf32>
    %60 = vector.extract_strided_slice %49 {offsets = [2, 0], sizes = [80, 4], strides = [1, 1]} : vector<110x4xbf16> to vector<80x4xbf16>
    %c11 = arith.constant 11 : index
    %c0_41 = arith.constant 0 : index
    %c0_42 = arith.constant 0 : index
    %61 = vector.load %arg5[%c11, %c0_41, %c0_42] : memref<27x4x128xbf16, #tpu.memory_space<vmem>>, vector<1x4x128xbf16>
    %62 = vector.shape_cast %61 : vector<1x4x128xbf16> to vector<4x128xbf16>
    %cst_43 = arith.constant dense<0.000000e+00> : vector<80x128xf32>
    %63 = tpu.matmul %60, %62, %cst_43 {dimension_numbers = #tpu.dot_dimension_numbers<[1], [0], [0], [1], [0, 0, 1, 1], [], []>} : vector<80x4xbf16>, vector<4x128xbf16>, vector<80x128xf32> -> vector<80x128xf32>
    %64 = arith.addf %59, %63 : vector<80x128xf32>
    %65 = vector.extract_strided_slice %49 {offsets = [10, 0], sizes = [80, 4], strides = [1, 1]} : vector<110x4xbf16> to vector<80x4xbf16>
    %c12 = arith.constant 12 : index
    %c0_44 = arith.constant 0 : index
    %c0_45 = arith.constant 0 : index
    %66 = vector.load %arg5[%c12, %c0_44, %c0_45] : memref<27x4x128xbf16, #tpu.memory_space<vmem>>, vector<1x4x128xbf16>
    %67 = vector.shape_cast %66 : vector<1x4x128xbf16> to vector<4x128xbf16>
    %cst_46 = arith.constant dense<0.000000e+00> : vector<80x128xf32>
    %68 = tpu.matmul %65, %67, %cst_46 {dimension_numbers = #tpu.dot_dimension_numbers<[1], [0], [0], [1], [0, 0, 1, 1], [], []>} : vector<80x4xbf16>, vector<4x128xbf16>, vector<80x128xf32> -> vector<80x128xf32>
    %69 = arith.addf %64, %68 : vector<80x128xf32>
    %70 = vector.extract_strided_slice %49 {offsets = [11, 0], sizes = [80, 4], strides = [1, 1]} : vector<110x4xbf16> to vector<80x4xbf16>
    %c13 = arith.constant 13 : index
    %c0_47 = arith.constant 0 : index
    %c0_48 = arith.constant 0 : index
    %71 = vector.load %arg5[%c13, %c0_47, %c0_48] : memref<27x4x128xbf16, #tpu.memory_space<vmem>>, vector<1x4x128xbf16>
    %72 = vector.shape_cast %71 : vector<1x4x128xbf16> to vector<4x128xbf16>
    %cst_49 = arith.constant dense<0.000000e+00> : vector<80x128xf32>
    %73 = tpu.matmul %70, %72, %cst_49 {dimension_numbers = #tpu.dot_dimension_numbers<[1], [0], [0], [1], [0, 0, 1, 1], [], []>} : vector<80x4xbf16>, vector<4x128xbf16>, vector<80x128xf32> -> vector<80x128xf32>
    %74 = arith.addf %69, %73 : vector<80x128xf32>
    %75 = vector.extract_strided_slice %49 {offsets = [12, 0], sizes = [80, 4], strides = [1, 1]} : vector<110x4xbf16> to vector<80x4xbf16>
    %c14 = arith.constant 14 : index
    %c0_50 = arith.constant 0 : index
    %c0_51 = arith.constant 0 : index
    %76 = vector.load %arg5[%c14, %c0_50, %c0_51] : memref<27x4x128xbf16, #tpu.memory_space<vmem>>, vector<1x4x128xbf16>
    %77 = vector.shape_cast %76 : vector<1x4x128xbf16> to vector<4x128xbf16>
    %cst_52 = arith.constant dense<0.000000e+00> : vector<80x128xf32>
    %78 = tpu.matmul %75, %77, %cst_52 {dimension_numbers = #tpu.dot_dimension_numbers<[1], [0], [0], [1], [0, 0, 1, 1], [], []>} : vector<80x4xbf16>, vector<4x128xbf16>, vector<80x128xf32> -> vector<80x128xf32>
    %79 = arith.addf %74, %78 : vector<80x128xf32>
    %80 = vector.extract_strided_slice %49 {offsets = [20, 0], sizes = [80, 4], strides = [1, 1]} : vector<110x4xbf16> to vector<80x4xbf16>
    %c15 = arith.constant 15 : index
    %c0_53 = arith.constant 0 : index
    %c0_54 = arith.constant 0 : index
    %81 = vector.load %arg5[%c15, %c0_53, %c0_54] : memref<27x4x128xbf16, #tpu.memory_space<vmem>>, vector<1x4x128xbf16>
    %82 = vector.shape_cast %81 : vector<1x4x128xbf16> to vector<4x128xbf16>
    %cst_55 = arith.constant dense<0.000000e+00> : vector<80x128xf32>
    %83 = tpu.matmul %80, %82, %cst_55 {dimension_numbers = #tpu.dot_dimension_numbers<[1], [0], [0], [1], [0, 0, 1, 1], [], []>} : vector<80x4xbf16>, vector<4x128xbf16>, vector<80x128xf32> -> vector<80x128xf32>
    %84 = arith.addf %79, %83 : vector<80x128xf32>
    %85 = vector.extract_strided_slice %49 {offsets = [21, 0], sizes = [80, 4], strides = [1, 1]} : vector<110x4xbf16> to vector<80x4xbf16>
    %c16 = arith.constant 16 : index
    %c0_56 = arith.constant 0 : index
    %c0_57 = arith.constant 0 : index
    %86 = vector.load %arg5[%c16, %c0_56, %c0_57] : memref<27x4x128xbf16, #tpu.memory_space<vmem>>, vector<1x4x128xbf16>
    %87 = vector.shape_cast %86 : vector<1x4x128xbf16> to vector<4x128xbf16>
    %cst_58 = arith.constant dense<0.000000e+00> : vector<80x128xf32>
    %88 = tpu.matmul %85, %87, %cst_58 {dimension_numbers = #tpu.dot_dimension_numbers<[1], [0], [0], [1], [0, 0, 1, 1], [], []>} : vector<80x4xbf16>, vector<4x128xbf16>, vector<80x128xf32> -> vector<80x128xf32>
    %89 = arith.addf %84, %88 : vector<80x128xf32>
    %90 = vector.extract_strided_slice %49 {offsets = [22, 0], sizes = [80, 4], strides = [1, 1]} : vector<110x4xbf16> to vector<80x4xbf16>
    %c17 = arith.constant 17 : index
    %c0_59 = arith.constant 0 : index
    %c0_60 = arith.constant 0 : index
    %91 = vector.load %arg5[%c17, %c0_59, %c0_60] : memref<27x4x128xbf16, #tpu.memory_space<vmem>>, vector<1x4x128xbf16>
    %92 = vector.shape_cast %91 : vector<1x4x128xbf16> to vector<4x128xbf16>
    %cst_61 = arith.constant dense<0.000000e+00> : vector<80x128xf32>
    %93 = tpu.matmul %90, %92, %cst_61 {dimension_numbers = #tpu.dot_dimension_numbers<[1], [0], [0], [1], [0, 0, 1, 1], [], []>} : vector<80x4xbf16>, vector<4x128xbf16>, vector<80x128xf32> -> vector<80x128xf32>
    %94 = arith.addf %89, %93 : vector<80x128xf32>
    %c0_62 = arith.constant 0 : index
    %c0_63 = arith.constant 0 : index
    %c0_64 = arith.constant 0 : index
    %c0_65 = arith.constant 0 : index
    %95 = vector.load %arg4[%c0_62, %c0_63, %c0_64, %c0_65] : memref<1x1x110x4xbf16, #tpu.memory_space<vmem>>, vector<1x1x110x4xbf16>
    %96 = vector.shape_cast %95 : vector<1x1x110x4xbf16> to vector<110x4xbf16>
    %97 = vector.extract_strided_slice %96 {offsets = [0, 0], sizes = [80, 4], strides = [1, 1]} : vector<110x4xbf16> to vector<80x4xbf16>
    %c18 = arith.constant 18 : index
    %c0_66 = arith.constant 0 : index
    %c0_67 = arith.constant 0 : index
    %98 = vector.load %arg5[%c18, %c0_66, %c0_67] : memref<27x4x128xbf16, #tpu.memory_space<vmem>>, vector<1x4x128xbf16>
    %99 = vector.shape_cast %98 : vector<1x4x128xbf16> to vector<4x128xbf16>
    %cst_68 = arith.constant dense<0.000000e+00> : vector<80x128xf32>
    %100 = tpu.matmul %97, %99, %cst_68 {dimension_numbers = #tpu.dot_dimension_numbers<[1], [0], [0], [1], [0, 0, 1, 1], [], []>} : vector<80x4xbf16>, vector<4x128xbf16>, vector<80x128xf32> -> vector<80x128xf32>
    %101 = arith.addf %94, %100 : vector<80x128xf32>
    %102 = vector.extract_strided_slice %96 {offsets = [1, 0], sizes = [80, 4], strides = [1, 1]} : vector<110x4xbf16> to vector<80x4xbf16>
    %c19 = arith.constant 19 : index
    %c0_69 = arith.constant 0 : index
    %c0_70 = arith.constant 0 : index
    %103 = vector.load %arg5[%c19, %c0_69, %c0_70] : memref<27x4x128xbf16, #tpu.memory_space<vmem>>, vector<1x4x128xbf16>
    %104 = vector.shape_cast %103 : vector<1x4x128xbf16> to vector<4x128xbf16>
    %cst_71 = arith.constant dense<0.000000e+00> : vector<80x128xf32>
    %105 = tpu.matmul %102, %104, %cst_71 {dimension_numbers = #tpu.dot_dimension_numbers<[1], [0], [0], [1], [0, 0, 1, 1], [], []>} : vector<80x4xbf16>, vector<4x128xbf16>, vector<80x128xf32> -> vector<80x128xf32>
    %106 = arith.addf %101, %105 : vector<80x128xf32>
    %107 = vector.extract_strided_slice %96 {offsets = [2, 0], sizes = [80, 4], strides = [1, 1]} : vector<110x4xbf16> to vector<80x4xbf16>
    %c20 = arith.constant 20 : index
    %c0_72 = arith.constant 0 : index
    %c0_73 = arith.constant 0 : index
    %108 = vector.load %arg5[%c20, %c0_72, %c0_73] : memref<27x4x128xbf16, #tpu.memory_space<vmem>>, vector<1x4x128xbf16>
    %109 = vector.shape_cast %108 : vector<1x4x128xbf16> to vector<4x128xbf16>
    %cst_74 = arith.constant dense<0.000000e+00> : vector<80x128xf32>
    %110 = tpu.matmul %107, %109, %cst_74 {dimension_numbers = #tpu.dot_dimension_numbers<[1], [0], [0], [1], [0, 0, 1, 1], [], []>} : vector<80x4xbf16>, vector<4x128xbf16>, vector<80x128xf32> -> vector<80x128xf32>
    %111 = arith.addf %106, %110 : vector<80x128xf32>
    %112 = vector.extract_strided_slice %96 {offsets = [10, 0], sizes = [80, 4], strides = [1, 1]} : vector<110x4xbf16> to vector<80x4xbf16>
    %c21 = arith.constant 21 : index
    %c0_75 = arith.constant 0 : index
    %c0_76 = arith.constant 0 : index
    %113 = vector.load %arg5[%c21, %c0_75, %c0_76] : memref<27x4x128xbf16, #tpu.memory_space<vmem>>, vector<1x4x128xbf16>
    %114 = vector.shape_cast %113 : vector<1x4x128xbf16> to vector<4x128xbf16>
    %cst_77 = arith.constant dense<0.000000e+00> : vector<80x128xf32>
    %115 = tpu.matmul %112, %114, %cst_77 {dimension_numbers = #tpu.dot_dimension_numbers<[1], [0], [0], [1], [0, 0, 1, 1], [], []>} : vector<80x4xbf16>, vector<4x128xbf16>, vector<80x128xf32> -> vector<80x128xf32>
    %116 = arith.addf %111, %115 : vector<80x128xf32>
    %117 = vector.extract_strided_slice %96 {offsets = [11, 0], sizes = [80, 4], strides = [1, 1]} : vector<110x4xbf16> to vector<80x4xbf16>
    %c22 = arith.constant 22 : index
    %c0_78 = arith.constant 0 : index
    %c0_79 = arith.constant 0 : index
    %118 = vector.load %arg5[%c22, %c0_78, %c0_79] : memref<27x4x128xbf16, #tpu.memory_space<vmem>>, vector<1x4x128xbf16>
    %119 = vector.shape_cast %118 : vector<1x4x128xbf16> to vector<4x128xbf16>
    %cst_80 = arith.constant dense<0.000000e+00> : vector<80x128xf32>
    %120 = tpu.matmul %117, %119, %cst_80 {dimension_numbers = #tpu.dot_dimension_numbers<[1], [0], [0], [1], [0, 0, 1, 1], [], []>} : vector<80x4xbf16>, vector<4x128xbf16>, vector<80x128xf32> -> vector<80x128xf32>
    %121 = arith.addf %116, %120 : vector<80x128xf32>
    %122 = vector.extract_strided_slice %96 {offsets = [12, 0], sizes = [80, 4], strides = [1, 1]} : vector<110x4xbf16> to vector<80x4xbf16>
    %c23 = arith.constant 23 : index
    %c0_81 = arith.constant 0 : index
    %c0_82 = arith.constant 0 : index
    %123 = vector.load %arg5[%c23, %c0_81, %c0_82] : memref<27x4x128xbf16, #tpu.memory_space<vmem>>, vector<1x4x128xbf16>
    %124 = vector.shape_cast %123 : vector<1x4x128xbf16> to vector<4x128xbf16>
    %cst_83 = arith.constant dense<0.000000e+00> : vector<80x128xf32>
    %125 = tpu.matmul %122, %124, %cst_83 {dimension_numbers = #tpu.dot_dimension_numbers<[1], [0], [0], [1], [0, 0, 1, 1], [], []>} : vector<80x4xbf16>, vector<4x128xbf16>, vector<80x128xf32> -> vector<80x128xf32>
    %126 = arith.addf %121, %125 : vector<80x128xf32>
    %127 = vector.extract_strided_slice %96 {offsets = [20, 0], sizes = [80, 4], strides = [1, 1]} : vector<110x4xbf16> to vector<80x4xbf16>
    %c24 = arith.constant 24 : index
    %c0_84 = arith.constant 0 : index
    %c0_85 = arith.constant 0 : index
    %128 = vector.load %arg5[%c24, %c0_84, %c0_85] : memref<27x4x128xbf16, #tpu.memory_space<vmem>>, vector<1x4x128xbf16>
    %129 = vector.shape_cast %128 : vector<1x4x128xbf16> to vector<4x128xbf16>
    %cst_86 = arith.constant dense<0.000000e+00> : vector<80x128xf32>
    %130 = tpu.matmul %127, %129, %cst_86 {dimension_numbers = #tpu.dot_dimension_numbers<[1], [0], [0], [1], [0, 0, 1, 1], [], []>} : vector<80x4xbf16>, vector<4x128xbf16>, vector<80x128xf32> -> vector<80x128xf32>
    %131 = arith.addf %126, %130 : vector<80x128xf32>
    %132 = vector.extract_strided_slice %96 {offsets = [21, 0], sizes = [80, 4], strides = [1, 1]} : vector<110x4xbf16> to vector<80x4xbf16>
    %c25 = arith.constant 25 : index
    %c0_87 = arith.constant 0 : index
    %c0_88 = arith.constant 0 : index
    %133 = vector.load %arg5[%c25, %c0_87, %c0_88] : memref<27x4x128xbf16, #tpu.memory_space<vmem>>, vector<1x4x128xbf16>
    %134 = vector.shape_cast %133 : vector<1x4x128xbf16> to vector<4x128xbf16>
    %cst_89 = arith.constant dense<0.000000e+00> : vector<80x128xf32>
    %135 = tpu.matmul %132, %134, %cst_89 {dimension_numbers = #tpu.dot_dimension_numbers<[1], [0], [0], [1], [0, 0, 1, 1], [], []>} : vector<80x4xbf16>, vector<4x128xbf16>, vector<80x128xf32> -> vector<80x128xf32>
    %136 = arith.addf %131, %135 : vector<80x128xf32>
    %137 = vector.extract_strided_slice %96 {offsets = [22, 0], sizes = [80, 4], strides = [1, 1]} : vector<110x4xbf16> to vector<80x4xbf16>
    %c26 = arith.constant 26 : index
    %c0_90 = arith.constant 0 : index
    %c0_91 = arith.constant 0 : index
    %138 = vector.load %arg5[%c26, %c0_90, %c0_91] : memref<27x4x128xbf16, #tpu.memory_space<vmem>>, vector<1x4x128xbf16>
    %139 = vector.shape_cast %138 : vector<1x4x128xbf16> to vector<4x128xbf16>
    %cst_92 = arith.constant dense<0.000000e+00> : vector<80x128xf32>
    %140 = tpu.matmul %137, %139, %cst_92 {dimension_numbers = #tpu.dot_dimension_numbers<[1], [0], [0], [1], [0, 0, 1, 1], [], []>} : vector<80x4xbf16>, vector<4x128xbf16>, vector<80x128xf32> -> vector<80x128xf32>
    %141 = arith.addf %136, %140 : vector<80x128xf32>
    %c0_93 = arith.constant 0 : index
    %c0_94 = arith.constant 0 : index
    %142 = vector.load %arg6[%c0_93, %c0_94] : memref<1x128xf32, #tpu.memory_space<vmem>>, vector<1x128xf32>
    %143 = vector.broadcast %142 : vector<1x128xf32> to vector<80x128xf32>
    %144 = arith.addf %141, %143 : vector<80x128xf32>
    %cst_95 = arith.constant 0.000000e+00 : f32
    %145 = vector.broadcast %cst_95 : f32 to vector<80x128xf32>
    %146 = arith.maximumf %144, %145 : vector<80x128xf32>
    %147 = arith.truncf %146 : vector<80x128xf32> to vector<80x128xbf16>
    %c0_96 = arith.constant 0 : index
    %c0_97 = arith.constant 0 : index
    %c0_98 = arith.constant 0 : index
    %c0_99 = arith.constant 0 : index
    %148 = vector.load %arg7[%c0_96, %c0_97, %c0_98, %c0_99] : memref<1x1x80x128xbf16, #tpu.memory_space<vmem>>, vector<1x1x80x128xbf16>
    %149 = vector.shape_cast %148 : vector<1x1x80x128xbf16> to vector<80x128xbf16>
    %150 = vector.shape_cast %147 : vector<80x128xbf16> to vector<1x1x80x128xbf16>
    tpu.vector_store %arg7[%c0_96, %c0_97, %c0_98, %c0_99], %150 {strides = array<i32>} : memref<1x1x80x128xbf16, #tpu.memory_space<vmem>>, vector<1x1x80x128xbf16>,
    return
  }
  func.func @transform_0(%arg0: i32, %arg1: i32) -> (i32, i32, i32, i32) {
    %c0_i32 = arith.constant 0 : i32
    %0 = arith.addi %arg1, %c0_i32 : i32
    %c0_i32_0 = arith.constant 0 : i32
    %c0_i32_1 = arith.constant 0 : i32
    %c0_i32_2 = arith.constant 0 : i32
    return %arg0, %0, %c0_i32_0, %c0_i32_1 : i32, i32, i32, i32
  }
  func.func @transform_1(%arg0: i32, %arg1: i32) -> (i32, i32, i32, i32) {
    %c1_i32 = arith.constant 1 : i32
    %0 = arith.addi %arg1, %c1_i32 : i32
    %c0_i32 = arith.constant 0 : i32
    %c0_i32_0 = arith.constant 0 : i32
    %c0_i32_1 = arith.constant 0 : i32
    return %arg0, %0, %c0_i32, %c0_i32_0 : i32, i32, i32, i32
  }
  func.func @transform_2(%arg0: i32, %arg1: i32) -> (i32, i32, i32, i32) {
    %c2_i32 = arith.constant 2 : i32
    %0 = arith.addi %arg1, %c2_i32 : i32
    %c0_i32 = arith.constant 0 : i32
    %c0_i32_0 = arith.constant 0 : i32
    %c0_i32_1 = arith.constant 0 : i32
    return %arg0, %0, %c0_i32, %c0_i32_0 : i32, i32, i32, i32
  }
  func.func @transform_3(%arg0: i32, %arg1: i32) -> (i32, i32, i32) {
    %c0_i32 = arith.constant 0 : i32
    %c0_i32_0 = arith.constant 0 : i32
    %c0_i32_1 = arith.constant 0 : i32
    %c0_i32_2 = arith.constant 0 : i32
    return %c0_i32, %c0_i32_0, %c0_i32_1 : i32, i32, i32
  }
  func.func @transform_4(%arg0: i32, %arg1: i32) -> (i32, i32) {
    %c0_i32 = arith.constant 0 : i32
    %c0_i32_0 = arith.constant 0 : i32
    %c0_i32_1 = arith.constant 0 : i32
    return %c0_i32, %c0_i32_0 : i32, i32
  }
  func.func @transform_5(%arg0: i32, %arg1: i32) -> (i32, i32, i32, i32) {
    %c0_i32 = arith.constant 0 : i32
    %c0_i32_0 = arith.constant 0 : i32
    %c0_i32_1 = arith.constant 0 : i32
    return %arg0, %arg1, %c0_i32, %c0_i32_0 : i32, i32, i32, i32
  }
}

module attributes {stable_mosaic.version = 11 : i64} {
  func.func @_conv3d_taps_kernel(%arg0: i32, %arg1: i32, %arg2: memref<1x1x110x8xbf16, #tpu.memory_space<vmem>>, %arg3: memref<1x1x110x8xbf16, #tpu.memory_space<vmem>>, %arg4: memref<1x1x110x8xbf16, #tpu.memory_space<vmem>>, %arg5: memref<27x8x128xbf16, #tpu.memory_space<vmem>>, %arg6: memref<1x128xf32, #tpu.memory_space<vmem>>, %arg7: memref<1x1x80x128xf32, #tpu.memory_space<vmem>>) attributes {dimension_semantics = [#tpu.dimension_semantics<parallel>, #tpu.dimension_semantics<parallel>], iteration_bounds = array<i64: 2, 8>, scalar_prefetch = 0 : i64, scratch_operands = 0 : i64, tpu.core_type = #tpu.core_type<tc>, window_params = [{transform_indices = @transform_0, window_bounds = array<i64: 1, 1, 110, 8>}, {transform_indices = @transform_1, window_bounds = array<i64: 1, 1, 110, 8>}, {transform_indices = @transform_2, window_bounds = array<i64: 1, 1, 110, 8>}, {pipeline_mode = #tpu.pipeline_mode<synchronous>, transform_indices = @transform_3, window_bounds = array<i64: 27, 8, 128>}, {pipeline_mode = #tpu.pipeline_mode<synchronous>, transform_indices = @transform_4, window_bounds = array<i64: 1, 128>}, {transform_indices = @transform_5, window_bounds = array<i64: 1, 1, 80, 128>}]} {
    %cst = arith.constant 0.000000e+00 : f32
    %0 = vector.broadcast %cst : f32 to vector<80x128xf32>
    %c0 = arith.constant 0 : index
    %c0_0 = arith.constant 0 : index
    %c0_1 = arith.constant 0 : index
    %c0_2 = arith.constant 0 : index
    %1 = vector.load %arg2[%c0, %c0_0, %c0_1, %c0_2] : memref<1x1x110x8xbf16, #tpu.memory_space<vmem>>, vector<1x1x110x8xbf16>
    %2 = vector.shape_cast %1 : vector<1x1x110x8xbf16> to vector<110x8xbf16>
    %3 = vector.extract_strided_slice %2 {offsets = [0, 0], sizes = [80, 8], strides = [1, 1]} : vector<110x8xbf16> to vector<80x8xbf16>
    %c0_3 = arith.constant 0 : index
    %c0_4 = arith.constant 0 : index
    %c0_5 = arith.constant 0 : index
    %4 = vector.load %arg5[%c0_3, %c0_4, %c0_5] : memref<27x8x128xbf16, #tpu.memory_space<vmem>>, vector<1x8x128xbf16>
    %5 = vector.shape_cast %4 : vector<1x8x128xbf16> to vector<8x128xbf16>
    %cst_6 = arith.constant dense<0.000000e+00> : vector<80x128xf32>
    %6 = tpu.matmul %3, %5, %cst_6 {dimension_numbers = #tpu.dot_dimension_numbers<[1], [0], [0], [1], [0, 0, 1, 1], [], []>} : vector<80x8xbf16>, vector<8x128xbf16>, vector<80x128xf32> -> vector<80x128xf32>
    %7 = arith.addf %0, %6 : vector<80x128xf32>
    %8 = vector.extract_strided_slice %2 {offsets = [1, 0], sizes = [80, 8], strides = [1, 1]} : vector<110x8xbf16> to vector<80x8xbf16>
    %c1 = arith.constant 1 : index
    %c0_7 = arith.constant 0 : index
    %c0_8 = arith.constant 0 : index
    %9 = vector.load %arg5[%c1, %c0_7, %c0_8] : memref<27x8x128xbf16, #tpu.memory_space<vmem>>, vector<1x8x128xbf16>
    %10 = vector.shape_cast %9 : vector<1x8x128xbf16> to vector<8x128xbf16>
    %cst_9 = arith.constant dense<0.000000e+00> : vector<80x128xf32>
    %11 = tpu.matmul %8, %10, %cst_9 {dimension_numbers = #tpu.dot_dimension_numbers<[1], [0], [0], [1], [0, 0, 1, 1], [], []>} : vector<80x8xbf16>, vector<8x128xbf16>, vector<80x128xf32> -> vector<80x128xf32>
    %12 = arith.addf %7, %11 : vector<80x128xf32>
    %13 = vector.extract_strided_slice %2 {offsets = [2, 0], sizes = [80, 8], strides = [1, 1]} : vector<110x8xbf16> to vector<80x8xbf16>
    %c2 = arith.constant 2 : index
    %c0_10 = arith.constant 0 : index
    %c0_11 = arith.constant 0 : index
    %14 = vector.load %arg5[%c2, %c0_10, %c0_11] : memref<27x8x128xbf16, #tpu.memory_space<vmem>>, vector<1x8x128xbf16>
    %15 = vector.shape_cast %14 : vector<1x8x128xbf16> to vector<8x128xbf16>
    %cst_12 = arith.constant dense<0.000000e+00> : vector<80x128xf32>
    %16 = tpu.matmul %13, %15, %cst_12 {dimension_numbers = #tpu.dot_dimension_numbers<[1], [0], [0], [1], [0, 0, 1, 1], [], []>} : vector<80x8xbf16>, vector<8x128xbf16>, vector<80x128xf32> -> vector<80x128xf32>
    %17 = arith.addf %12, %16 : vector<80x128xf32>
    %18 = vector.extract_strided_slice %2 {offsets = [10, 0], sizes = [80, 8], strides = [1, 1]} : vector<110x8xbf16> to vector<80x8xbf16>
    %c3 = arith.constant 3 : index
    %c0_13 = arith.constant 0 : index
    %c0_14 = arith.constant 0 : index
    %19 = vector.load %arg5[%c3, %c0_13, %c0_14] : memref<27x8x128xbf16, #tpu.memory_space<vmem>>, vector<1x8x128xbf16>
    %20 = vector.shape_cast %19 : vector<1x8x128xbf16> to vector<8x128xbf16>
    %cst_15 = arith.constant dense<0.000000e+00> : vector<80x128xf32>
    %21 = tpu.matmul %18, %20, %cst_15 {dimension_numbers = #tpu.dot_dimension_numbers<[1], [0], [0], [1], [0, 0, 1, 1], [], []>} : vector<80x8xbf16>, vector<8x128xbf16>, vector<80x128xf32> -> vector<80x128xf32>
    %22 = arith.addf %17, %21 : vector<80x128xf32>
    %23 = vector.extract_strided_slice %2 {offsets = [11, 0], sizes = [80, 8], strides = [1, 1]} : vector<110x8xbf16> to vector<80x8xbf16>
    %c4 = arith.constant 4 : index
    %c0_16 = arith.constant 0 : index
    %c0_17 = arith.constant 0 : index
    %24 = vector.load %arg5[%c4, %c0_16, %c0_17] : memref<27x8x128xbf16, #tpu.memory_space<vmem>>, vector<1x8x128xbf16>
    %25 = vector.shape_cast %24 : vector<1x8x128xbf16> to vector<8x128xbf16>
    %cst_18 = arith.constant dense<0.000000e+00> : vector<80x128xf32>
    %26 = tpu.matmul %23, %25, %cst_18 {dimension_numbers = #tpu.dot_dimension_numbers<[1], [0], [0], [1], [0, 0, 1, 1], [], []>} : vector<80x8xbf16>, vector<8x128xbf16>, vector<80x128xf32> -> vector<80x128xf32>
    %27 = arith.addf %22, %26 : vector<80x128xf32>
    %28 = vector.extract_strided_slice %2 {offsets = [12, 0], sizes = [80, 8], strides = [1, 1]} : vector<110x8xbf16> to vector<80x8xbf16>
    %c5 = arith.constant 5 : index
    %c0_19 = arith.constant 0 : index
    %c0_20 = arith.constant 0 : index
    %29 = vector.load %arg5[%c5, %c0_19, %c0_20] : memref<27x8x128xbf16, #tpu.memory_space<vmem>>, vector<1x8x128xbf16>
    %30 = vector.shape_cast %29 : vector<1x8x128xbf16> to vector<8x128xbf16>
    %cst_21 = arith.constant dense<0.000000e+00> : vector<80x128xf32>
    %31 = tpu.matmul %28, %30, %cst_21 {dimension_numbers = #tpu.dot_dimension_numbers<[1], [0], [0], [1], [0, 0, 1, 1], [], []>} : vector<80x8xbf16>, vector<8x128xbf16>, vector<80x128xf32> -> vector<80x128xf32>
    %32 = arith.addf %27, %31 : vector<80x128xf32>
    %33 = vector.extract_strided_slice %2 {offsets = [20, 0], sizes = [80, 8], strides = [1, 1]} : vector<110x8xbf16> to vector<80x8xbf16>
    %c6 = arith.constant 6 : index
    %c0_22 = arith.constant 0 : index
    %c0_23 = arith.constant 0 : index
    %34 = vector.load %arg5[%c6, %c0_22, %c0_23] : memref<27x8x128xbf16, #tpu.memory_space<vmem>>, vector<1x8x128xbf16>
    %35 = vector.shape_cast %34 : vector<1x8x128xbf16> to vector<8x128xbf16>
    %cst_24 = arith.constant dense<0.000000e+00> : vector<80x128xf32>
    %36 = tpu.matmul %33, %35, %cst_24 {dimension_numbers = #tpu.dot_dimension_numbers<[1], [0], [0], [1], [0, 0, 1, 1], [], []>} : vector<80x8xbf16>, vector<8x128xbf16>, vector<80x128xf32> -> vector<80x128xf32>
    %37 = arith.addf %32, %36 : vector<80x128xf32>
    %38 = vector.extract_strided_slice %2 {offsets = [21, 0], sizes = [80, 8], strides = [1, 1]} : vector<110x8xbf16> to vector<80x8xbf16>
    %c7 = arith.constant 7 : index
    %c0_25 = arith.constant 0 : index
    %c0_26 = arith.constant 0 : index
    %39 = vector.load %arg5[%c7, %c0_25, %c0_26] : memref<27x8x128xbf16, #tpu.memory_space<vmem>>, vector<1x8x128xbf16>
    %40 = vector.shape_cast %39 : vector<1x8x128xbf16> to vector<8x128xbf16>
    %cst_27 = arith.constant dense<0.000000e+00> : vector<80x128xf32>
    %41 = tpu.matmul %38, %40, %cst_27 {dimension_numbers = #tpu.dot_dimension_numbers<[1], [0], [0], [1], [0, 0, 1, 1], [], []>} : vector<80x8xbf16>, vector<8x128xbf16>, vector<80x128xf32> -> vector<80x128xf32>
    %42 = arith.addf %37, %41 : vector<80x128xf32>
    %43 = vector.extract_strided_slice %2 {offsets = [22, 0], sizes = [80, 8], strides = [1, 1]} : vector<110x8xbf16> to vector<80x8xbf16>
    %c8 = arith.constant 8 : index
    %c0_28 = arith.constant 0 : index
    %c0_29 = arith.constant 0 : index
    %44 = vector.load %arg5[%c8, %c0_28, %c0_29] : memref<27x8x128xbf16, #tpu.memory_space<vmem>>, vector<1x8x128xbf16>
    %45 = vector.shape_cast %44 : vector<1x8x128xbf16> to vector<8x128xbf16>
    %cst_30 = arith.constant dense<0.000000e+00> : vector<80x128xf32>
    %46 = tpu.matmul %43, %45, %cst_30 {dimension_numbers = #tpu.dot_dimension_numbers<[1], [0], [0], [1], [0, 0, 1, 1], [], []>} : vector<80x8xbf16>, vector<8x128xbf16>, vector<80x128xf32> -> vector<80x128xf32>
    %47 = arith.addf %42, %46 : vector<80x128xf32>
    %c0_31 = arith.constant 0 : index
    %c0_32 = arith.constant 0 : index
    %c0_33 = arith.constant 0 : index
    %c0_34 = arith.constant 0 : index
    %48 = vector.load %arg3[%c0_31, %c0_32, %c0_33, %c0_34] : memref<1x1x110x8xbf16, #tpu.memory_space<vmem>>, vector<1x1x110x8xbf16>
    %49 = vector.shape_cast %48 : vector<1x1x110x8xbf16> to vector<110x8xbf16>
    %50 = vector.extract_strided_slice %49 {offsets = [0, 0], sizes = [80, 8], strides = [1, 1]} : vector<110x8xbf16> to vector<80x8xbf16>
    %c9 = arith.constant 9 : index
    %c0_35 = arith.constant 0 : index
    %c0_36 = arith.constant 0 : index
    %51 = vector.load %arg5[%c9, %c0_35, %c0_36] : memref<27x8x128xbf16, #tpu.memory_space<vmem>>, vector<1x8x128xbf16>
    %52 = vector.shape_cast %51 : vector<1x8x128xbf16> to vector<8x128xbf16>
    %cst_37 = arith.constant dense<0.000000e+00> : vector<80x128xf32>
    %53 = tpu.matmul %50, %52, %cst_37 {dimension_numbers = #tpu.dot_dimension_numbers<[1], [0], [0], [1], [0, 0, 1, 1], [], []>} : vector<80x8xbf16>, vector<8x128xbf16>, vector<80x128xf32> -> vector<80x128xf32>
    %54 = arith.addf %47, %53 : vector<80x128xf32>
    %55 = vector.extract_strided_slice %49 {offsets = [1, 0], sizes = [80, 8], strides = [1, 1]} : vector<110x8xbf16> to vector<80x8xbf16>
    %c10 = arith.constant 10 : index
    %c0_38 = arith.constant 0 : index
    %c0_39 = arith.constant 0 : index
    %56 = vector.load %arg5[%c10, %c0_38, %c0_39] : memref<27x8x128xbf16, #tpu.memory_space<vmem>>, vector<1x8x128xbf16>
    %57 = vector.shape_cast %56 : vector<1x8x128xbf16> to vector<8x128xbf16>
    %cst_40 = arith.constant dense<0.000000e+00> : vector<80x128xf32>
    %58 = tpu.matmul %55, %57, %cst_40 {dimension_numbers = #tpu.dot_dimension_numbers<[1], [0], [0], [1], [0, 0, 1, 1], [], []>} : vector<80x8xbf16>, vector<8x128xbf16>, vector<80x128xf32> -> vector<80x128xf32>
    %59 = arith.addf %54, %58 : vector<80x128xf32>
    %60 = vector.extract_strided_slice %49 {offsets = [2, 0], sizes = [80, 8], strides = [1, 1]} : vector<110x8xbf16> to vector<80x8xbf16>
    %c11 = arith.constant 11 : index
    %c0_41 = arith.constant 0 : index
    %c0_42 = arith.constant 0 : index
    %61 = vector.load %arg5[%c11, %c0_41, %c0_42] : memref<27x8x128xbf16, #tpu.memory_space<vmem>>, vector<1x8x128xbf16>
    %62 = vector.shape_cast %61 : vector<1x8x128xbf16> to vector<8x128xbf16>
    %cst_43 = arith.constant dense<0.000000e+00> : vector<80x128xf32>
    %63 = tpu.matmul %60, %62, %cst_43 {dimension_numbers = #tpu.dot_dimension_numbers<[1], [0], [0], [1], [0, 0, 1, 1], [], []>} : vector<80x8xbf16>, vector<8x128xbf16>, vector<80x128xf32> -> vector<80x128xf32>
    %64 = arith.addf %59, %63 : vector<80x128xf32>
    %65 = vector.extract_strided_slice %49 {offsets = [10, 0], sizes = [80, 8], strides = [1, 1]} : vector<110x8xbf16> to vector<80x8xbf16>
    %c12 = arith.constant 12 : index
    %c0_44 = arith.constant 0 : index
    %c0_45 = arith.constant 0 : index
    %66 = vector.load %arg5[%c12, %c0_44, %c0_45] : memref<27x8x128xbf16, #tpu.memory_space<vmem>>, vector<1x8x128xbf16>
    %67 = vector.shape_cast %66 : vector<1x8x128xbf16> to vector<8x128xbf16>
    %cst_46 = arith.constant dense<0.000000e+00> : vector<80x128xf32>
    %68 = tpu.matmul %65, %67, %cst_46 {dimension_numbers = #tpu.dot_dimension_numbers<[1], [0], [0], [1], [0, 0, 1, 1], [], []>} : vector<80x8xbf16>, vector<8x128xbf16>, vector<80x128xf32> -> vector<80x128xf32>
    %69 = arith.addf %64, %68 : vector<80x128xf32>
    %70 = vector.extract_strided_slice %49 {offsets = [11, 0], sizes = [80, 8], strides = [1, 1]} : vector<110x8xbf16> to vector<80x8xbf16>
    %c13 = arith.constant 13 : index
    %c0_47 = arith.constant 0 : index
    %c0_48 = arith.constant 0 : index
    %71 = vector.load %arg5[%c13, %c0_47, %c0_48] : memref<27x8x128xbf16, #tpu.memory_space<vmem>>, vector<1x8x128xbf16>
    %72 = vector.shape_cast %71 : vector<1x8x128xbf16> to vector<8x128xbf16>
    %cst_49 = arith.constant dense<0.000000e+00> : vector<80x128xf32>
    %73 = tpu.matmul %70, %72, %cst_49 {dimension_numbers = #tpu.dot_dimension_numbers<[1], [0], [0], [1], [0, 0, 1, 1], [], []>} : vector<80x8xbf16>, vector<8x128xbf16>, vector<80x128xf32> -> vector<80x128xf32>
    %74 = arith.addf %69, %73 : vector<80x128xf32>
    %75 = vector.extract_strided_slice %49 {offsets = [12, 0], sizes = [80, 8], strides = [1, 1]} : vector<110x8xbf16> to vector<80x8xbf16>
    %c14 = arith.constant 14 : index
    %c0_50 = arith.constant 0 : index
    %c0_51 = arith.constant 0 : index
    %76 = vector.load %arg5[%c14, %c0_50, %c0_51] : memref<27x8x128xbf16, #tpu.memory_space<vmem>>, vector<1x8x128xbf16>
    %77 = vector.shape_cast %76 : vector<1x8x128xbf16> to vector<8x128xbf16>
    %cst_52 = arith.constant dense<0.000000e+00> : vector<80x128xf32>
    %78 = tpu.matmul %75, %77, %cst_52 {dimension_numbers = #tpu.dot_dimension_numbers<[1], [0], [0], [1], [0, 0, 1, 1], [], []>} : vector<80x8xbf16>, vector<8x128xbf16>, vector<80x128xf32> -> vector<80x128xf32>
    %79 = arith.addf %74, %78 : vector<80x128xf32>
    %80 = vector.extract_strided_slice %49 {offsets = [20, 0], sizes = [80, 8], strides = [1, 1]} : vector<110x8xbf16> to vector<80x8xbf16>
    %c15 = arith.constant 15 : index
    %c0_53 = arith.constant 0 : index
    %c0_54 = arith.constant 0 : index
    %81 = vector.load %arg5[%c15, %c0_53, %c0_54] : memref<27x8x128xbf16, #tpu.memory_space<vmem>>, vector<1x8x128xbf16>
    %82 = vector.shape_cast %81 : vector<1x8x128xbf16> to vector<8x128xbf16>
    %cst_55 = arith.constant dense<0.000000e+00> : vector<80x128xf32>
    %83 = tpu.matmul %80, %82, %cst_55 {dimension_numbers = #tpu.dot_dimension_numbers<[1], [0], [0], [1], [0, 0, 1, 1], [], []>} : vector<80x8xbf16>, vector<8x128xbf16>, vector<80x128xf32> -> vector<80x128xf32>
    %84 = arith.addf %79, %83 : vector<80x128xf32>
    %85 = vector.extract_strided_slice %49 {offsets = [21, 0], sizes = [80, 8], strides = [1, 1]} : vector<110x8xbf16> to vector<80x8xbf16>
    %c16 = arith.constant 16 : index
    %c0_56 = arith.constant 0 : index
    %c0_57 = arith.constant 0 : index
    %86 = vector.load %arg5[%c16, %c0_56, %c0_57] : memref<27x8x128xbf16, #tpu.memory_space<vmem>>, vector<1x8x128xbf16>
    %87 = vector.shape_cast %86 : vector<1x8x128xbf16> to vector<8x128xbf16>
    %cst_58 = arith.constant dense<0.000000e+00> : vector<80x128xf32>
    %88 = tpu.matmul %85, %87, %cst_58 {dimension_numbers = #tpu.dot_dimension_numbers<[1], [0], [0], [1], [0, 0, 1, 1], [], []>} : vector<80x8xbf16>, vector<8x128xbf16>, vector<80x128xf32> -> vector<80x128xf32>
    %89 = arith.addf %84, %88 : vector<80x128xf32>
    %90 = vector.extract_strided_slice %49 {offsets = [22, 0], sizes = [80, 8], strides = [1, 1]} : vector<110x8xbf16> to vector<80x8xbf16>
    %c17 = arith.constant 17 : index
    %c0_59 = arith.constant 0 : index
    %c0_60 = arith.constant 0 : index
    %91 = vector.load %arg5[%c17, %c0_59, %c0_60] : memref<27x8x128xbf16, #tpu.memory_space<vmem>>, vector<1x8x128xbf16>
    %92 = vector.shape_cast %91 : vector<1x8x128xbf16> to vector<8x128xbf16>
    %cst_61 = arith.constant dense<0.000000e+00> : vector<80x128xf32>
    %93 = tpu.matmul %90, %92, %cst_61 {dimension_numbers = #tpu.dot_dimension_numbers<[1], [0], [0], [1], [0, 0, 1, 1], [], []>} : vector<80x8xbf16>, vector<8x128xbf16>, vector<80x128xf32> -> vector<80x128xf32>
    %94 = arith.addf %89, %93 : vector<80x128xf32>
    %c0_62 = arith.constant 0 : index
    %c0_63 = arith.constant 0 : index
    %c0_64 = arith.constant 0 : index
    %c0_65 = arith.constant 0 : index
    %95 = vector.load %arg4[%c0_62, %c0_63, %c0_64, %c0_65] : memref<1x1x110x8xbf16, #tpu.memory_space<vmem>>, vector<1x1x110x8xbf16>
    %96 = vector.shape_cast %95 : vector<1x1x110x8xbf16> to vector<110x8xbf16>
    %97 = vector.extract_strided_slice %96 {offsets = [0, 0], sizes = [80, 8], strides = [1, 1]} : vector<110x8xbf16> to vector<80x8xbf16>
    %c18 = arith.constant 18 : index
    %c0_66 = arith.constant 0 : index
    %c0_67 = arith.constant 0 : index
    %98 = vector.load %arg5[%c18, %c0_66, %c0_67] : memref<27x8x128xbf16, #tpu.memory_space<vmem>>, vector<1x8x128xbf16>
    %99 = vector.shape_cast %98 : vector<1x8x128xbf16> to vector<8x128xbf16>
    %cst_68 = arith.constant dense<0.000000e+00> : vector<80x128xf32>
    %100 = tpu.matmul %97, %99, %cst_68 {dimension_numbers = #tpu.dot_dimension_numbers<[1], [0], [0], [1], [0, 0, 1, 1], [], []>} : vector<80x8xbf16>, vector<8x128xbf16>, vector<80x128xf32> -> vector<80x128xf32>
    %101 = arith.addf %94, %100 : vector<80x128xf32>
    %102 = vector.extract_strided_slice %96 {offsets = [1, 0], sizes = [80, 8], strides = [1, 1]} : vector<110x8xbf16> to vector<80x8xbf16>
    %c19 = arith.constant 19 : index
    %c0_69 = arith.constant 0 : index
    %c0_70 = arith.constant 0 : index
    %103 = vector.load %arg5[%c19, %c0_69, %c0_70] : memref<27x8x128xbf16, #tpu.memory_space<vmem>>, vector<1x8x128xbf16>
    %104 = vector.shape_cast %103 : vector<1x8x128xbf16> to vector<8x128xbf16>
    %cst_71 = arith.constant dense<0.000000e+00> : vector<80x128xf32>
    %105 = tpu.matmul %102, %104, %cst_71 {dimension_numbers = #tpu.dot_dimension_numbers<[1], [0], [0], [1], [0, 0, 1, 1], [], []>} : vector<80x8xbf16>, vector<8x128xbf16>, vector<80x128xf32> -> vector<80x128xf32>
    %106 = arith.addf %101, %105 : vector<80x128xf32>
    %107 = vector.extract_strided_slice %96 {offsets = [2, 0], sizes = [80, 8], strides = [1, 1]} : vector<110x8xbf16> to vector<80x8xbf16>
    %c20 = arith.constant 20 : index
    %c0_72 = arith.constant 0 : index
    %c0_73 = arith.constant 0 : index
    %108 = vector.load %arg5[%c20, %c0_72, %c0_73] : memref<27x8x128xbf16, #tpu.memory_space<vmem>>, vector<1x8x128xbf16>
    %109 = vector.shape_cast %108 : vector<1x8x128xbf16> to vector<8x128xbf16>
    %cst_74 = arith.constant dense<0.000000e+00> : vector<80x128xf32>
    %110 = tpu.matmul %107, %109, %cst_74 {dimension_numbers = #tpu.dot_dimension_numbers<[1], [0], [0], [1], [0, 0, 1, 1], [], []>} : vector<80x8xbf16>, vector<8x128xbf16>, vector<80x128xf32> -> vector<80x128xf32>
    %111 = arith.addf %106, %110 : vector<80x128xf32>
    %112 = vector.extract_strided_slice %96 {offsets = [10, 0], sizes = [80, 8], strides = [1, 1]} : vector<110x8xbf16> to vector<80x8xbf16>
    %c21 = arith.constant 21 : index
    %c0_75 = arith.constant 0 : index
    %c0_76 = arith.constant 0 : index
    %113 = vector.load %arg5[%c21, %c0_75, %c0_76] : memref<27x8x128xbf16, #tpu.memory_space<vmem>>, vector<1x8x128xbf16>
    %114 = vector.shape_cast %113 : vector<1x8x128xbf16> to vector<8x128xbf16>
    %cst_77 = arith.constant dense<0.000000e+00> : vector<80x128xf32>
    %115 = tpu.matmul %112, %114, %cst_77 {dimension_numbers = #tpu.dot_dimension_numbers<[1], [0], [0], [1], [0, 0, 1, 1], [], []>} : vector<80x8xbf16>, vector<8x128xbf16>, vector<80x128xf32> -> vector<80x128xf32>
    %116 = arith.addf %111, %115 : vector<80x128xf32>
    %117 = vector.extract_strided_slice %96 {offsets = [11, 0], sizes = [80, 8], strides = [1, 1]} : vector<110x8xbf16> to vector<80x8xbf16>
    %c22 = arith.constant 22 : index
    %c0_78 = arith.constant 0 : index
    %c0_79 = arith.constant 0 : index
    %118 = vector.load %arg5[%c22, %c0_78, %c0_79] : memref<27x8x128xbf16, #tpu.memory_space<vmem>>, vector<1x8x128xbf16>
    %119 = vector.shape_cast %118 : vector<1x8x128xbf16> to vector<8x128xbf16>
    %cst_80 = arith.constant dense<0.000000e+00> : vector<80x128xf32>
    %120 = tpu.matmul %117, %119, %cst_80 {dimension_numbers = #tpu.dot_dimension_numbers<[1], [0], [0], [1], [0, 0, 1, 1], [], []>} : vector<80x8xbf16>, vector<8x128xbf16>, vector<80x128xf32> -> vector<80x128xf32>
    %121 = arith.addf %116, %120 : vector<80x128xf32>
    %122 = vector.extract_strided_slice %96 {offsets = [12, 0], sizes = [80, 8], strides = [1, 1]} : vector<110x8xbf16> to vector<80x8xbf16>
    %c23 = arith.constant 23 : index
    %c0_81 = arith.constant 0 : index
    %c0_82 = arith.constant 0 : index
    %123 = vector.load %arg5[%c23, %c0_81, %c0_82] : memref<27x8x128xbf16, #tpu.memory_space<vmem>>, vector<1x8x128xbf16>
    %124 = vector.shape_cast %123 : vector<1x8x128xbf16> to vector<8x128xbf16>
    %cst_83 = arith.constant dense<0.000000e+00> : vector<80x128xf32>
    %125 = tpu.matmul %122, %124, %cst_83 {dimension_numbers = #tpu.dot_dimension_numbers<[1], [0], [0], [1], [0, 0, 1, 1], [], []>} : vector<80x8xbf16>, vector<8x128xbf16>, vector<80x128xf32> -> vector<80x128xf32>
    %126 = arith.addf %121, %125 : vector<80x128xf32>
    %127 = vector.extract_strided_slice %96 {offsets = [20, 0], sizes = [80, 8], strides = [1, 1]} : vector<110x8xbf16> to vector<80x8xbf16>
    %c24 = arith.constant 24 : index
    %c0_84 = arith.constant 0 : index
    %c0_85 = arith.constant 0 : index
    %128 = vector.load %arg5[%c24, %c0_84, %c0_85] : memref<27x8x128xbf16, #tpu.memory_space<vmem>>, vector<1x8x128xbf16>
    %129 = vector.shape_cast %128 : vector<1x8x128xbf16> to vector<8x128xbf16>
    %cst_86 = arith.constant dense<0.000000e+00> : vector<80x128xf32>
    %130 = tpu.matmul %127, %129, %cst_86 {dimension_numbers = #tpu.dot_dimension_numbers<[1], [0], [0], [1], [0, 0, 1, 1], [], []>} : vector<80x8xbf16>, vector<8x128xbf16>, vector<80x128xf32> -> vector<80x128xf32>
    %131 = arith.addf %126, %130 : vector<80x128xf32>
    %132 = vector.extract_strided_slice %96 {offsets = [21, 0], sizes = [80, 8], strides = [1, 1]} : vector<110x8xbf16> to vector<80x8xbf16>
    %c25 = arith.constant 25 : index
    %c0_87 = arith.constant 0 : index
    %c0_88 = arith.constant 0 : index
    %133 = vector.load %arg5[%c25, %c0_87, %c0_88] : memref<27x8x128xbf16, #tpu.memory_space<vmem>>, vector<1x8x128xbf16>
    %134 = vector.shape_cast %133 : vector<1x8x128xbf16> to vector<8x128xbf16>
    %cst_89 = arith.constant dense<0.000000e+00> : vector<80x128xf32>
    %135 = tpu.matmul %132, %134, %cst_89 {dimension_numbers = #tpu.dot_dimension_numbers<[1], [0], [0], [1], [0, 0, 1, 1], [], []>} : vector<80x8xbf16>, vector<8x128xbf16>, vector<80x128xf32> -> vector<80x128xf32>
    %136 = arith.addf %131, %135 : vector<80x128xf32>
    %137 = vector.extract_strided_slice %96 {offsets = [22, 0], sizes = [80, 8], strides = [1, 1]} : vector<110x8xbf16> to vector<80x8xbf16>
    %c26 = arith.constant 26 : index
    %c0_90 = arith.constant 0 : index
    %c0_91 = arith.constant 0 : index
    %138 = vector.load %arg5[%c26, %c0_90, %c0_91] : memref<27x8x128xbf16, #tpu.memory_space<vmem>>, vector<1x8x128xbf16>
    %139 = vector.shape_cast %138 : vector<1x8x128xbf16> to vector<8x128xbf16>
    %cst_92 = arith.constant dense<0.000000e+00> : vector<80x128xf32>
    %140 = tpu.matmul %137, %139, %cst_92 {dimension_numbers = #tpu.dot_dimension_numbers<[1], [0], [0], [1], [0, 0, 1, 1], [], []>} : vector<80x8xbf16>, vector<8x128xbf16>, vector<80x128xf32> -> vector<80x128xf32>
    %141 = arith.addf %136, %140 : vector<80x128xf32>
    %c0_93 = arith.constant 0 : index
    %c0_94 = arith.constant 0 : index
    %142 = vector.load %arg6[%c0_93, %c0_94] : memref<1x128xf32, #tpu.memory_space<vmem>>, vector<1x128xf32>
    %143 = vector.broadcast %142 : vector<1x128xf32> to vector<80x128xf32>
    %144 = arith.addf %141, %143 : vector<80x128xf32>
    %cst_95 = arith.constant 0.000000e+00 : f32
    %145 = vector.broadcast %cst_95 : f32 to vector<80x128xf32>
    %146 = arith.maximumf %144, %145 : vector<80x128xf32>
    %c0_96 = arith.constant 0 : index
    %c0_97 = arith.constant 0 : index
    %c0_98 = arith.constant 0 : index
    %c0_99 = arith.constant 0 : index
    %147 = vector.load %arg7[%c0_96, %c0_97, %c0_98, %c0_99] : memref<1x1x80x128xf32, #tpu.memory_space<vmem>>, vector<1x1x80x128xf32>
    %148 = vector.shape_cast %147 : vector<1x1x80x128xf32> to vector<80x128xf32>
    %149 = vector.shape_cast %146 : vector<80x128xf32> to vector<1x1x80x128xf32>
    tpu.vector_store %arg7[%c0_96, %c0_97, %c0_98, %c0_99], %149 {strides = array<i32>} : memref<1x1x80x128xf32, #tpu.memory_space<vmem>>, vector<1x1x80x128xf32>,
    return
  }
  func.func @transform_0(%arg0: i32, %arg1: i32) -> (i32, i32, i32, i32) {
    %c0_i32 = arith.constant 0 : i32
    %0 = arith.addi %arg1, %c0_i32 : i32
    %c0_i32_0 = arith.constant 0 : i32
    %c0_i32_1 = arith.constant 0 : i32
    %c0_i32_2 = arith.constant 0 : i32
    return %arg0, %0, %c0_i32_0, %c0_i32_1 : i32, i32, i32, i32
  }
  func.func @transform_1(%arg0: i32, %arg1: i32) -> (i32, i32, i32, i32) {
    %c1_i32 = arith.constant 1 : i32
    %0 = arith.addi %arg1, %c1_i32 : i32
    %c0_i32 = arith.constant 0 : i32
    %c0_i32_0 = arith.constant 0 : i32
    %c0_i32_1 = arith.constant 0 : i32
    return %arg0, %0, %c0_i32, %c0_i32_0 : i32, i32, i32, i32
  }
  func.func @transform_2(%arg0: i32, %arg1: i32) -> (i32, i32, i32, i32) {
    %c2_i32 = arith.constant 2 : i32
    %0 = arith.addi %arg1, %c2_i32 : i32
    %c0_i32 = arith.constant 0 : i32
    %c0_i32_0 = arith.constant 0 : i32
    %c0_i32_1 = arith.constant 0 : i32
    return %arg0, %0, %c0_i32, %c0_i32_0 : i32, i32, i32, i32
  }
  func.func @transform_3(%arg0: i32, %arg1: i32) -> (i32, i32, i32) {
    %c0_i32 = arith.constant 0 : i32
    %c0_i32_0 = arith.constant 0 : i32
    %c0_i32_1 = arith.constant 0 : i32
    %c0_i32_2 = arith.constant 0 : i32
    return %c0_i32, %c0_i32_0, %c0_i32_1 : i32, i32, i32
  }
  func.func @transform_4(%arg0: i32, %arg1: i32) -> (i32, i32) {
    %c0_i32 = arith.constant 0 : i32
    %c0_i32_0 = arith.constant 0 : i32
    %c0_i32_1 = arith.constant 0 : i32
    return %c0_i32, %c0_i32_0 : i32, i32
  }
  func.func @transform_5(%arg0: i32, %arg1: i32) -> (i32, i32, i32, i32) {
    %c0_i32 = arith.constant 0 : i32
    %c0_i32_0 = arith.constant 0 : i32
    %c0_i32_1 = arith.constant 0 : i32
    return %arg0, %arg1, %c0_i32, %c0_i32_0 : i32, i32, i32, i32
  }
}

</mosaic_0001>

<llo_original>
// kernel: _conv_block_3d_impl.2
$region0: #{_conv_block_3d_impl.2}
  #allocation0 [shape = 'u32[]', space=smem, size = 0x4, offset = 0x4, fixed_abs, tag = 'smem constant byte address 0x4 - core index']
  #allocation1 [shape = 'u32[144,128]{1,0:T(1,128)}', space=vmem, size = 0x12000, scoped, tag = 'internal scratch']
  %s0 = inlined_call_operand.vmem [shape: bf16[2,10,110,4], index: 0, kind: input, shape index: {}, may-alias: {0,1,2}]
  %s1 = inlined_call_operand.vmem [shape: bf16[2,10,110,4], index: 1, kind: input, shape index: {}, may-alias: {0,1,2}]
  %s2 = inlined_call_operand.vmem [shape: bf16[2,10,110,4], index: 2, kind: input, shape index: {}, may-alias: {0,1,2}]
  %s3 = inlined_call_operand.vmem [shape: bf16[27,4,128], index: 3, kind: input, shape index: {}]
  %s4 = inlined_call_operand.vmem [shape: f32[1,128], index: 4, kind: input, shape index: {}]
  %s5 = inlined_call_operand.vmem [shape: bf16[2,8,80,128], index: 5, kind: output, shape index: {}]
  %s6 = sld [smem:[#allocation0]]
  $region53: #{_conv_block_3d_impl.2} parent=0
    _
  %s8 = ssub.s32 1, %s6
  %s9 = scalar_select 0, %s8, %s6
  loop: start=0, step=1, limit=18
  $region2: #{_conv_block_3d_impl.2} parent=0 // loop_pre_header
    _
  $region3: #{_conv_block_3d_impl.2} parent=0 // loop_header
    %s11 = sphi 0, %s15
    %p12 = scmp.ge.s32.totalorder %s11, 18
    %s18 = sphi 0, %s30
    %s19 = sphi 0, %s26
    %s20 = sphi 0, %s18
    %s21 = sphi 0, %s19
    %s22 = sphi 0, %s20
    %s23 = sphi 0, %s21
    %s35 = sphi 0, %s37
    %s38 = sphi 0, %s35
    %s39 = sphi 0, %s38
    %s55 = sphi 0, %s39
    %s65 = sphi 0, %s67
    %s68 = sphi 0, %s65
    %s69 = sphi 0, %s68
    %s85 = sphi 0, %s69
    %s95 = sphi 0, %s97
    %s98 = sphi 0, %s95
    %s99 = sphi 0, %s98
    %s115 = sphi 0, %s99
    %s119 = sphi 0, %s119
    %s121 = sphi 0, %s119
    %s122 = sphi 0, %s121
    %s136 = sphi 0, %s122
    %s140 = sphi 0, %s140
    %s142 = sphi 0, %s140
    %s143 = sphi 0, %s142
    %s157 = sphi 0, %s143
    %s165 = sphi 0, %s167
    %s168 = sphi 0, %s165
    %s169 = sphi 0, %s168
    %s185 = sphi 0, %s169
  $region4: #{_conv_block_3d_impl.2} parent=0 // loop_header_branch
    %14 = sbr.rel (%p12) target = $region8
  $region5: #{_conv_block_3d_impl.2} parent=0 // loop_body
    %s16 = ssub.s32 %s11, 1
    %s17 = ssub.s32 %s11, 2
    %s24 = sadd.s32 1, %s19
    %p25 = scmp.ge.s32.totalorder %s24, 8
    %s26 = scalar_select %p25, 0, %s24
    %s27 = sadd.s32 1, %s18
    %s28 = scalar_select %p25, %s27, %s18
    %p29 = scmp.ge.s32.totalorder %s28, 2
    %s30 = scalar_select %p29, 0, %s28
    %s31 = ssub.s32 %s18, %s30
    %s32 = ssub.s32 %s19, %s26
    %s33 = sor.u32 %s31, %s32
    %p34 = scmp.eq.s32.totalorder %s33, 0
    %s36 = sadd.s32 %s35, 1
    %s37 = scalar_select %p34, %s35, %s36
    %p40 = pneg %p34
    %p41 = scmp.eq.s32.totalorder %s11, 15
    %p42 = por %p40, %p41
    %p43 = scmp.ne.s32.totalorder %s35, %s38
    %p44 = scmp.eq.s32.totalorder %s11, 0
    %p45 = por %p43, %p44
    %p46 = scmp.ne.s32.totalorder %s35, %s38
    %p47 = scmp.eq.s32.totalorder %s16, 15
    %p48 = por %p46, %p47
    %p49 = scmp.ne.s32.totalorder %s38, %s39
    %p50 = scmp.eq.s32.totalorder %s16, 0
    %p51 = por %p49, %p50
    %p52 = scmp.ne.s32.totalorder %s38, %s39
    %p53 = scmp.eq.s32.totalorder %s17, 15
    %p54 = por %p52, %p53
    %p56 = scmp.ne.s32.totalorder %s39, %s55
    %p57 = scmp.eq.s32.totalorder %s17, 0
    %p58 = por %p56, %p57
    %s59 = sadd.s32 %s19, 1
    %s60 = sadd.s32 %s26, 1
    %s61 = ssub.s32 %s18, %s30
    %s62 = ssub.s32 %s59, %s60
    %s63 = sor.u32 %s61, %s62
    %p64 = scmp.eq.s32.totalorder %s63, 0
    %s66 = sadd.s32 %s65, 1
    %s67 = scalar_select %p64, %s65, %s66
    %p70 = pneg %p64
    %p71 = scmp.eq.s32.totalorder %s11, 15
    %p72 = por %p70, %p71
    %p73 = scmp.ne.s32.totalorder %s65, %s68
    %p74 = scmp.eq.s32.totalorder %s11, 0
    %p75 = por %p73, %p74
    %p76 = scmp.ne.s32.totalorder %s65, %s68
    %p77 = scmp.eq.s32.totalorder %s16, 15
    %p78 = por %p76, %p77
    %p79 = scmp.ne.s32.totalorder %s68, %s69
    %p80 = scmp.eq.s32.totalorder %s16, 0
    %p81 = por %p79, %p80
    %p82 = scmp.ne.s32.totalorder %s68, %s69
    %p83 = scmp.eq.s32.totalorder %s17, 15
    %p84 = por %p82, %p83
    %p86 = scmp.ne.s32.totalorder %s69, %s85
    %p87 = scmp.eq.s32.totalorder %s17, 0
    %p88 = por %p86, %p87
    %s89 = sadd.s32 %s19, 2
    %s90 = sadd.s32 %s26, 2
    %s91 = ssub.s32 %s18, %s30
    %s92 = ssub.s32 %s89, %s90
    %s93 = sor.u32 %s91, %s92
    %p94 = scmp.eq.s32.totalorder %s93, 0
    %s96 = sadd.s32 %s95, 1
    %s97 = scalar_select %p94, %s95, %s96
    %p100 = pneg %p94
    %p101 = scmp.eq.s32.totalorder %s11, 15
    %p102 = por %p100, %p101
    %p103 = scmp.ne.s32.totalorder %s95, %s98
    %p104 = scmp.eq.s32.totalorder %s11, 0
    %p105 = por %p103, %p104
    %p106 = scmp.ne.s32.totalorder %s95, %s98
    %p107 = scmp.eq.s32.totalorder %s16, 15
    %p108 = por %p106, %p107
    %p109 = scmp.ne.s32.totalorder %s98, %s99
    %p110 = scmp.eq.s32.totalorder %s16, 0
    %p111 = por %p109, %p110
    %p112 = scmp.ne.s32.totalorder %s98, %s99
    %p113 = scmp.eq.s32.totalorder %s17, 15
    %p114 = por %p112, %p113
    %p116 = scmp.ne.s32.totalorder %s99, %s115
    %p117 = scmp.eq.s32.totalorder %s17, 0
    %p118 = por %p116, %p117
    %s120 = sadd.s32 %s119, 1
    %p123 = scmp.eq.s32.totalorder %s11, 15
    %p124 = scmp.ne.s32.totalorder %s119, %s121
    %p125 = scmp.eq.s32.totalorder %s11, 0
    %p126 = por %p124, %p125
    %p127 = scmp.ne.s32.totalorder %s119, %s121
    %p128 = scmp.eq.s32.totalorder %s16, 15
    %p129 = por %p127, %p128
    %p130 = scmp.ne.s32.totalorder %s121, %s122
    %p131 = scmp.eq.s32.totalorder %s16, 0
    %p132 = por %p130, %p131
    %p133 = scmp.ne.s32.totalorder %s121, %s122
    %p134 = scmp.eq.s32.totalorder %s17, 15
    %p135 = por %p133, %p134
    %p137 = scmp.ne.s32.totalorder %s122, %s136
    %p138 = scmp.eq.s32.totalorder %s17, 0
    %p139 = por %p137, %p138
    %s141 = sadd.s32 %s140, 1
    %p144 = scmp.eq.s32.totalorder %s11, 15
    %p145 = scmp.ne.s32.totalorder %s140, %s142
    %p146 = scmp.eq.s32.totalorder %s11, 0
    %p147 = por %p145, %p146
    %p148 = scmp.ne.s32.totalorder %s140, %s142
    %p149 = scmp.eq.s32.totalorder %s16, 15
    %p150 = por %p148, %p149
    %p151 = scmp.ne.s32.totalorder %s142, %s143
    %p152 = scmp.eq.s32.totalorder %s16, 0
    %p153 = por %p151, %p152
    %p154 = scmp.ne.s32.totalorder %s142, %s143
    %p155 = scmp.eq.s32.totalorder %s17, 15
    %p156 = por %p154, %p155
    %p158 = scmp.ne.s32.totalorder %s143, %s157
    %p159 = scmp.eq.s32.totalorder %s17, 0
    %p160 = por %p158, %p159
    %s161 = ssub.s32 %s18, %s30
    %s162 = ssub.s32 %s19, %s26
    %s163 = sor.u32 %s161, %s162
    %p164 = scmp.eq.s32.totalorder %s163, 0
    %s166 = sadd.s32 %s165, 1
    %s167 = scalar_select %p164, %s165, %s166
    %p170 = pneg %p164
    %p171 = scmp.eq.s32.totalorder %s11, 15
    %p172 = por %p170, %p171
    %p173 = scmp.ne.s32.totalorder %s165, %s168
    %p174 = scmp.eq.s32.totalorder %s11, 0
    %p175 = por %p173, %p174
    %p176 = scmp.ne.s32.totalorder %s165, %s168
    %p177 = scmp.eq.s32.totalorder %s16, 15
    %p178 = por %p176, %p177
    %p179 = scmp.ne.s32.totalorder %s168, %s169
    %p180 = scmp.eq.s32.totalorder %s16, 0
    %p181 = por %p179, %p180
    %p182 = scmp.ne.s32.totalorder %s168, %s169
    %p183 = scmp.eq.s32.totalorder %s17, 15
    %p184 = por %p182, %p183
    %p186 = scmp.ne.s32.totalorder %s169, %s185
    %p187 = scmp.eq.s32.totalorder %s17, 0
    %p188 = por %p186, %p187
    %p189 = scmp.le.s32.totalorder 1, %s11
    %p190 = scmp.lt.s32.totalorder %s11, 17
    %p191 = pnand %p189, %p190
    %p192 = pneg %p191
    // Predicated region
    $region9: #{_conv_block_3d_impl.2} parent=5 // pred_check
      _
    $region10: #{_conv_block_3d_impl.2} parent=5 // pred_check_branch
      %194 = sbr.rel (%p191) target = $region12
    $region11: #{_conv_block_3d_impl.2} parent=5 // pred_region
      %s195 = ssub.s32 %s11, 1
      // Predicated region
      $region13: #{_conv_block_3d_impl.2} parent=11 // pred_check
        %p196 = pneg %p132
      $region14: #{_conv_block_3d_impl.2} parent=11 // pred_check_branch
        %198 = sbr.rel (%p196) target = $region16
      $region15: #{_conv_block_3d_impl.2} parent=11 // pred_region
        _
      $region16: #{_conv_block_3d_impl.2} parent=11 // pred_fallthru
        _
      // Predicated region
      $region17: #{_conv_block_3d_impl.2} parent=11 // pred_check
        %p199 = pneg %p153
      $region18: #{_conv_block_3d_impl.2} parent=11 // pred_check_branch
        %201 = sbr.rel (%p199) target = $region20
      $region19: #{_conv_block_3d_impl.2} parent=11 // pred_region
        _
      $region20: #{_conv_block_3d_impl.2} parent=11 // pred_fallthru
        _
    $region12: #{_conv_block_3d_impl.2} parent=5 // pred_fallthru
      _
    %p202 = scmp.lt.s32.totalorder %s11, 16
    // Predicated region
    $region21: #{_conv_block_3d_impl.2} parent=5 // pred_check
      %p203 = pneg %p202
    $region22: #{_conv_block_3d_impl.2} parent=5 // pred_check_branch
      %205 = sbr.rel (%p203) target = $region24
    $region23: #{_conv_block_3d_impl.2} parent=5 // pred_region
      // Predicated region
      $region25: #{_conv_block_3d_impl.2} parent=23 // pred_check
        %p206 = pneg %p45
      $region26: #{_conv_block_3d_impl.2} parent=23 // pred_check_branch
        %208 = sbr.rel (%p206) target = $region28
      $region27: #{_conv_block_3d_impl.2} parent=23 // pred_region
        %p209 = scmp.lt.s32.totalorder %s18, 1
        %s210 = scalar_select %p209, %s18, 1
        %p211 = scmp.lt.s32.totalorder %s19, 9
        %s212 = scalar_select %p211, %s19, 9
        %s213 = smul.addr %s212, 14
        %s214 = smul.addr %s210, 140
        %s215 = sadd.s32 %s213, %s214
        %s216 = smul.addr %s215, 4
        %s217 = scalar_lea.vmem %s0, %s216
      $region28: #{_conv_block_3d_impl.2} parent=23 // pred_fallthru
        _
      // Predicated region
      $region29: #{_conv_block_3d_impl.2} parent=23 // pred_check
        %p218 = pneg %p75
      $region30: #{_conv_block_3d_impl.2} parent=23 // pred_check_branch
        %220 = sbr.rel (%p218) target = $region32
      $region31: #{_conv_block_3d_impl.2} parent=23 // pred_region
        %s221 = sadd.s32 %s19, 1
        %p222 = scmp.lt.s32.totalorder %s18, 1
        %s223 = scalar_select %p222, %s18, 1
        %p224 = scmp.lt.s32.totalorder %s221, 9
        %s225 = scalar_select %p224, %s221, 9
        %s226 = smul.addr %s225, 14
        %s227 = smul.addr %s223, 140
        %s228 = sadd.s32 %s226, %s227
        %s229 = smul.addr %s228, 4
        %s230 = scalar_lea.vmem %s1, %s229
        %s231 = sadd.s32 %s19, 1
      $region32: #{_conv_block_3d_impl.2} parent=23 // pred_fallthru
        _
      // Predicated region
      $region33: #{_conv_block_3d_impl.2} parent=23 // pred_check
        %p232 = pneg %p105
      $region34: #{_conv_block_3d_impl.2} parent=23 // pred_check_branch
        %234 = sbr.rel (%p232) target = $region36
      $region35: #{_conv_block_3d_impl.2} parent=23 // pred_region
        %s235 = sadd.s32 %s19, 2
        %p236 = scmp.lt.s32.totalorder %s18, 1
        %s237 = scalar_select %p236, %s18, 1
        %p238 = scmp.lt.s32.totalorder %s235, 9
        %s239 = scalar_select %p238, %s235, 9
        %s240 = smul.addr %s239, 14
        %s241 = smul.addr %s237, 140
        %s242 = sadd.s32 %s240, %s241
        %s243 = smul.addr %s242, 4
        %s244 = scalar_lea.vmem %s2, %s243
        %s245 = sadd.s32 %s19, 2
      $region36: #{_conv_block_3d_impl.2} parent=23 // pred_fallthru
        _
    $region24: #{_conv_block_3d_impl.2} parent=5 // pred_fallthru
      _
    %p246 = scmp.le.s32.totalorder 1, %s11
    %p247 = scmp.lt.s32.totalorder %s11, 17
    %p248 = pnand %p246, %p247
    %p249 = pneg %p248
    // Predicated region
    $region37: #{_conv_block_3d_impl.2} parent=5 // pred_check
      _
    $region38: #{_conv_block_3d_impl.2} parent=5 // pred_check_branch
      %251 = sbr.rel (%p248) target = $region40
    $region39: #{_conv_block_3d_impl.2} parent=5 // pred_region
      %s252 = ssub.s32 %s11, 1
      %p253 = scmp.lt.s32.totalorder %s20, 1
      %s254 = scalar_select %p253, %s20, 1
      %p255 = scmp.lt.s32.totalorder %s21, 9
      %s256 = scalar_select %p255, %s21, 9
      %s257 = smul.addr %s256, 14
      %s258 = smul.addr %s254, 140
      %s259 = sadd.s32 %s257, %s258
      %s260 = smul.addr %s259, 4
      %s261 = scalar_lea.vmem %s0, %s260
      %p262 = pneg %p51
      %p263 = pneg %p48
      %s264 = sadd.s32 %s21, 1
      %p265 = scmp.lt.s32.totalorder %s20, 1
      %s266 = scalar_select %p265, %s20, 1
      %p267 = scmp.lt.s32.totalorder %s264, 9
      %s268 = scalar_select %p267, %s264, 9
      %s269 = smul.addr %s268, 14
      %s270 = smul.addr %s266, 140
      %s271 = sadd.s32 %s269, %s270
      %s272 = smul.addr %s271, 4
      %s273 = scalar_lea.vmem %s1, %s272
      %p274 = pneg %p81
      %p275 = pneg %p78
      %s276 = sadd.s32 %s21, 2
      %p277 = scmp.lt.s32.totalorder %s20, 1
      %s278 = scalar_select %p277, %s20, 1
      %p279 = scmp.lt.s32.totalorder %s276, 9
      %s280 = scalar_select %p279, %s276, 9
      %s281 = smul.addr %s280, 14
      %s282 = smul.addr %s278, 140
      %s283 = sadd.s32 %s281, %s282
      %s284 = smul.addr %s283, 4
      %s285 = scalar_lea.vmem %s2, %s284
      %p286 = pneg %p111
      %p287 = pneg %p108
      %p288 = pneg %p132
      %p289 = pneg %p129
      %p290 = pneg %p153
      %p291 = pneg %p150
      %p292 = pneg %p181
      %p293 = pneg %p178
      %p294 = scmp.lt.s32.totalorder %s20, 1
      %s295 = scalar_select %p294, %s20, 1
      %p296 = scmp.lt.s32.totalorder %s21, 7
      %s297 = scalar_select %p296, %s21, 7
      %s298 = smul.addr %s297, 10
      %s299 = smul.addr %s295, 80
      %s300 = sadd.s32 %s298, %s299
      %s301 = smul.addr %s300, 4
      %s302 = scalar_lea.vmem %s5, %s301
      %p303 = scmp.lt.s32.totalorder %s20, 1
      %s304 = scalar_select %p303, %s20, 1
      %p305 = scmp.lt.s32.totalorder %s21, 9
      %s306 = scalar_select %p305, %s21, 9
      %s307 = smul.addr %s306, 14
      %s308 = smul.addr %s304, 140
      %s309 = sadd.s32 %s307, %s308
      %s310 = smul.addr %s309, 4
      %s311 = scalar_lea.vmem %s0, %s310
      %s312 = sadd.s32 %s21, 1
      %p313 = scmp.lt.s32.totalorder %s20, 1
      %s314 = scalar_select %p313, %s20, 1
      %p315 = scmp.lt.s32.totalorder %s312, 9
      %s316 = scalar_select %p315, %s312, 9
      %s317 = smul.addr %s316, 14
      %s318 = smul.addr %s314, 140
      %s319 = sadd.s32 %s317, %s318
      %s320 = smul.addr %s319, 4
      %s321 = scalar_lea.vmem %s1, %s320
      %s322 = sadd.s32 %s21, 1
      %s323 = sadd.s32 %s21, 2
      %p324 = scmp.lt.s32.totalorder %s20, 1
      %s325 = scalar_select %p324, %s20, 1
      %p326 = scmp.lt.s32.totalorder %s323, 9
      %s327 = scalar_select %p326, %s323, 9
      %s328 = smul.addr %s327, 14
      %s329 = smul.addr %s325, 140
      %s330 = sadd.s32 %s328, %s329
      %s331 = smul.addr %s330, 4
      %s332 = scalar_lea.vmem %s2, %s331
      %s333 = sadd.s32 %s21, 2
      %p334 = scmp.lt.s32.totalorder %s20, 1
      %s335 = scalar_select %p334, %s20, 1
      %p336 = scmp.lt.s32.totalorder %s21, 7
      %s337 = scalar_select %p336, %s21, 7
      %s338 = smul.addr %s337, 10
      %s339 = smul.addr %s335, 80
      %s340 = sadd.s32 %s338, %s339
      %s341 = smul.addr %s340, 4
      %s342 = scalar_lea.vmem %s5, %s341
      %v344 = vld [vmem:[%s311] sm:$0xf]
      %v345 = vld [vmem:[%s311 + $0x4] sm:$0xf]
      %v346 = vld [vmem:[%s311 + $0x8] sm:$0xf]
      %v347 = vld [vmem:[%s311 + $0xc] sm:$0xf]
      %v348 = vld [vmem:[%s311 + $0x10] sm:$0xf]
      %v349 = vld [vmem:[%s311 + $0x14] sm:$0xf]
      %v350 = vld [vmem:[%s311 + $0x18] sm:$0xf]
      %v351 = vld [vmem:[%s311 + $0x1c] sm:$0xf]
      %v352 = vld [vmem:[%s311 + $0x20] sm:$0xf]
      %v353 = vld [vmem:[%s311 + $0x24] sm:$0xf]
      %v354 = vld [vmem:[%s311 + $0x28] sm:$0xf]
      %v355 = vld [vmem:[%s311 + $0x2c] sm:$0xf]
      %v356 = vld [vmem:[%s311 + $0x30] sm:$0xf]
      %v357 = vld [vmem:[%s3] sm:$0x3]
      %s358 = scalar_lea.vmem %s3, 2
      %v359 = vld [vmem:[%s358] sm:$0x3]
      %v371 = vunpack.c.l.b16 %v344
      %v372 = vunpack.c.l.b16 %v345
      %v373 = vunpack.c.l.b16 %v346
      %v374 = vunpack.c.l.b16 %v347
      %v375 = vunpack.c.l.b16 %v348
      %v376 = vunpack.c.l.b16 %v349
      %v377 = vunpack.c.l.b16 %v350
      %v378 = vunpack.c.l.b16 %v351
      %v379 = vunpack.c.l.b16 %v352
      %v380 = vunpack.c.l.b16 %v353
      %v381 = vunpack.c.l.b16 %v354
      %v382 = vpack.c.b16 %v372, %v371
      %v383 = vpack.c.b16 %v374, %v373
      %v384 = vpack.c.b16 %v376, %v375
      %v385 = vpack.c.b16 %v378, %v377
      %v386 = vpack.c.b16 %v380, %v379
      %v387 = vpack.c.b16 %v381, %v381
      %vm388 = vsmask.f32 7424
      %v390 = vshrl.u32 %v382, 16
      %v392 = vshll.u32 %v382, 16
      %v394 = vrot.slane %v392, 1
      %v395 = vor.u32 %v390, %v394
      %v397 = vshll.u32 %v383, 16
      %v399 = vrot.slane %v397, 1
      %v400 = vsel %vm388, %v395, %v399
      %v401 = vshrl.u32 %v383, 16
      %v403 = vor.u32 %v401, %v399
      %v405 = vshll.u32 %v384, 16
      %v407 = vrot.slane %v405, 1
      %v408 = vsel %vm388, %v403, %v407
      %v409 = vshrl.u32 %v384, 16
      %v411 = vor.u32 %v409, %v407
      %v413 = vshll.u32 %v385, 16
      %v415 = vrot.slane %v413, 1
      %v416 = vsel %vm388, %v411, %v415
      %v417 = vshrl.u32 %v385, 16
      %v419 = vor.u32 %v417, %v415
      %v421 = vshll.u32 %v386, 16
      %v423 = vrot.slane %v421, 1
      %v424 = vsel %vm388, %v419, %v423
      %v425 = vshrl.u32 %v386, 16
      %v427 = vor.u32 %v425, %v423
      %v429 = vshll.u32 %v387, 16
      %v431 = vrot.slane %v429, 1
      %v432 = vsel %vm388, %v427, %v431
      %vm433 = vcmask 31744
      %v435 = vsel %vm433, %v400, 0
      %v438 = vsel %vm433, %v408, 0
      %v441 = vsel %vm433, %v416, 0
      %v444 = vsel %vm433, %v424, 0
      %v447 = vsel %vm433, %v432, 0
      %vm449 = vcmask 1041408
      %v451 = vsel %vm449, %v359, 0
      %453 = vmatprep.subr.bf16.mxu0 0
      %454 = vmatpush1.bf16.msra.mxu0 0
      %455 = vmatprep.subr.bf16.mxu0 0
      %456 = vmatpush1.bf16.msra.mxu0 0
      %457 = vmatprep.subr.bf16.mxu0 0
      %458 = vmatpush1.bf16.msra.mxu0 0
      %459 = vmatprep.subr.bf16.mxu0 0
      %460 = vmatpush1.bf16.msra.mxu0 0
      %461 = vmatprep.subr.bf16.mxu0 0
      %462 = vmatpush1.bf16.msra.mxu0 0
      %463 = vmatprep.subr.bf16.mxu0 0
      %464 = vmatpush1.bf16.msra.mxu0 0
      %465 = vmatprep.subr.bf16.mxu0 0
      %466 = vmatpush1.bf16.msra.mxu0 0
      %467 = vmatprep.subr.bf16.mxu0 0
      %468 = vmatpush1.bf16.msra.mxu0 %v451
      %469 = vmatprep.subr.bf16.mxu0 0
      %470 = vmatpush2.bf16.msra.mxu0 0
      %471 = vmatprep.subr.bf16.mxu0 0
      %472 = vmatpush2.bf16.msra.mxu0 0
      %473 = vmatprep.subr.bf16.mxu0 0
      %474 = vmatpush2.bf16.msra.mxu0 0
      %475 = vmatprep.subr.bf16.mxu0 0
      %476 = vmatpush2.bf16.msra.mxu0 0
      %477 = vmatprep.subr.bf16.mxu0 0
      %478 = vmatpush2.bf16.msra.mxu0 0
      %479 = vmatprep.subr.bf16.mxu0 0
      %480 = vmatpush2.bf16.msra.mxu0 0
      %481 = vmatprep.subr.bf16.mxu0 0
      %482 = vmatpush2.bf16.msra.mxu0 0
      %483 = vmatprep.subr.bf16.mxu0 0
      %484 = vmatpush2.bf16.msra.mxu0 0
      %485 = vmatprep.mubr.bf16.mxu0 0
      %486 = vmatmul.mubr.bf16.gmra.mxu0 %v435
      %v487 = vpop.f32.mrf.mxu0
      %v488 = vadd.f32 0.0, %v487
      %v489 = vpop.f32.mrf.mxu0
      %v490 = vpop.f32.mrf.mxu0
      %v491 = vadd.f32 0.0, %v490
      %v492 = vpop.f32.mrf.mxu0
      %493 = vmatprep.mubr.bf16.mxu0 0
      %494 = vmatmul.mubr.bf16.gmra.mxu0 %v438
      %v495 = vpop.f32.mrf.mxu0
      %v496 = vadd.f32 0.0, %v495
      %v497 = vpop.f32.mrf.mxu0
      %v498 = vpop.f32.mrf.mxu0
      %v499 = vadd.f32 0.0, %v498
      %v500 = vpop.f32.mrf.mxu0
      %501 = vmatprep.mubr.bf16.mxu0 0
      %502 = vmatmul.mubr.bf16.gmra.mxu0 %v441
      %v503 = vpop.f32.mrf.mxu0
      %v504 = vadd.f32 0.0, %v503
      %v505 = vpop.f32.mrf.mxu0
      %v506 = vpop.f32.mrf.mxu0
      %v507 = vadd.f32 0.0, %v506
      %v508 = vpop.f32.mrf.mxu0
      %509 = vmatprep.mubr.bf16.mxu0 0
      %510 = vmatmul.mubr.bf16.gmra.mxu0 %v444
      %v511 = vpop.f32.mrf.mxu0
      %v512 = vadd.f32 0.0, %v511
      %v513 = vpop.f32.mrf.mxu0
      %v514 = vpop.f32.mrf.mxu0
      %v515 = vadd.f32 0.0, %v514
      %v516 = vpop.f32.mrf.mxu0
      %517 = vmatprep.mubr.bf16.mxu0 0
      %518 = vmatmul.mubr.bf16.gmra.mxu0 %v447
      %v519 = vpop.f32.mrf.mxu0
      %v520 = vadd.f32 0.0, %v519
      %v521 = vpop.f32.mrf.mxu0
      %v522 = vpop.f32.mrf.mxu0
      %v523 = vadd.f32 0.0, %v522
      %v524 = vpop.f32.mrf.mxu0
      %525 = vdwg.mxu0
      %v526 = vsel %vm433, %v382, 0
      %v528 = vsel %vm433, %v383, 0
      %v530 = vsel %vm433, %v384, 0
      %v532 = vsel %vm433, %v385, 0
      %v534 = vsel %vm433, %v386, 0
      %v537 = vsel %vm449, %v357, 0
      %539 = vmatprep.subr.bf16.mxu0 0
      %540 = vmatpush1.bf16.msra.mxu0 0
      %541 = vmatprep.subr.bf16.mxu0 0
      %542 = vmatpush1.bf16.msra.mxu0 0
      %543 = vmatprep.subr.bf16.mxu0 0
      %544 = vmatpush1.bf16.msra.mxu0 0
      %545 = vmatprep.subr.bf16.mxu0 0
      %546 = vmatpush1.bf16.msra.mxu0 0
      %547 = vmatprep.subr.bf16.mxu0 0
      %548 = vmatpush1.bf16.msra.mxu0 0
      %549 = vmatprep.subr.bf16.mxu0 0
      %550 = vmatpush1.bf16.msra.mxu0 0
      %551 = vmatprep.subr.bf16.mxu0 0
      %552 = vmatpush1.bf16.msra.mxu0 0
      %553 = vmatprep.subr.bf16.mxu0 0
      %554 = vmatpush1.bf16.msra.mxu0 %v537
      %555 = vmatprep.subr.bf16.mxu0 0
      %556 = vmatpush2.bf16.msra.mxu0 0
      %557 = vmatprep.subr.bf16.mxu0 0
      %558 = vmatpush2.bf16.msra.mxu0 0
      %559 = vmatprep.subr.bf16.mxu0 0
      %560 = vmatpush2.bf16.msra.mxu0 0
      %561 = vmatprep.subr.bf16.mxu0 0
      %562 = vmatpush2.bf16.msra.mxu0 0
      %563 = vmatprep.subr.bf16.mxu0 0
      %564 = vmatpush2.bf16.msra.mxu0 0
      %565 = vmatprep.subr.bf16.mxu0 0
      %566 = vmatpush2.bf16.msra.mxu0 0
      %567 = vmatprep.subr.bf16.mxu0 0
      %568 = vmatpush2.bf16.msra.mxu0 0
      %569 = vmatprep.subr.bf16.mxu0 0
      %570 = vmatpush2.bf16.msra.mxu0 0
      %571 = vmatprep.mubr.bf16.mxu0 0
      %572 = vmatmul.mubr.bf16.gmra.mxu0 %v526
      %v573 = vpop.f32.mrf.mxu0
      %v574 = vadd.f32 %v488, %v573
      %v575 = vpop.f32.mrf.mxu0
      %v576 = vpop.f32.mrf.mxu0
      %v577 = vadd.f32 %v491, %v576
      %v578 = vpop.f32.mrf.mxu0
      %579 = vmatprep.mubr.bf16.mxu0 0
      %580 = vmatmul.mubr.bf16.gmra.mxu0 %v528
      %v581 = vpop.f32.mrf.mxu0
      %v582 = vadd.f32 %v496, %v581
      %v583 = vpop.f32.mrf.mxu0
      %v584 = vpop.f32.mrf.mxu0
      %v585 = vadd.f32 %v499, %v584
      %v586 = vpop.f32.mrf.mxu0
      %587 = vmatprep.mubr.bf16.mxu0 0
      %588 = vmatmul.mubr.bf16.gmra.mxu0 %v530
      %v589 = vpop.f32.mrf.mxu0
      %v590 = vadd.f32 %v504, %v589
      %v591 = vpop.f32.mrf.mxu0
      %v592 = vpop.f32.mrf.mxu0
      %v593 = vadd.f32 %v507, %v592
      %v594 = vpop.f32.mrf.mxu0
      %595 = vmatprep.mubr.bf16.mxu0 0
      %596 = vmatmul.mubr.bf16.gmra.mxu0 %v532
      %v597 = vpop.f32.mrf.mxu0
      %v598 = vadd.f32 %v512, %v597
      %v599 = vpop.f32.mrf.mxu0
      %v600 = vpop.f32.mrf.mxu0
      %v601 = vadd.f32 %v515, %v600
      %v602 = vpop.f32.mrf.mxu0
      %603 = vmatprep.mubr.bf16.mxu0 0
      %604 = vmatmul.mubr.bf16.gmra.mxu0 %v534
      %v605 = vpop.f32.mrf.mxu0
      %v606 = vadd.f32 %v520, %v605
      %v607 = vpop.f32.mrf.mxu0
      %v608 = vpop.f32.mrf.mxu0
      %v609 = vadd.f32 %v523, %v608
      %v610 = vpop.f32.mrf.mxu0
      %611 = vdwg.mxu0
      %s612 = scalar_lea.vmem %s3, 4
      %v613 = vld [vmem:[%s612] sm:$0x3]
      %vm614 = vcmask 1046528
      %v615 = vrot.slane %v382, 1
      %v616 = vrot.slane %v383, 1
      %v617 = vsel %vm614, %v615, %v616
      %v618 = vrot.slane %v384, 1
      %v619 = vsel %vm614, %v616, %v618
      %v620 = vrot.slane %v385, 1
      %v621 = vsel %vm614, %v618, %v620
      %v622 = vrot.slane %v386, 1
      %v623 = vsel %vm614, %v620, %v622
      %v624 = vrot.slane %v387, 1
      %v625 = vsel %vm614, %v622, %v624
      %v627 = vsel %vm433, %v617, 0
      %v630 = vsel %vm433, %v619, 0
      %v633 = vsel %vm433, %v621, 0
      %v636 = vsel %vm433, %v623, 0
      %v639 = vsel %vm433, %v625, 0
      %v642 = vsel %vm449, %v613, 0
      %644 = vmatprep.subr.bf16.mxu0 0
      %645 = vmatpush1.bf16.msra.mxu0 0
      %646 = vmatprep.subr.bf16.mxu0 0
      %647 = vmatpush1.bf16.msra.mxu0 0
      %648 = vmatprep.subr.bf16.mxu0 0
      %649 = vmatpush1.bf16.msra.mxu0 0
      %650 = vmatprep.subr.bf16.mxu0 0
      %651 = vmatpush1.bf16.msra.mxu0 0
      %652 = vmatprep.subr.bf16.mxu0 0
      %653 = vmatpush1.bf16.msra.mxu0 0
      %654 = vmatprep.subr.bf16.mxu0 0
      %655 = vmatpush1.bf16.msra.mxu0 0
      %656 = vmatprep.subr.bf16.mxu0 0
      %657 = vmatpush1.bf16.msra.mxu0 0
      %658 = vmatprep.subr.bf16.mxu0 0
      %659 = vmatpush1.bf16.msra.mxu0 %v642
      %660 = vmatprep.subr.bf16.mxu0 0
      %661 = vmatpush2.bf16.msra.mxu0 0
      %662 = vmatprep.subr.bf16.mxu0 0
      %663 = vmatpush2.bf16.msra.mxu0 0
      %664 = vmatprep.subr.bf16.mxu0 0
      %665 = vmatpush2.bf16.msra.mxu0 0
      %666 = vmatprep.subr.bf16.mxu0 0
      %667 = vmatpush2.bf16.msra.mxu0 0
      %668 = vmatprep.subr.bf16.mxu0 0
      %669 = vmatpush2.bf16.msra.mxu0 0
      %670 = vmatprep.subr.bf16.mxu0 0
      %671 = vmatpush2.bf16.msra.mxu0 0
      %672 = vmatprep.subr.bf16.mxu0 0
      %673 = vmatpush2.bf16.msra.mxu0 0
      %674 = vmatprep.subr.bf16.mxu0 0
      %675 = vmatpush2.bf16.msra.mxu0 0
      %676 = vmatprep.mubr.bf16.mxu0 0
      %677 = vmatmul.mubr.bf16.gmra.mxu0 %v627
      %v678 = vpop.f32.mrf.mxu0
      %v679 = vadd.f32 0.0, %v678
      %v680 = vpop.f32.mrf.mxu0
      %v681 = vpop.f32.mrf.mxu0
      %v682 = vadd.f32 0.0, %v681
      %v683 = vpop.f32.mrf.mxu0
      %684 = vmatprep.mubr.bf16.mxu0 0
      %685 = vmatmul.mubr.bf16.gmra.mxu0 %v630
      %v686 = vpop.f32.mrf.mxu0
      %v687 = vadd.f32 0.0, %v686
      %v688 = vpop.f32.mrf.mxu0
      %v689 = vpop.f32.mrf.mxu0
      %v690 = vadd.f32 0.0, %v689
      %v691 = vpop.f32.mrf.mxu0
      %692 = vmatprep.mubr.bf16.mxu0 0
      %693 = vmatmul.mubr.bf16.gmra.mxu0 %v633
      %v694 = vpop.f32.mrf.mxu0
      %v695 = vadd.f32 0.0, %v694
      %v696 = vpop.f32.mrf.mxu0
      %v697 = vpop.f32.mrf.mxu0
      %v698 = vadd.f32 0.0, %v697
      %v699 = vpop.f32.mrf.mxu0
      %700 = vmatprep.mubr.bf16.mxu0 0
      %701 = vmatmul.mubr.bf16.gmra.mxu0 %v636
      %v702 = vpop.f32.mrf.mxu0
      %v703 = vadd.f32 0.0, %v702
      %v704 = vpop.f32.mrf.mxu0
      %v705 = vpop.f32.mrf.mxu0
      %v706 = vadd.f32 0.0, %v705
      %v707 = vpop.f32.mrf.mxu0
      %708 = vmatprep.mubr.bf16.mxu0 0
      %709 = vmatmul.mubr.bf16.gmra.mxu0 %v639
      %v710 = vpop.f32.mrf.mxu0
      %v711 = vadd.f32 0.0, %v710
      %v712 = vpop.f32.mrf.mxu0
      %v713 = vpop.f32.mrf.mxu0
      %v714 = vadd.f32 0.0, %v713
      %v715 = vpop.f32.mrf.mxu0
      %716 = vdwg.mxu0
      %v717 = vadd.f32 %v574, %v679
      %v718 = vadd.f32 %v577, %v682
      %v719 = vadd.f32 %v582, %v687
      %v720 = vadd.f32 %v585, %v690
      %v721 = vadd.f32 %v590, %v695
      %v722 = vadd.f32 %v593, %v698
      %v723 = vadd.f32 %v598, %v703
      %v724 = vadd.f32 %v601, %v706
      %v725 = vadd.f32 %v606, %v711
      %v726 = vadd.f32 %v609, %v714
      %s727 = scalar_lea.vmem %s3, 6
      %v728 = vld [vmem:[%s727] sm:$0x3]
      %v730 = vunpack.c.l.b16 %v355
      %v731 = vpack.c.b16 %v373, %v372
      %v732 = vpack.c.b16 %v375, %v374
      %v733 = vpack.c.b16 %v377, %v376
      %v734 = vpack.c.b16 %v379, %v378
      %v735 = vpack.c.b16 %v381, %v380
      %v736 = vpack.c.b16 %v730, %v730
      %v737 = vrot.slane %v731, 1
      %v738 = vrot.slane %v732, 1
      %v739 = vsel %vm614, %v737, %v738
      %v740 = vrot.slane %v733, 1
      %v741 = vsel %vm614, %v738, %v740
      %v742 = vrot.slane %v734, 1
      %v743 = vsel %vm614, %v740, %v742
      %v744 = vrot.slane %v735, 1
      %v745 = vsel %vm614, %v742, %v744
      %v746 = vrot.slane %v736, 1
      %v747 = vsel %vm614, %v744, %v746
      %v749 = vsel %vm433, %v739, 0
      %v752 = vsel %vm433, %v741, 0
      %v755 = vsel %vm433, %v743, 0
      %v758 = vsel %vm433, %v745, 0
      %v761 = vsel %vm433, %v747, 0
      %v764 = vsel %vm449, %v728, 0
      %766 = vmatprep.subr.bf16.mxu0 0
      %767 = vmatpush1.bf16.msra.mxu0 0
      %768 = vmatprep.subr.bf16.mxu0 0
      %769 = vmatpush1.bf16.msra.mxu0 0
      %770 = vmatprep.subr.bf16.mxu0 0
      %771 = vmatpush1.bf16.msra.mxu0 0
      %772 = vmatprep.subr.bf16.mxu0 0
      %773 = vmatpush1.bf16.msra.mxu0 0
      %774 = vmatprep.subr.bf16.mxu0 0
      %775 = vmatpush1.bf16.msra.mxu0 0
      %776 = vmatprep.subr.bf16.mxu0 0
      %777 = vmatpush1.bf16.msra.mxu0 0
      %778 = vmatprep.subr.bf16.mxu0 0
      %779 = vmatpush1.bf16.msra.mxu0 0
      %780 = vmatprep.subr.bf16.mxu0 0
      %781 = vmatpush1.bf16.msra.mxu0 %v764
      %782 = vmatprep.subr.bf16.mxu0 0
      %783 = vmatpush2.bf16.msra.mxu0 0
      %784 = vmatprep.subr.bf16.mxu0 0
      %785 = vmatpush2.bf16.msra.mxu0 0
      %786 = vmatprep.subr.bf16.mxu0 0
      %787 = vmatpush2.bf16.msra.mxu0 0
      %788 = vmatprep.subr.bf16.mxu0 0
      %789 = vmatpush2.bf16.msra.mxu0 0
      %790 = vmatprep.subr.bf16.mxu0 0
      %791 = vmatpush2.bf16.msra.mxu0 0
      %792 = vmatprep.subr.bf16.mxu0 0
      %793 = vmatpush2.bf16.msra.mxu0 0
      %794 = vmatprep.subr.bf16.mxu0 0
      %795 = vmatpush2.bf16.msra.mxu0 0
      %796 = vmatprep.subr.bf16.mxu0 0
      %797 = vmatpush2.bf16.msra.mxu0 0
      %798 = vmatprep.mubr.bf16.mxu0 0
      %799 = vmatmul.mubr.bf16.gmra.mxu0 %v749
      %v800 = vpop.f32.mrf.mxu0
      %v801 = vadd.f32 0.0, %v800
      %v802 = vpop.f32.mrf.mxu0
      %v803 = vpop.f32.mrf.mxu0
      %v804 = vadd.f32 0.0, %v803
      %v805 = vpop.f32.mrf.mxu0
      %806 = vmatprep.mubr.bf16.mxu0 0
      %807 = vmatmul.mubr.bf16.gmra.mxu0 %v752
      %v808 = vpop.f32.mrf.mxu0
      %v809 = vadd.f32 0.0, %v808
      %v810 = vpop.f32.mrf.mxu0
      %v811 = vpop.f32.mrf.mxu0
      %v812 = vadd.f32 0.0, %v811
      %v813 = vpop.f32.mrf.mxu0
      %814 = vmatprep.mubr.bf16.mxu0 0
      %815 = vmatmul.mubr.bf16.gmra.mxu0 %v755
      %v816 = vpop.f32.mrf.mxu0
      %v817 = vadd.f32 0.0, %v816
      %v818 = vpop.f32.mrf.mxu0
      %v819 = vpop.f32.mrf.mxu0
      %v820 = vadd.f32 0.0, %v819
      %v821 = vpop.f32.mrf.mxu0
      %822 = vmatprep.mubr.bf16.mxu0 0
      %823 = vmatmul.mubr.bf16.gmra.mxu0 %v758
      %v824 = vpop.f32.mrf.mxu0
      %v825 = vadd.f32 0.0, %v824
      %v826 = vpop.f32.mrf.mxu0
      %v827 = vpop.f32.mrf.mxu0
      %v828 = vadd.f32 0.0, %v827
      %v829 = vpop.f32.mrf.mxu0
      %830 = vmatprep.mubr.bf16.mxu0 0
      %831 = vmatmul.mubr.bf16.gmra.mxu0 %v761
      %v832 = vpop.f32.mrf.mxu0
      %v833 = vadd.f32 0.0, %v832
      %v834 = vpop.f32.mrf.mxu0
      %v835 = vpop.f32.mrf.mxu0
      %v836 = vadd.f32 0.0, %v835
      %v837 = vpop.f32.mrf.mxu0
      %838 = vdwg.mxu0
      %v839 = vadd.f32 %v717, %v801
      %v840 = vadd.f32 %v718, %v804
      %v841 = vadd.f32 %v719, %v809
      %v842 = vadd.f32 %v720, %v812
      %v843 = vadd.f32 %v721, %v817
      %v844 = vadd.f32 %v722, %v820
      %v845 = vadd.f32 %v723, %v825
      %v846 = vadd.f32 %v724, %v828
      %v847 = vadd.f32 %v725, %v833
      %v848 = vadd.f32 %v726, %v836
      %s849 = scalar_lea.vmem %s3, 8
      %v850 = vld [vmem:[%s849] sm:$0x3]
      %vm851 = vsmask.f32 6400
      %v853 = vshrl.u32 %v731, 16
      %v855 = vrot.slane %v853, 1
      %v856 = vshll.u32 %v731, 16
      %v858 = vrot.slane %v856, 2
      %v859 = vor.u32 %v855, %v858
      %v861 = vshrl.u32 %v732, 16
      %v863 = vrot.slane %v861, 1
      %v864 = vshll.u32 %v732, 16
      %v866 = vrot.slane %v864, 2
      %v867 = vor.u32 %v863, %v866
      %v868 = vsel %vm851, %v859, %v867
      %v870 = vshrl.u32 %v733, 16
      %v872 = vrot.slane %v870, 1
      %v873 = vshll.u32 %v733, 16
      %v875 = vrot.slane %v873, 2
      %v876 = vor.u32 %v872, %v875
      %v877 = vsel %vm851, %v867, %v876
      %v879 = vshrl.u32 %v734, 16
      %v881 = vrot.slane %v879, 1
      %v882 = vshll.u32 %v734, 16
      %v884 = vrot.slane %v882, 2
      %v885 = vor.u32 %v881, %v884
      %v886 = vsel %vm851, %v876, %v885
      %v888 = vshrl.u32 %v735, 16
      %v890 = vrot.slane %v888, 1
      %v891 = vshll.u32 %v735, 16
      %v893 = vrot.slane %v891, 2
      %v894 = vor.u32 %v890, %v893
      %v895 = vsel %vm851, %v885, %v894
      %v897 = vshrl.u32 %v736, 16
      %v899 = vrot.slane %v897, 1
      %v900 = vshll.u32 %v736, 16
      %v902 = vrot.slane %v900, 2
      %v903 = vor.u32 %v899, %v902
      %v904 = vsel %vm851, %v894, %v903
      %v906 = vsel %vm433, %v868, 0
      %v909 = vsel %vm433, %v877, 0
      %v912 = vsel %vm433, %v886, 0
      %v915 = vsel %vm433, %v895, 0
      %v918 = vsel %vm433, %v904, 0
      %v921 = vsel %vm449, %v850, 0
      %923 = vmatprep.subr.bf16.mxu0 0
      %924 = vmatpush1.bf16.msra.mxu0 0
      %925 = vmatprep.subr.bf16.mxu0 0
      %926 = vmatpush1.bf16.msra.mxu0 0
      %927 = vmatprep.subr.bf16.mxu0 0
      %928 = vmatpush1.bf16.msra.mxu0 0
      %929 = vmatprep.subr.bf16.mxu0 0
      %930 = vmatpush1.bf16.msra.mxu0 0
      %931 = vmatprep.subr.bf16.mxu0 0
      %932 = vmatpush1.bf16.msra.mxu0 0
      %933 = vmatprep.subr.bf16.mxu0 0
      %934 = vmatpush1.bf16.msra.mxu0 0
      %935 = vmatprep.subr.bf16.mxu0 0
      %936 = vmatpush1.bf16.msra.mxu0 0
      %937 = vmatprep.subr.bf16.mxu0 0
      %938 = vmatpush1.bf16.msra.mxu0 %v921
      %939 = vmatprep.subr.bf16.mxu0 0
      %940 = vmatpush2.bf16.msra.mxu0 0
      %941 = vmatprep.subr.bf16.mxu0 0
      %942 = vmatpush2.bf16.msra.mxu0 0
      %943 = vmatprep.subr.bf16.mxu0 0
      %944 = vmatpush2.bf16.msra.mxu0 0
      %945 = vmatprep.subr.bf16.mxu0 0
      %946 = vmatpush2.bf16.msra.mxu0 0
      %947 = vmatprep.subr.bf16.mxu0 0
      %948 = vmatpush2.bf16.msra.mxu0 0
      %949 = vmatprep.subr.bf16.mxu0 0
      %950 = vmatpush2.bf16.msra.mxu0 0
      %951 = vmatprep.subr.bf16.mxu0 0
      %952 = vmatpush2.bf16.msra.mxu0 0
      %953 = vmatprep.subr.bf16.mxu0 0
      %954 = vmatpush2.bf16.msra.mxu0 0
      %955 = vmatprep.mubr.bf16.mxu0 0
      %956 = vmatmul.mubr.bf16.gmra.mxu0 %v906
      %v957 = vpop.f32.mrf.mxu0
      %v958 = vadd.f32 0.0, %v957
      %v959 = vpop.f32.mrf.mxu0
      %v960 = vpop.f32.mrf.mxu0
      %v961 = vadd.f32 0.0, %v960
      %v962 = vpop.f32.mrf.mxu0
      %963 = vmatprep.mubr.bf16.mxu0 0
      %964 = vmatmul.mubr.bf16.gmra.mxu0 %v909
      %v965 = vpop.f32.mrf.mxu0
      %v966 = vadd.f32 0.0, %v965
      %v967 = vpop.f32.mrf.mxu0
      %v968 = vpop.f32.mrf.mxu0
      %v969 = vadd.f32 0.0, %v968
      %v970 = vpop.f32.mrf.mxu0
      %971 = vmatprep.mubr.bf16.mxu0 0
      %972 = vmatmul.mubr.bf16.gmra.mxu0 %v912
      %v973 = vpop.f32.mrf.mxu0
      %v974 = vadd.f32 0.0, %v973
      %v975 = vpop.f32.mrf.mxu0
      %v976 = vpop.f32.mrf.mxu0
      %v977 = vadd.f32 0.0, %v976
      %v978 = vpop.f32.mrf.mxu0
      %979 = vmatprep.mubr.bf16.mxu0 0
      %980 = vmatmul.mubr.bf16.gmra.mxu0 %v915
      %v981 = vpop.f32.mrf.mxu0
      %v982 = vadd.f32 0.0, %v981
      %v983 = vpop.f32.mrf.mxu0
      %v984 = vpop.f32.mrf.mxu0
      %v985 = vadd.f32 0.0, %v984
      %v986 = vpop.f32.mrf.mxu0
      %987 = vmatprep.mubr.bf16.mxu0 0
      %988 = vmatmul.mubr.bf16.gmra.mxu0 %v918
      %v989 = vpop.f32.mrf.mxu0
      %v990 = vadd.f32 0.0, %v989
      %v991 = vpop.f32.mrf.mxu0
      %v992 = vpop.f32.mrf.mxu0
      %v993 = vadd.f32 0.0, %v992
      %v994 = vpop.f32.mrf.mxu0
      %995 = vdwg.mxu0
      %v996 = vadd.f32 %v839, %v958
      %v997 = vadd.f32 %v840, %v961
      %v998 = vadd.f32 %v841, %v966
      %v999 = vadd.f32 %v842, %v969
      %v1000 = vadd.f32 %v843, %v974
      %v1001 = vadd.f32 %v844, %v977
      %v1002 = vadd.f32 %v845, %v982
      %v1003 = vadd.f32 %v846, %v985
      %v1004 = vadd.f32 %v847, %v990
      %v1005 = vadd.f32 %v848, %v993
      %s1006 = scalar_lea.vmem %s3, 10
      %v1007 = vld [vmem:[%s1006] sm:$0x3]
      %vm1008 = vcmask 1045504
      %v1009 = vrot.slane %v731, 2
      %v1010 = vrot.slane %v732, 2
      %v1011 = vsel %vm1008, %v1009, %v1010
      %v1012 = vrot.slane %v733, 2
      %v1013 = vsel %vm1008, %v1010, %v1012
      %v1014 = vrot.slane %v734, 2
      %v1015 = vsel %vm1008, %v1012, %v1014
      %v1016 = vrot.slane %v735, 2
      %v1017 = vsel %vm1008, %v1014, %v1016
      %v1018 = vrot.slane %v736, 2
      %v1019 = vsel %vm1008, %v1016, %v1018
      %v1021 = vsel %vm433, %v1011, 0
      %v1024 = vsel %vm433, %v1013, 0
      %v1027 = vsel %vm433, %v1015, 0
      %v1030 = vsel %vm433, %v1017, 0
      %v1033 = vsel %vm433, %v1019, 0
      %v1036 = vsel %vm449, %v1007, 0
      %1038 = vmatprep.subr.bf16.mxu0 0
      %1039 = vmatpush1.bf16.msra.mxu0 0
      %1040 = vmatprep.subr.bf16.mxu0 0
      %1041 = vmatpush1.bf16.msra.mxu0 0
      %1042 = vmatprep.subr.bf16.mxu0 0
      %1043 = vmatpush1.bf16.msra.mxu0 0
      %1044 = vmatprep.subr.bf16.mxu0 0
      %1045 = vmatpush1.bf16.msra.mxu0 0
      %1046 = vmatprep.subr.bf16.mxu0 0
      %1047 = vmatpush1.bf16.msra.mxu0 0
      %1048 = vmatprep.subr.bf16.mxu0 0
      %1049 = vmatpush1.bf16.msra.mxu0 0
      %1050 = vmatprep.subr.bf16.mxu0 0
      %1051 = vmatpush1.bf16.msra.mxu0 0
      %1052 = vmatprep.subr.bf16.mxu0 0
      %1053 = vmatpush1.bf16.msra.mxu0 %v1036
      %1054 = vmatprep.subr.bf16.mxu0 0
      %1055 = vmatpush2.bf16.msra.mxu0 0
      %1056 = vmatprep.subr.bf16.mxu0 0
      %1057 = vmatpush2.bf16.msra.mxu0 0
      %1058 = vmatprep.subr.bf16.mxu0 0
      %1059 = vmatpush2.bf16.msra.mxu0 0
      %1060 = vmatprep.subr.bf16.mxu0 0
      %1061 = vmatpush2.bf16.msra.mxu0 0
      %1062 = vmatprep.subr.bf16.mxu0 0
      %1063 = vmatpush2.bf16.msra.mxu0 0
      %1064 = vmatprep.subr.bf16.mxu0 0
      %1065 = vmatpush2.bf16.msra.mxu0 0
      %1066 = vmatprep.subr.bf16.mxu0 0
      %1067 = vmatpush2.bf16.msra.mxu0 0
      %1068 = vmatprep.subr.bf16.mxu0 0
      %1069 = vmatpush2.bf16.msra.mxu0 0
      %1070 = vmatprep.mubr.bf16.mxu0 0
      %1071 = vmatmul.mubr.bf16.gmra.mxu0 %v1021
      %v1072 = vpop.f32.mrf.mxu0
      %v1073 = vadd.f32 0.0, %v1072
      %v1074 = vpop.f32.mrf.mxu0
      %v1075 = vpop.f32.mrf.mxu0
      %v1076 = vadd.f32 0.0, %v1075
      %v1077 = vpop.f32.mrf.mxu0
      %1078 = vmatprep.mubr.bf16.mxu0 0
      %1079 = vmatmul.mubr.bf16.gmra.mxu0 %v1024
      %v1080 = vpop.f32.mrf.mxu0
      %v1081 = vadd.f32 0.0, %v1080
      %v1082 = vpop.f32.mrf.mxu0
      %v1083 = vpop.f32.mrf.mxu0
      %v1084 = vadd.f32 0.0, %v1083
      %v1085 = vpop.f32.mrf.mxu0
      %1086 = vmatprep.mubr.bf16.mxu0 0
      %1087 = vmatmul.mubr.bf16.gmra.mxu0 %v1027
      %v1088 = vpop.f32.mrf.mxu0
      %v1089 = vadd.f32 0.0, %v1088
      %v1090 = vpop.f32.mrf.mxu0
      %v1091 = vpop.f32.mrf.mxu0
      %v1092 = vadd.f32 0.0, %v1091
      %v1093 = vpop.f32.mrf.mxu0
      %1094 = vmatprep.mubr.bf16.mxu0 0
      %1095 = vmatmul.mubr.bf16.gmra.mxu0 %v1030
      %v1096 = vpop.f32.mrf.mxu0
      %v1097 = vadd.f32 0.0, %v1096
      %v1098 = vpop.f32.mrf.mxu0
      %v1099 = vpop.f32.mrf.mxu0
      %v1100 = vadd.f32 0.0, %v1099
      %v1101 = vpop.f32.mrf.mxu0
      %1102 = vmatprep.mubr.bf16.mxu0 0
      %1103 = vmatmul.mubr.bf16.gmra.mxu0 %v1033
      %v1104 = vpop.f32.mrf.mxu0
      %v1105 = vadd.f32 0.0, %v1104
      %v1106 = vpop.f32.mrf.mxu0
      %v1107 = vpop.f32.mrf.mxu0
      %v1108 = vadd.f32 0.0, %v1107
      %v1109 = vpop.f32.mrf.mxu0
      %1110 = vdwg.mxu0
      %v1111 = vadd.f32 %v996, %v1073
      %v1112 = vadd.f32 %v997, %v1076
      %v1113 = vadd.f32 %v998, %v1081
      %v1114 = vadd.f32 %v999, %v1084
      %v1115 = vadd.f32 %v1000, %v1089
      %v1116 = vadd.f32 %v1001, %v1092
      %v1117 = vadd.f32 %v1002, %v1097
      %v1118 = vadd.f32 %v1003, %v1100
      %v1119 = vadd.f32 %v1004, %v1105
      %v1120 = vadd.f32 %v1005, %v1108
      %s1121 = scalar_lea.vmem %s3, 12
      %v1122 = vld [vmem:[%s1121] sm:$0x3]
      %v1124 = vunpack.c.l.b16 %v356
      %v1125 = vpack.c.b16 %v730, %v381
      %v1126 = vpack.c.b16 %v1124, %v1124
      %v1127 = vrot.slane %v383, 2
      %v1128 = vrot.slane %v384, 2
      %v1129 = vsel %vm1008, %v1127, %v1128
      %v1130 = vrot.slane %v385, 2
      %v1131 = vsel %vm1008, %v1128, %v1130
      %v1132 = vrot.slane %v386, 2
      %v1133 = vsel %vm1008, %v1130, %v1132
      %v1134 = vrot.slane %v1125, 2
      %v1135 = vsel %vm1008, %v1132, %v1134
      %v1136 = vrot.slane %v1126, 2
      %v1137 = vsel %vm1008, %v1134, %v1136
      %v1139 = vsel %vm433, %v1129, 0
      %v1142 = vsel %vm433, %v1131, 0
      %v1145 = vsel %vm433, %v1133, 0
      %v1148 = vsel %vm433, %v1135, 0
      %v1151 = vsel %vm433, %v1137, 0
      %v1154 = vsel %vm449, %v1122, 0
      %1156 = vmatprep.subr.bf16.mxu0 0
      %1157 = vmatpush1.bf16.msra.mxu0 0
      %1158 = vmatprep.subr.bf16.mxu0 0
      %1159 = vmatpush1.bf16.msra.mxu0 0
      %1160 = vmatprep.subr.bf16.mxu0 0
      %1161 = vmatpush1.bf16.msra.mxu0 0
      %1162 = vmatprep.subr.bf16.mxu0 0
      %1163 = vmatpush1.bf16.msra.mxu0 0
      %1164 = vmatprep.subr.bf16.mxu0 0
      %1165 = vmatpush1.bf16.msra.mxu0 0
      %1166 = vmatprep.subr.bf16.mxu0 0
      %1167 = vmatpush1.bf16.msra.mxu0 0
      %1168 = vmatprep.subr.bf16.mxu0 0
      %1169 = vmatpush1.bf16.msra.mxu0 0
      %1170 = vmatprep.subr.bf16.mxu0 0
      %1171 = vmatpush1.bf16.msra.mxu0 %v1154
      %1172 = vmatprep.subr.bf16.mxu0 0
      %1173 = vmatpush2.bf16.msra.mxu0 0
      %1174 = vmatprep.subr.bf16.mxu0 0
      %1175 = vmatpush2.bf16.msra.mxu0 0
      %1176 = vmatprep.subr.bf16.mxu0 0
      %1177 = vmatpush2.bf16.msra.mxu0 0
      %1178 = vmatprep.subr.bf16.mxu0 0
      %1179 = vmatpush2.bf16.msra.mxu0 0
      %1180 = vmatprep.subr.bf16.mxu0 0
      %1181 = vmatpush2.bf16.msra.mxu0 0
      %1182 = vmatprep.subr.bf16.mxu0 0
      %1183 = vmatpush2.bf16.msra.mxu0 0
      %1184 = vmatprep.subr.bf16.mxu0 0
      %1185 = vmatpush2.bf16.msra.mxu0 0
      %1186 = vmatprep.subr.bf16.mxu0 0
      %1187 = vmatpush2.bf16.msra.mxu0 0
      %1188 = vmatprep.mubr.bf16.mxu0 0
      %1189 = vmatmul.mubr.bf16.gmra.mxu0 %v1139
      %v1190 = vpop.f32.mrf.mxu0
      %v1191 = vadd.f32 0.0, %v1190
      %v1192 = vpop.f32.mrf.mxu0
      %v1193 = vpop.f32.mrf.mxu0
      %v1194 = vadd.f32 0.0, %v1193
      %v1195 = vpop.f32.mrf.mxu0
      %1196 = vmatprep.mubr.bf16.mxu0 0
      %1197 = vmatmul.mubr.bf16.gmra.mxu0 %v1142
      %v1198 = vpop.f32.mrf.mxu0
      %v1199 = vadd.f32 0.0, %v1198
      %v1200 = vpop.f32.mrf.mxu0
      %v1201 = vpop.f32.mrf.mxu0
      %v1202 = vadd.f32 0.0, %v1201
      %v1203 = vpop.f32.mrf.mxu0
      %1204 = vmatprep.mubr.bf16.mxu0 0
      %1205 = vmatmul.mubr.bf16.gmra.mxu0 %v1145
      %v1206 = vpop.f32.mrf.mxu0
      %v1207 = vadd.f32 0.0, %v1206
      %v1208 = vpop.f32.mrf.mxu0
      %v1209 = vpop.f32.mrf.mxu0
      %v1210 = vadd.f32 0.0, %v1209
      %v1211 = vpop.f32.mrf.mxu0
      %1212 = vmatprep.mubr.bf16.mxu0 0
      %1213 = vmatmul.mubr.bf16.gmra.mxu0 %v1148
      %v1214 = vpop.f32.mrf.mxu0
      %v1215 = vadd.f32 0.0, %v1214
      %v1216 = vpop.f32.mrf.mxu0
      %v1217 = vpop.f32.mrf.mxu0
      %v1218 = vadd.f32 0.0, %v1217
      %v1219 = vpop.f32.mrf.mxu0
      %1220 = vmatprep.mubr.bf16.mxu0 0
      %1221 = vmatmul.mubr.bf16.gmra.mxu0 %v1151
      %v1222 = vpop.f32.mrf.mxu0
      %v1223 = vadd.f32 0.0, %v1222
      %v1224 = vpop.f32.mrf.mxu0
      %v1225 = vpop.f32.mrf.mxu0
      %v1226 = vadd.f32 0.0, %v1225
      %v1227 = vpop.f32.mrf.mxu0
      %1228 = vdwg.mxu0
      %v1229 = vadd.f32 %v1111, %v1191
      %v1230 = vadd.f32 %v1112, %v1194
      %v1231 = vadd.f32 %v1113, %v1199
      %v1232 = vadd.f32 %v1114, %v1202
      %v1233 = vadd.f32 %v1115, %v1207
      %v1234 = vadd.f32 %v1116, %v1210
      %v1235 = vadd.f32 %v1117, %v1215
      %v1236 = vadd.f32 %v1118, %v1218
      %v1237 = vadd.f32 %v1119, %v1223
      %v1238 = vadd.f32 %v1120, %v1226
      %s1239 = scalar_lea.vmem %s3, 14
      %v1240 = vld [vmem:[%s1239] sm:$0x3]
      %vm1241 = vsmask.f32 5376
      %v1242 = vrot.slane %v401, 2
      %v1243 = vrot.slane %v397, 3
      %v1244 = vor.u32 %v1242, %v1243
      %v1245 = vrot.slane %v409, 2
      %v1246 = vrot.slane %v405, 3
      %v1247 = vor.u32 %v1245, %v1246
      %v1248 = vsel %vm1241, %v1244, %v1247
      %v1249 = vrot.slane %v417, 2
      %v1250 = vrot.slane %v413, 3
      %v1251 = vor.u32 %v1249, %v1250
      %v1252 = vsel %vm1241, %v1247, %v1251
      %v1253 = vrot.slane %v425, 2
      %v1254 = vrot.slane %v421, 3
      %v1255 = vor.u32 %v1253, %v1254
      %v1256 = vsel %vm1241, %v1251, %v1255
      %v1258 = vshrl.u32 %v1125, 16
      %v1260 = vrot.slane %v1258, 2
      %v1261 = vshll.u32 %v1125, 16
      %v1263 = vrot.slane %v1261, 3
      %v1264 = vor.u32 %v1260, %v1263
      %v1265 = vsel %vm1241, %v1255, %v1264
      %v1267 = vshrl.u32 %v1126, 16
      %v1269 = vrot.slane %v1267, 2
      %v1270 = vshll.u32 %v1126, 16
      %v1272 = vrot.slane %v1270, 3
      %v1273 = vor.u32 %v1269, %v1272
      %v1274 = vsel %vm1241, %v1264, %v1273
      %v1276 = vsel %vm433, %v1248, 0
      %v1279 = vsel %vm433, %v1252, 0
      %v1282 = vsel %vm433, %v1256, 0
      %v1285 = vsel %vm433, %v1265, 0
      %v1288 = vsel %vm433, %v1274, 0
      %v1291 = vsel %vm449, %v1240, 0
      %1293 = vmatprep.subr.bf16.mxu0 0
      %1294 = vmatpush1.bf16.msra.mxu0 0
      %1295 = vmatprep.subr.bf16.mxu0 0
      %1296 = vmatpush1.bf16.msra.mxu0 0
      %1297 = vmatprep.subr.bf16.mxu0 0
      %1298 = vmatpush1.bf16.msra.mxu0 0
      %1299 = vmatprep.subr.bf16.mxu0 0
      %1300 = vmatpush1.bf16.msra.mxu0 0
      %1301 = vmatprep.subr.bf16.mxu0 0
      %1302 = vmatpush1.bf16.msra.mxu0 0
      %1303 = vmatprep.subr.bf16.mxu0 0
      %1304 = vmatpush1.bf16.msra.mxu0 0
      %1305 = vmatprep.subr.bf16.mxu0 0
      %1306 = vmatpush1.bf16.msra.mxu0 0
      %1307 = vmatprep.subr.bf16.mxu0 0
      %1308 = vmatpush1.bf16.msra.mxu0 %v1291
      %1309 = vmatprep.subr.bf16.mxu0 0
      %1310 = vmatpush2.bf16.msra.mxu0 0
      %1311 = vmatprep.subr.bf16.mxu0 0
      %1312 = vmatpush2.bf16.msra.mxu0 0
      %1313 = vmatprep.subr.bf16.mxu0 0
      %1314 = vmatpush2.bf16.msra.mxu0 0
      %1315 = vmatprep.subr.bf16.mxu0 0
      %1316 = vmatpush2.bf16.msra.mxu0 0
      %1317 = vmatprep.subr.bf16.mxu0 0
      %1318 = vmatpush2.bf16.msra.mxu0 0
      %1319 = vmatprep.subr.bf16.mxu0 0
      %1320 = vmatpush2.bf16.msra.mxu0 0
      %1321 = vmatprep.subr.bf16.mxu0 0
      %1322 = vmatpush2.bf16.msra.mxu0 0
      %1323 = vmatprep.subr.bf16.mxu0 0
      %1324 = vmatpush2.bf16.msra.mxu0 0
      %1325 = vmatprep.mubr.bf16.mxu0 0
      %1326 = vmatmul.mubr.bf16.gmra.mxu0 %v1276
      %v1327 = vpop.f32.mrf.mxu0
      %v1328 = vadd.f32 0.0, %v1327
      %v1329 = vpop.f32.mrf.mxu0
      %v1330 = vpop.f32.mrf.mxu0
      %v1331 = vadd.f32 0.0, %v1330
      %v1332 = vpop.f32.mrf.mxu0
      %1333 = vmatprep.mubr.bf16.mxu0 0
      %1334 = vmatmul.mubr.bf16.gmra.mxu0 %v1279
      %v1335 = vpop.f32.mrf.mxu0
      %v1336 = vadd.f32 0.0, %v1335
      %v1337 = vpop.f32.mrf.mxu0
      %v1338 = vpop.f32.mrf.mxu0
      %v1339 = vadd.f32 0.0, %v1338
      %v1340 = vpop.f32.mrf.mxu0
      %1341 = vmatprep.mubr.bf16.mxu0 0
      %1342 = vmatmul.mubr.bf16.gmra.mxu0 %v1282
      %v1343 = vpop.f32.mrf.mxu0
      %v1344 = vadd.f32 0.0, %v1343
      %v1345 = vpop.f32.mrf.mxu0
      %v1346 = vpop.f32.mrf.mxu0
      %v1347 = vadd.f32 0.0, %v1346
      %v1348 = vpop.f32.mrf.mxu0
      %1349 = vmatprep.mubr.bf16.mxu0 0
      %1350 = vmatmul.mubr.bf16.gmra.mxu0 %v1285
      %v1351 = vpop.f32.mrf.mxu0
      %v1352 = vadd.f32 0.0, %v1351
      %v1353 = vpop.f32.mrf.mxu0
      %v1354 = vpop.f32.mrf.mxu0
      %v1355 = vadd.f32 0.0, %v1354
      %v1356 = vpop.f32.mrf.mxu0
      %1357 = vmatprep.mubr.bf16.mxu0 0
      %1358 = vmatmul.mubr.bf16.gmra.mxu0 %v1288
      %v1359 = vpop.f32.mrf.mxu0
      %v1360 = vadd.f32 0.0, %v1359
      %v1361 = vpop.f32.mrf.mxu0
      %v1362 = vpop.f32.mrf.mxu0
      %v1363 = vadd.f32 0.0, %v1362
      %v1364 = vpop.f32.mrf.mxu0
      %1365 = vdwg.mxu0
      %v1366 = vadd.f32 %v1229, %v1328
      %v1367 = vadd.f32 %v1230, %v1331
      %v1368 = vadd.f32 %v1231, %v1336
      %v1369 = vadd.f32 %v1232, %v1339
      %v1370 = vadd.f32 %v1233, %v1344
      %v1371 = vadd.f32 %v1234, %v1347
      %v1372 = vadd.f32 %v1235, %v1352
      %v1373 = vadd.f32 %v1236, %v1355
      %v1374 = vadd.f32 %v1237, %v1360
      %v1375 = vadd.f32 %v1238, %v1363
      %s1376 = scalar_lea.vmem %s3, 16
      %v1377 = vld [vmem:[%s1376] sm:$0x3]
      %vm1378 = vcmask 1044480
      %v1379 = vrot.slane %v383, 3
      %v1380 = vrot.slane %v384, 3
      %v1381 = vsel %vm1378, %v1379, %v1380
      %v1382 = vrot.slane %v385, 3
      %v1383 = vsel %vm1378, %v1380, %v1382
      %v1384 = vrot.slane %v386, 3
      %v1385 = vsel %vm1378, %v1382, %v1384
      %v1386 = vrot.slane %v1125, 3
      %v1387 = vsel %vm1378, %v1384, %v1386
      %v1388 = vrot.slane %v1126, 3
      %v1389 = vsel %vm1378, %v1386, %v1388
      %v1391 = vsel %vm433, %v1381, 0
      %v1394 = vsel %vm433, %v1383, 0
      %v1397 = vsel %vm433, %v1385, 0
      %v1400 = vsel %vm433, %v1387, 0
      %v1403 = vsel %vm433, %v1389, 0
      %v1406 = vsel %vm449, %v1377, 0
      %1408 = vmatprep.subr.bf16.mxu0 0
      %1409 = vmatpush1.bf16.msra.mxu0 0
      %1410 = vmatprep.subr.bf16.mxu0 0
      %1411 = vmatpush1.bf16.msra.mxu0 0
      %1412 = vmatprep.subr.bf16.mxu0 0
      %1413 = vmatpush1.bf16.msra.mxu0 0
      %1414 = vmatprep.subr.bf16.mxu0 0
      %1415 = vmatpush1.bf16.msra.mxu0 0
      %1416 = vmatprep.subr.bf16.mxu0 0
      %1417 = vmatpush1.bf16.msra.mxu0 0
      %1418 = vmatprep.subr.bf16.mxu0 0
      %1419 = vmatpush1.bf16.msra.mxu0 0
      %1420 = vmatprep.subr.bf16.mxu0 0
      %1421 = vmatpush1.bf16.msra.mxu0 0
      %1422 = vmatprep.subr.bf16.mxu0 0
      %1423 = vmatpush1.bf16.msra.mxu0 %v1406
      %1424 = vmatprep.subr.bf16.mxu0 0
      %1425 = vmatpush2.bf16.msra.mxu0 0
      %1426 = vmatprep.subr.bf16.mxu0 0
      %1427 = vmatpush2.bf16.msra.mxu0 0
      %1428 = vmatprep.subr.bf16.mxu0 0
      %1429 = vmatpush2.bf16.msra.mxu0 0
      %1430 = vmatprep.subr.bf16.mxu0 0
      %1431 = vmatpush2.bf16.msra.mxu0 0
      %1432 = vmatprep.subr.bf16.mxu0 0
      %1433 = vmatpush2.bf16.msra.mxu0 0
      %1434 = vmatprep.subr.bf16.mxu0 0
      %1435 = vmatpush2.bf16.msra.mxu0 0
      %1436 = vmatprep.subr.bf16.mxu0 0
      %1437 = vmatpush2.bf16.msra.mxu0 0
      %1438 = vmatprep.subr.bf16.mxu0 0
      %1439 = vmatpush2.bf16.msra.mxu0 0
      %1440 = vmatprep.mubr.bf16.mxu0 0
      %1441 = vmatmul.mubr.bf16.gmra.mxu0 %v1391
      %v1442 = vpop.f32.mrf.mxu0
      %v1443 = vadd.f32 0.0, %v1442
      %v1444 = vpop.f32.mrf.mxu0
      %v1445 = vpop.f32.mrf.mxu0
      %v1446 = vadd.f32 0.0, %v1445
      %v1447 = vpop.f32.mrf.mxu0
      %1448 = vmatprep.mubr.bf16.mxu0 0
      %1449 = vmatmul.mubr.bf16.gmra.mxu0 %v1394
      %v1450 = vpop.f32.mrf.mxu0
      %v1451 = vadd.f32 0.0, %v1450
      %v1452 = vpop.f32.mrf.mxu0
      %v1453 = vpop.f32.mrf.mxu0
      %v1454 = vadd.f32 0.0, %v1453
      %v1455 = vpop.f32.mrf.mxu0
      %1456 = vmatprep.mubr.bf16.mxu0 0
      %1457 = vmatmul.mubr.bf16.gmra.mxu0 %v1397
      %v1458 = vpop.f32.mrf.mxu0
      %v1459 = vadd.f32 0.0, %v1458
      %v1460 = vpop.f32.mrf.mxu0
      %v1461 = vpop.f32.mrf.mxu0
      %v1462 = vadd.f32 0.0, %v1461
      %v1463 = vpop.f32.mrf.mxu0
      %1464 = vmatprep.mubr.bf16.mxu0 0
      %1465 = vmatmul.mubr.bf16.gmra.mxu0 %v1400
      %v1466 = vpop.f32.mrf.mxu0
      %v1467 = vadd.f32 0.0, %v1466
      %v1468 = vpop.f32.mrf.mxu0
      %v1469 = vpop.f32.mrf.mxu0
      %v1470 = vadd.f32 0.0, %v1469
      %v1471 = vpop.f32.mrf.mxu0
      %1472 = vmatprep.mubr.bf16.mxu0 0
      %1473 = vmatmul.mubr.bf16.gmra.mxu0 %v1403
      %v1474 = vpop.f32.mrf.mxu0
      %v1475 = vadd.f32 0.0, %v1474
      %v1476 = vpop.f32.mrf.mxu0
      %v1477 = vpop.f32.mrf.mxu0
      %v1478 = vadd.f32 0.0, %v1477
      %v1479 = vpop.f32.mrf.mxu0
      %1480 = vdwg.mxu0
      %v1481 = vadd.f32 %v1366, %v1443
      %v1482 = vadd.f32 %v1367, %v1446
      %v1483 = vadd.f32 %v1368, %v1451
      %v1484 = vadd.f32 %v1369, %v1454
      %v1485 = vadd.f32 %v1370, %v1459
      %v1486 = vadd.f32 %v1371, %v1462
      %v1487 = vadd.f32 %v1372, %v1467
      %v1488 = vadd.f32 %v1373, %v1470
      %v1489 = vadd.f32 %v1374, %v1475
      %v1490 = vadd.f32 %v1375, %v1478
      %v1491 = vld [vmem:[%s321] sm:$0xf]
      %v1492 = vld [vmem:[%s321 + $0x4] sm:$0xf]
      %v1493 = vld [vmem:[%s321 + $0x8] sm:$0xf]
      %v1494 = vld [vmem:[%s321 + $0xc] sm:$0xf]
      %v1495 = vld [vmem:[%s321 + $0x10] sm:$0xf]
      %v1496 = vld [vmem:[%s321 + $0x14] sm:$0xf]
      %v1497 = vld [vmem:[%s321 + $0x18] sm:$0xf]
      %v1498 = vld [vmem:[%s321 + $0x1c] sm:$0xf]
      %v1499 = vld [vmem:[%s321 + $0x20] sm:$0xf]
      %v1500 = vld [vmem:[%s321 + $0x24] sm:$0xf]
      %v1501 = vld [vmem:[%s321 + $0x28] sm:$0xf]
      %v1502 = vld [vmem:[%s321 + $0x2c] sm:$0xf]
      %v1503 = vld [vmem:[%s321 + $0x30] sm:$0xf]
      %s1504 = scalar_lea.vmem %s3, 18
      %v1505 = vld [vmem:[%s1504] sm:$0x3]
      %v1516 = vunpack.c.l.b16 %v1491
      %v1517 = vunpack.c.l.b16 %v1492
      %v1518 = vunpack.c.l.b16 %v1493
      %v1519 = vunpack.c.l.b16 %v1494
      %v1520 = vunpack.c.l.b16 %v1495
      %v1521 = vunpack.c.l.b16 %v1496
      %v1522 = vunpack.c.l.b16 %v1497
      %v1523 = vunpack.c.l.b16 %v1498
      %v1524 = vunpack.c.l.b16 %v1499
      %v1525 = vunpack.c.l.b16 %v1500
      %v1526 = vpack.c.b16 %v1517, %v1516
      %v1527 = vpack.c.b16 %v1519, %v1518
      %v1528 = vpack.c.b16 %v1521, %v1520
      %v1529 = vpack.c.b16 %v1523, %v1522
      %v1530 = vpack.c.b16 %v1525, %v1524
      %v1532 = vsel %vm433, %v1526, 0
      %v1535 = vsel %vm433, %v1527, 0
      %v1538 = vsel %vm433, %v1528, 0
      %v1541 = vsel %vm433, %v1529, 0
      %v1544 = vsel %vm433, %v1530, 0
      %v1547 = vsel %vm449, %v1505, 0
      %1549 = vmatprep.subr.bf16.mxu0 0
      %1550 = vmatpush1.bf16.msra.mxu0 0
      %1551 = vmatprep.subr.bf16.mxu0 0
      %1552 = vmatpush1.bf16.msra.mxu0 0
      %1553 = vmatprep.subr.bf16.mxu0 0
      %1554 = vmatpush1.bf16.msra.mxu0 0
      %1555 = vmatprep.subr.bf16.mxu0 0
      %1556 = vmatpush1.bf16.msra.mxu0 0
      %1557 = vmatprep.subr.bf16.mxu0 0
      %1558 = vmatpush1.bf16.msra.mxu0 0
      %1559 = vmatprep.subr.bf16.mxu0 0
      %1560 = vmatpush1.bf16.msra.mxu0 0
      %1561 = vmatprep.subr.bf16.mxu0 0
      %1562 = vmatpush1.bf16.msra.mxu0 0
      %1563 = vmatprep.subr.bf16.mxu0 0
      %1564 = vmatpush1.bf16.msra.mxu0 %v1547
      %1565 = vmatprep.subr.bf16.mxu0 0
      %1566 = vmatpush2.bf16.msra.mxu0 0
      %1567 = vmatprep.subr.bf16.mxu0 0
      %1568 = vmatpush2.bf16.msra.mxu0 0
      %1569 = vmatprep.subr.bf16.mxu0 0
      %1570 = vmatpush2.bf16.msra.mxu0 0
      %1571 = vmatprep.subr.bf16.mxu0 0
      %1572 = vmatpush2.bf16.msra.mxu0 0
      %1573 = vmatprep.subr.bf16.mxu0 0
      %1574 = vmatpush2.bf16.msra.mxu0 0
      %1575 = vmatprep.subr.bf16.mxu0 0
      %1576 = vmatpush2.bf16.msra.mxu0 0
      %1577 = vmatprep.subr.bf16.mxu0 0
      %1578 = vmatpush2.bf16.msra.mxu0 0
      %1579 = vmatprep.subr.bf16.mxu0 0
      %1580 = vmatpush2.bf16.msra.mxu0 0
      %1581 = vmatprep.mubr.bf16.mxu0 0
      %1582 = vmatmul.mubr.bf16.gmra.mxu0 %v1532
      %v1583 = vpop.f32.mrf.mxu0
      %v1584 = vadd.f32 0.0, %v1583
      %v1585 = vpop.f32.mrf.mxu0
      %v1586 = vpop.f32.mrf.mxu0
      %v1587 = vadd.f32 0.0, %v1586
      %v1588 = vpop.f32.mrf.mxu0
      %1589 = vmatprep.mubr.bf16.mxu0 0
      %1590 = vmatmul.mubr.bf16.gmra.mxu0 %v1535
      %v1591 = vpop.f32.mrf.mxu0
      %v1592 = vadd.f32 0.0, %v1591
      %v1593 = vpop.f32.mrf.mxu0
      %v1594 = vpop.f32.mrf.mxu0
      %v1595 = vadd.f32 0.0, %v1594
      %v1596 = vpop.f32.mrf.mxu0
      %1597 = vmatprep.mubr.bf16.mxu0 0
      %1598 = vmatmul.mubr.bf16.gmra.mxu0 %v1538
      %v1599 = vpop.f32.mrf.mxu0
      %v1600 = vadd.f32 0.0, %v1599
      %v1601 = vpop.f32.mrf.mxu0
      %v1602 = vpop.f32.mrf.mxu0
      %v1603 = vadd.f32 0.0, %v1602
      %v1604 = vpop.f32.mrf.mxu0
      %1605 = vmatprep.mubr.bf16.mxu0 0
      %1606 = vmatmul.mubr.bf16.gmra.mxu0 %v1541
      %v1607 = vpop.f32.mrf.mxu0
      %v1608 = vadd.f32 0.0, %v1607
      %v1609 = vpop.f32.mrf.mxu0
      %v1610 = vpop.f32.mrf.mxu0
      %v1611 = vadd.f32 0.0, %v1610
      %v1612 = vpop.f32.mrf.mxu0
      %1613 = vmatprep.mubr.bf16.mxu0 0
      %1614 = vmatmul.mubr.bf16.gmra.mxu0 %v1544
      %v1615 = vpop.f32.mrf.mxu0
      %v1616 = vadd.f32 0.0, %v1615
      %v1617 = vpop.f32.mrf.mxu0
      %v1618 = vpop.f32.mrf.mxu0
      %v1619 = vadd.f32 0.0, %v1618
      %v1620 = vpop.f32.mrf.mxu0
      %1621 = vdwg.mxu0
      %v1622 = vadd.f32 %v1481, %v1584
      %v1623 = vadd.f32 %v1482, %v1587
      %v1624 = vadd.f32 %v1483, %v1592
      %v1625 = vadd.f32 %v1484, %v1595
      %v1626 = vadd.f32 %v1485, %v1600
      %v1627 = vadd.f32 %v1486, %v1603
      %v1628 = vadd.f32 %v1487, %v1608
      %v1629 = vadd.f32 %v1488, %v1611
      %v1630 = vadd.f32 %v1489, %v1616
      %v1631 = vadd.f32 %v1490, %v1619
      %s1632 = scalar_lea.vmem %s3, 20
      %v1633 = vld [vmem:[%s1632] sm:$0x3]
      %v1635 = vunpack.c.l.b16 %v1501
      %v1636 = vpack.c.b16 %v1635, %v1635
      %v1637 = vshrl.u32 %v1526, 16
      %v1639 = vshll.u32 %v1526, 16
      %v1641 = vrot.slane %v1639, 1
      %v1642 = vor.u32 %v1637, %v1641
      %v1643 = vshll.u32 %v1527, 16
      %v1645 = vrot.slane %v1643, 1
      %v1646 = vsel %vm388, %v1642, %v1645
      %v1647 = vshrl.u32 %v1527, 16
      %v1649 = vor.u32 %v1647, %v1645
      %v1650 = vshll.u32 %v1528, 16
      %v1652 = vrot.slane %v1650, 1
      %v1653 = vsel %vm388, %v1649, %v1652
      %v1654 = vshrl.u32 %v1528, 16
      %v1656 = vor.u32 %v1654, %v1652
      %v1657 = vshll.u32 %v1529, 16
      %v1659 = vrot.slane %v1657, 1
      %v1660 = vsel %vm388, %v1656, %v1659
      %v1661 = vshrl.u32 %v1529, 16
      %v1663 = vor.u32 %v1661, %v1659
      %v1664 = vshll.u32 %v1530, 16
      %v1666 = vrot.slane %v1664, 1
      %v1667 = vsel %vm388, %v1663, %v1666
      %v1668 = vshrl.u32 %v1530, 16
      %v1670 = vor.u32 %v1668, %v1666
      %v1672 = vshll.u32 %v1636, 16
      %v1674 = vrot.slane %v1672, 1
      %v1675 = vsel %vm388, %v1670, %v1674
      %v1677 = vsel %vm433, %v1646, 0
      %v1680 = vsel %vm433, %v1653, 0
      %v1683 = vsel %vm433, %v1660, 0
      %v1686 = vsel %vm433, %v1667, 0
      %v1689 = vsel %vm433, %v1675, 0
      %v1692 = vsel %vm449, %v1633, 0
      %1694 = vmatprep.subr.bf16.mxu0 0
      %1695 = vmatpush1.bf16.msra.mxu0 0
      %1696 = vmatprep.subr.bf16.mxu0 0
      %1697 = vmatpush1.bf16.msra.mxu0 0
      %1698 = vmatprep.subr.bf16.mxu0 0
      %1699 = vmatpush1.bf16.msra.mxu0 0
      %1700 = vmatprep.subr.bf16.mxu0 0
      %1701 = vmatpush1.bf16.msra.mxu0 0
      %1702 = vmatprep.subr.bf16.mxu0 0
      %1703 = vmatpush1.bf16.msra.mxu0 0
      %1704 = vmatprep.subr.bf16.mxu0 0
      %1705 = vmatpush1.bf16.msra.mxu0 0
      %1706 = vmatprep.subr.bf16.mxu0 0
      %1707 = vmatpush1.bf16.msra.mxu0 0
      %1708 = vmatprep.subr.bf16.mxu0 0
      %1709 = vmatpush1.bf16.msra.mxu0 %v1692
      %1710 = vmatprep.subr.bf16.mxu0 0
      %1711 = vmatpush2.bf16.msra.mxu0 0
      %1712 = vmatprep.subr.bf16.mxu0 0
      %1713 = vmatpush2.bf16.msra.mxu0 0
      %1714 = vmatprep.subr.bf16.mxu0 0
      %1715 = vmatpush2.bf16.msra.mxu0 0
      %1716 = vmatprep.subr.bf16.mxu0 0
      %1717 = vmatpush2.bf16.msra.mxu0 0
      %1718 = vmatprep.subr.bf16.mxu0 0
      %1719 = vmatpush2.bf16.msra.mxu0 0
      %1720 = vmatprep.subr.bf16.mxu0 0
      %1721 = vmatpush2.bf16.msra.mxu0 0
      %1722 = vmatprep.subr.bf16.mxu0 0
      %1723 = vmatpush2.bf16.msra.mxu0 0
      %1724 = vmatprep.subr.bf16.mxu0 0
      %1725 = vmatpush2.bf16.msra.mxu0 0
      %1726 = vmatprep.mubr.bf16.mxu0 0
      %1727 = vmatmul.mubr.bf16.gmra.mxu0 %v1677
      %v1728 = vpop.f32.mrf.mxu0
      %v1729 = vadd.f32 0.0, %v1728
      %v1730 = vpop.f32.mrf.mxu0
      %v1731 = vpop.f32.mrf.mxu0
      %v1732 = vadd.f32 0.0, %v1731
      %v1733 = vpop.f32.mrf.mxu0
      %1734 = vmatprep.mubr.bf16.mxu0 0
      %1735 = vmatmul.mubr.bf16.gmra.mxu0 %v1680
      %v1736 = vpop.f32.mrf.mxu0
      %v1737 = vadd.f32 0.0, %v1736
      %v1738 = vpop.f32.mrf.mxu0
      %v1739 = vpop.f32.mrf.mxu0
      %v1740 = vadd.f32 0.0, %v1739
      %v1741 = vpop.f32.mrf.mxu0
      %1742 = vmatprep.mubr.bf16.mxu0 0
      %1743 = vmatmul.mubr.bf16.gmra.mxu0 %v1683
      %v1744 = vpop.f32.mrf.mxu0
      %v1745 = vadd.f32 0.0, %v1744
      %v1746 = vpop.f32.mrf.mxu0
      %v1747 = vpop.f32.mrf.mxu0
      %v1748 = vadd.f32 0.0, %v1747
      %v1749 = vpop.f32.mrf.mxu0
      %1750 = vmatprep.mubr.bf16.mxu0 0
      %1751 = vmatmul.mubr.bf16.gmra.mxu0 %v1686
      %v1752 = vpop.f32.mrf.mxu0
      %v1753 = vadd.f32 0.0, %v1752
      %v1754 = vpop.f32.mrf.mxu0
      %v1755 = vpop.f32.mrf.mxu0
      %v1756 = vadd.f32 0.0, %v1755
      %v1757 = vpop.f32.mrf.mxu0
      %1758 = vmatprep.mubr.bf16.mxu0 0
      %1759 = vmatmul.mubr.bf16.gmra.mxu0 %v1689
      %v1760 = vpop.f32.mrf.mxu0
      %v1761 = vadd.f32 0.0, %v1760
      %v1762 = vpop.f32.mrf.mxu0
      %v1763 = vpop.f32.mrf.mxu0
      %v1764 = vadd.f32 0.0, %v1763
      %v1765 = vpop.f32.mrf.mxu0
      %1766 = vdwg.mxu0
      %v1767 = vadd.f32 %v1622, %v1729
      %v1768 = vadd.f32 %v1623, %v1732
      %v1769 = vadd.f32 %v1624, %v1737
      %v1770 = vadd.f32 %v1625, %v1740
      %v1771 = vadd.f32 %v1626, %v1745
      %v1772 = vadd.f32 %v1627, %v1748
      %v1773 = vadd.f32 %v1628, %v1753
      %v1774 = vadd.f32 %v1629, %v1756
      %v1775 = vadd.f32 %v1630, %v1761
      %v1776 = vadd.f32 %v1631, %v1764
      %s1777 = scalar_lea.vmem %s3, 22
      %v1778 = vld [vmem:[%s1777] sm:$0x3]
      %v1779 = vrot.slane %v1526, 1
      %v1780 = vrot.slane %v1527, 1
      %v1781 = vsel %vm614, %v1779, %v1780
      %v1782 = vrot.slane %v1528, 1
      %v1783 = vsel %vm614, %v1780, %v1782
      %v1784 = vrot.slane %v1529, 1
      %v1785 = vsel %vm614, %v1782, %v1784
      %v1786 = vrot.slane %v1530, 1
      %v1787 = vsel %vm614, %v1784, %v1786
      %v1788 = vrot.slane %v1636, 1
      %v1789 = vsel %vm614, %v1786, %v1788
      %v1791 = vsel %vm433, %v1781, 0
      %v1794 = vsel %vm433, %v1783, 0
      %v1797 = vsel %vm433, %v1785, 0
      %v1800 = vsel %vm433, %v1787, 0
      %v1803 = vsel %vm433, %v1789, 0
      %v1806 = vsel %vm449, %v1778, 0
      %1808 = vmatprep.subr.bf16.mxu0 0
      %1809 = vmatpush1.bf16.msra.mxu0 0
      %1810 = vmatprep.subr.bf16.mxu0 0
      %1811 = vmatpush1.bf16.msra.mxu0 0
      %1812 = vmatprep.subr.bf16.mxu0 0
      %1813 = vmatpush1.bf16.msra.mxu0 0
      %1814 = vmatprep.subr.bf16.mxu0 0
      %1815 = vmatpush1.bf16.msra.mxu0 0
      %1816 = vmatprep.subr.bf16.mxu0 0
      %1817 = vmatpush1.bf16.msra.mxu0 0
      %1818 = vmatprep.subr.bf16.mxu0 0
      %1819 = vmatpush1.bf16.msra.mxu0 0
      %1820 = vmatprep.subr.bf16.mxu0 0
      %1821 = vmatpush1.bf16.msra.mxu0 0
      %1822 = vmatprep.subr.bf16.mxu0 0
      %1823 = vmatpush1.bf16.msra.mxu0 %v1806
      %1824 = vmatprep.subr.bf16.mxu0 0
      %1825 = vmatpush2.bf16.msra.mxu0 0
      %1826 = vmatprep.subr.bf16.mxu0 0
      %1827 = vmatpush2.bf16.msra.mxu0 0
      %1828 = vmatprep.subr.bf16.mxu0 0
      %1829 = vmatpush2.bf16.msra.mxu0 0
      %1830 = vmatprep.subr.bf16.mxu0 0
      %1831 = vmatpush2.bf16.msra.mxu0 0
      %1832 = vmatprep.subr.bf16.mxu0 0
      %1833 = vmatpush2.bf16.msra.mxu0 0
      %1834 = vmatprep.subr.bf16.mxu0 0
      %1835 = vmatpush2.bf16.msra.mxu0 0
      %1836 = vmatprep.subr.bf16.mxu0 0
      %1837 = vmatpush2.bf16.msra.mxu0 0
      %1838 = vmatprep.subr.bf16.mxu0 0
      %1839 = vmatpush2.bf16.msra.mxu0 0
      %1840 = vmatprep.mubr.bf16.mxu0 0
      %1841 = vmatmul.mubr.bf16.gmra.mxu0 %v1791
      %v1842 = vpop.f32.mrf.mxu0
      %v1843 = vadd.f32 0.0, %v1842
      %v1844 = vpop.f32.mrf.mxu0
      %v1845 = vpop.f32.mrf.mxu0
      %v1846 = vadd.f32 0.0, %v1845
      %v1847 = vpop.f32.mrf.mxu0
      %1848 = vmatprep.mubr.bf16.mxu0 0
      %1849 = vmatmul.mubr.bf16.gmra.mxu0 %v1794
      %v1850 = vpop.f32.mrf.mxu0
      %v1851 = vadd.f32 0.0, %v1850
      %v1852 = vpop.f32.mrf.mxu0
      %v1853 = vpop.f32.mrf.mxu0
      %v1854 = vadd.f32 0.0, %v1853
      %v1855 = vpop.f32.mrf.mxu0
      %1856 = vmatprep.mubr.bf16.mxu0 0
      %1857 = vmatmul.mubr.bf16.gmra.mxu0 %v1797
      %v1858 = vpop.f32.mrf.mxu0
      %v1859 = vadd.f32 0.0, %v1858
      %v1860 = vpop.f32.mrf.mxu0
      %v1861 = vpop.f32.mrf.mxu0
      %v1862 = vadd.f32 0.0, %v1861
      %v1863 = vpop.f32.mrf.mxu0
      %1864 = vmatprep.mubr.bf16.mxu0 0
      %1865 = vmatmul.mubr.bf16.gmra.mxu0 %v1800
      %v1866 = vpop.f32.mrf.mxu0
      %v1867 = vadd.f32 0.0, %v1866
      %v1868 = vpop.f32.mrf.mxu0
      %v1869 = vpop.f32.mrf.mxu0
      %v1870 = vadd.f32 0.0, %v1869
      %v1871 = vpop.f32.mrf.mxu0
      %1872 = vmatprep.mubr.bf16.mxu0 0
      %1873 = vmatmul.mubr.bf16.gmra.mxu0 %v1803
      %v1874 = vpop.f32.mrf.mxu0
      %v1875 = vadd.f32 0.0, %v1874
      %v1876 = vpop.f32.mrf.mxu0
      %v1877 = vpop.f32.mrf.mxu0
      %v1878 = vadd.f32 0.0, %v1877
      %v1879 = vpop.f32.mrf.mxu0
      %1880 = vdwg.mxu0
      %v1881 = vadd.f32 %v1767, %v1843
      %v1882 = vadd.f32 %v1768, %v1846
      %v1883 = vadd.f32 %v1769, %v1851
      %v1884 = vadd.f32 %v1770, %v1854
      %v1885 = vadd.f32 %v1771, %v1859
      %v1886 = vadd.f32 %v1772, %v1862
      %v1887 = vadd.f32 %v1773, %v1867
      %v1888 = vadd.f32 %v1774, %v1870
      %v1889 = vadd.f32 %v1775, %v1875
      %v1890 = vadd.f32 %v1776, %v1878
      %s1891 = scalar_lea.vmem %s3, 24
      %v1892 = vld [vmem:[%s1891] sm:$0x3]
      %v1894 = vunpack.c.l.b16 %v1502
      %v1895 = vpack.c.b16 %v1518, %v1517
      %v1896 = vpack.c.b16 %v1520, %v1519
      %v1897 = vpack.c.b16 %v1522, %v1521
      %v1898 = vpack.c.b16 %v1524, %v1523
      %v1899 = vpack.c.b16 %v1635, %v1525
      %v1900 = vpack.c.b16 %v1894, %v1894
      %v1901 = vrot.slane %v1895, 1
      %v1902 = vrot.slane %v1896, 1
      %v1903 = vsel %vm614, %v1901, %v1902
      %v1904 = vrot.slane %v1897, 1
      %v1905 = vsel %vm614, %v1902, %v1904
      %v1906 = vrot.slane %v1898, 1
      %v1907 = vsel %vm614, %v1904, %v1906
      %v1908 = vrot.slane %v1899, 1
      %v1909 = vsel %vm614, %v1906, %v1908
      %v1910 = vrot.slane %v1900, 1
      %v1911 = vsel %vm614, %v1908, %v1910
      %v1913 = vsel %vm433, %v1903, 0
      %v1916 = vsel %vm433, %v1905, 0
      %v1919 = vsel %vm433, %v1907, 0
      %v1922 = vsel %vm433, %v1909, 0
      %v1925 = vsel %vm433, %v1911, 0
      %v1928 = vsel %vm449, %v1892, 0
      %1930 = vmatprep.subr.bf16.mxu0 0
      %1931 = vmatpush1.bf16.msra.mxu0 0
      %1932 = vmatprep.subr.bf16.mxu0 0
      %1933 = vmatpush1.bf16.msra.mxu0 0
      %1934 = vmatprep.subr.bf16.mxu0 0
      %1935 = vmatpush1.bf16.msra.mxu0 0
      %1936 = vmatprep.subr.bf16.mxu0 0
      %1937 = vmatpush1.bf16.msra.mxu0 0
      %1938 = vmatprep.subr.bf16.mxu0 0
      %1939 = vmatpush1.bf16.msra.mxu0 0
      %1940 = vmatprep.subr.bf16.mxu0 0
      %1941 = vmatpush1.bf16.msra.mxu0 0
      %1942 = vmatprep.subr.bf16.mxu0 0
      %1943 = vmatpush1.bf16.msra.mxu0 0
      %1944 = vmatprep.subr.bf16.mxu0 0
      %1945 = vmatpush1.bf16.msra.mxu0 %v1928
      %1946 = vmatprep.subr.bf16.mxu0 0
      %1947 = vmatpush2.bf16.msra.mxu0 0
      %1948 = vmatprep.subr.bf16.mxu0 0
      %1949 = vmatpush2.bf16.msra.mxu0 0
      %1950 = vmatprep.subr.bf16.mxu0 0
      %1951 = vmatpush2.bf16.msra.mxu0 0
      %1952 = vmatprep.subr.bf16.mxu0 0
      %1953 = vmatpush2.bf16.msra.mxu0 0
      %1954 = vmatprep.subr.bf16.mxu0 0
      %1955 = vmatpush2.bf16.msra.mxu0 0
      %1956 = vmatprep.subr.bf16.mxu0 0
      %1957 = vmatpush2.bf16.msra.mxu0 0
      %1958 = vmatprep.subr.bf16.mxu0 0
      %1959 = vmatpush2.bf16.msra.mxu0 0
      %1960 = vmatprep.subr.bf16.mxu0 0
      %1961 = vmatpush2.bf16.msra.mxu0 0
      %1962 = vmatprep.mubr.bf16.mxu0 0
      %1963 = vmatmul.mubr.bf16.gmra.mxu0 %v1913
      %v1964 = vpop.f32.mrf.mxu0
      %v1965 = vadd.f32 0.0, %v1964
      %v1966 = vpop.f32.mrf.mxu0
      %v1967 = vpop.f32.mrf.mxu0
      %v1968 = vadd.f32 0.0, %v1967
      %v1969 = vpop.f32.mrf.mxu0
      %1970 = vmatprep.mubr.bf16.mxu0 0
      %1971 = vmatmul.mubr.bf16.gmra.mxu0 %v1916
      %v1972 = vpop.f32.mrf.mxu0
      %v1973 = vadd.f32 0.0, %v1972
      %v1974 = vpop.f32.mrf.mxu0
      %v1975 = vpop.f32.mrf.mxu0
      %v1976 = vadd.f32 0.0, %v1975
      %v1977 = vpop.f32.mrf.mxu0
      %1978 = vmatprep.mubr.bf16.mxu0 0
      %1979 = vmatmul.mubr.bf16.gmra.mxu0 %v1919
      %v1980 = vpop.f32.mrf.mxu0
      %v1981 = vadd.f32 0.0, %v1980
      %v1982 = vpop.f32.mrf.mxu0
      %v1983 = vpop.f32.mrf.mxu0
      %v1984 = vadd.f32 0.0, %v1983
      %v1985 = vpop.f32.mrf.mxu0
      %1986 = vmatprep.mubr.bf16.mxu0 0
      %1987 = vmatmul.mubr.bf16.gmra.mxu0 %v1922
      %v1988 = vpop.f32.mrf.mxu0
      %v1989 = vadd.f32 0.0, %v1988
      %v1990 = vpop.f32.mrf.mxu0
      %v1991 = vpop.f32.mrf.mxu0
      %v1992 = vadd.f32 0.0, %v1991
      %v1993 = vpop.f32.mrf.mxu0
      %1994 = vmatprep.mubr.bf16.mxu0 0
      %1995 = vmatmul.mubr.bf16.gmra.mxu0 %v1925
      %v1996 = vpop.f32.mrf.mxu0
      %v1997 = vadd.f32 0.0, %v1996
      %v1998 = vpop.f32.mrf.mxu0
      %v1999 = vpop.f32.mrf.mxu0
      %v2000 = vadd.f32 0.0, %v1999
      %v2001 = vpop.f32.mrf.mxu0
      %2002 = vdwg.mxu0
      %v2003 = vadd.f32 %v1881, %v1965
      %v2004 = vadd.f32 %v1882, %v1968
      %v2005 = vadd.f32 %v1883, %v1973
      %v2006 = vadd.f32 %v1884, %v1976
      %v2007 = vadd.f32 %v1885, %v1981
      %v2008 = vadd.f32 %v1886, %v1984
      %v2009 = vadd.f32 %v1887, %v1989
      %v2010 = vadd.f32 %v1888, %v1992
      %v2011 = vadd.f32 %v1889, %v1997
      %v2012 = vadd.f32 %v1890, %v2000
      %s2013 = scalar_lea.vmem %s3, 26
      %v2014 = vld [vmem:[%s2013] sm:$0x3]
      %v2016 = vshrl.u32 %v1895, 16
      %v2018 = vrot.slane %v2016, 1
      %v2019 = vshll.u32 %v1895, 16
      %v2021 = vrot.slane %v2019, 2
      %v2022 = vor.u32 %v2018, %v2021
      %v2024 = vshrl.u32 %v1896, 16
      %v2026 = vrot.slane %v2024, 1
      %v2027 = vshll.u32 %v1896, 16
      %v2029 = vrot.slane %v2027, 2
      %v2030 = vor.u32 %v2026, %v2029
      %v2031 = vsel %vm851, %v2022, %v2030
      %v2033 = vshrl.u32 %v1897, 16
      %v2035 = vrot.slane %v2033, 1
      %v2036 = vshll.u32 %v1897, 16
      %v2038 = vrot.slane %v2036, 2
      %v2039 = vor.u32 %v2035, %v2038
      %v2040 = vsel %vm851, %v2030, %v2039
      %v2042 = vshrl.u32 %v1898, 16
      %v2044 = vrot.slane %v2042, 1
      %v2045 = vshll.u32 %v1898, 16
      %v2047 = vrot.slane %v2045, 2
      %v2048 = vor.u32 %v2044, %v2047
      %v2049 = vsel %vm851, %v2039, %v2048
      %v2051 = vshrl.u32 %v1899, 16
      %v2053 = vrot.slane %v2051, 1
      %v2054 = vshll.u32 %v1899, 16
      %v2056 = vrot.slane %v2054, 2
      %v2057 = vor.u32 %v2053, %v2056
      %v2058 = vsel %vm851, %v2048, %v2057
      %v2060 = vshrl.u32 %v1900, 16
      %v2062 = vrot.slane %v2060, 1
      %v2063 = vshll.u32 %v1900, 16
      %v2065 = vrot.slane %v2063, 2
      %v2066 = vor.u32 %v2062, %v2065
      %v2067 = vsel %vm851, %v2057, %v2066
      %v2069 = vsel %vm433, %v2031, 0
      %v2072 = vsel %vm433, %v2040, 0
      %v2075 = vsel %vm433, %v2049, 0
      %v2078 = vsel %vm433, %v2058, 0
      %v2081 = vsel %vm433, %v2067, 0
      %v2084 = vsel %vm449, %v2014, 0
      %2086 = vmatprep.subr.bf16.mxu0 0
      %2087 = vmatpush1.bf16.msra.mxu0 0
      %2088 = vmatprep.subr.bf16.mxu0 0
      %2089 = vmatpush1.bf16.msra.mxu0 0
      %2090 = vmatprep.subr.bf16.mxu0 0
      %2091 = vmatpush1.bf16.msra.mxu0 0
      %2092 = vmatprep.subr.bf16.mxu0 0
      %2093 = vmatpush1.bf16.msra.mxu0 0
      %2094 = vmatprep.subr.bf16.mxu0 0
      %2095 = vmatpush1.bf16.msra.mxu0 0
      %2096 = vmatprep.subr.bf16.mxu0 0
      %2097 = vmatpush1.bf16.msra.mxu0 0
      %2098 = vmatprep.subr.bf16.mxu0 0
      %2099 = vmatpush1.bf16.msra.mxu0 0
      %2100 = vmatprep.subr.bf16.mxu0 0
      %2101 = vmatpush1.bf16.msra.mxu0 %v2084
      %2102 = vmatprep.subr.bf16.mxu0 0
      %2103 = vmatpush2.bf16.msra.mxu0 0
      %2104 = vmatprep.subr.bf16.mxu0 0
      %2105 = vmatpush2.bf16.msra.mxu0 0
      %2106 = vmatprep.subr.bf16.mxu0 0
      %2107 = vmatpush2.bf16.msra.mxu0 0
      %2108 = vmatprep.subr.bf16.mxu0 0
      %2109 = vmatpush2.bf16.msra.mxu0 0
      %2110 = vmatprep.subr.bf16.mxu0 0
      %2111 = vmatpush2.bf16.msra.mxu0 0
      %2112 = vmatprep.subr.bf16.mxu0 0
      %2113 = vmatpush2.bf16.msra.mxu0 0
      %2114 = vmatprep.subr.bf16.mxu0 0
      %2115 = vmatpush2.bf16.msra.mxu0 0
      %2116 = vmatprep.subr.bf16.mxu0 0
      %2117 = vmatpush2.bf16.msra.mxu0 0
      %2118 = vmatprep.mubr.bf16.mxu0 0
      %2119 = vmatmul.mubr.bf16.gmra.mxu0 %v2069
      %v2120 = vpop.f32.mrf.mxu0
      %v2121 = vadd.f32 0.0, %v2120
      %v2122 = vpop.f32.mrf.mxu0
      %v2123 = vpop.f32.mrf.mxu0
      %v2124 = vadd.f32 0.0, %v2123
      %v2125 = vpop.f32.mrf.mxu0
      %2126 = vmatprep.mubr.bf16.mxu0 0
      %2127 = vmatmul.mubr.bf16.gmra.mxu0 %v2072
      %v2128 = vpop.f32.mrf.mxu0
      %v2129 = vadd.f32 0.0, %v2128
      %v2130 = vpop.f32.mrf.mxu0
      %v2131 = vpop.f32.mrf.mxu0
      %v2132 = vadd.f32 0.0, %v2131
      %v2133 = vpop.f32.mrf.mxu0
      %2134 = vmatprep.mubr.bf16.mxu0 0
      %2135 = vmatmul.mubr.bf16.gmra.mxu0 %v2075
      %v2136 = vpop.f32.mrf.mxu0
      %v2137 = vadd.f32 0.0, %v2136
      %v2138 = vpop.f32.mrf.mxu0
      %v2139 = vpop.f32.mrf.mxu0
      %v2140 = vadd.f32 0.0, %v2139
      %v2141 = vpop.f32.mrf.mxu0
      %2142 = vmatprep.mubr.bf16.mxu0 0
      %2143 = vmatmul.mubr.bf16.gmra.mxu0 %v2078
      %v2144 = vpop.f32.mrf.mxu0
      %v2145 = vadd.f32 0.0, %v2144
      %v2146 = vpop.f32.mrf.mxu0
      %v2147 = vpop.f32.mrf.mxu0
      %v2148 = vadd.f32 0.0, %v2147
      %v2149 = vpop.f32.mrf.mxu0
      %2150 = vmatprep.mubr.bf16.mxu0 0
      %2151 = vmatmul.mubr.bf16.gmra.mxu0 %v2081
      %v2152 = vpop.f32.mrf.mxu0
      %v2153 = vadd.f32 0.0, %v2152
      %v2154 = vpop.f32.mrf.mxu0
      %v2155 = vpop.f32.mrf.mxu0
      %v2156 = vadd.f32 0.0, %v2155
      %v2157 = vpop.f32.mrf.mxu0
      %2158 = vdwg.mxu0
      %v2159 = vadd.f32 %v2003, %v2121
      %v2160 = vadd.f32 %v2004, %v2124
      %v2161 = vadd.f32 %v2005, %v2129
      %v2162 = vadd.f32 %v2006, %v2132
      %v2163 = vadd.f32 %v2007, %v2137
      %v2164 = vadd.f32 %v2008, %v2140
      %v2165 = vadd.f32 %v2009, %v2145
      %v2166 = vadd.f32 %v2010, %v2148
      %v2167 = vadd.f32 %v2011, %v2153
      %v2168 = vadd.f32 %v2012, %v2156
      %s2169 = scalar_lea.vmem %s3, 28
      %v2170 = vld [vmem:[%s2169] sm:$0x3]
      %v2171 = vrot.slane %v1895, 2
      %v2172 = vrot.slane %v1896, 2
      %v2173 = vsel %vm1008, %v2171, %v2172
      %v2174 = vrot.slane %v1897, 2
      %v2175 = vsel %vm1008, %v2172, %v2174
      %v2176 = vrot.slane %v1898, 2
      %v2177 = vsel %vm1008, %v2174, %v2176
      %v2178 = vrot.slane %v1899, 2
      %v2179 = vsel %vm1008, %v2176, %v2178
      %v2180 = vrot.slane %v1900, 2
      %v2181 = vsel %vm1008, %v2178, %v2180
      %v2183 = vsel %vm433, %v2173, 0
      %v2186 = vsel %vm433, %v2175, 0
      %v2189 = vsel %vm433, %v2177, 0
      %v2192 = vsel %vm433, %v2179, 0
      %v2195 = vsel %vm433, %v2181, 0
      %v2198 = vsel %vm449, %v2170, 0
      %2200 = vmatprep.subr.bf16.mxu0 0
      %2201 = vmatpush1.bf16.msra.mxu0 0
      %2202 = vmatprep.subr.bf16.mxu0 0
      %2203 = vmatpush1.bf16.msra.mxu0 0
      %2204 = vmatprep.subr.bf16.mxu0 0
      %2205 = vmatpush1.bf16.msra.mxu0 0
      %2206 = vmatprep.subr.bf16.mxu0 0
      %2207 = vmatpush1.bf16.msra.mxu0 0
      %2208 = vmatprep.subr.bf16.mxu0 0
      %2209 = vmatpush1.bf16.msra.mxu0 0
      %2210 = vmatprep.subr.bf16.mxu0 0
      %2211 = vmatpush1.bf16.msra.mxu0 0
      %2212 = vmatprep.subr.bf16.mxu0 0
      %2213 = vmatpush1.bf16.msra.mxu0 0
      %2214 = vmatprep.subr.bf16.mxu0 0
      %2215 = vmatpush1.bf16.msra.mxu0 %v2198
      %2216 = vmatprep.subr.bf16.mxu0 0
      %2217 = vmatpush2.bf16.msra.mxu0 0
      %2218 = vmatprep.subr.bf16.mxu0 0
      %2219 = vmatpush2.bf16.msra.mxu0 0
      %2220 = vmatprep.subr.bf16.mxu0 0
      %2221 = vmatpush2.bf16.msra.mxu0 0
      %2222 = vmatprep.subr.bf16.mxu0 0
      %2223 = vmatpush2.bf16.msra.mxu0 0
      %2224 = vmatprep.subr.bf16.mxu0 0
      %2225 = vmatpush2.bf16.msra.mxu0 0
      %2226 = vmatprep.subr.bf16.mxu0 0
      %2227 = vmatpush2.bf16.msra.mxu0 0
      %2228 = vmatprep.subr.bf16.mxu0 0
      %2229 = vmatpush2.bf16.msra.mxu0 0
      %2230 = vmatprep.subr.bf16.mxu0 0
      %2231 = vmatpush2.bf16.msra.mxu0 0
      %2232 = vmatprep.mubr.bf16.mxu0 0
      %2233 = vmatmul.mubr.bf16.gmra.mxu0 %v2183
      %v2234 = vpop.f32.mrf.mxu0
      %v2235 = vadd.f32 0.0, %v2234
      %v2236 = vpop.f32.mrf.mxu0
      %v2237 = vpop.f32.mrf.mxu0
      %v2238 = vadd.f32 0.0, %v2237
      %v2239 = vpop.f32.mrf.mxu0
      %2240 = vmatprep.mubr.bf16.mxu0 0
      %2241 = vmatmul.mubr.bf16.gmra.mxu0 %v2186
      %v2242 = vpop.f32.mrf.mxu0
      %v2243 = vadd.f32 0.0, %v2242
      %v2244 = vpop.f32.mrf.mxu0
      %v2245 = vpop.f32.mrf.mxu0
      %v2246 = vadd.f32 0.0, %v2245
      %v2247 = vpop.f32.mrf.mxu0
      %2248 = vmatprep.mubr.bf16.mxu0 0
      %2249 = vmatmul.mubr.bf16.gmra.mxu0 %v2189
      %v2250 = vpop.f32.mrf.mxu0
      %v2251 = vadd.f32 0.0, %v2250
      %v2252 = vpop.f32.mrf.mxu0
      %v2253 = vpop.f32.mrf.mxu0
      %v2254 = vadd.f32 0.0, %v2253
      %v2255 = vpop.f32.mrf.mxu0
      %2256 = vmatprep.mubr.bf16.mxu0 0
      %2257 = vmatmul.mubr.bf16.gmra.mxu0 %v2192
      %v2258 = vpop.f32.mrf.mxu0
      %v2259 = vadd.f32 0.0, %v2258
      %v2260 = vpop.f32.mrf.mxu0
      %v2261 = vpop.f32.mrf.mxu0
      %v2262 = vadd.f32 0.0, %v2261
      %v2263 = vpop.f32.mrf.mxu0
      %2264 = vmatprep.mubr.bf16.mxu0 0
      %2265 = vmatmul.mubr.bf16.gmra.mxu0 %v2195
      %v2266 = vpop.f32.mrf.mxu0
      %v2267 = vadd.f32 0.0, %v2266
      %v2268 = vpop.f32.mrf.mxu0
      %v2269 = vpop.f32.mrf.mxu0
      %v2270 = vadd.f32 0.0, %v2269
      %v2271 = vpop.f32.mrf.mxu0
      %2272 = vdwg.mxu0
      %v2273 = vadd.f32 %v2159, %v2235
      %v2274 = vadd.f32 %v2160, %v2238
      %v2275 = vadd.f32 %v2161, %v2243
      %v2276 = vadd.f32 %v2162, %v2246
      %v2277 = vadd.f32 %v2163, %v2251
      %v2278 = vadd.f32 %v2164, %v2254
      %v2279 = vadd.f32 %v2165, %v2259
      %v2280 = vadd.f32 %v2166, %v2262
      %v2281 = vadd.f32 %v2167, %v2267
      %v2282 = vadd.f32 %v2168, %v2270
      %s2283 = scalar_lea.vmem %s3, 30
      %v2284 = vld [vmem:[%s2283] sm:$0x3]
      %v2286 = vunpack.c.l.b16 %v1503
      %v2287 = vpack.c.b16 %v1894, %v1635
      %v2288 = vpack.c.b16 %v2286, %v2286
      %v2289 = vrot.slane %v1527, 2
      %v2290 = vrot.slane %v1528, 2
      %v2291 = vsel %vm1008, %v2289, %v2290
      %v2292 = vrot.slane %v1529, 2
      %v2293 = vsel %vm1008, %v2290, %v2292
      %v2294 = vrot.slane %v1530, 2
      %v2295 = vsel %vm1008, %v2292, %v2294
      %v2296 = vrot.slane %v2287, 2
      %v2297 = vsel %vm1008, %v2294, %v2296
      %v2298 = vrot.slane %v2288, 2
      %v2299 = vsel %vm1008, %v2296, %v2298
      %v2301 = vsel %vm433, %v2291, 0
      %v2304 = vsel %vm433, %v2293, 0
      %v2307 = vsel %vm433, %v2295, 0
      %v2310 = vsel %vm433, %v2297, 0
      %v2313 = vsel %vm433, %v2299, 0
      %v2316 = vsel %vm449, %v2284, 0
      %2318 = vmatprep.subr.bf16.mxu0 0
      %2319 = vmatpush1.bf16.msra.mxu0 0
      %2320 = vmatprep.subr.bf16.mxu0 0
      %2321 = vmatpush1.bf16.msra.mxu0 0
      %2322 = vmatprep.subr.bf16.mxu0 0
      %2323 = vmatpush1.bf16.msra.mxu0 0
      %2324 = vmatprep.subr.bf16.mxu0 0
      %2325 = vmatpush1.bf16.msra.mxu0 0
      %2326 = vmatprep.subr.bf16.mxu0 0
      %2327 = vmatpush1.bf16.msra.mxu0 0
      %2328 = vmatprep.subr.bf16.mxu0 0
      %2329 = vmatpush1.bf16.msra.mxu0 0
      %2330 = vmatprep.subr.bf16.mxu0 0
      %2331 = vmatpush1.bf16.msra.mxu0 0
      %2332 = vmatprep.subr.bf16.mxu0 0
      %2333 = vmatpush1.bf16.msra.mxu0 %v2316
      %2334 = vmatprep.subr.bf16.mxu0 0
      %2335 = vmatpush2.bf16.msra.mxu0 0
      %2336 = vmatprep.subr.bf16.mxu0 0
      %2337 = vmatpush2.bf16.msra.mxu0 0
      %2338 = vmatprep.subr.bf16.mxu0 0
      %2339 = vmatpush2.bf16.msra.mxu0 0
      %2340 = vmatprep.subr.bf16.mxu0 0
      %2341 = vmatpush2.bf16.msra.mxu0 0
      %2342 = vmatprep.subr.bf16.mxu0 0
      %2343 = vmatpush2.bf16.msra.mxu0 0
      %2344 = vmatprep.subr.bf16.mxu0 0
      %2345 = vmatpush2.bf16.msra.mxu0 0
      %2346 = vmatprep.subr.bf16.mxu0 0
      %2347 = vmatpush2.bf16.msra.mxu0 0
      %2348 = vmatprep.subr.bf16.mxu0 0
      %2349 = vmatpush2.bf16.msra.mxu0 0
      %2350 = vmatprep.mubr.bf16.mxu0 0
      %2351 = vmatmul.mubr.bf16.gmra.mxu0 %v2301
      %v2352 = vpop.f32.mrf.mxu0
      %v2353 = vadd.f32 0.0, %v2352
      %v2354 = vpop.f32.mrf.mxu0
      %v2355 = vpop.f32.mrf.mxu0
      %v2356 = vadd.f32 0.0, %v2355
      %v2357 = vpop.f32.mrf.mxu0
      %2358 = vmatprep.mubr.bf16.mxu0 0
      %2359 = vmatmul.mubr.bf16.gmra.mxu0 %v2304
      %v2360 = vpop.f32.mrf.mxu0
      %v2361 = vadd.f32 0.0, %v2360
      %v2362 = vpop.f32.mrf.mxu0
      %v2363 = vpop.f32.mrf.mxu0
      %v2364 = vadd.f32 0.0, %v2363
      %v2365 = vpop.f32.mrf.mxu0
      %2366 = vmatprep.mubr.bf16.mxu0 0
      %2367 = vmatmul.mubr.bf16.gmra.mxu0 %v2307
      %v2368 = vpop.f32.mrf.mxu0
      %v2369 = vadd.f32 0.0, %v2368
      %v2370 = vpop.f32.mrf.mxu0
      %v2371 = vpop.f32.mrf.mxu0
      %v2372 = vadd.f32 0.0, %v2371
      %v2373 = vpop.f32.mrf.mxu0
      %2374 = vmatprep.mubr.bf16.mxu0 0
      %2375 = vmatmul.mubr.bf16.gmra.mxu0 %v2310
      %v2376 = vpop.f32.mrf.mxu0
      %v2377 = vadd.f32 0.0, %v2376
      %v2378 = vpop.f32.mrf.mxu0
      %v2379 = vpop.f32.mrf.mxu0
      %v2380 = vadd.f32 0.0, %v2379
      %v2381 = vpop.f32.mrf.mxu0
      %2382 = vmatprep.mubr.bf16.mxu0 0
      %2383 = vmatmul.mubr.bf16.gmra.mxu0 %v2313
      %v2384 = vpop.f32.mrf.mxu0
      %v2385 = vadd.f32 0.0, %v2384
      %v2386 = vpop.f32.mrf.mxu0
      %v2387 = vpop.f32.mrf.mxu0
      %v2388 = vadd.f32 0.0, %v2387
      %v2389 = vpop.f32.mrf.mxu0
      %2390 = vdwg.mxu0
      %v2391 = vadd.f32 %v2273, %v2353
      %v2392 = vadd.f32 %v2274, %v2356
      %v2393 = vadd.f32 %v2275, %v2361
      %v2394 = vadd.f32 %v2276, %v2364
      %v2395 = vadd.f32 %v2277, %v2369
      %v2396 = vadd.f32 %v2278, %v2372
      %v2397 = vadd.f32 %v2279, %v2377
      %v2398 = vadd.f32 %v2280, %v2380
      %v2399 = vadd.f32 %v2281, %v2385
      %v2400 = vadd.f32 %v2282, %v2388
      %s2401 = scalar_lea.vmem %s3, 32
      %v2402 = vld [vmem:[%s2401] sm:$0x3]
      %v2403 = vrot.slane %v1647, 2
      %v2404 = vrot.slane %v1643, 3
      %v2405 = vor.u32 %v2403, %v2404
      %v2406 = vrot.slane %v1654, 2
      %v2407 = vrot.slane %v1650, 3
      %v2408 = vor.u32 %v2406, %v2407
      %v2409 = vsel %vm1241, %v2405, %v2408
      %v2410 = vrot.slane %v1661, 2
      %v2411 = vrot.slane %v1657, 3
      %v2412 = vor.u32 %v2410, %v2411
      %v2413 = vsel %vm1241, %v2408, %v2412
      %v2414 = vrot.slane %v1668, 2
      %v2415 = vrot.slane %v1664, 3
      %v2416 = vor.u32 %v2414, %v2415
      %v2417 = vsel %vm1241, %v2412, %v2416
      %v2419 = vshrl.u32 %v2287, 16
      %v2421 = vrot.slane %v2419, 2
      %v2422 = vshll.u32 %v2287, 16
      %v2424 = vrot.slane %v2422, 3
      %v2425 = vor.u32 %v2421, %v2424
      %v2426 = vsel %vm1241, %v2416, %v2425
      %v2428 = vshrl.u32 %v2288, 16
      %v2430 = vrot.slane %v2428, 2
      %v2431 = vshll.u32 %v2288, 16
      %v2433 = vrot.slane %v2431, 3
      %v2434 = vor.u32 %v2430, %v2433
      %v2435 = vsel %vm1241, %v2425, %v2434
      %v2437 = vsel %vm433, %v2409, 0
      %v2440 = vsel %vm433, %v2413, 0
      %v2443 = vsel %vm433, %v2417, 0
      %v2446 = vsel %vm433, %v2426, 0
      %v2449 = vsel %vm433, %v2435, 0
      %v2452 = vsel %vm449, %v2402, 0
      %2454 = vmatprep.subr.bf16.mxu0 0
      %2455 = vmatpush1.bf16.msra.mxu0 0
      %2456 = vmatprep.subr.bf16.mxu0 0
      %2457 = vmatpush1.bf16.msra.mxu0 0
      %2458 = vmatprep.subr.bf16.mxu0 0
      %2459 = vmatpush1.bf16.msra.mxu0 0
      %2460 = vmatprep.subr.bf16.mxu0 0
      %2461 = vmatpush1.bf16.msra.mxu0 0
      %2462 = vmatprep.subr.bf16.mxu0 0
      %2463 = vmatpush1.bf16.msra.mxu0 0
      %2464 = vmatprep.subr.bf16.mxu0 0
      %2465 = vmatpush1.bf16.msra.mxu0 0
      %2466 = vmatprep.subr.bf16.mxu0 0
      %2467 = vmatpush1.bf16.msra.mxu0 0
      %2468 = vmatprep.subr.bf16.mxu0 0
      %2469 = vmatpush1.bf16.msra.mxu0 %v2452
      %2470 = vmatprep.subr.bf16.mxu0 0
      %2471 = vmatpush2.bf16.msra.mxu0 0
      %2472 = vmatprep.subr.bf16.mxu0 0
      %2473 = vmatpush2.bf16.msra.mxu0 0
      %2474 = vmatprep.subr.bf16.mxu0 0
      %2475 = vmatpush2.bf16.msra.mxu0 0
      %2476 = vmatprep.subr.bf16.mxu0 0
      %2477 = vmatpush2.bf16.msra.mxu0 0
      %2478 = vmatprep.subr.bf16.mxu0 0
      %2479 = vmatpush2.bf16.msra.mxu0 0
      %2480 = vmatprep.subr.bf16.mxu0 0
      %2481 = vmatpush2.bf16.msra.mxu0 0
      %2482 = vmatprep.subr.bf16.mxu0 0
      %2483 = vmatpush2.bf16.msra.mxu0 0
      %2484 = vmatprep.subr.bf16.mxu0 0
      %2485 = vmatpush2.bf16.msra.mxu0 0
      %2486 = vmatprep.mubr.bf16.mxu0 0
      %2487 = vmatmul.mubr.bf16.gmra.mxu0 %v2437
      %v2488 = vpop.f32.mrf.mxu0
      %v2489 = vadd.f32 0.0, %v2488
      %v2490 = vpop.f32.mrf.mxu0
      %v2491 = vpop.f32.mrf.mxu0
      %v2492 = vadd.f32 0.0, %v2491
      %v2493 = vpop.f32.mrf.mxu0
      %2494 = vmatprep.mubr.bf16.mxu0 0
      %2495 = vmatmul.mubr.bf16.gmra.mxu0 %v2440
      %v2496 = vpop.f32.mrf.mxu0
      %v2497 = vadd.f32 0.0, %v2496
      %v2498 = vpop.f32.mrf.mxu0
      %v2499 = vpop.f32.mrf.mxu0
      %v2500 = vadd.f32 0.0, %v2499
      %v2501 = vpop.f32.mrf.mxu0
      %2502 = vmatprep.mubr.bf16.mxu0 0
      %2503 = vmatmul.mubr.bf16.gmra.mxu0 %v2443
      %v2504 = vpop.f32.mrf.mxu0
      %v2505 = vadd.f32 0.0, %v2504
      %v2506 = vpop.f32.mrf.mxu0
      %v2507 = vpop.f32.mrf.mxu0
      %v2508 = vadd.f32 0.0, %v2507
      %v2509 = vpop.f32.mrf.mxu0
      %2510 = vmatprep.mubr.bf16.mxu0 0
      %2511 = vmatmul.mubr.bf16.gmra.mxu0 %v2446
      %v2512 = vpop.f32.mrf.mxu0
      %v2513 = vadd.f32 0.0, %v2512
      %v2514 = vpop.f32.mrf.mxu0
      %v2515 = vpop.f32.mrf.mxu0
      %v2516 = vadd.f32 0.0, %v2515
      %v2517 = vpop.f32.mrf.mxu0
      %2518 = vmatprep.mubr.bf16.mxu0 0
      %2519 = vmatmul.mubr.bf16.gmra.mxu0 %v2449
      %v2520 = vpop.f32.mrf.mxu0
      %v2521 = vadd.f32 0.0, %v2520
      %v2522 = vpop.f32.mrf.mxu0
      %v2523 = vpop.f32.mrf.mxu0
      %v2524 = vadd.f32 0.0, %v2523
      %v2525 = vpop.f32.mrf.mxu0
      %2526 = vdwg.mxu0
      %v2527 = vadd.f32 %v2391, %v2489
      %v2528 = vadd.f32 %v2392, %v2492
      %v2529 = vadd.f32 %v2393, %v2497
      %v2530 = vadd.f32 %v2394, %v2500
      %v2531 = vadd.f32 %v2395, %v2505
      %v2532 = vadd.f32 %v2396, %v2508
      %v2533 = vadd.f32 %v2397, %v2513
      %v2534 = vadd.f32 %v2398, %v2516
      %v2535 = vadd.f32 %v2399, %v2521
      %v2536 = vadd.f32 %v2400, %v2524
      %s2537 = scalar_lea.vmem %s3, 34
      %v2538 = vld [vmem:[%s2537] sm:$0x3]
      %v2539 = vrot.slane %v1527, 3
      %v2540 = vrot.slane %v1528, 3
      %v2541 = vsel %vm1378, %v2539, %v2540
      %v2542 = vrot.slane %v1529, 3
      %v2543 = vsel %vm1378, %v2540, %v2542
      %v2544 = vrot.slane %v1530, 3
      %v2545 = vsel %vm1378, %v2542, %v2544
      %v2546 = vrot.slane %v2287, 3
      %v2547 = vsel %vm1378, %v2544, %v2546
      %v2548 = vrot.slane %v2288, 3
      %v2549 = vsel %vm1378, %v2546, %v2548
      %v2551 = vsel %vm433, %v2541, 0
      %v2554 = vsel %vm433, %v2543, 0
      %v2557 = vsel %vm433, %v2545, 0
      %v2560 = vsel %vm433, %v2547, 0
      %v2563 = vsel %vm433, %v2549, 0
      %v2566 = vsel %vm449, %v2538, 0
      %2568 = vmatprep.subr.bf16.mxu0 0
      %2569 = vmatpush1.bf16.msra.mxu0 0
      %2570 = vmatprep.subr.bf16.mxu0 0
      %2571 = vmatpush1.bf16.msra.mxu0 0
      %2572 = vmatprep.subr.bf16.mxu0 0
      %2573 = vmatpush1.bf16.msra.mxu0 0
      %2574 = vmatprep.subr.bf16.mxu0 0
      %2575 = vmatpush1.bf16.msra.mxu0 0
      %2576 = vmatprep.subr.bf16.mxu0 0
      %2577 = vmatpush1.bf16.msra.mxu0 0
      %2578 = vmatprep.subr.bf16.mxu0 0
      %2579 = vmatpush1.bf16.msra.mxu0 0
      %2580 = vmatprep.subr.bf16.mxu0 0
      %2581 = vmatpush1.bf16.msra.mxu0 0
      %2582 = vmatprep.subr.bf16.mxu0 0
      %2583 = vmatpush1.bf16.msra.mxu0 %v2566
      %2584 = vmatprep.subr.bf16.mxu0 0
      %2585 = vmatpush2.bf16.msra.mxu0 0
      %2586 = vmatprep.subr.bf16.mxu0 0
      %2587 = vmatpush2.bf16.msra.mxu0 0
      %2588 = vmatprep.subr.bf16.mxu0 0
      %2589 = vmatpush2.bf16.msra.mxu0 0
      %2590 = vmatprep.subr.bf16.mxu0 0
      %2591 = vmatpush2.bf16.msra.mxu0 0
      %2592 = vmatprep.subr.bf16.mxu0 0
      %2593 = vmatpush2.bf16.msra.mxu0 0
      %2594 = vmatprep.subr.bf16.mxu0 0
      %2595 = vmatpush2.bf16.msra.mxu0 0
      %2596 = vmatprep.subr.bf16.mxu0 0
      %2597 = vmatpush2.bf16.msra.mxu0 0
      %2598 = vmatprep.subr.bf16.mxu0 0
      %2599 = vmatpush2.bf16.msra.mxu0 0
      %2600 = vmatprep.mubr.bf16.mxu0 0
      %2601 = vmatmul.mubr.bf16.gmra.mxu0 %v2551
      %v2602 = vpop.f32.mrf.mxu0
      %v2603 = vadd.f32 0.0, %v2602
      %v2604 = vpop.f32.mrf.mxu0
      %v2605 = vpop.f32.mrf.mxu0
      %v2606 = vadd.f32 0.0, %v2605
      %v2607 = vpop.f32.mrf.mxu0
      %2608 = vmatprep.mubr.bf16.mxu0 0
      %2609 = vmatmul.mubr.bf16.gmra.mxu0 %v2554
      %v2610 = vpop.f32.mrf.mxu0
      %v2611 = vadd.f32 0.0, %v2610
      %v2612 = vpop.f32.mrf.mxu0
      %v2613 = vpop.f32.mrf.mxu0
      %v2614 = vadd.f32 0.0, %v2613
      %v2615 = vpop.f32.mrf.mxu0
      %2616 = vmatprep.mubr.bf16.mxu0 0
      %2617 = vmatmul.mubr.bf16.gmra.mxu0 %v2557
      %v2618 = vpop.f32.mrf.mxu0
      %v2619 = vadd.f32 0.0, %v2618
      %v2620 = vpop.f32.mrf.mxu0
      %v2621 = vpop.f32.mrf.mxu0
      %v2622 = vadd.f32 0.0, %v2621
      %v2623 = vpop.f32.mrf.mxu0
      %2624 = vmatprep.mubr.bf16.mxu0 0
      %2625 = vmatmul.mubr.bf16.gmra.mxu0 %v2560
      %v2626 = vpop.f32.mrf.mxu0
      %v2627 = vadd.f32 0.0, %v2626
      %v2628 = vpop.f32.mrf.mxu0
      %v2629 = vpop.f32.mrf.mxu0
      %v2630 = vadd.f32 0.0, %v2629
      %v2631 = vpop.f32.mrf.mxu0
      %2632 = vmatprep.mubr.bf16.mxu0 0
      %2633 = vmatmul.mubr.bf16.gmra.mxu0 %v2563
      %v2634 = vpop.f32.mrf.mxu0
      %v2635 = vadd.f32 0.0, %v2634
      %v2636 = vpop.f32.mrf.mxu0
      %v2637 = vpop.f32.mrf.mxu0
      %v2638 = vadd.f32 0.0, %v2637
      %v2639 = vpop.f32.mrf.mxu0
      %2640 = vdwg.mxu0
      %v2641 = vadd.f32 %v2527, %v2603
      %v2642 = vadd.f32 %v2528, %v2606
      %v2643 = vadd.f32 %v2529, %v2611
      %v2644 = vadd.f32 %v2530, %v2614
      %v2645 = vadd.f32 %v2531, %v2619
      %v2646 = vadd.f32 %v2532, %v2622
      %v2647 = vadd.f32 %v2533, %v2627
      %v2648 = vadd.f32 %v2534, %v2630
      %v2649 = vadd.f32 %v2535, %v2635
      %v2650 = vadd.f32 %v2536, %v2638
      %v2651 = vld [vmem:[%s332] sm:$0xf]
      %v2652 = vld [vmem:[%s332 + $0x4] sm:$0xf]
      %v2653 = vld [vmem:[%s332 + $0x8] sm:$0xf]
      %v2654 = vld [vmem:[%s332 + $0xc] sm:$0xf]
      %v2655 = vld [vmem:[%s332 + $0x10] sm:$0xf]
      %v2656 = vld [vmem:[%s332 + $0x14] sm:$0xf]
      %v2657 = vld [vmem:[%s332 + $0x18] sm:$0xf]
      %v2658 = vld [vmem:[%s332 + $0x1c] sm:$0xf]
      %v2659 = vld [vmem:[%s332 + $0x20] sm:$0xf]
      %v2660 = vld [vmem:[%s332 + $0x24] sm:$0xf]
      %v2661 = vld [vmem:[%s332 + $0x28] sm:$0xf]
      %v2662 = vld [vmem:[%s332 + $0x2c] sm:$0xf]
      %v2663 = vld [vmem:[%s332 + $0x30] sm:$0xf]
      %s2664 = scalar_lea.vmem %s3, 36
      %v2665 = vld [vmem:[%s2664] sm:$0x3]
      %v2676 = vunpack.c.l.b16 %v2651
      %v2677 = vunpack.c.l.b16 %v2652
      %v2678 = vunpack.c.l.b16 %v2653
      %v2679 = vunpack.c.l.b16 %v2654
      %v2680 = vunpack.c.l.b16 %v2655
      %v2681 = vunpack.c.l.b16 %v2656
      %v2682 = vunpack.c.l.b16 %v2657
      %v2683 = vunpack.c.l.b16 %v2658
      %v2684 = vunpack.c.l.b16 %v2659
      %v2685 = vunpack.c.l.b16 %v2660
      %v2686 = vpack.c.b16 %v2677, %v2676
      %v2687 = vpack.c.b16 %v2679, %v2678
      %v2688 = vpack.c.b16 %v2681, %v2680
      %v2689 = vpack.c.b16 %v2683, %v2682
      %v2690 = vpack.c.b16 %v2685, %v2684
      %v2692 = vsel %vm433, %v2686, 0
      %v2695 = vsel %vm433, %v2687, 0
      %v2698 = vsel %vm433, %v2688, 0
      %v2701 = vsel %vm433, %v2689, 0
      %v2704 = vsel %vm433, %v2690, 0
      %v2707 = vsel %vm449, %v2665, 0
      %2709 = vmatprep.subr.bf16.mxu0 0
      %2710 = vmatpush1.bf16.msra.mxu0 0
      %2711 = vmatprep.subr.bf16.mxu0 0
      %2712 = vmatpush1.bf16.msra.mxu0 0
      %2713 = vmatprep.subr.bf16.mxu0 0
      %2714 = vmatpush1.bf16.msra.mxu0 0
      %2715 = vmatprep.subr.bf16.mxu0 0
      %2716 = vmatpush1.bf16.msra.mxu0 0
      %2717 = vmatprep.subr.bf16.mxu0 0
      %2718 = vmatpush1.bf16.msra.mxu0 0
      %2719 = vmatprep.subr.bf16.mxu0 0
      %2720 = vmatpush1.bf16.msra.mxu0 0
      %2721 = vmatprep.subr.bf16.mxu0 0
      %2722 = vmatpush1.bf16.msra.mxu0 0
      %2723 = vmatprep.subr.bf16.mxu0 0
      %2724 = vmatpush1.bf16.msra.mxu0 %v2707
      %2725 = vmatprep.subr.bf16.mxu0 0
      %2726 = vmatpush2.bf16.msra.mxu0 0
      %2727 = vmatprep.subr.bf16.mxu0 0
      %2728 = vmatpush2.bf16.msra.mxu0 0
      %2729 = vmatprep.subr.bf16.mxu0 0
      %2730 = vmatpush2.bf16.msra.mxu0 0
      %2731 = vmatprep.subr.bf16.mxu0 0
      %2732 = vmatpush2.bf16.msra.mxu0 0
      %2733 = vmatprep.subr.bf16.mxu0 0
      %2734 = vmatpush2.bf16.msra.mxu0 0
      %2735 = vmatprep.subr.bf16.mxu0 0
      %2736 = vmatpush2.bf16.msra.mxu0 0
      %2737 = vmatprep.subr.bf16.mxu0 0
      %2738 = vmatpush2.bf16.msra.mxu0 0
      %2739 = vmatprep.subr.bf16.mxu0 0
      %2740 = vmatpush2.bf16.msra.mxu0 0
      %2741 = vmatprep.mubr.bf16.mxu0 0
      %2742 = vmatmul.mubr.bf16.gmra.mxu0 %v2692
      %v2743 = vpop.f32.mrf.mxu0
      %v2744 = vadd.f32 0.0, %v2743
      %v2745 = vpop.f32.mrf.mxu0
      %v2746 = vpop.f32.mrf.mxu0
      %v2747 = vadd.f32 0.0, %v2746
      %v2748 = vpop.f32.mrf.mxu0
      %2749 = vmatprep.mubr.bf16.mxu0 0
      %2750 = vmatmul.mubr.bf16.gmra.mxu0 %v2695
      %v2751 = vpop.f32.mrf.mxu0
      %v2752 = vadd.f32 0.0, %v2751
      %v2753 = vpop.f32.mrf.mxu0
      %v2754 = vpop.f32.mrf.mxu0
      %v2755 = vadd.f32 0.0, %v2754
      %v2756 = vpop.f32.mrf.mxu0
      %2757 = vmatprep.mubr.bf16.mxu0 0
      %2758 = vmatmul.mubr.bf16.gmra.mxu0 %v2698
      %v2759 = vpop.f32.mrf.mxu0
      %v2760 = vadd.f32 0.0, %v2759
      %v2761 = vpop.f32.mrf.mxu0
      %v2762 = vpop.f32.mrf.mxu0
      %v2763 = vadd.f32 0.0, %v2762
      %v2764 = vpop.f32.mrf.mxu0
      %2765 = vmatprep.mubr.bf16.mxu0 0
      %2766 = vmatmul.mubr.bf16.gmra.mxu0 %v2701
      %v2767 = vpop.f32.mrf.mxu0
      %v2768 = vadd.f32 0.0, %v2767
      %v2769 = vpop.f32.mrf.mxu0
      %v2770 = vpop.f32.mrf.mxu0
      %v2771 = vadd.f32 0.0, %v2770
      %v2772 = vpop.f32.mrf.mxu0
      %2773 = vmatprep.mubr.bf16.mxu0 0
      %2774 = vmatmul.mubr.bf16.gmra.mxu0 %v2704
      %v2775 = vpop.f32.mrf.mxu0
      %v2776 = vadd.f32 0.0, %v2775
      %v2777 = vpop.f32.mrf.mxu0
      %v2778 = vpop.f32.mrf.mxu0
      %v2779 = vadd.f32 0.0, %v2778
      %v2780 = vpop.f32.mrf.mxu0
      %2781 = vdwg.mxu0
      %v2782 = vadd.f32 %v2641, %v2744
      %v2783 = vadd.f32 %v2642, %v2747
      %v2784 = vadd.f32 %v2643, %v2752
      %v2785 = vadd.f32 %v2644, %v2755
      %v2786 = vadd.f32 %v2645, %v2760
      %v2787 = vadd.f32 %v2646, %v2763
      %v2788 = vadd.f32 %v2647, %v2768
      %v2789 = vadd.f32 %v2648, %v2771
      %v2790 = vadd.f32 %v2649, %v2776
      %v2791 = vadd.f32 %v2650, %v2779
      %s2792 = scalar_lea.vmem %s3, 38
      %v2793 = vld [vmem:[%s2792] sm:$0x3]
      %v2795 = vunpack.c.l.b16 %v2661
      %v2796 = vpack.c.b16 %v2795, %v2795
      %v2797 = vshrl.u32 %v2686, 16
      %v2799 = vshll.u32 %v2686, 16
      %v2801 = vrot.slane %v2799, 1
      %v2802 = vor.u32 %v2797, %v2801
      %v2803 = vshll.u32 %v2687, 16
      %v2805 = vrot.slane %v2803, 1
      %v2806 = vsel %vm388, %v2802, %v2805
      %v2807 = vshrl.u32 %v2687, 16
      %v2809 = vor.u32 %v2807, %v2805
      %v2810 = vshll.u32 %v2688, 16
      %v2812 = vrot.slane %v2810, 1
      %v2813 = vsel %vm388, %v2809, %v2812
      %v2814 = vshrl.u32 %v2688, 16
      %v2816 = vor.u32 %v2814, %v2812
      %v2817 = vshll.u32 %v2689, 16
      %v2819 = vrot.slane %v2817, 1
      %v2820 = vsel %vm388, %v2816, %v2819
      %v2821 = vshrl.u32 %v2689, 16
      %v2823 = vor.u32 %v2821, %v2819
      %v2824 = vshll.u32 %v2690, 16
      %v2826 = vrot.slane %v2824, 1
      %v2827 = vsel %vm388, %v2823, %v2826
      %v2828 = vshrl.u32 %v2690, 16
      %v2830 = vor.u32 %v2828, %v2826
      %v2832 = vshll.u32 %v2796, 16
      %v2834 = vrot.slane %v2832, 1
      %v2835 = vsel %vm388, %v2830, %v2834
      %v2837 = vsel %vm433, %v2806, 0
      %v2840 = vsel %vm433, %v2813, 0
      %v2843 = vsel %vm433, %v2820, 0
      %v2846 = vsel %vm433, %v2827, 0
      %v2849 = vsel %vm433, %v2835, 0
      %v2852 = vsel %vm449, %v2793, 0
      %2854 = vmatprep.subr.bf16.mxu0 0
      %2855 = vmatpush1.bf16.msra.mxu0 0
      %2856 = vmatprep.subr.bf16.mxu0 0
      %2857 = vmatpush1.bf16.msra.mxu0 0
      %2858 = vmatprep.subr.bf16.mxu0 0
      %2859 = vmatpush1.bf16.msra.mxu0 0
      %2860 = vmatprep.subr.bf16.mxu0 0
      %2861 = vmatpush1.bf16.msra.mxu0 0
      %2862 = vmatprep.subr.bf16.mxu0 0
      %2863 = vmatpush1.bf16.msra.mxu0 0
      %2864 = vmatprep.subr.bf16.mxu0 0
      %2865 = vmatpush1.bf16.msra.mxu0 0
      %2866 = vmatprep.subr.bf16.mxu0 0
      %2867 = vmatpush1.bf16.msra.mxu0 0
      %2868 = vmatprep.subr.bf16.mxu0 0
      %2869 = vmatpush1.bf16.msra.mxu0 %v2852
      %2870 = vmatprep.subr.bf16.mxu0 0
      %2871 = vmatpush2.bf16.msra.mxu0 0
      %2872 = vmatprep.subr.bf16.mxu0 0
      %2873 = vmatpush2.bf16.msra.mxu0 0
      %2874 = vmatprep.subr.bf16.mxu0 0
      %2875 = vmatpush2.bf16.msra.mxu0 0
      %2876 = vmatprep.subr.bf16.mxu0 0
      %2877 = vmatpush2.bf16.msra.mxu0 0
      %2878 = vmatprep.subr.bf16.mxu0 0
      %2879 = vmatpush2.bf16.msra.mxu0 0
      %2880 = vmatprep.subr.bf16.mxu0 0
      %2881 = vmatpush2.bf16.msra.mxu0 0
      %2882 = vmatprep.subr.bf16.mxu0 0
      %2883 = vmatpush2.bf16.msra.mxu0 0
      %2884 = vmatprep.subr.bf16.mxu0 0
      %2885 = vmatpush2.bf16.msra.mxu0 0
      %2886 = vmatprep.mubr.bf16.mxu0 0
      %2887 = vmatmul.mubr.bf16.gmra.mxu0 %v2837
      %v2888 = vpop.f32.mrf.mxu0
      %v2889 = vadd.f32 0.0, %v2888
      %v2890 = vpop.f32.mrf.mxu0
      %v2891 = vpop.f32.mrf.mxu0
      %v2892 = vadd.f32 0.0, %v2891
      %v2893 = vpop.f32.mrf.mxu0
      %2894 = vmatprep.mubr.bf16.mxu0 0
      %2895 = vmatmul.mubr.bf16.gmra.mxu0 %v2840
      %v2896 = vpop.f32.mrf.mxu0
      %v2897 = vadd.f32 0.0, %v2896
      %v2898 = vpop.f32.mrf.mxu0
      %v2899 = vpop.f32.mrf.mxu0
      %v2900 = vadd.f32 0.0, %v2899
      %v2901 = vpop.f32.mrf.mxu0
      %2902 = vmatprep.mubr.bf16.mxu0 0
      %2903 = vmatmul.mubr.bf16.gmra.mxu0 %v2843
      %v2904 = vpop.f32.mrf.mxu0
      %v2905 = vadd.f32 0.0, %v2904
      %v2906 = vpop.f32.mrf.mxu0
      %v2907 = vpop.f32.mrf.mxu0
      %v2908 = vadd.f32 0.0, %v2907
      %v2909 = vpop.f32.mrf.mxu0
      %2910 = vmatprep.mubr.bf16.mxu0 0
      %2911 = vmatmul.mubr.bf16.gmra.mxu0 %v2846
      %v2912 = vpop.f32.mrf.mxu0
      %v2913 = vadd.f32 0.0, %v2912
      %v2914 = vpop.f32.mrf.mxu0
      %v2915 = vpop.f32.mrf.mxu0
      %v2916 = vadd.f32 0.0, %v2915
      %v2917 = vpop.f32.mrf.mxu0
      %2918 = vmatprep.mubr.bf16.mxu0 0
      %2919 = vmatmul.mubr.bf16.gmra.mxu0 %v2849
      %v2920 = vpop.f32.mrf.mxu0
      %v2921 = vadd.f32 0.0, %v2920
      %v2922 = vpop.f32.mrf.mxu0
      %v2923 = vpop.f32.mrf.mxu0
      %v2924 = vadd.f32 0.0, %v2923
      %v2925 = vpop.f32.mrf.mxu0
      %2926 = vdwg.mxu0
      %v2927 = vadd.f32 %v2782, %v2889
      %v2928 = vadd.f32 %v2783, %v2892
      %v2929 = vadd.f32 %v2784, %v2897
      %v2930 = vadd.f32 %v2785, %v2900
      %v2931 = vadd.f32 %v2786, %v2905
      %v2932 = vadd.f32 %v2787, %v2908
      %v2933 = vadd.f32 %v2788, %v2913
      %v2934 = vadd.f32 %v2789, %v2916
      %v2935 = vadd.f32 %v2790, %v2921
      %v2936 = vadd.f32 %v2791, %v2924
      %s2937 = scalar_lea.vmem %s3, 40
      %v2938 = vld [vmem:[%s2937] sm:$0x3]
      %v2939 = vrot.slane %v2686, 1
      %v2940 = vrot.slane %v2687, 1
      %v2941 = vsel %vm614, %v2939, %v2940
      %v2942 = vrot.slane %v2688, 1
      %v2943 = vsel %vm614, %v2940, %v2942
      %v2944 = vrot.slane %v2689, 1
      %v2945 = vsel %vm614, %v2942, %v2944
      %v2946 = vrot.slane %v2690, 1
      %v2947 = vsel %vm614, %v2944, %v2946
      %v2948 = vrot.slane %v2796, 1
      %v2949 = vsel %vm614, %v2946, %v2948
      %v2951 = vsel %vm433, %v2941, 0
      %v2954 = vsel %vm433, %v2943, 0
      %v2957 = vsel %vm433, %v2945, 0
      %v2960 = vsel %vm433, %v2947, 0
      %v2963 = vsel %vm433, %v2949, 0
      %v2966 = vsel %vm449, %v2938, 0
      %2968 = vmatprep.subr.bf16.mxu0 0
      %2969 = vmatpush1.bf16.msra.mxu0 0
      %2970 = vmatprep.subr.bf16.mxu0 0
      %2971 = vmatpush1.bf16.msra.mxu0 0
      %2972 = vmatprep.subr.bf16.mxu0 0
      %2973 = vmatpush1.bf16.msra.mxu0 0
      %2974 = vmatprep.subr.bf16.mxu0 0
      %2975 = vmatpush1.bf16.msra.mxu0 0
      %2976 = vmatprep.subr.bf16.mxu0 0
      %2977 = vmatpush1.bf16.msra.mxu0 0
      %2978 = vmatprep.subr.bf16.mxu0 0
      %2979 = vmatpush1.bf16.msra.mxu0 0
      %2980 = vmatprep.subr.bf16.mxu0 0
      %2981 = vmatpush1.bf16.msra.mxu0 0
      %2982 = vmatprep.subr.bf16.mxu0 0
      %2983 = vmatpush1.bf16.msra.mxu0 %v2966
      %2984 = vmatprep.subr.bf16.mxu0 0
      %2985 = vmatpush2.bf16.msra.mxu0 0
      %2986 = vmatprep.subr.bf16.mxu0 0
      %2987 = vmatpush2.bf16.msra.mxu0 0
      %2988 = vmatprep.subr.bf16.mxu0 0
      %2989 = vmatpush2.bf16.msra.mxu0 0
      %2990 = vmatprep.subr.bf16.mxu0 0
      %2991 = vmatpush2.bf16.msra.mxu0 0
      %2992 = vmatprep.subr.bf16.mxu0 0
      %2993 = vmatpush2.bf16.msra.mxu0 0
      %2994 = vmatprep.subr.bf16.mxu0 0
      %2995 = vmatpush2.bf16.msra.mxu0 0
      %2996 = vmatprep.subr.bf16.mxu0 0
      %2997 = vmatpush2.bf16.msra.mxu0 0
      %2998 = vmatprep.subr.bf16.mxu0 0
      %2999 = vmatpush2.bf16.msra.mxu0 0
      %3000 = vmatprep.mubr.bf16.mxu0 0
      %3001 = vmatmul.mubr.bf16.gmra.mxu0 %v2951
      %v3002 = vpop.f32.mrf.mxu0
      %v3003 = vadd.f32 0.0, %v3002
      %v3004 = vpop.f32.mrf.mxu0
      %v3005 = vpop.f32.mrf.mxu0
      %v3006 = vadd.f32 0.0, %v3005
      %v3007 = vpop.f32.mrf.mxu0
      %3008 = vmatprep.mubr.bf16.mxu0 0
      %3009 = vmatmul.mubr.bf16.gmra.mxu0 %v2954
      %v3010 = vpop.f32.mrf.mxu0
      %v3011 = vadd.f32 0.0, %v3010
      %v3012 = vpop.f32.mrf.mxu0
      %v3013 = vpop.f32.mrf.mxu0
      %v3014 = vadd.f32 0.0, %v3013
      %v3015 = vpop.f32.mrf.mxu0
      %3016 = vmatprep.mubr.bf16.mxu0 0
      %3017 = vmatmul.mubr.bf16.gmra.mxu0 %v2957
      %v3018 = vpop.f32.mrf.mxu0
      %v3019 = vadd.f32 0.0, %v3018
      %v3020 = vpop.f32.mrf.mxu0
      %v3021 = vpop.f32.mrf.mxu0
      %v3022 = vadd.f32 0.0, %v3021
      %v3023 = vpop.f32.mrf.mxu0
      %3024 = vmatprep.mubr.bf16.mxu0 0
      %3025 = vmatmul.mubr.bf16.gmra.mxu0 %v2960
      %v3026 = vpop.f32.mrf.mxu0
      %v3027 = vadd.f32 0.0, %v3026
      %v3028 = vpop.f32.mrf.mxu0
      %v3029 = vpop.f32.mrf.mxu0
      %v3030 = vadd.f32 0.0, %v3029
      %v3031 = vpop.f32.mrf.mxu0
      %3032 = vmatprep.mubr.bf16.mxu0 0
      %3033 = vmatmul.mubr.bf16.gmra.mxu0 %v2963
      %v3034 = vpop.f32.mrf.mxu0
      %v3035 = vadd.f32 0.0, %v3034
      %v3036 = vpop.f32.mrf.mxu0
      %v3037 = vpop.f32.mrf.mxu0
      %v3038 = vadd.f32 0.0, %v3037
      %v3039 = vpop.f32.mrf.mxu0
      %3040 = vdwg.mxu0
      %v3041 = vadd.f32 %v2927, %v3003
      %v3042 = vadd.f32 %v2928, %v3006
      %v3043 = vadd.f32 %v2929, %v3011
      %v3044 = vadd.f32 %v2930, %v3014
      %v3045 = vadd.f32 %v2931, %v3019
      %v3046 = vadd.f32 %v2932, %v3022
      %v3047 = vadd.f32 %v2933, %v3027
      %v3048 = vadd.f32 %v2934, %v3030
      %v3049 = vadd.f32 %v2935, %v3035
      %v3050 = vadd.f32 %v2936, %v3038
      %s3051 = scalar_lea.vmem %s3, 42
      %v3052 = vld [vmem:[%s3051] sm:$0x3]
      %v3054 = vunpack.c.l.b16 %v2662
      %v3055 = vpack.c.b16 %v2678, %v2677
      %v3056 = vpack.c.b16 %v2680, %v2679
      %v3057 = vpack.c.b16 %v2682, %v2681
      %v3058 = vpack.c.b16 %v2684, %v2683
      %v3059 = vpack.c.b16 %v2795, %v2685
      %v3060 = vpack.c.b16 %v3054, %v3054
      %v3061 = vrot.slane %v3055, 1
      %v3062 = vrot.slane %v3056, 1
      %v3063 = vsel %vm614, %v3061, %v3062
      %v3064 = vrot.slane %v3057, 1
      %v3065 = vsel %vm614, %v3062, %v3064
      %v3066 = vrot.slane %v3058, 1
      %v3067 = vsel %vm614, %v3064, %v3066
      %v3068 = vrot.slane %v3059, 1
      %v3069 = vsel %vm614, %v3066, %v3068
      %v3070 = vrot.slane %v3060, 1
      %v3071 = vsel %vm614, %v3068, %v3070
      %v3073 = vsel %vm433, %v3063, 0
      %v3076 = vsel %vm433, %v3065, 0
      %v3079 = vsel %vm433, %v3067, 0
      %v3082 = vsel %vm433, %v3069, 0
      %v3085 = vsel %vm433, %v3071, 0
      %v3088 = vsel %vm449, %v3052, 0
      %3090 = vmatprep.subr.bf16.mxu0 0
      %3091 = vmatpush1.bf16.msra.mxu0 0
      %3092 = vmatprep.subr.bf16.mxu0 0
      %3093 = vmatpush1.bf16.msra.mxu0 0
      %3094 = vmatprep.subr.bf16.mxu0 0
      %3095 = vmatpush1.bf16.msra.mxu0 0
      %3096 = vmatprep.subr.bf16.mxu0 0
      %3097 = vmatpush1.bf16.msra.mxu0 0
      %3098 = vmatprep.subr.bf16.mxu0 0
      %3099 = vmatpush1.bf16.msra.mxu0 0
      %3100 = vmatprep.subr.bf16.mxu0 0
      %3101 = vmatpush1.bf16.msra.mxu0 0
      %3102 = vmatprep.subr.bf16.mxu0 0
      %3103 = vmatpush1.bf16.msra.mxu0 0
      %3104 = vmatprep.subr.bf16.mxu0 0
      %3105 = vmatpush1.bf16.msra.mxu0 %v3088
      %3106 = vmatprep.subr.bf16.mxu0 0
      %3107 = vmatpush2.bf16.msra.mxu0 0
      %3108 = vmatprep.subr.bf16.mxu0 0
      %3109 = vmatpush2.bf16.msra.mxu0 0
      %3110 = vmatprep.subr.bf16.mxu0 0
      %3111 = vmatpush2.bf16.msra.mxu0 0
      %3112 = vmatprep.subr.bf16.mxu0 0
      %3113 = vmatpush2.bf16.msra.mxu0 0
      %3114 = vmatprep.subr.bf16.mxu0 0
      %3115 = vmatpush2.bf16.msra.mxu0 0
      %3116 = vmatprep.subr.bf16.mxu0 0
      %3117 = vmatpush2.bf16.msra.mxu0 0
      %3118 = vmatprep.subr.bf16.mxu0 0
      %3119 = vmatpush2.bf16.msra.mxu0 0
      %3120 = vmatprep.subr.bf16.mxu0 0
      %3121 = vmatpush2.bf16.msra.mxu0 0
      %3122 = vmatprep.mubr.bf16.mxu0 0
      %3123 = vmatmul.mubr.bf16.gmra.mxu0 %v3073
      %v3124 = vpop.f32.mrf.mxu0
      %v3125 = vadd.f32 0.0, %v3124
      %v3126 = vpop.f32.mrf.mxu0
      %v3127 = vpop.f32.mrf.mxu0
      %v3128 = vadd.f32 0.0, %v3127
      %v3129 = vpop.f32.mrf.mxu0
      %3130 = vmatprep.mubr.bf16.mxu0 0
      %3131 = vmatmul.mubr.bf16.gmra.mxu0 %v3076
      %v3132 = vpop.f32.mrf.mxu0
      %v3133 = vadd.f32 0.0, %v3132
      %v3134 = vpop.f32.mrf.mxu0
      %v3135 = vpop.f32.mrf.mxu0
      %v3136 = vadd.f32 0.0, %v3135
      %v3137 = vpop.f32.mrf.mxu0
      %3138 = vmatprep.mubr.bf16.mxu0 0
      %3139 = vmatmul.mubr.bf16.gmra.mxu0 %v3079
      %v3140 = vpop.f32.mrf.mxu0
      %v3141 = vadd.f32 0.0, %v3140
      %v3142 = vpop.f32.mrf.mxu0
      %v3143 = vpop.f32.mrf.mxu0
      %v3144 = vadd.f32 0.0, %v3143
      %v3145 = vpop.f32.mrf.mxu0
      %3146 = vmatprep.mubr.bf16.mxu0 0
      %3147 = vmatmul.mubr.bf16.gmra.mxu0 %v3082
      %v3148 = vpop.f32.mrf.mxu0
      %v3149 = vadd.f32 0.0, %v3148
      %v3150 = vpop.f32.mrf.mxu0
      %v3151 = vpop.f32.mrf.mxu0
      %v3152 = vadd.f32 0.0, %v3151
      %v3153 = vpop.f32.mrf.mxu0
      %3154 = vmatprep.mubr.bf16.mxu0 0
      %3155 = vmatmul.mubr.bf16.gmra.mxu0 %v3085
      %v3156 = vpop.f32.mrf.mxu0
      %v3157 = vadd.f32 0.0, %v3156
      %v3158 = vpop.f32.mrf.mxu0
      %v3159 = vpop.f32.mrf.mxu0
      %v3160 = vadd.f32 0.0, %v3159
      %v3161 = vpop.f32.mrf.mxu0
      %3162 = vdwg.mxu0
      %v3163 = vadd.f32 %v3041, %v3125
      %v3164 = vadd.f32 %v3042, %v3128
      %v3165 = vadd.f32 %v3043, %v3133
      %v3166 = vadd.f32 %v3044, %v3136
      %v3167 = vadd.f32 %v3045, %v3141
      %v3168 = vadd.f32 %v3046, %v3144
      %v3169 = vadd.f32 %v3047, %v3149
      %v3170 = vadd.f32 %v3048, %v3152
      %v3171 = vadd.f32 %v3049, %v3157
      %v3172 = vadd.f32 %v3050, %v3160
      %s3173 = scalar_lea.vmem %s3, 44
      %v3174 = vld [vmem:[%s3173] sm:$0x3]
      %v3176 = vshrl.u32 %v3055, 16
      %v3178 = vrot.slane %v3176, 1
      %v3179 = vshll.u32 %v3055, 16
      %v3181 = vrot.slane %v3179, 2
      %v3182 = vor.u32 %v3178, %v3181
      %v3184 = vshrl.u32 %v3056, 16
      %v3186 = vrot.slane %v3184, 1
      %v3187 = vshll.u32 %v3056, 16
      %v3189 = vrot.slane %v3187, 2
      %v3190 = vor.u32 %v3186, %v3189
      %v3191 = vsel %vm851, %v3182, %v3190
      %v3193 = vshrl.u32 %v3057, 16
      %v3195 = vrot.slane %v3193, 1
      %v3196 = vshll.u32 %v3057, 16
      %v3198 = vrot.slane %v3196, 2
      %v3199 = vor.u32 %v3195, %v3198
      %v3200 = vsel %vm851, %v3190, %v3199
      %v3202 = vshrl.u32 %v3058, 16
      %v3204 = vrot.slane %v3202, 1
      %v3205 = vshll.u32 %v3058, 16
      %v3207 = vrot.slane %v3205, 2
      %v3208 = vor.u32 %v3204, %v3207
      %v3209 = vsel %vm851, %v3199, %v3208
      %v3211 = vshrl.u32 %v3059, 16
      %v3213 = vrot.slane %v3211, 1
      %v3214 = vshll.u32 %v3059, 16
      %v3216 = vrot.slane %v3214, 2
      %v3217 = vor.u32 %v3213, %v3216
      %v3218 = vsel %vm851, %v3208, %v3217
      %v3220 = vshrl.u32 %v3060, 16
      %v3222 = vrot.slane %v3220, 1
      %v3223 = vshll.u32 %v3060, 16
      %v3225 = vrot.slane %v3223, 2
      %v3226 = vor.u32 %v3222, %v3225
      %v3227 = vsel %vm851, %v3217, %v3226
      %v3229 = vsel %vm433, %v3191, 0
      %v3232 = vsel %vm433, %v3200, 0
      %v3235 = vsel %vm433, %v3209, 0
      %v3238 = vsel %vm433, %v3218, 0
      %v3241 = vsel %vm433, %v3227, 0
      %v3244 = vsel %vm449, %v3174, 0
      %3246 = vmatprep.subr.bf16.mxu0 0
      %3247 = vmatpush1.bf16.msra.mxu0 0
      %3248 = vmatprep.subr.bf16.mxu0 0
      %3249 = vmatpush1.bf16.msra.mxu0 0
      %3250 = vmatprep.subr.bf16.mxu0 0
      %3251 = vmatpush1.bf16.msra.mxu0 0
      %3252 = vmatprep.subr.bf16.mxu0 0
      %3253 = vmatpush1.bf16.msra.mxu0 0
      %3254 = vmatprep.subr.bf16.mxu0 0
      %3255 = vmatpush1.bf16.msra.mxu0 0
      %3256 = vmatprep.subr.bf16.mxu0 0
      %3257 = vmatpush1.bf16.msra.mxu0 0
      %3258 = vmatprep.subr.bf16.mxu0 0
      %3259 = vmatpush1.bf16.msra.mxu0 0
      %3260 = vmatprep.subr.bf16.mxu0 0
      %3261 = vmatpush1.bf16.msra.mxu0 %v3244
      %3262 = vmatprep.subr.bf16.mxu0 0
      %3263 = vmatpush2.bf16.msra.mxu0 0
      %3264 = vmatprep.subr.bf16.mxu0 0
      %3265 = vmatpush2.bf16.msra.mxu0 0
      %3266 = vmatprep.subr.bf16.mxu0 0
      %3267 = vmatpush2.bf16.msra.mxu0 0
      %3268 = vmatprep.subr.bf16.mxu0 0
      %3269 = vmatpush2.bf16.msra.mxu0 0
      %3270 = vmatprep.subr.bf16.mxu0 0
      %3271 = vmatpush2.bf16.msra.mxu0 0
      %3272 = vmatprep.subr.bf16.mxu0 0
      %3273 = vmatpush2.bf16.msra.mxu0 0
      %3274 = vmatprep.subr.bf16.mxu0 0
      %3275 = vmatpush2.bf16.msra.mxu0 0
      %3276 = vmatprep.subr.bf16.mxu0 0
      %3277 = vmatpush2.bf16.msra.mxu0 0
      %3278 = vmatprep.mubr.bf16.mxu0 0
      %3279 = vmatmul.mubr.bf16.gmra.mxu0 %v3229
      %v3280 = vpop.f32.mrf.mxu0
      %v3281 = vadd.f32 0.0, %v3280
      %v3282 = vpop.f32.mrf.mxu0
      %v3283 = vpop.f32.mrf.mxu0
      %v3284 = vadd.f32 0.0, %v3283
      %v3285 = vpop.f32.mrf.mxu0
      %3286 = vmatprep.mubr.bf16.mxu0 0
      %3287 = vmatmul.mubr.bf16.gmra.mxu0 %v3232
      %v3288 = vpop.f32.mrf.mxu0
      %v3289 = vadd.f32 0.0, %v3288
      %v3290 = vpop.f32.mrf.mxu0
      %v3291 = vpop.f32.mrf.mxu0
      %v3292 = vadd.f32 0.0, %v3291
      %v3293 = vpop.f32.mrf.mxu0
      %3294 = vmatprep.mubr.bf16.mxu0 0
      %3295 = vmatmul.mubr.bf16.gmra.mxu0 %v3235
      %v3296 = vpop.f32.mrf.mxu0
      %v3297 = vadd.f32 0.0, %v3296
      %v3298 = vpop.f32.mrf.mxu0
      %v3299 = vpop.f32.mrf.mxu0
      %v3300 = vadd.f32 0.0, %v3299
      %v3301 = vpop.f32.mrf.mxu0
      %3302 = vmatprep.mubr.bf16.mxu0 0
      %3303 = vmatmul.mubr.bf16.gmra.mxu0 %v3238
      %v3304 = vpop.f32.mrf.mxu0
      %v3305 = vadd.f32 0.0, %v3304
      %v3306 = vpop.f32.mrf.mxu0
      %v3307 = vpop.f32.mrf.mxu0
      %v3308 = vadd.f32 0.0, %v3307
      %v3309 = vpop.f32.mrf.mxu0
      %3310 = vmatprep.mubr.bf16.mxu0 0
      %3311 = vmatmul.mubr.bf16.gmra.mxu0 %v3241
      %v3312 = vpop.f32.mrf.mxu0
      %v3313 = vadd.f32 0.0, %v3312
      %v3314 = vpop.f32.mrf.mxu0
      %v3315 = vpop.f32.mrf.mxu0
      %v3316 = vadd.f32 0.0, %v3315
      %v3317 = vpop.f32.mrf.mxu0
      %3318 = vdwg.mxu0
      %v3319 = vadd.f32 %v3163, %v3281
      %v3320 = vadd.f32 %v3164, %v3284
      %v3321 = vadd.f32 %v3165, %v3289
      %v3322 = vadd.f32 %v3166, %v3292
      %v3323 = vadd.f32 %v3167, %v3297
      %v3324 = vadd.f32 %v3168, %v3300
      %v3325 = vadd.f32 %v3169, %v3305
      %v3326 = vadd.f32 %v3170, %v3308
      %v3327 = vadd.f32 %v3171, %v3313
      %v3328 = vadd.f32 %v3172, %v3316
      %s3329 = scalar_lea.vmem %s3, 46
      %v3330 = vld [vmem:[%s3329] sm:$0x3]
      %v3331 = vrot.slane %v3055, 2
      %v3332 = vrot.slane %v3056, 2
      %v3333 = vsel %vm1008, %v3331, %v3332
      %v3334 = vrot.slane %v3057, 2
      %v3335 = vsel %vm1008, %v3332, %v3334
      %v3336 = vrot.slane %v3058, 2
      %v3337 = vsel %vm1008, %v3334, %v3336
      %v3338 = vrot.slane %v3059, 2
      %v3339 = vsel %vm1008, %v3336, %v3338
      %v3340 = vrot.slane %v3060, 2
      %v3341 = vsel %vm1008, %v3338, %v3340
      %v3343 = vsel %vm433, %v3333, 0
      %v3346 = vsel %vm433, %v3335, 0
      %v3349 = vsel %vm433, %v3337, 0
      %v3352 = vsel %vm433, %v3339, 0
      %v3355 = vsel %vm433, %v3341, 0
      %v3358 = vsel %vm449, %v3330, 0
      %3360 = vmatprep.subr.bf16.mxu0 0
      %3361 = vmatpush1.bf16.msra.mxu0 0
      %3362 = vmatprep.subr.bf16.mxu0 0
      %3363 = vmatpush1.bf16.msra.mxu0 0
      %3364 = vmatprep.subr.bf16.mxu0 0
      %3365 = vmatpush1.bf16.msra.mxu0 0
      %3366 = vmatprep.subr.bf16.mxu0 0
      %3367 = vmatpush1.bf16.msra.mxu0 0
      %3368 = vmatprep.subr.bf16.mxu0 0
      %3369 = vmatpush1.bf16.msra.mxu0 0
      %3370 = vmatprep.subr.bf16.mxu0 0
      %3371 = vmatpush1.bf16.msra.mxu0 0
      %3372 = vmatprep.subr.bf16.mxu0 0
      %3373 = vmatpush1.bf16.msra.mxu0 0
      %3374 = vmatprep.subr.bf16.mxu0 0
      %3375 = vmatpush1.bf16.msra.mxu0 %v3358
      %3376 = vmatprep.subr.bf16.mxu0 0
      %3377 = vmatpush2.bf16.msra.mxu0 0
      %3378 = vmatprep.subr.bf16.mxu0 0
      %3379 = vmatpush2.bf16.msra.mxu0 0
      %3380 = vmatprep.subr.bf16.mxu0 0
      %3381 = vmatpush2.bf16.msra.mxu0 0
      %3382 = vmatprep.subr.bf16.mxu0 0
      %3383 = vmatpush2.bf16.msra.mxu0 0
      %3384 = vmatprep.subr.bf16.mxu0 0
      %3385 = vmatpush2.bf16.msra.mxu0 0
      %3386 = vmatprep.subr.bf16.mxu0 0
      %3387 = vmatpush2.bf16.msra.mxu0 0
      %3388 = vmatprep.subr.bf16.mxu0 0
      %3389 = vmatpush2.bf16.msra.mxu0 0
      %3390 = vmatprep.subr.bf16.mxu0 0
      %3391 = vmatpush2.bf16.msra.mxu0 0
      %3392 = vmatprep.mubr.bf16.mxu0 0
      %3393 = vmatmul.mubr.bf16.gmra.mxu0 %v3343
      %v3394 = vpop.f32.mrf.mxu0
      %v3395 = vadd.f32 0.0, %v3394
      %v3396 = vpop.f32.mrf.mxu0
      %v3397 = vpop.f32.mrf.mxu0
      %v3398 = vadd.f32 0.0, %v3397
      %v3399 = vpop.f32.mrf.mxu0
      %3400 = vmatprep.mubr.bf16.mxu0 0
      %3401 = vmatmul.mubr.bf16.gmra.mxu0 %v3346
      %v3402 = vpop.f32.mrf.mxu0
      %v3403 = vadd.f32 0.0, %v3402
      %v3404 = vpop.f32.mrf.mxu0
      %v3405 = vpop.f32.mrf.mxu0
      %v3406 = vadd.f32 0.0, %v3405
      %v3407 = vpop.f32.mrf.mxu0
      %3408 = vmatprep.mubr.bf16.mxu0 0
      %3409 = vmatmul.mubr.bf16.gmra.mxu0 %v3349
      %v3410 = vpop.f32.mrf.mxu0
      %v3411 = vadd.f32 0.0, %v3410
      %v3412 = vpop.f32.mrf.mxu0
      %v3413 = vpop.f32.mrf.mxu0
      %v3414 = vadd.f32 0.0, %v3413
      %v3415 = vpop.f32.mrf.mxu0
      %3416 = vmatprep.mubr.bf16.mxu0 0
      %3417 = vmatmul.mubr.bf16.gmra.mxu0 %v3352
      %v3418 = vpop.f32.mrf.mxu0
      %v3419 = vadd.f32 0.0, %v3418
      %v3420 = vpop.f32.mrf.mxu0
      %v3421 = vpop.f32.mrf.mxu0
      %v3422 = vadd.f32 0.0, %v3421
      %v3423 = vpop.f32.mrf.mxu0
      %3424 = vmatprep.mubr.bf16.mxu0 0
      %3425 = vmatmul.mubr.bf16.gmra.mxu0 %v3355
      %v3426 = vpop.f32.mrf.mxu0
      %v3427 = vadd.f32 0.0, %v3426
      %v3428 = vpop.f32.mrf.mxu0
      %v3429 = vpop.f32.mrf.mxu0
      %v3430 = vadd.f32 0.0, %v3429
      %v3431 = vpop.f32.mrf.mxu0
      %3432 = vdwg.mxu0
      %v3433 = vadd.f32 %v3319, %v3395
      %v3434 = vadd.f32 %v3320, %v3398
      %v3435 = vadd.f32 %v3321, %v3403
      %v3436 = vadd.f32 %v3322, %v3406
      %v3437 = vadd.f32 %v3323, %v3411
      %v3438 = vadd.f32 %v3324, %v3414
      %v3439 = vadd.f32 %v3325, %v3419
      %v3440 = vadd.f32 %v3326, %v3422
      %v3441 = vadd.f32 %v3327, %v3427
      %v3442 = vadd.f32 %v3328, %v3430
      %s3443 = scalar_lea.vmem %s3, 48
      %v3444 = vld [vmem:[%s3443] sm:$0x3]
      %v3446 = vunpack.c.l.b16 %v2663
      %v3447 = vpack.c.b16 %v3054, %v2795
      %v3448 = vpack.c.b16 %v3446, %v3446
      %v3449 = vrot.slane %v2687, 2
      %v3450 = vrot.slane %v2688, 2
      %v3451 = vsel %vm1008, %v3449, %v3450
      %v3452 = vrot.slane %v2689, 2
      %v3453 = vsel %vm1008, %v3450, %v3452
      %v3454 = vrot.slane %v2690, 2
      %v3455 = vsel %vm1008, %v3452, %v3454
      %v3456 = vrot.slane %v3447, 2
      %v3457 = vsel %vm1008, %v3454, %v3456
      %v3458 = vrot.slane %v3448, 2
      %v3459 = vsel %vm1008, %v3456, %v3458
      %v3461 = vsel %vm433, %v3451, 0
      %v3464 = vsel %vm433, %v3453, 0
      %v3467 = vsel %vm433, %v3455, 0
      %v3470 = vsel %vm433, %v3457, 0
      %v3473 = vsel %vm433, %v3459, 0
      %v3476 = vsel %vm449, %v3444, 0
      %3478 = vmatprep.subr.bf16.mxu0 0
      %3479 = vmatpush1.bf16.msra.mxu0 0
      %3480 = vmatprep.subr.bf16.mxu0 0
      %3481 = vmatpush1.bf16.msra.mxu0 0
      %3482 = vmatprep.subr.bf16.mxu0 0
      %3483 = vmatpush1.bf16.msra.mxu0 0
      %3484 = vmatprep.subr.bf16.mxu0 0
      %3485 = vmatpush1.bf16.msra.mxu0 0
      %3486 = vmatprep.subr.bf16.mxu0 0
      %3487 = vmatpush1.bf16.msra.mxu0 0
      %3488 = vmatprep.subr.bf16.mxu0 0
      %3489 = vmatpush1.bf16.msra.mxu0 0
      %3490 = vmatprep.subr.bf16.mxu0 0
      %3491 = vmatpush1.bf16.msra.mxu0 0
      %3492 = vmatprep.subr.bf16.mxu0 0
      %3493 = vmatpush1.bf16.msra.mxu0 %v3476
      %3494 = vmatprep.subr.bf16.mxu0 0
      %3495 = vmatpush2.bf16.msra.mxu0 0
      %3496 = vmatprep.subr.bf16.mxu0 0
      %3497 = vmatpush2.bf16.msra.mxu0 0
      %3498 = vmatprep.subr.bf16.mxu0 0
      %3499 = vmatpush2.bf16.msra.mxu0 0
      %3500 = vmatprep.subr.bf16.mxu0 0
      %3501 = vmatpush2.bf16.msra.mxu0 0
      %3502 = vmatprep.subr.bf16.mxu0 0
      %3503 = vmatpush2.bf16.msra.mxu0 0
      %3504 = vmatprep.subr.bf16.mxu0 0
      %3505 = vmatpush2.bf16.msra.mxu0 0
      %3506 = vmatprep.subr.bf16.mxu0 0
      %3507 = vmatpush2.bf16.msra.mxu0 0
      %3508 = vmatprep.subr.bf16.mxu0 0
      %3509 = vmatpush2.bf16.msra.mxu0 0
      %3510 = vmatprep.mubr.bf16.mxu0 0
      %3511 = vmatmul.mubr.bf16.gmra.mxu0 %v3461
      %v3512 = vpop.f32.mrf.mxu0
      %v3513 = vadd.f32 0.0, %v3512
      %v3514 = vpop.f32.mrf.mxu0
      %v3515 = vpop.f32.mrf.mxu0
      %v3516 = vadd.f32 0.0, %v3515
      %v3517 = vpop.f32.mrf.mxu0
      %3518 = vmatprep.mubr.bf16.mxu0 0
      %3519 = vmatmul.mubr.bf16.gmra.mxu0 %v3464
      %v3520 = vpop.f32.mrf.mxu0
      %v3521 = vadd.f32 0.0, %v3520
      %v3522 = vpop.f32.mrf.mxu0
      %v3523 = vpop.f32.mrf.mxu0
      %v3524 = vadd.f32 0.0, %v3523
      %v3525 = vpop.f32.mrf.mxu0
      %3526 = vmatprep.mubr.bf16.mxu0 0
      %3527 = vmatmul.mubr.bf16.gmra.mxu0 %v3467
      %v3528 = vpop.f32.mrf.mxu0
      %v3529 = vadd.f32 0.0, %v3528
      %v3530 = vpop.f32.mrf.mxu0
      %v3531 = vpop.f32.mrf.mxu0
      %v3532 = vadd.f32 0.0, %v3531
      %v3533 = vpop.f32.mrf.mxu0
      %3534 = vmatprep.mubr.bf16.mxu0 0
      %3535 = vmatmul.mubr.bf16.gmra.mxu0 %v3470
      %v3536 = vpop.f32.mrf.mxu0
      %v3537 = vadd.f32 0.0, %v3536
      %v3538 = vpop.f32.mrf.mxu0
      %v3539 = vpop.f32.mrf.mxu0
      %v3540 = vadd.f32 0.0, %v3539
      %v3541 = vpop.f32.mrf.mxu0
      %3542 = vmatprep.mubr.bf16.mxu0 0
      %3543 = vmatmul.mubr.bf16.gmra.mxu0 %v3473
      %v3544 = vpop.f32.mrf.mxu0
      %v3545 = vadd.f32 0.0, %v3544
      %v3546 = vpop.f32.mrf.mxu0
      %v3547 = vpop.f32.mrf.mxu0
      %v3548 = vadd.f32 0.0, %v3547
      %v3549 = vpop.f32.mrf.mxu0
      %3550 = vdwg.mxu0
      %v3551 = vadd.f32 %v3433, %v3513
      %v3552 = vadd.f32 %v3434, %v3516
      %v3553 = vadd.f32 %v3435, %v3521
      %v3554 = vadd.f32 %v3436, %v3524
      %v3555 = vadd.f32 %v3437, %v3529
      %v3556 = vadd.f32 %v3438, %v3532
      %v3557 = vadd.f32 %v3439, %v3537
      %v3558 = vadd.f32 %v3440, %v3540
      %v3559 = vadd.f32 %v3441, %v3545
      %v3560 = vadd.f32 %v3442, %v3548
      %s3561 = scalar_lea.vmem %s3, 50
      %v3562 = vld [vmem:[%s3561] sm:$0x3]
      %v3563 = vrot.slane %v2807, 2
      %v3564 = vrot.slane %v2803, 3
      %v3565 = vor.u32 %v3563, %v3564
      %v3566 = vrot.slane %v2814, 2
      %v3567 = vrot.slane %v2810, 3
      %v3568 = vor.u32 %v3566, %v3567
      %v3569 = vsel %vm1241, %v3565, %v3568
      %v3570 = vrot.slane %v2821, 2
      %v3571 = vrot.slane %v2817, 3
      %v3572 = vor.u32 %v3570, %v3571
      %v3573 = vsel %vm1241, %v3568, %v3572
      %v3574 = vrot.slane %v2828, 2
      %v3575 = vrot.slane %v2824, 3
      %v3576 = vor.u32 %v3574, %v3575
      %v3577 = vsel %vm1241, %v3572, %v3576
      %v3579 = vshrl.u32 %v3447, 16
      %v3581 = vrot.slane %v3579, 2
      %v3582 = vshll.u32 %v3447, 16
      %v3584 = vrot.slane %v3582, 3
      %v3585 = vor.u32 %v3581, %v3584
      %v3586 = vsel %vm1241, %v3576, %v3585
      %v3588 = vshrl.u32 %v3448, 16
      %v3590 = vrot.slane %v3588, 2
      %v3591 = vshll.u32 %v3448, 16
      %v3593 = vrot.slane %v3591, 3
      %v3594 = vor.u32 %v3590, %v3593
      %v3595 = vsel %vm1241, %v3585, %v3594
      %v3597 = vsel %vm433, %v3569, 0
      %v3600 = vsel %vm433, %v3573, 0
      %v3603 = vsel %vm433, %v3577, 0
      %v3606 = vsel %vm433, %v3586, 0
      %v3609 = vsel %vm433, %v3595, 0
      %v3612 = vsel %vm449, %v3562, 0
      %3614 = vmatprep.subr.bf16.mxu0 0
      %3615 = vmatpush1.bf16.msra.mxu0 0
      %3616 = vmatprep.subr.bf16.mxu0 0
      %3617 = vmatpush1.bf16.msra.mxu0 0
      %3618 = vmatprep.subr.bf16.mxu0 0
      %3619 = vmatpush1.bf16.msra.mxu0 0
      %3620 = vmatprep.subr.bf16.mxu0 0
      %3621 = vmatpush1.bf16.msra.mxu0 0
      %3622 = vmatprep.subr.bf16.mxu0 0
      %3623 = vmatpush1.bf16.msra.mxu0 0
      %3624 = vmatprep.subr.bf16.mxu0 0
      %3625 = vmatpush1.bf16.msra.mxu0 0
      %3626 = vmatprep.subr.bf16.mxu0 0
      %3627 = vmatpush1.bf16.msra.mxu0 0
      %3628 = vmatprep.subr.bf16.mxu0 0
      %3629 = vmatpush1.bf16.msra.mxu0 %v3612
      %3630 = vmatprep.subr.bf16.mxu0 0
      %3631 = vmatpush2.bf16.msra.mxu0 0
      %3632 = vmatprep.subr.bf16.mxu0 0
      %3633 = vmatpush2.bf16.msra.mxu0 0
      %3634 = vmatprep.subr.bf16.mxu0 0
      %3635 = vmatpush2.bf16.msra.mxu0 0
      %3636 = vmatprep.subr.bf16.mxu0 0
      %3637 = vmatpush2.bf16.msra.mxu0 0
      %3638 = vmatprep.subr.bf16.mxu0 0
      %3639 = vmatpush2.bf16.msra.mxu0 0
      %3640 = vmatprep.subr.bf16.mxu0 0
      %3641 = vmatpush2.bf16.msra.mxu0 0
      %3642 = vmatprep.subr.bf16.mxu0 0
      %3643 = vmatpush2.bf16.msra.mxu0 0
      %3644 = vmatprep.subr.bf16.mxu0 0
      %3645 = vmatpush2.bf16.msra.mxu0 0
      %3646 = vmatprep.mubr.bf16.mxu0 0
      %3647 = vmatmul.mubr.bf16.gmra.mxu0 %v3597
      %v3648 = vpop.f32.mrf.mxu0
      %v3649 = vadd.f32 0.0, %v3648
      %v3650 = vpop.f32.mrf.mxu0
      %v3651 = vpop.f32.mrf.mxu0
      %v3652 = vadd.f32 0.0, %v3651
      %v3653 = vpop.f32.mrf.mxu0
      %3654 = vmatprep.mubr.bf16.mxu0 0
      %3655 = vmatmul.mubr.bf16.gmra.mxu0 %v3600
      %v3656 = vpop.f32.mrf.mxu0
      %v3657 = vadd.f32 0.0, %v3656
      %v3658 = vpop.f32.mrf.mxu0
      %v3659 = vpop.f32.mrf.mxu0
      %v3660 = vadd.f32 0.0, %v3659
      %v3661 = vpop.f32.mrf.mxu0
      %3662 = vmatprep.mubr.bf16.mxu0 0
      %3663 = vmatmul.mubr.bf16.gmra.mxu0 %v3603
      %v3664 = vpop.f32.mrf.mxu0
      %v3665 = vadd.f32 0.0, %v3664
      %v3666 = vpop.f32.mrf.mxu0
      %v3667 = vpop.f32.mrf.mxu0
      %v3668 = vadd.f32 0.0, %v3667
      %v3669 = vpop.f32.mrf.mxu0
      %3670 = vmatprep.mubr.bf16.mxu0 0
      %3671 = vmatmul.mubr.bf16.gmra.mxu0 %v3606
      %v3672 = vpop.f32.mrf.mxu0
      %v3673 = vadd.f32 0.0, %v3672
      %v3674 = vpop.f32.mrf.mxu0
      %v3675 = vpop.f32.mrf.mxu0
      %v3676 = vadd.f32 0.0, %v3675
      %v3677 = vpop.f32.mrf.mxu0
      %3678 = vmatprep.mubr.bf16.mxu0 0
      %3679 = vmatmul.mubr.bf16.gmra.mxu0 %v3609
      %v3680 = vpop.f32.mrf.mxu0
      %v3681 = vadd.f32 0.0, %v3680
      %v3682 = vpop.f32.mrf.mxu0
      %v3683 = vpop.f32.mrf.mxu0
      %v3684 = vadd.f32 0.0, %v3683
      %v3685 = vpop.f32.mrf.mxu0
      %3686 = vdwg.mxu0
      %v3687 = vadd.f32 %v3551, %v3649
      %v3688 = vadd.f32 %v3552, %v3652
      %v3689 = vadd.f32 %v3553, %v3657
      %v3690 = vadd.f32 %v3554, %v3660
      %v3691 = vadd.f32 %v3555, %v3665
      %v3692 = vadd.f32 %v3556, %v3668
      %v3693 = vadd.f32 %v3557, %v3673
      %v3694 = vadd.f32 %v3558, %v3676
      %v3695 = vadd.f32 %v3559, %v3681
      %v3696 = vadd.f32 %v3560, %v3684
      %s3697 = scalar_lea.vmem %s3, 52
      %v3698 = vld [vmem:[%s3697] sm:$0x3]
      %v3699 = vrot.slane %v2687, 3
      %v3700 = vrot.slane %v2688, 3
      %v3701 = vsel %vm1378, %v3699, %v3700
      %v3702 = vrot.slane %v2689, 3
      %v3703 = vsel %vm1378, %v3700, %v3702
      %v3704 = vrot.slane %v2690, 3
      %v3705 = vsel %vm1378, %v3702, %v3704
      %v3706 = vrot.slane %v3447, 3
      %v3707 = vsel %vm1378, %v3704, %v3706
      %v3708 = vrot.slane %v3448, 3
      %v3709 = vsel %vm1378, %v3706, %v3708
      %v3711 = vsel %vm433, %v3701, 0
      %v3714 = vsel %vm433, %v3703, 0
      %v3717 = vsel %vm433, %v3705, 0
      %v3720 = vsel %vm433, %v3707, 0
      %v3723 = vsel %vm433, %v3709, 0
      %v3726 = vsel %vm449, %v3698, 0
      %3728 = vmatprep.subr.bf16.mxu0 0
      %3729 = vmatpush1.bf16.msra.mxu0 0
      %3730 = vmatprep.subr.bf16.mxu0 0
      %3731 = vmatpush1.bf16.msra.mxu0 0
      %3732 = vmatprep.subr.bf16.mxu0 0
      %3733 = vmatpush1.bf16.msra.mxu0 0
      %3734 = vmatprep.subr.bf16.mxu0 0
      %3735 = vmatpush1.bf16.msra.mxu0 0
      %3736 = vmatprep.subr.bf16.mxu0 0
      %3737 = vmatpush1.bf16.msra.mxu0 0
      %3738 = vmatprep.subr.bf16.mxu0 0
      %3739 = vmatpush1.bf16.msra.mxu0 0
      %3740 = vmatprep.subr.bf16.mxu0 0
      %3741 = vmatpush1.bf16.msra.mxu0 0
      %3742 = vmatprep.subr.bf16.mxu0 0
      %3743 = vmatpush1.bf16.msra.mxu0 %v3726
      %3744 = vmatprep.subr.bf16.mxu0 0
      %3745 = vmatpush2.bf16.msra.mxu0 0
      %3746 = vmatprep.subr.bf16.mxu0 0
      %3747 = vmatpush2.bf16.msra.mxu0 0
      %3748 = vmatprep.subr.bf16.mxu0 0
      %3749 = vmatpush2.bf16.msra.mxu0 0
      %3750 = vmatprep.subr.bf16.mxu0 0
      %3751 = vmatpush2.bf16.msra.mxu0 0
      %3752 = vmatprep.subr.bf16.mxu0 0
      %3753 = vmatpush2.bf16.msra.mxu0 0
      %3754 = vmatprep.subr.bf16.mxu0 0
      %3755 = vmatpush2.bf16.msra.mxu0 0
      %3756 = vmatprep.subr.bf16.mxu0 0
      %3757 = vmatpush2.bf16.msra.mxu0 0
      %3758 = vmatprep.subr.bf16.mxu0 0
      %3759 = vmatpush2.bf16.msra.mxu0 0
      %3760 = vmatprep.mubr.bf16.mxu0 0
      %3761 = vmatmul.mubr.bf16.gmra.mxu0 %v3711
      %v3762 = vpop.f32.mrf.mxu0
      %v3763 = vadd.f32 0.0, %v3762
      %v3764 = vpop.f32.mrf.mxu0
      %v3765 = vpop.f32.mrf.mxu0
      %v3766 = vadd.f32 0.0, %v3765
      %v3767 = vpop.f32.mrf.mxu0
      %3768 = vmatprep.mubr.bf16.mxu0 0
      %3769 = vmatmul.mubr.bf16.gmra.mxu0 %v3714
      %v3770 = vpop.f32.mrf.mxu0
      %v3771 = vadd.f32 0.0, %v3770
      %v3772 = vpop.f32.mrf.mxu0
      %v3773 = vpop.f32.mrf.mxu0
      %v3774 = vadd.f32 0.0, %v3773
      %v3775 = vpop.f32.mrf.mxu0
      %3776 = vmatprep.mubr.bf16.mxu0 0
      %3777 = vmatmul.mubr.bf16.gmra.mxu0 %v3717
      %v3778 = vpop.f32.mrf.mxu0
      %v3779 = vadd.f32 0.0, %v3778
      %v3780 = vpop.f32.mrf.mxu0
      %v3781 = vpop.f32.mrf.mxu0
      %v3782 = vadd.f32 0.0, %v3781
      %v3783 = vpop.f32.mrf.mxu0
      %3784 = vmatprep.mubr.bf16.mxu0 0
      %3785 = vmatmul.mubr.bf16.gmra.mxu0 %v3720
      %v3786 = vpop.f32.mrf.mxu0
      %v3787 = vadd.f32 0.0, %v3786
      %v3788 = vpop.f32.mrf.mxu0
      %v3789 = vpop.f32.mrf.mxu0
      %v3790 = vadd.f32 0.0, %v3789
      %v3791 = vpop.f32.mrf.mxu0
      %3792 = vmatprep.mubr.bf16.mxu0 0
      %3793 = vmatmul.mubr.bf16.gmra.mxu0 %v3723
      %v3794 = vpop.f32.mrf.mxu0
      %v3795 = vadd.f32 0.0, %v3794
      %v3796 = vpop.f32.mrf.mxu0
      %v3797 = vpop.f32.mrf.mxu0
      %v3798 = vadd.f32 0.0, %v3797
      %v3799 = vpop.f32.mrf.mxu0
      %3800 = vdwg.mxu0
      %v3801 = vadd.f32 %v3687, %v3763
      %v3802 = vadd.f32 %v3688, %v3766
      %v3803 = vadd.f32 %v3689, %v3771
      %v3804 = vadd.f32 %v3690, %v3774
      %v3805 = vadd.f32 %v3691, %v3779
      %v3806 = vadd.f32 %v3692, %v3782
      %v3807 = vadd.f32 %v3693, %v3787
      %v3808 = vadd.f32 %v3694, %v3790
      %v3809 = vadd.f32 %v3695, %v3795
      %v3810 = vadd.f32 %v3696, %v3798
      %v3811 = vld [vmem:[%s4] sm:$0x1]
      %v3813 = vlaneseq
      %v3814 = vshrl.u32 %v3813, 7
      %v3815 = vsub.s32 0, %v3814
      %v3816 = vrot.slane %v3811, %v3815
      %v3818 = vadd.f32 %v3801, %v3816
      %v3819 = vadd.f32 %v3802, %v3816
      %v3820 = vadd.f32 %v3803, %v3816
      %v3821 = vadd.f32 %v3804, %v3816
      %v3822 = vadd.f32 %v3805, %v3816
      %v3823 = vadd.f32 %v3806, %v3816
      %v3824 = vadd.f32 %v3807, %v3816
      %v3825 = vadd.f32 %v3808, %v3816
      %v3826 = vadd.f32 %v3809, %v3816
      %v3827 = vadd.f32 %v3810, %v3816
      %v3828 = vmax.f32 %v3818, 0.0
      %v3829 = vmax.f32 %v3819, 0.0
      %v3830 = vmax.f32 %v3820, 0.0
      %v3831 = vmax.f32 %v3821, 0.0
      %v3832 = vmax.f32 %v3822, 0.0
      %v3833 = vmax.f32 %v3823, 0.0
      %v3834 = vmax.f32 %v3824, 0.0
      %v3835 = vmax.f32 %v3825, 0.0
      %v3836 = vmax.f32 %v3826, 0.0
      %v3837 = vmax.f32 %v3827, 0.0
      %v3838 = vpack.c.bf16 %v3829, %v3828
      %v3839 = vpack.c.bf16 %v3831, %v3830
      %v3840 = vpack.c.bf16 %v3833, %v3832
      %v3841 = vpack.c.bf16 %v3835, %v3834
      %v3842 = vpack.c.bf16 %v3837, %v3836
      %v3848 = vunpack.c.l.b16 %v3838
      %v3849 = vunpack.c.h.b16 %v3838
      %v3850 = vunpack.c.l.b16 %v3839
      %v3851 = vunpack.c.h.b16 %v3839
      %v3852 = vunpack.c.l.b16 %v3840
      %v3853 = vunpack.c.h.b16 %v3840
      %v3854 = vunpack.c.l.b16 %v3841
      %v3855 = vunpack.c.h.b16 %v3841
      %v3856 = vunpack.c.l.b16 %v3842
      %v3857 = vunpack.c.h.b16 %v3842
      %v3858 = vpack.c.b16 %v3848, %v3848
      %v3859 = vpack.c.b16 %v3849, %v3849
      %v3860 = vpack.c.b16 %v3850, %v3850
      %v3861 = vpack.c.b16 %v3851, %v3851
      %v3862 = vpack.c.b16 %v3852, %v3852
      %v3863 = vpack.c.b16 %v3853, %v3853
      %v3864 = vpack.c.b16 %v3854, %v3854
      %v3865 = vpack.c.b16 %v3855, %v3855
      %v3866 = vpack.c.b16 %v3856, %v3856
      %v3867 = vpack.c.b16 %v3857, %v3857
      %3878 = vst [vmem:[%s342] sm:$0xf] %v3858
      %3879 = vst [vmem:[%s342 + $0x4] sm:$0xf] %v3859
      %3880 = vst [vmem:[%s342 + $0x8] sm:$0xf] %v3860
      %3881 = vst [vmem:[%s342 + $0xc] sm:$0xf] %v3861
      %3882 = vst [vmem:[%s342 + $0x10] sm:$0xf] %v3862
      %3883 = vst [vmem:[%s342 + $0x14] sm:$0xf] %v3863
      %3884 = vst [vmem:[%s342 + $0x18] sm:$0xf] %v3864
      %3885 = vst [vmem:[%s342 + $0x1c] sm:$0xf] %v3865
      %3886 = vst [vmem:[%s342 + $0x20] sm:$0xf] %v3866
      %3887 = vst [vmem:[%s342 + $0x24] sm:$0xf] %v3867
      %p3888 = scmp.lt.s32.totalorder %s20, 1
      %s3889 = scalar_select %p3888, %s20, 1
      %p3890 = scmp.lt.s32.totalorder %s21, 7
      %s3891 = scalar_select %p3890, %s21, 7
      %s3892 = smul.addr %s3891, 10
      %s3893 = smul.addr %s3889, 80
      %s3894 = sadd.s32 %s3892, %s3893
      %s3895 = smul.addr %s3894, 4
      %s3896 = scalar_lea.vmem %s5, %s3895
      // Predicated region
      $region41: #{_conv_block_3d_impl.2} parent=39 // pred_check
        %p3897 = pneg %p178
      $region42: #{_conv_block_3d_impl.2} parent=39 // pred_check_branch
        %3899 = sbr.rel (%p3897) target = $region44
      $region43: #{_conv_block_3d_impl.2} parent=39 // pred_region
        _
      $region44: #{_conv_block_3d_impl.2} parent=39 // pred_fallthru
        _
    $region40: #{_conv_block_3d_impl.2} parent=5 // pred_fallthru
      _
    %p3900 = scmp.le.s32.totalorder 2, %s11
    // Predicated region
    $region45: #{_conv_block_3d_impl.2} parent=5 // pred_check
      %p3901 = pneg %p3900
    $region46: #{_conv_block_3d_impl.2} parent=5 // pred_check_branch
      %3903 = sbr.rel (%p3901) target = $region48
    $region47: #{_conv_block_3d_impl.2} parent=5 // pred_region
      %s3904 = ssub.s32 %s11, 2
      // Predicated region
      $region49: #{_conv_block_3d_impl.2} parent=47 // pred_check
        %p3905 = pneg %p184
      $region50: #{_conv_block_3d_impl.2} parent=47 // pred_check_branch
        %3907 = sbr.rel (%p3905) target = $region52
      $region51: #{_conv_block_3d_impl.2} parent=47 // pred_region
        %p3908 = scmp.lt.s32.totalorder %s22, 1
        %s3909 = scalar_select %p3908, %s22, 1
        %p3910 = scmp.lt.s32.totalorder %s23, 7
        %s3911 = scalar_select %p3910, %s23, 7
        %s3912 = smul.addr %s3911, 10
        %s3913 = smul.addr %s3909, 80
        %s3914 = sadd.s32 %s3912, %s3913
        %s3915 = smul.addr %s3914, 4
        %s3916 = scalar_lea.vmem %s5, %s3915
      $region52: #{_conv_block_3d_impl.2} parent=47 // pred_fallthru
        _
    $region48: #{_conv_block_3d_impl.2} parent=5 // pred_fallthru
      _
  $region6: #{_conv_block_3d_impl.2} parent=0 // loop_footer
    %s15 = sadd.s32 1, %s11
  $region7: #{_conv_block_3d_impl.2} parent=0 // loop_footer_branch
    %10 = sbr.rel target = $region3
  $region8: #{_conv_block_3d_impl.2} parent=0 // loop_exit
    _

// kernel: _conv_block_3d_impl.3
$region0: #{_conv_block_3d_impl.3}
  #allocation0 [shape = 'u32[]', space=smem, size = 0x4, offset = 0x4, fixed_abs, tag = 'smem constant byte address 0x4 - core index']
  #allocation1 [shape = 'u32[144,128]{1,0:T(1,128)}', space=vmem, size = 0x12000, scoped, tag = 'internal scratch']
  %s0 = inlined_call_operand.vmem [shape: bf16[2,10,110,8], index: 0, kind: input, shape index: {}, may-alias: {0,1,2}]
  %s1 = inlined_call_operand.vmem [shape: bf16[2,10,110,8], index: 1, kind: input, shape index: {}, may-alias: {0,1,2}]
  %s2 = inlined_call_operand.vmem [shape: bf16[2,10,110,8], index: 2, kind: input, shape index: {}, may-alias: {0,1,2}]
  %s3 = inlined_call_operand.vmem [shape: bf16[27,8,128], index: 3, kind: input, shape index: {}]
  %s4 = inlined_call_operand.vmem [shape: f32[1,128], index: 4, kind: input, shape index: {}]
  %s5 = inlined_call_operand.vmem [shape: f32[2,8,80,128], index: 5, kind: output, shape index: {}]
  %s6 = sld [smem:[#allocation0]]
  $region53: #{_conv_block_3d_impl.3} parent=0
    _
  %s8 = ssub.s32 1, %s6
  %s9 = scalar_select 0, %s8, %s6
  loop: start=0, step=1, limit=18
  $region2: #{_conv_block_3d_impl.3} parent=0 // loop_pre_header
    _
  $region3: #{_conv_block_3d_impl.3} parent=0 // loop_header
    %s11 = sphi 0, %s15
    %p12 = scmp.ge.s32.totalorder %s11, 18
    %s18 = sphi 0, %s30
    %s19 = sphi 0, %s26
    %s20 = sphi 0, %s18
    %s21 = sphi 0, %s19
    %s22 = sphi 0, %s20
    %s23 = sphi 0, %s21
    %s35 = sphi 0, %s37
    %s38 = sphi 0, %s35
    %s39 = sphi 0, %s38
    %s55 = sphi 0, %s39
    %s65 = sphi 0, %s67
    %s68 = sphi 0, %s65
    %s69 = sphi 0, %s68
    %s85 = sphi 0, %s69
    %s95 = sphi 0, %s97
    %s98 = sphi 0, %s95
    %s99 = sphi 0, %s98
    %s115 = sphi 0, %s99
    %s119 = sphi 0, %s119
    %s121 = sphi 0, %s119
    %s122 = sphi 0, %s121
    %s136 = sphi 0, %s122
    %s140 = sphi 0, %s140
    %s142 = sphi 0, %s140
    %s143 = sphi 0, %s142
    %s157 = sphi 0, %s143
    %s165 = sphi 0, %s167
    %s168 = sphi 0, %s165
    %s169 = sphi 0, %s168
    %s185 = sphi 0, %s169
  $region4: #{_conv_block_3d_impl.3} parent=0 // loop_header_branch
    %14 = sbr.rel (%p12) target = $region8
  $region5: #{_conv_block_3d_impl.3} parent=0 // loop_body
    %s16 = ssub.s32 %s11, 1
    %s17 = ssub.s32 %s11, 2
    %s24 = sadd.s32 1, %s19
    %p25 = scmp.ge.s32.totalorder %s24, 8
    %s26 = scalar_select %p25, 0, %s24
    %s27 = sadd.s32 1, %s18
    %s28 = scalar_select %p25, %s27, %s18
    %p29 = scmp.ge.s32.totalorder %s28, 2
    %s30 = scalar_select %p29, 0, %s28
    %s31 = ssub.s32 %s18, %s30
    %s32 = ssub.s32 %s19, %s26
    %s33 = sor.u32 %s31, %s32
    %p34 = scmp.eq.s32.totalorder %s33, 0
    %s36 = sadd.s32 %s35, 1
    %s37 = scalar_select %p34, %s35, %s36
    %p40 = pneg %p34
    %p41 = scmp.eq.s32.totalorder %s11, 15
    %p42 = por %p40, %p41
    %p43 = scmp.ne.s32.totalorder %s35, %s38
    %p44 = scmp.eq.s32.totalorder %s11, 0
    %p45 = por %p43, %p44
    %p46 = scmp.ne.s32.totalorder %s35, %s38
    %p47 = scmp.eq.s32.totalorder %s16, 15
    %p48 = por %p46, %p47
    %p49 = scmp.ne.s32.totalorder %s38, %s39
    %p50 = scmp.eq.s32.totalorder %s16, 0
    %p51 = por %p49, %p50
    %p52 = scmp.ne.s32.totalorder %s38, %s39
    %p53 = scmp.eq.s32.totalorder %s17, 15
    %p54 = por %p52, %p53
    %p56 = scmp.ne.s32.totalorder %s39, %s55
    %p57 = scmp.eq.s32.totalorder %s17, 0
    %p58 = por %p56, %p57
    %s59 = sadd.s32 %s19, 1
    %s60 = sadd.s32 %s26, 1
    %s61 = ssub.s32 %s18, %s30
    %s62 = ssub.s32 %s59, %s60
    %s63 = sor.u32 %s61, %s62
    %p64 = scmp.eq.s32.totalorder %s63, 0
    %s66 = sadd.s32 %s65, 1
    %s67 = scalar_select %p64, %s65, %s66
    %p70 = pneg %p64
    %p71 = scmp.eq.s32.totalorder %s11, 15
    %p72 = por %p70, %p71
    %p73 = scmp.ne.s32.totalorder %s65, %s68
    %p74 = scmp.eq.s32.totalorder %s11, 0
    %p75 = por %p73, %p74
    %p76 = scmp.ne.s32.totalorder %s65, %s68
    %p77 = scmp.eq.s32.totalorder %s16, 15
    %p78 = por %p76, %p77
    %p79 = scmp.ne.s32.totalorder %s68, %s69
    %p80 = scmp.eq.s32.totalorder %s16, 0
    %p81 = por %p79, %p80
    %p82 = scmp.ne.s32.totalorder %s68, %s69
    %p83 = scmp.eq.s32.totalorder %s17, 15
    %p84 = por %p82, %p83
    %p86 = scmp.ne.s32.totalorder %s69, %s85
    %p87 = scmp.eq.s32.totalorder %s17, 0
    %p88 = por %p86, %p87
    %s89 = sadd.s32 %s19, 2
    %s90 = sadd.s32 %s26, 2
    %s91 = ssub.s32 %s18, %s30
    %s92 = ssub.s32 %s89, %s90
    %s93 = sor.u32 %s91, %s92
    %p94 = scmp.eq.s32.totalorder %s93, 0
    %s96 = sadd.s32 %s95, 1
    %s97 = scalar_select %p94, %s95, %s96
    %p100 = pneg %p94
    %p101 = scmp.eq.s32.totalorder %s11, 15
    %p102 = por %p100, %p101
    %p103 = scmp.ne.s32.totalorder %s95, %s98
    %p104 = scmp.eq.s32.totalorder %s11, 0
    %p105 = por %p103, %p104
    %p106 = scmp.ne.s32.totalorder %s95, %s98
    %p107 = scmp.eq.s32.totalorder %s16, 15
    %p108 = por %p106, %p107
    %p109 = scmp.ne.s32.totalorder %s98, %s99
    %p110 = scmp.eq.s32.totalorder %s16, 0
    %p111 = por %p109, %p110
    %p112 = scmp.ne.s32.totalorder %s98, %s99
    %p113 = scmp.eq.s32.totalorder %s17, 15
    %p114 = por %p112, %p113
    %p116 = scmp.ne.s32.totalorder %s99, %s115
    %p117 = scmp.eq.s32.totalorder %s17, 0
    %p118 = por %p116, %p117
    %s120 = sadd.s32 %s119, 1
    %p123 = scmp.eq.s32.totalorder %s11, 15
    %p124 = scmp.ne.s32.totalorder %s119, %s121
    %p125 = scmp.eq.s32.totalorder %s11, 0
    %p126 = por %p124, %p125
    %p127 = scmp.ne.s32.totalorder %s119, %s121
    %p128 = scmp.eq.s32.totalorder %s16, 15
    %p129 = por %p127, %p128
    %p130 = scmp.ne.s32.totalorder %s121, %s122
    %p131 = scmp.eq.s32.totalorder %s16, 0
    %p132 = por %p130, %p131
    %p133 = scmp.ne.s32.totalorder %s121, %s122
    %p134 = scmp.eq.s32.totalorder %s17, 15
    %p135 = por %p133, %p134
    %p137 = scmp.ne.s32.totalorder %s122, %s136
    %p138 = scmp.eq.s32.totalorder %s17, 0
    %p139 = por %p137, %p138
    %s141 = sadd.s32 %s140, 1
    %p144 = scmp.eq.s32.totalorder %s11, 15
    %p145 = scmp.ne.s32.totalorder %s140, %s142
    %p146 = scmp.eq.s32.totalorder %s11, 0
    %p147 = por %p145, %p146
    %p148 = scmp.ne.s32.totalorder %s140, %s142
    %p149 = scmp.eq.s32.totalorder %s16, 15
    %p150 = por %p148, %p149
    %p151 = scmp.ne.s32.totalorder %s142, %s143
    %p152 = scmp.eq.s32.totalorder %s16, 0
    %p153 = por %p151, %p152
    %p154 = scmp.ne.s32.totalorder %s142, %s143
    %p155 = scmp.eq.s32.totalorder %s17, 15
    %p156 = por %p154, %p155
    %p158 = scmp.ne.s32.totalorder %s143, %s157
    %p159 = scmp.eq.s32.totalorder %s17, 0
    %p160 = por %p158, %p159
    %s161 = ssub.s32 %s18, %s30
    %s162 = ssub.s32 %s19, %s26
    %s163 = sor.u32 %s161, %s162
    %p164 = scmp.eq.s32.totalorder %s163, 0
    %s166 = sadd.s32 %s165, 1
    %s167 = scalar_select %p164, %s165, %s166
    %p170 = pneg %p164
    %p171 = scmp.eq.s32.totalorder %s11, 15
    %p172 = por %p170, %p171
    %p173 = scmp.ne.s32.totalorder %s165, %s168
    %p174 = scmp.eq.s32.totalorder %s11, 0
    %p175 = por %p173, %p174
    %p176 = scmp.ne.s32.totalorder %s165, %s168
    %p177 = scmp.eq.s32.totalorder %s16, 15
    %p178 = por %p176, %p177
    %p179 = scmp.ne.s32.totalorder %s168, %s169
    %p180 = scmp.eq.s32.totalorder %s16, 0
    %p181 = por %p179, %p180
    %p182 = scmp.ne.s32.totalorder %s168, %s169
    %p183 = scmp.eq.s32.totalorder %s17, 15
    %p184 = por %p182, %p183
    %p186 = scmp.ne.s32.totalorder %s169, %s185
    %p187 = scmp.eq.s32.totalorder %s17, 0
    %p188 = por %p186, %p187
    %p189 = scmp.le.s32.totalorder 1, %s11
    %p190 = scmp.lt.s32.totalorder %s11, 17
    %p191 = pnand %p189, %p190
    %p192 = pneg %p191
    // Predicated region
    $region9: #{_conv_block_3d_impl.3} parent=5 // pred_check
      _
    $region10: #{_conv_block_3d_impl.3} parent=5 // pred_check_branch
      %194 = sbr.rel (%p191) target = $region12
    $region11: #{_conv_block_3d_impl.3} parent=5 // pred_region
      %s195 = ssub.s32 %s11, 1
      // Predicated region
      $region13: #{_conv_block_3d_impl.3} parent=11 // pred_check
        %p196 = pneg %p132
      $region14: #{_conv_block_3d_impl.3} parent=11 // pred_check_branch
        %198 = sbr.rel (%p196) target = $region16
      $region15: #{_conv_block_3d_impl.3} parent=11 // pred_region
        _
      $region16: #{_conv_block_3d_impl.3} parent=11 // pred_fallthru
        _
      // Predicated region
      $region17: #{_conv_block_3d_impl.3} parent=11 // pred_check
        %p199 = pneg %p153
      $region18: #{_conv_block_3d_impl.3} parent=11 // pred_check_branch
        %201 = sbr.rel (%p199) target = $region20
      $region19: #{_conv_block_3d_impl.3} parent=11 // pred_region
        _
      $region20: #{_conv_block_3d_impl.3} parent=11 // pred_fallthru
        _
    $region12: #{_conv_block_3d_impl.3} parent=5 // pred_fallthru
      _
    %p202 = scmp.lt.s32.totalorder %s11, 16
    // Predicated region
    $region21: #{_conv_block_3d_impl.3} parent=5 // pred_check
      %p203 = pneg %p202
    $region22: #{_conv_block_3d_impl.3} parent=5 // pred_check_branch
      %205 = sbr.rel (%p203) target = $region24
    $region23: #{_conv_block_3d_impl.3} parent=5 // pred_region
      // Predicated region
      $region25: #{_conv_block_3d_impl.3} parent=23 // pred_check
        %p206 = pneg %p45
      $region26: #{_conv_block_3d_impl.3} parent=23 // pred_check_branch
        %208 = sbr.rel (%p206) target = $region28
      $region27: #{_conv_block_3d_impl.3} parent=23 // pred_region
        %p209 = scmp.lt.s32.totalorder %s18, 1
        %s210 = scalar_select %p209, %s18, 1
        %p211 = scmp.lt.s32.totalorder %s19, 9
        %s212 = scalar_select %p211, %s19, 9
        %s213 = smul.addr %s212, 14
        %s214 = smul.addr %s210, 140
        %s215 = sadd.s32 %s213, %s214
        %s216 = smul.addr %s215, 4
        %s217 = scalar_lea.vmem %s0, %s216
      $region28: #{_conv_block_3d_impl.3} parent=23 // pred_fallthru
        _
      // Predicated region
      $region29: #{_conv_block_3d_impl.3} parent=23 // pred_check
        %p218 = pneg %p75
      $region30: #{_conv_block_3d_impl.3} parent=23 // pred_check_branch
        %220 = sbr.rel (%p218) target = $region32
      $region31: #{_conv_block_3d_impl.3} parent=23 // pred_region
        %s221 = sadd.s32 %s19, 1
        %p222 = scmp.lt.s32.totalorder %s18, 1
        %s223 = scalar_select %p222, %s18, 1
        %p224 = scmp.lt.s32.totalorder %s221, 9
        %s225 = scalar_select %p224, %s221, 9
        %s226 = smul.addr %s225, 14
        %s227 = smul.addr %s223, 140
        %s228 = sadd.s32 %s226, %s227
        %s229 = smul.addr %s228, 4
        %s230 = scalar_lea.vmem %s1, %s229
        %s231 = sadd.s32 %s19, 1
      $region32: #{_conv_block_3d_impl.3} parent=23 // pred_fallthru
        _
      // Predicated region
      $region33: #{_conv_block_3d_impl.3} parent=23 // pred_check
        %p232 = pneg %p105
      $region34: #{_conv_block_3d_impl.3} parent=23 // pred_check_branch
        %234 = sbr.rel (%p232) target = $region36
      $region35: #{_conv_block_3d_impl.3} parent=23 // pred_region
        %s235 = sadd.s32 %s19, 2
        %p236 = scmp.lt.s32.totalorder %s18, 1
        %s237 = scalar_select %p236, %s18, 1
        %p238 = scmp.lt.s32.totalorder %s235, 9
        %s239 = scalar_select %p238, %s235, 9
        %s240 = smul.addr %s239, 14
        %s241 = smul.addr %s237, 140
        %s242 = sadd.s32 %s240, %s241
        %s243 = smul.addr %s242, 4
        %s244 = scalar_lea.vmem %s2, %s243
        %s245 = sadd.s32 %s19, 2
      $region36: #{_conv_block_3d_impl.3} parent=23 // pred_fallthru
        _
    $region24: #{_conv_block_3d_impl.3} parent=5 // pred_fallthru
      _
    %p246 = scmp.le.s32.totalorder 1, %s11
    %p247 = scmp.lt.s32.totalorder %s11, 17
    %p248 = pnand %p246, %p247
    %p249 = pneg %p248
    // Predicated region
    $region37: #{_conv_block_3d_impl.3} parent=5 // pred_check
      _
    $region38: #{_conv_block_3d_impl.3} parent=5 // pred_check_branch
      %251 = sbr.rel (%p248) target = $region40
    $region39: #{_conv_block_3d_impl.3} parent=5 // pred_region
      %s252 = ssub.s32 %s11, 1
      %p253 = scmp.lt.s32.totalorder %s20, 1
      %s254 = scalar_select %p253, %s20, 1
      %p255 = scmp.lt.s32.totalorder %s21, 9
      %s256 = scalar_select %p255, %s21, 9
      %s257 = smul.addr %s256, 14
      %s258 = smul.addr %s254, 140
      %s259 = sadd.s32 %s257, %s258
      %s260 = smul.addr %s259, 4
      %s261 = scalar_lea.vmem %s0, %s260
      %p262 = pneg %p51
      %p263 = pneg %p48
      %s264 = sadd.s32 %s21, 1
      %p265 = scmp.lt.s32.totalorder %s20, 1
      %s266 = scalar_select %p265, %s20, 1
      %p267 = scmp.lt.s32.totalorder %s264, 9
      %s268 = scalar_select %p267, %s264, 9
      %s269 = smul.addr %s268, 14
      %s270 = smul.addr %s266, 140
      %s271 = sadd.s32 %s269, %s270
      %s272 = smul.addr %s271, 4
      %s273 = scalar_lea.vmem %s1, %s272
      %p274 = pneg %p81
      %p275 = pneg %p78
      %s276 = sadd.s32 %s21, 2
      %p277 = scmp.lt.s32.totalorder %s20, 1
      %s278 = scalar_select %p277, %s20, 1
      %p279 = scmp.lt.s32.totalorder %s276, 9
      %s280 = scalar_select %p279, %s276, 9
      %s281 = smul.addr %s280, 14
      %s282 = smul.addr %s278, 140
      %s283 = sadd.s32 %s281, %s282
      %s284 = smul.addr %s283, 4
      %s285 = scalar_lea.vmem %s2, %s284
      %p286 = pneg %p111
      %p287 = pneg %p108
      %p288 = pneg %p132
      %p289 = pneg %p129
      %p290 = pneg %p153
      %p291 = pneg %p150
      %p292 = pneg %p181
      %p293 = pneg %p178
      %p294 = scmp.lt.s32.totalorder %s20, 1
      %s295 = scalar_select %p294, %s20, 1
      %p296 = scmp.lt.s32.totalorder %s21, 7
      %s297 = scalar_select %p296, %s21, 7
      %s298 = smul.addr %s297, 10
      %s299 = smul.addr %s295, 80
      %s300 = sadd.s32 %s298, %s299
      %s301 = smul.addr %s300, 8
      %s302 = scalar_lea.vmem %s5, %s301
      %p303 = scmp.lt.s32.totalorder %s20, 1
      %s304 = scalar_select %p303, %s20, 1
      %p305 = scmp.lt.s32.totalorder %s21, 9
      %s306 = scalar_select %p305, %s21, 9
      %s307 = smul.addr %s306, 14
      %s308 = smul.addr %s304, 140
      %s309 = sadd.s32 %s307, %s308
      %s310 = smul.addr %s309, 4
      %s311 = scalar_lea.vmem %s0, %s310
      %s312 = sadd.s32 %s21, 1
      %p313 = scmp.lt.s32.totalorder %s20, 1
      %s314 = scalar_select %p313, %s20, 1
      %p315 = scmp.lt.s32.totalorder %s312, 9
      %s316 = scalar_select %p315, %s312, 9
      %s317 = smul.addr %s316, 14
      %s318 = smul.addr %s314, 140
      %s319 = sadd.s32 %s317, %s318
      %s320 = smul.addr %s319, 4
      %s321 = scalar_lea.vmem %s1, %s320
      %s322 = sadd.s32 %s21, 1
      %s323 = sadd.s32 %s21, 2
      %p324 = scmp.lt.s32.totalorder %s20, 1
      %s325 = scalar_select %p324, %s20, 1
      %p326 = scmp.lt.s32.totalorder %s323, 9
      %s327 = scalar_select %p326, %s323, 9
      %s328 = smul.addr %s327, 14
      %s329 = smul.addr %s325, 140
      %s330 = sadd.s32 %s328, %s329
      %s331 = smul.addr %s330, 4
      %s332 = scalar_lea.vmem %s2, %s331
      %s333 = sadd.s32 %s21, 2
      %p334 = scmp.lt.s32.totalorder %s20, 1
      %s335 = scalar_select %p334, %s20, 1
      %p336 = scmp.lt.s32.totalorder %s21, 7
      %s337 = scalar_select %p336, %s21, 7
      %s338 = smul.addr %s337, 10
      %s339 = smul.addr %s335, 80
      %s340 = sadd.s32 %s338, %s339
      %s341 = smul.addr %s340, 8
      %s342 = scalar_lea.vmem %s5, %s341
      %v344 = vld [vmem:[%s311] sm:$0xf]
      %v345 = vld [vmem:[%s311 + $0x4] sm:$0xf]
      %v346 = vld [vmem:[%s311 + $0x8] sm:$0xf]
      %v347 = vld [vmem:[%s311 + $0xc] sm:$0xf]
      %v348 = vld [vmem:[%s311 + $0x10] sm:$0xf]
      %v349 = vld [vmem:[%s311 + $0x14] sm:$0xf]
      %v350 = vld [vmem:[%s311 + $0x18] sm:$0xf]
      %v351 = vld [vmem:[%s311 + $0x1c] sm:$0xf]
      %v352 = vld [vmem:[%s311 + $0x20] sm:$0xf]
      %v353 = vld [vmem:[%s311 + $0x24] sm:$0xf]
      %v354 = vld [vmem:[%s311 + $0x28] sm:$0xf]
      %v355 = vld [vmem:[%s311 + $0x2c] sm:$0xf]
      %v356 = vld [vmem:[%s311 + $0x30] sm:$0xf]
      %v357 = vld [vmem:[%s3] sm:$0xf]
      %s358 = scalar_lea.vmem %s3, 4
      %v359 = vld [vmem:[%s358] sm:$0xf]
      %v371 = vunpack.c.l.b16 %v344
      %v372 = vunpack.c.l.b16 %v345
      %v373 = vunpack.c.l.b16 %v346
      %v374 = vunpack.c.l.b16 %v347
      %v375 = vunpack.c.l.b16 %v348
      %v376 = vunpack.c.l.b16 %v349
      %v377 = vunpack.c.l.b16 %v350
      %v378 = vunpack.c.l.b16 %v351
      %v379 = vunpack.c.l.b16 %v352
      %v380 = vunpack.c.l.b16 %v353
      %v381 = vunpack.c.l.b16 %v354
      %v382 = vpack.c.b16 %v372, %v371
      %v383 = vpack.c.b16 %v374, %v373
      %v384 = vpack.c.b16 %v376, %v375
      %v385 = vpack.c.b16 %v378, %v377
      %v386 = vpack.c.b16 %v380, %v379
      %v387 = vpack.c.b16 %v381, %v381
      %vm388 = vsmask.f32 7424
      %v390 = vshrl.u32 %v382, 16
      %v392 = vshll.u32 %v382, 16
      %v394 = vrot.slane %v392, 1
      %v395 = vor.u32 %v390, %v394
      %v397 = vshll.u32 %v383, 16
      %v399 = vrot.slane %v397, 1
      %v400 = vsel %vm388, %v395, %v399
      %v401 = vshrl.u32 %v383, 16
      %v403 = vor.u32 %v401, %v399
      %v405 = vshll.u32 %v384, 16
      %v407 = vrot.slane %v405, 1
      %v408 = vsel %vm388, %v403, %v407
      %v409 = vshrl.u32 %v384, 16
      %v411 = vor.u32 %v409, %v407
      %v413 = vshll.u32 %v385, 16
      %v415 = vrot.slane %v413, 1
      %v416 = vsel %vm388, %v411, %v415
      %v417 = vshrl.u32 %v385, 16
      %v419 = vor.u32 %v417, %v415
      %v421 = vshll.u32 %v386, 16
      %v423 = vrot.slane %v421, 1
      %v424 = vsel %vm388, %v419, %v423
      %v425 = vshrl.u32 %v386, 16
      %v427 = vor.u32 %v425, %v423
      %v429 = vshll.u32 %v387, 16
      %v431 = vrot.slane %v429, 1
      %v432 = vsel %vm388, %v427, %v431
      %vm433 = vcmask 64512
      %v435 = vsel %vm433, %v400, 0
      %v438 = vsel %vm433, %v408, 0
      %v441 = vsel %vm433, %v416, 0
      %v444 = vsel %vm433, %v424, 0
      %v447 = vsel %vm433, %v432, 0
      %vm449 = vcmask 1043456
      %v451 = vsel %vm449, %v359, 0
      %453 = vmatprep.subr.bf16.mxu0 0
      %454 = vmatpush1.bf16.msra.mxu0 0
      %455 = vmatprep.subr.bf16.mxu0 0
      %456 = vmatpush1.bf16.msra.mxu0 0
      %457 = vmatprep.subr.bf16.mxu0 0
      %458 = vmatpush1.bf16.msra.mxu0 0
      %459 = vmatprep.subr.bf16.mxu0 0
      %460 = vmatpush1.bf16.msra.mxu0 0
      %461 = vmatprep.subr.bf16.mxu0 0
      %462 = vmatpush1.bf16.msra.mxu0 0
      %463 = vmatprep.subr.bf16.mxu0 0
      %464 = vmatpush1.bf16.msra.mxu0 0
      %465 = vmatprep.subr.bf16.mxu0 0
      %466 = vmatpush1.bf16.msra.mxu0 0
      %467 = vmatprep.subr.bf16.mxu0 0
      %468 = vmatpush1.bf16.msra.mxu0 %v451
      %469 = vmatprep.subr.bf16.mxu0 0
      %470 = vmatpush2.bf16.msra.mxu0 0
      %471 = vmatprep.subr.bf16.mxu0 0
      %472 = vmatpush2.bf16.msra.mxu0 0
      %473 = vmatprep.subr.bf16.mxu0 0
      %474 = vmatpush2.bf16.msra.mxu0 0
      %475 = vmatprep.subr.bf16.mxu0 0
      %476 = vmatpush2.bf16.msra.mxu0 0
      %477 = vmatprep.subr.bf16.mxu0 0
      %478 = vmatpush2.bf16.msra.mxu0 0
      %479 = vmatprep.subr.bf16.mxu0 0
      %480 = vmatpush2.bf16.msra.mxu0 0
      %481 = vmatprep.subr.bf16.mxu0 0
      %482 = vmatpush2.bf16.msra.mxu0 0
      %483 = vmatprep.subr.bf16.mxu0 0
      %484 = vmatpush2.bf16.msra.mxu0 0
      %485 = vmatprep.mubr.bf16.mxu0 0
      %486 = vmatmul.mubr.bf16.gmra.mxu0 %v435
      %v487 = vpop.f32.mrf.mxu0
      %v488 = vadd.f32 0.0, %v487
      %v489 = vpop.f32.mrf.mxu0
      %v490 = vpop.f32.mrf.mxu0
      %v491 = vadd.f32 0.0, %v490
      %v492 = vpop.f32.mrf.mxu0
      %493 = vmatprep.mubr.bf16.mxu0 0
      %494 = vmatmul.mubr.bf16.gmra.mxu0 %v438
      %v495 = vpop.f32.mrf.mxu0
      %v496 = vadd.f32 0.0, %v495
      %v497 = vpop.f32.mrf.mxu0
      %v498 = vpop.f32.mrf.mxu0
      %v499 = vadd.f32 0.0, %v498
      %v500 = vpop.f32.mrf.mxu0
      %501 = vmatprep.mubr.bf16.mxu0 0
      %502 = vmatmul.mubr.bf16.gmra.mxu0 %v441
      %v503 = vpop.f32.mrf.mxu0
      %v504 = vadd.f32 0.0, %v503
      %v505 = vpop.f32.mrf.mxu0
      %v506 = vpop.f32.mrf.mxu0
      %v507 = vadd.f32 0.0, %v506
      %v508 = vpop.f32.mrf.mxu0
      %509 = vmatprep.mubr.bf16.mxu0 0
      %510 = vmatmul.mubr.bf16.gmra.mxu0 %v444
      %v511 = vpop.f32.mrf.mxu0
      %v512 = vadd.f32 0.0, %v511
      %v513 = vpop.f32.mrf.mxu0
      %v514 = vpop.f32.mrf.mxu0
      %v515 = vadd.f32 0.0, %v514
      %v516 = vpop.f32.mrf.mxu0
      %517 = vmatprep.mubr.bf16.mxu0 0
      %518 = vmatmul.mubr.bf16.gmra.mxu0 %v447
      %v519 = vpop.f32.mrf.mxu0
      %v520 = vadd.f32 0.0, %v519
      %v521 = vpop.f32.mrf.mxu0
      %v522 = vpop.f32.mrf.mxu0
      %v523 = vadd.f32 0.0, %v522
      %v524 = vpop.f32.mrf.mxu0
      %525 = vdwg.mxu0
      %v526 = vsel %vm433, %v382, 0
      %v528 = vsel %vm433, %v383, 0
      %v530 = vsel %vm433, %v384, 0
      %v532 = vsel %vm433, %v385, 0
      %v534 = vsel %vm433, %v386, 0
      %v537 = vsel %vm449, %v357, 0
      %539 = vmatprep.subr.bf16.mxu0 0
      %540 = vmatpush1.bf16.msra.mxu0 0
      %541 = vmatprep.subr.bf16.mxu0 0
      %542 = vmatpush1.bf16.msra.mxu0 0
      %543 = vmatprep.subr.bf16.mxu0 0
      %544 = vmatpush1.bf16.msra.mxu0 0
      %545 = vmatprep.subr.bf16.mxu0 0
      %546 = vmatpush1.bf16.msra.mxu0 0
      %547 = vmatprep.subr.bf16.mxu0 0
      %548 = vmatpush1.bf16.msra.mxu0 0
      %549 = vmatprep.subr.bf16.mxu0 0
      %550 = vmatpush1.bf16.msra.mxu0 0
      %551 = vmatprep.subr.bf16.mxu0 0
      %552 = vmatpush1.bf16.msra.mxu0 0
      %553 = vmatprep.subr.bf16.mxu0 0
      %554 = vmatpush1.bf16.msra.mxu0 %v537
      %555 = vmatprep.subr.bf16.mxu0 0
      %556 = vmatpush2.bf16.msra.mxu0 0
      %557 = vmatprep.subr.bf16.mxu0 0
      %558 = vmatpush2.bf16.msra.mxu0 0
      %559 = vmatprep.subr.bf16.mxu0 0
      %560 = vmatpush2.bf16.msra.mxu0 0
      %561 = vmatprep.subr.bf16.mxu0 0
      %562 = vmatpush2.bf16.msra.mxu0 0
      %563 = vmatprep.subr.bf16.mxu0 0
      %564 = vmatpush2.bf16.msra.mxu0 0
      %565 = vmatprep.subr.bf16.mxu0 0
      %566 = vmatpush2.bf16.msra.mxu0 0
      %567 = vmatprep.subr.bf16.mxu0 0
      %568 = vmatpush2.bf16.msra.mxu0 0
      %569 = vmatprep.subr.bf16.mxu0 0
      %570 = vmatpush2.bf16.msra.mxu0 0
      %571 = vmatprep.mubr.bf16.mxu0 0
      %572 = vmatmul.mubr.bf16.gmra.mxu0 %v526
      %v573 = vpop.f32.mrf.mxu0
      %v574 = vadd.f32 %v488, %v573
      %v575 = vpop.f32.mrf.mxu0
      %v576 = vpop.f32.mrf.mxu0
      %v577 = vadd.f32 %v491, %v576
      %v578 = vpop.f32.mrf.mxu0
      %579 = vmatprep.mubr.bf16.mxu0 0
      %580 = vmatmul.mubr.bf16.gmra.mxu0 %v528
      %v581 = vpop.f32.mrf.mxu0
      %v582 = vadd.f32 %v496, %v581
      %v583 = vpop.f32.mrf.mxu0
      %v584 = vpop.f32.mrf.mxu0
      %v585 = vadd.f32 %v499, %v584
      %v586 = vpop.f32.mrf.mxu0
      %587 = vmatprep.mubr.bf16.mxu0 0
      %588 = vmatmul.mubr.bf16.gmra.mxu0 %v530
      %v589 = vpop.f32.mrf.mxu0
      %v590 = vadd.f32 %v504, %v589
      %v591 = vpop.f32.mrf.mxu0
      %v592 = vpop.f32.mrf.mxu0
      %v593 = vadd.f32 %v507, %v592
      %v594 = vpop.f32.mrf.mxu0
      %595 = vmatprep.mubr.bf16.mxu0 0
      %596 = vmatmul.mubr.bf16.gmra.mxu0 %v532
      %v597 = vpop.f32.mrf.mxu0
      %v598 = vadd.f32 %v512, %v597
      %v599 = vpop.f32.mrf.mxu0
      %v600 = vpop.f32.mrf.mxu0
      %v601 = vadd.f32 %v515, %v600
      %v602 = vpop.f32.mrf.mxu0
      %603 = vmatprep.mubr.bf16.mxu0 0
      %604 = vmatmul.mubr.bf16.gmra.mxu0 %v534
      %v605 = vpop.f32.mrf.mxu0
      %v606 = vadd.f32 %v520, %v605
      %v607 = vpop.f32.mrf.mxu0
      %v608 = vpop.f32.mrf.mxu0
      %v609 = vadd.f32 %v523, %v608
      %v610 = vpop.f32.mrf.mxu0
      %611 = vdwg.mxu0
      %s612 = scalar_lea.vmem %s3, 8
      %v613 = vld [vmem:[%s612] sm:$0xf]
      %vm614 = vcmask 1046528
      %v615 = vrot.slane %v382, 1
      %v616 = vrot.slane %v383, 1
      %v617 = vsel %vm614, %v615, %v616
      %v618 = vrot.slane %v384, 1
      %v619 = vsel %vm614, %v616, %v618
      %v620 = vrot.slane %v385, 1
      %v621 = vsel %vm614, %v618, %v620
      %v622 = vrot.slane %v386, 1
      %v623 = vsel %vm614, %v620, %v622
      %v624 = vrot.slane %v387, 1
      %v625 = vsel %vm614, %v622, %v624
      %v627 = vsel %vm433, %v617, 0
      %v630 = vsel %vm433, %v619, 0
      %v633 = vsel %vm433, %v621, 0
      %v636 = vsel %vm433, %v623, 0
      %v639 = vsel %vm433, %v625, 0
      %v642 = vsel %vm449, %v613, 0
      %644 = vmatprep.subr.bf16.mxu0 0
      %645 = vmatpush1.bf16.msra.mxu0 0
      %646 = vmatprep.subr.bf16.mxu0 0
      %647 = vmatpush1.bf16.msra.mxu0 0
      %648 = vmatprep.subr.bf16.mxu0 0
      %649 = vmatpush1.bf16.msra.mxu0 0
      %650 = vmatprep.subr.bf16.mxu0 0
      %651 = vmatpush1.bf16.msra.mxu0 0
      %652 = vmatprep.subr.bf16.mxu0 0
      %653 = vmatpush1.bf16.msra.mxu0 0
      %654 = vmatprep.subr.bf16.mxu0 0
      %655 = vmatpush1.bf16.msra.mxu0 0
      %656 = vmatprep.subr.bf16.mxu0 0
      %657 = vmatpush1.bf16.msra.mxu0 0
      %658 = vmatprep.subr.bf16.mxu0 0
      %659 = vmatpush1.bf16.msra.mxu0 %v642
      %660 = vmatprep.subr.bf16.mxu0 0
      %661 = vmatpush2.bf16.msra.mxu0 0
      %662 = vmatprep.subr.bf16.mxu0 0
      %663 = vmatpush2.bf16.msra.mxu0 0
      %664 = vmatprep.subr.bf16.mxu0 0
      %665 = vmatpush2.bf16.msra.mxu0 0
      %666 = vmatprep.subr.bf16.mxu0 0
      %667 = vmatpush2.bf16.msra.mxu0 0
      %668 = vmatprep.subr.bf16.mxu0 0
      %669 = vmatpush2.bf16.msra.mxu0 0
      %670 = vmatprep.subr.bf16.mxu0 0
      %671 = vmatpush2.bf16.msra.mxu0 0
      %672 = vmatprep.subr.bf16.mxu0 0
      %673 = vmatpush2.bf16.msra.mxu0 0
      %674 = vmatprep.subr.bf16.mxu0 0
      %675 = vmatpush2.bf16.msra.mxu0 0
      %676 = vmatprep.mubr.bf16.mxu0 0
      %677 = vmatmul.mubr.bf16.gmra.mxu0 %v627
      %v678 = vpop.f32.mrf.mxu0
      %v679 = vadd.f32 0.0, %v678
      %v680 = vpop.f32.mrf.mxu0
      %v681 = vpop.f32.mrf.mxu0
      %v682 = vadd.f32 0.0, %v681
      %v683 = vpop.f32.mrf.mxu0
      %684 = vmatprep.mubr.bf16.mxu0 0
      %685 = vmatmul.mubr.bf16.gmra.mxu0 %v630
      %v686 = vpop.f32.mrf.mxu0
      %v687 = vadd.f32 0.0, %v686
      %v688 = vpop.f32.mrf.mxu0
      %v689 = vpop.f32.mrf.mxu0
      %v690 = vadd.f32 0.0, %v689
      %v691 = vpop.f32.mrf.mxu0
      %692 = vmatprep.mubr.bf16.mxu0 0
      %693 = vmatmul.mubr.bf16.gmra.mxu0 %v633
      %v694 = vpop.f32.mrf.mxu0
      %v695 = vadd.f32 0.0, %v694
      %v696 = vpop.f32.mrf.mxu0
      %v697 = vpop.f32.mrf.mxu0
      %v698 = vadd.f32 0.0, %v697
      %v699 = vpop.f32.mrf.mxu0
      %700 = vmatprep.mubr.bf16.mxu0 0
      %701 = vmatmul.mubr.bf16.gmra.mxu0 %v636
      %v702 = vpop.f32.mrf.mxu0
      %v703 = vadd.f32 0.0, %v702
      %v704 = vpop.f32.mrf.mxu0
      %v705 = vpop.f32.mrf.mxu0
      %v706 = vadd.f32 0.0, %v705
      %v707 = vpop.f32.mrf.mxu0
      %708 = vmatprep.mubr.bf16.mxu0 0
      %709 = vmatmul.mubr.bf16.gmra.mxu0 %v639
      %v710 = vpop.f32.mrf.mxu0
      %v711 = vadd.f32 0.0, %v710
      %v712 = vpop.f32.mrf.mxu0
      %v713 = vpop.f32.mrf.mxu0
      %v714 = vadd.f32 0.0, %v713
      %v715 = vpop.f32.mrf.mxu0
      %716 = vdwg.mxu0
      %v717 = vadd.f32 %v574, %v679
      %v718 = vadd.f32 %v577, %v682
      %v719 = vadd.f32 %v582, %v687
      %v720 = vadd.f32 %v585, %v690
      %v721 = vadd.f32 %v590, %v695
      %v722 = vadd.f32 %v593, %v698
      %v723 = vadd.f32 %v598, %v703
      %v724 = vadd.f32 %v601, %v706
      %v725 = vadd.f32 %v606, %v711
      %v726 = vadd.f32 %v609, %v714
      %s727 = scalar_lea.vmem %s3, 12
      %v728 = vld [vmem:[%s727] sm:$0xf]
      %v730 = vunpack.c.l.b16 %v355
      %v731 = vpack.c.b16 %v373, %v372
      %v732 = vpack.c.b16 %v375, %v374
      %v733 = vpack.c.b16 %v377, %v376
      %v734 = vpack.c.b16 %v379, %v378
      %v735 = vpack.c.b16 %v381, %v380
      %v736 = vpack.c.b16 %v730, %v730
      %v737 = vrot.slane %v731, 1
      %v738 = vrot.slane %v732, 1
      %v739 = vsel %vm614, %v737, %v738
      %v740 = vrot.slane %v733, 1
      %v741 = vsel %vm614, %v738, %v740
      %v742 = vrot.slane %v734, 1
      %v743 = vsel %vm614, %v740, %v742
      %v744 = vrot.slane %v735, 1
      %v745 = vsel %vm614, %v742, %v744
      %v746 = vrot.slane %v736, 1
      %v747 = vsel %vm614, %v744, %v746
      %v749 = vsel %vm433, %v739, 0
      %v752 = vsel %vm433, %v741, 0
      %v755 = vsel %vm433, %v743, 0
      %v758 = vsel %vm433, %v745, 0
      %v761 = vsel %vm433, %v747, 0
      %v764 = vsel %vm449, %v728, 0
      %766 = vmatprep.subr.bf16.mxu0 0
      %767 = vmatpush1.bf16.msra.mxu0 0
      %768 = vmatprep.subr.bf16.mxu0 0
      %769 = vmatpush1.bf16.msra.mxu0 0
      %770 = vmatprep.subr.bf16.mxu0 0
      %771 = vmatpush1.bf16.msra.mxu0 0
      %772 = vmatprep.subr.bf16.mxu0 0
      %773 = vmatpush1.bf16.msra.mxu0 0
      %774 = vmatprep.subr.bf16.mxu0 0
      %775 = vmatpush1.bf16.msra.mxu0 0
      %776 = vmatprep.subr.bf16.mxu0 0
      %777 = vmatpush1.bf16.msra.mxu0 0
      %778 = vmatprep.subr.bf16.mxu0 0
      %779 = vmatpush1.bf16.msra.mxu0 0
      %780 = vmatprep.subr.bf16.mxu0 0
      %781 = vmatpush1.bf16.msra.mxu0 %v764
      %782 = vmatprep.subr.bf16.mxu0 0
      %783 = vmatpush2.bf16.msra.mxu0 0
      %784 = vmatprep.subr.bf16.mxu0 0
      %785 = vmatpush2.bf16.msra.mxu0 0
      %786 = vmatprep.subr.bf16.mxu0 0
      %787 = vmatpush2.bf16.msra.mxu0 0
      %788 = vmatprep.subr.bf16.mxu0 0
      %789 = vmatpush2.bf16.msra.mxu0 0
      %790 = vmatprep.subr.bf16.mxu0 0
      %791 = vmatpush2.bf16.msra.mxu0 0
      %792 = vmatprep.subr.bf16.mxu0 0
      %793 = vmatpush2.bf16.msra.mxu0 0
      %794 = vmatprep.subr.bf16.mxu0 0
      %795 = vmatpush2.bf16.msra.mxu0 0
      %796 = vmatprep.subr.bf16.mxu0 0
      %797 = vmatpush2.bf16.msra.mxu0 0
      %798 = vmatprep.mubr.bf16.mxu0 0
      %799 = vmatmul.mubr.bf16.gmra.mxu0 %v749
      %v800 = vpop.f32.mrf.mxu0
      %v801 = vadd.f32 0.0, %v800
      %v802 = vpop.f32.mrf.mxu0
      %v803 = vpop.f32.mrf.mxu0
      %v804 = vadd.f32 0.0, %v803
      %v805 = vpop.f32.mrf.mxu0
      %806 = vmatprep.mubr.bf16.mxu0 0
      %807 = vmatmul.mubr.bf16.gmra.mxu0 %v752
      %v808 = vpop.f32.mrf.mxu0
      %v809 = vadd.f32 0.0, %v808
      %v810 = vpop.f32.mrf.mxu0
      %v811 = vpop.f32.mrf.mxu0
      %v812 = vadd.f32 0.0, %v811
      %v813 = vpop.f32.mrf.mxu0
      %814 = vmatprep.mubr.bf16.mxu0 0
      %815 = vmatmul.mubr.bf16.gmra.mxu0 %v755
      %v816 = vpop.f32.mrf.mxu0
      %v817 = vadd.f32 0.0, %v816
      %v818 = vpop.f32.mrf.mxu0
      %v819 = vpop.f32.mrf.mxu0
      %v820 = vadd.f32 0.0, %v819
      %v821 = vpop.f32.mrf.mxu0
      %822 = vmatprep.mubr.bf16.mxu0 0
      %823 = vmatmul.mubr.bf16.gmra.mxu0 %v758
      %v824 = vpop.f32.mrf.mxu0
      %v825 = vadd.f32 0.0, %v824
      %v826 = vpop.f32.mrf.mxu0
      %v827 = vpop.f32.mrf.mxu0
      %v828 = vadd.f32 0.0, %v827
      %v829 = vpop.f32.mrf.mxu0
      %830 = vmatprep.mubr.bf16.mxu0 0
      %831 = vmatmul.mubr.bf16.gmra.mxu0 %v761
      %v832 = vpop.f32.mrf.mxu0
      %v833 = vadd.f32 0.0, %v832
      %v834 = vpop.f32.mrf.mxu0
      %v835 = vpop.f32.mrf.mxu0
      %v836 = vadd.f32 0.0, %v835
      %v837 = vpop.f32.mrf.mxu0
      %838 = vdwg.mxu0
      %v839 = vadd.f32 %v717, %v801
      %v840 = vadd.f32 %v718, %v804
      %v841 = vadd.f32 %v719, %v809
      %v842 = vadd.f32 %v720, %v812
      %v843 = vadd.f32 %v721, %v817
      %v844 = vadd.f32 %v722, %v820
      %v845 = vadd.f32 %v723, %v825
      %v846 = vadd.f32 %v724, %v828
      %v847 = vadd.f32 %v725, %v833
      %v848 = vadd.f32 %v726, %v836
      %s849 = scalar_lea.vmem %s3, 16
      %v850 = vld [vmem:[%s849] sm:$0xf]
      %vm851 = vsmask.f32 6400
      %v853 = vshrl.u32 %v731, 16
      %v855 = vrot.slane %v853, 1
      %v856 = vshll.u32 %v731, 16
      %v858 = vrot.slane %v856, 2
      %v859 = vor.u32 %v855, %v858
      %v861 = vshrl.u32 %v732, 16
      %v863 = vrot.slane %v861, 1
      %v864 = vshll.u32 %v732, 16
      %v866 = vrot.slane %v864, 2
      %v867 = vor.u32 %v863, %v866
      %v868 = vsel %vm851, %v859, %v867
      %v870 = vshrl.u32 %v733, 16
      %v872 = vrot.slane %v870, 1
      %v873 = vshll.u32 %v733, 16
      %v875 = vrot.slane %v873, 2
      %v876 = vor.u32 %v872, %v875
      %v877 = vsel %vm851, %v867, %v876
      %v879 = vshrl.u32 %v734, 16
      %v881 = vrot.slane %v879, 1
      %v882 = vshll.u32 %v734, 16
      %v884 = vrot.slane %v882, 2
      %v885 = vor.u32 %v881, %v884
      %v886 = vsel %vm851, %v876, %v885
      %v888 = vshrl.u32 %v735, 16
      %v890 = vrot.slane %v888, 1
      %v891 = vshll.u32 %v735, 16
      %v893 = vrot.slane %v891, 2
      %v894 = vor.u32 %v890, %v893
      %v895 = vsel %vm851, %v885, %v894
      %v897 = vshrl.u32 %v736, 16
      %v899 = vrot.slane %v897, 1
      %v900 = vshll.u32 %v736, 16
      %v902 = vrot.slane %v900, 2
      %v903 = vor.u32 %v899, %v902
      %v904 = vsel %vm851, %v894, %v903
      %v906 = vsel %vm433, %v868, 0
      %v909 = vsel %vm433, %v877, 0
      %v912 = vsel %vm433, %v886, 0
      %v915 = vsel %vm433, %v895, 0
      %v918 = vsel %vm433, %v904, 0
      %v921 = vsel %vm449, %v850, 0
      %923 = vmatprep.subr.bf16.mxu0 0
      %924 = vmatpush1.bf16.msra.mxu0 0
      %925 = vmatprep.subr.bf16.mxu0 0
      %926 = vmatpush1.bf16.msra.mxu0 0
      %927 = vmatprep.subr.bf16.mxu0 0
      %928 = vmatpush1.bf16.msra.mxu0 0
      %929 = vmatprep.subr.bf16.mxu0 0
      %930 = vmatpush1.bf16.msra.mxu0 0
      %931 = vmatprep.subr.bf16.mxu0 0
      %932 = vmatpush1.bf16.msra.mxu0 0
      %933 = vmatprep.subr.bf16.mxu0 0
      %934 = vmatpush1.bf16.msra.mxu0 0
      %935 = vmatprep.subr.bf16.mxu0 0
      %936 = vmatpush1.bf16.msra.mxu0 0
      %937 = vmatprep.subr.bf16.mxu0 0
      %938 = vmatpush1.bf16.msra.mxu0 %v921
      %939 = vmatprep.subr.bf16.mxu0 0
      %940 = vmatpush2.bf16.msra.mxu0 0
      %941 = vmatprep.subr.bf16.mxu0 0
      %942 = vmatpush2.bf16.msra.mxu0 0
      %943 = vmatprep.subr.bf16.mxu0 0
      %944 = vmatpush2.bf16.msra.mxu0 0
      %945 = vmatprep.subr.bf16.mxu0 0
      %946 = vmatpush2.bf16.msra.mxu0 0
      %947 = vmatprep.subr.bf16.mxu0 0
      %948 = vmatpush2.bf16.msra.mxu0 0
      %949 = vmatprep.subr.bf16.mxu0 0
      %950 = vmatpush2.bf16.msra.mxu0 0
      %951 = vmatprep.subr.bf16.mxu0 0
      %952 = vmatpush2.bf16.msra.mxu0 0
      %953 = vmatprep.subr.bf16.mxu0 0
      %954 = vmatpush2.bf16.msra.mxu0 0
      %955 = vmatprep.mubr.bf16.mxu0 0
      %956 = vmatmul.mubr.bf16.gmra.mxu0 %v906
      %v957 = vpop.f32.mrf.mxu0
      %v958 = vadd.f32 0.0, %v957
      %v959 = vpop.f32.mrf.mxu0
      %v960 = vpop.f32.mrf.mxu0
      %v961 = vadd.f32 0.0, %v960
      %v962 = vpop.f32.mrf.mxu0
      %963 = vmatprep.mubr.bf16.mxu0 0
      %964 = vmatmul.mubr.bf16.gmra.mxu0 %v909
      %v965 = vpop.f32.mrf.mxu0
      %v966 = vadd.f32 0.0, %v965
      %v967 = vpop.f32.mrf.mxu0
      %v968 = vpop.f32.mrf.mxu0
      %v969 = vadd.f32 0.0, %v968
      %v970 = vpop.f32.mrf.mxu0
      %971 = vmatprep.mubr.bf16.mxu0 0
      %972 = vmatmul.mubr.bf16.gmra.mxu0 %v912
      %v973 = vpop.f32.mrf.mxu0
      %v974 = vadd.f32 0.0, %v973
      %v975 = vpop.f32.mrf.mxu0
      %v976 = vpop.f32.mrf.mxu0
      %v977 = vadd.f32 0.0, %v976
      %v978 = vpop.f32.mrf.mxu0
      %979 = vmatprep.mubr.bf16.mxu0 0
      %980 = vmatmul.mubr.bf16.gmra.mxu0 %v915
      %v981 = vpop.f32.mrf.mxu0
      %v982 = vadd.f32 0.0, %v981
      %v983 = vpop.f32.mrf.mxu0
      %v984 = vpop.f32.mrf.mxu0
      %v985 = vadd.f32 0.0, %v984
      %v986 = vpop.f32.mrf.mxu0
      %987 = vmatprep.mubr.bf16.mxu0 0
      %988 = vmatmul.mubr.bf16.gmra.mxu0 %v918
      %v989 = vpop.f32.mrf.mxu0
      %v990 = vadd.f32 0.0, %v989
      %v991 = vpop.f32.mrf.mxu0
      %v992 = vpop.f32.mrf.mxu0
      %v993 = vadd.f32 0.0, %v992
      %v994 = vpop.f32.mrf.mxu0
      %995 = vdwg.mxu0
      %v996 = vadd.f32 %v839, %v958
      %v997 = vadd.f32 %v840, %v961
      %v998 = vadd.f32 %v841, %v966
      %v999 = vadd.f32 %v842, %v969
      %v1000 = vadd.f32 %v843, %v974
      %v1001 = vadd.f32 %v844, %v977
      %v1002 = vadd.f32 %v845, %v982
      %v1003 = vadd.f32 %v846, %v985
      %v1004 = vadd.f32 %v847, %v990
      %v1005 = vadd.f32 %v848, %v993
      %s1006 = scalar_lea.vmem %s3, 20
      %v1007 = vld [vmem:[%s1006] sm:$0xf]
      %vm1008 = vcmask 1045504
      %v1009 = vrot.slane %v731, 2
      %v1010 = vrot.slane %v732, 2
      %v1011 = vsel %vm1008, %v1009, %v1010
      %v1012 = vrot.slane %v733, 2
      %v1013 = vsel %vm1008, %v1010, %v1012
      %v1014 = vrot.slane %v734, 2
      %v1015 = vsel %vm1008, %v1012, %v1014
      %v1016 = vrot.slane %v735, 2
      %v1017 = vsel %vm1008, %v1014, %v1016
      %v1018 = vrot.slane %v736, 2
      %v1019 = vsel %vm1008, %v1016, %v1018
      %v1021 = vsel %vm433, %v1011, 0
      %v1024 = vsel %vm433, %v1013, 0
      %v1027 = vsel %vm433, %v1015, 0
      %v1030 = vsel %vm433, %v1017, 0
      %v1033 = vsel %vm433, %v1019, 0
      %v1036 = vsel %vm449, %v1007, 0
      %1038 = vmatprep.subr.bf16.mxu0 0
      %1039 = vmatpush1.bf16.msra.mxu0 0
      %1040 = vmatprep.subr.bf16.mxu0 0
      %1041 = vmatpush1.bf16.msra.mxu0 0
      %1042 = vmatprep.subr.bf16.mxu0 0
      %1043 = vmatpush1.bf16.msra.mxu0 0
      %1044 = vmatprep.subr.bf16.mxu0 0
      %1045 = vmatpush1.bf16.msra.mxu0 0
      %1046 = vmatprep.subr.bf16.mxu0 0
      %1047 = vmatpush1.bf16.msra.mxu0 0
      %1048 = vmatprep.subr.bf16.mxu0 0
      %1049 = vmatpush1.bf16.msra.mxu0 0
      %1050 = vmatprep.subr.bf16.mxu0 0
      %1051 = vmatpush1.bf16.msra.mxu0 0
      %1052 = vmatprep.subr.bf16.mxu0 0
      %1053 = vmatpush1.bf16.msra.mxu0 %v1036
      %1054 = vmatprep.subr.bf16.mxu0 0
      %1055 = vmatpush2.bf16.msra.mxu0 0
      %1056 = vmatprep.subr.bf16.mxu0 0
      %1057 = vmatpush2.bf16.msra.mxu0 0
      %1058 = vmatprep.subr.bf16.mxu0 0
      %1059 = vmatpush2.bf16.msra.mxu0 0
      %1060 = vmatprep.subr.bf16.mxu0 0
      %1061 = vmatpush2.bf16.msra.mxu0 0
      %1062 = vmatprep.subr.bf16.mxu0 0
      %1063 = vmatpush2.bf16.msra.mxu0 0
      %1064 = vmatprep.subr.bf16.mxu0 0
      %1065 = vmatpush2.bf16.msra.mxu0 0
      %1066 = vmatprep.subr.bf16.mxu0 0
      %1067 = vmatpush2.bf16.msra.mxu0 0
      %1068 = vmatprep.subr.bf16.mxu0 0
      %1069 = vmatpush2.bf16.msra.mxu0 0
      %1070 = vmatprep.mubr.bf16.mxu0 0
      %1071 = vmatmul.mubr.bf16.gmra.mxu0 %v1021
      %v1072 = vpop.f32.mrf.mxu0
      %v1073 = vadd.f32 0.0, %v1072
      %v1074 = vpop.f32.mrf.mxu0
      %v1075 = vpop.f32.mrf.mxu0
      %v1076 = vadd.f32 0.0, %v1075
      %v1077 = vpop.f32.mrf.mxu0
      %1078 = vmatprep.mubr.bf16.mxu0 0
      %1079 = vmatmul.mubr.bf16.gmra.mxu0 %v1024
      %v1080 = vpop.f32.mrf.mxu0
      %v1081 = vadd.f32 0.0, %v1080
      %v1082 = vpop.f32.mrf.mxu0
      %v1083 = vpop.f32.mrf.mxu0
      %v1084 = vadd.f32 0.0, %v1083
      %v1085 = vpop.f32.mrf.mxu0
      %1086 = vmatprep.mubr.bf16.mxu0 0
      %1087 = vmatmul.mubr.bf16.gmra.mxu0 %v1027
      %v1088 = vpop.f32.mrf.mxu0
      %v1089 = vadd.f32 0.0, %v1088
      %v1090 = vpop.f32.mrf.mxu0
      %v1091 = vpop.f32.mrf.mxu0
      %v1092 = vadd.f32 0.0, %v1091
      %v1093 = vpop.f32.mrf.mxu0
      %1094 = vmatprep.mubr.bf16.mxu0 0
      %1095 = vmatmul.mubr.bf16.gmra.mxu0 %v1030
      %v1096 = vpop.f32.mrf.mxu0
      %v1097 = vadd.f32 0.0, %v1096
      %v1098 = vpop.f32.mrf.mxu0
      %v1099 = vpop.f32.mrf.mxu0
      %v1100 = vadd.f32 0.0, %v1099
      %v1101 = vpop.f32.mrf.mxu0
      %1102 = vmatprep.mubr.bf16.mxu0 0
      %1103 = vmatmul.mubr.bf16.gmra.mxu0 %v1033
      %v1104 = vpop.f32.mrf.mxu0
      %v1105 = vadd.f32 0.0, %v1104
      %v1106 = vpop.f32.mrf.mxu0
      %v1107 = vpop.f32.mrf.mxu0
      %v1108 = vadd.f32 0.0, %v1107
      %v1109 = vpop.f32.mrf.mxu0
      %1110 = vdwg.mxu0
      %v1111 = vadd.f32 %v996, %v1073
      %v1112 = vadd.f32 %v997, %v1076
      %v1113 = vadd.f32 %v998, %v1081
      %v1114 = vadd.f32 %v999, %v1084
      %v1115 = vadd.f32 %v1000, %v1089
      %v1116 = vadd.f32 %v1001, %v1092
      %v1117 = vadd.f32 %v1002, %v1097
      %v1118 = vadd.f32 %v1003, %v1100
      %v1119 = vadd.f32 %v1004, %v1105
      %v1120 = vadd.f32 %v1005, %v1108
      %s1121 = scalar_lea.vmem %s3, 24
      %v1122 = vld [vmem:[%s1121] sm:$0xf]
      %v1124 = vunpack.c.l.b16 %v356
      %v1125 = vpack.c.b16 %v730, %v381
      %v1126 = vpack.c.b16 %v1124, %v1124
      %v1127 = vrot.slane %v383, 2
      %v1128 = vrot.slane %v384, 2
      %v1129 = vsel %vm1008, %v1127, %v1128
      %v1130 = vrot.slane %v385, 2
      %v1131 = vsel %vm1008, %v1128, %v1130
      %v1132 = vrot.slane %v386, 2
      %v1133 = vsel %vm1008, %v1130, %v1132
      %v1134 = vrot.slane %v1125, 2
      %v1135 = vsel %vm1008, %v1132, %v1134
      %v1136 = vrot.slane %v1126, 2
      %v1137 = vsel %vm1008, %v1134, %v1136
      %v1139 = vsel %vm433, %v1129, 0
      %v1142 = vsel %vm433, %v1131, 0
      %v1145 = vsel %vm433, %v1133, 0
      %v1148 = vsel %vm433, %v1135, 0
      %v1151 = vsel %vm433, %v1137, 0
      %v1154 = vsel %vm449, %v1122, 0
      %1156 = vmatprep.subr.bf16.mxu0 0
      %1157 = vmatpush1.bf16.msra.mxu0 0
      %1158 = vmatprep.subr.bf16.mxu0 0
      %1159 = vmatpush1.bf16.msra.mxu0 0
      %1160 = vmatprep.subr.bf16.mxu0 0
      %1161 = vmatpush1.bf16.msra.mxu0 0
      %1162 = vmatprep.subr.bf16.mxu0 0
      %1163 = vmatpush1.bf16.msra.mxu0 0
      %1164 = vmatprep.subr.bf16.mxu0 0
      %1165 = vmatpush1.bf16.msra.mxu0 0
      %1166 = vmatprep.subr.bf16.mxu0 0
      %1167 = vmatpush1.bf16.msra.mxu0 0
      %1168 = vmatprep.subr.bf16.mxu0 0
      %1169 = vmatpush1.bf16.msra.mxu0 0
      %1170 = vmatprep.subr.bf16.mxu0 0
      %1171 = vmatpush1.bf16.msra.mxu0 %v1154
      %1172 = vmatprep.subr.bf16.mxu0 0
      %1173 = vmatpush2.bf16.msra.mxu0 0
      %1174 = vmatprep.subr.bf16.mxu0 0
      %1175 = vmatpush2.bf16.msra.mxu0 0
      %1176 = vmatprep.subr.bf16.mxu0 0
      %1177 = vmatpush2.bf16.msra.mxu0 0
      %1178 = vmatprep.subr.bf16.mxu0 0
      %1179 = vmatpush2.bf16.msra.mxu0 0
      %1180 = vmatprep.subr.bf16.mxu0 0
      %1181 = vmatpush2.bf16.msra.mxu0 0
      %1182 = vmatprep.subr.bf16.mxu0 0
      %1183 = vmatpush2.bf16.msra.mxu0 0
      %1184 = vmatprep.subr.bf16.mxu0 0
      %1185 = vmatpush2.bf16.msra.mxu0 0
      %1186 = vmatprep.subr.bf16.mxu0 0
      %1187 = vmatpush2.bf16.msra.mxu0 0
      %1188 = vmatprep.mubr.bf16.mxu0 0
      %1189 = vmatmul.mubr.bf16.gmra.mxu0 %v1139
      %v1190 = vpop.f32.mrf.mxu0
      %v1191 = vadd.f32 0.0, %v1190
      %v1192 = vpop.f32.mrf.mxu0
      %v1193 = vpop.f32.mrf.mxu0
      %v1194 = vadd.f32 0.0, %v1193
      %v1195 = vpop.f32.mrf.mxu0
      %1196 = vmatprep.mubr.bf16.mxu0 0
      %1197 = vmatmul.mubr.bf16.gmra.mxu0 %v1142
      %v1198 = vpop.f32.mrf.mxu0
      %v1199 = vadd.f32 0.0, %v1198
      %v1200 = vpop.f32.mrf.mxu0
      %v1201 = vpop.f32.mrf.mxu0
      %v1202 = vadd.f32 0.0, %v1201
      %v1203 = vpop.f32.mrf.mxu0
      %1204 = vmatprep.mubr.bf16.mxu0 0
      %1205 = vmatmul.mubr.bf16.gmra.mxu0 %v1145
      %v1206 = vpop.f32.mrf.mxu0
      %v1207 = vadd.f32 0.0, %v1206
      %v1208 = vpop.f32.mrf.mxu0
      %v1209 = vpop.f32.mrf.mxu0
      %v1210 = vadd.f32 0.0, %v1209
      %v1211 = vpop.f32.mrf.mxu0
      %1212 = vmatprep.mubr.bf16.mxu0 0
      %1213 = vmatmul.mubr.bf16.gmra.mxu0 %v1148
      %v1214 = vpop.f32.mrf.mxu0
      %v1215 = vadd.f32 0.0, %v1214
      %v1216 = vpop.f32.mrf.mxu0
      %v1217 = vpop.f32.mrf.mxu0
      %v1218 = vadd.f32 0.0, %v1217
      %v1219 = vpop.f32.mrf.mxu0
      %1220 = vmatprep.mubr.bf16.mxu0 0
      %1221 = vmatmul.mubr.bf16.gmra.mxu0 %v1151
      %v1222 = vpop.f32.mrf.mxu0
      %v1223 = vadd.f32 0.0, %v1222
      %v1224 = vpop.f32.mrf.mxu0
      %v1225 = vpop.f32.mrf.mxu0
      %v1226 = vadd.f32 0.0, %v1225
      %v1227 = vpop.f32.mrf.mxu0
      %1228 = vdwg.mxu0
      %v1229 = vadd.f32 %v1111, %v1191
      %v1230 = vadd.f32 %v1112, %v1194
      %v1231 = vadd.f32 %v1113, %v1199
      %v1232 = vadd.f32 %v1114, %v1202
      %v1233 = vadd.f32 %v1115, %v1207
      %v1234 = vadd.f32 %v1116, %v1210
      %v1235 = vadd.f32 %v1117, %v1215
      %v1236 = vadd.f32 %v1118, %v1218
      %v1237 = vadd.f32 %v1119, %v1223
      %v1238 = vadd.f32 %v1120, %v1226
      %s1239 = scalar_lea.vmem %s3, 28
      %v1240 = vld [vmem:[%s1239] sm:$0xf]
      %vm1241 = vsmask.f32 5376
      %v1242 = vrot.slane %v401, 2
      %v1243 = vrot.slane %v397, 3
      %v1244 = vor.u32 %v1242, %v1243
      %v1245 = vrot.slane %v409, 2
      %v1246 = vrot.slane %v405, 3
      %v1247 = vor.u32 %v1245, %v1246
      %v1248 = vsel %vm1241, %v1244, %v1247
      %v1249 = vrot.slane %v417, 2
      %v1250 = vrot.slane %v413, 3
      %v1251 = vor.u32 %v1249, %v1250
      %v1252 = vsel %vm1241, %v1247, %v1251
      %v1253 = vrot.slane %v425, 2
      %v1254 = vrot.slane %v421, 3
      %v1255 = vor.u32 %v1253, %v1254
      %v1256 = vsel %vm1241, %v1251, %v1255
      %v1258 = vshrl.u32 %v1125, 16
      %v1260 = vrot.slane %v1258, 2
      %v1261 = vshll.u32 %v1125, 16
      %v1263 = vrot.slane %v1261, 3
      %v1264 = vor.u32 %v1260, %v1263
      %v1265 = vsel %vm1241, %v1255, %v1264
      %v1267 = vshrl.u32 %v1126, 16
      %v1269 = vrot.slane %v1267, 2
      %v1270 = vshll.u32 %v1126, 16
      %v1272 = vrot.slane %v1270, 3
      %v1273 = vor.u32 %v1269, %v1272
      %v1274 = vsel %vm1241, %v1264, %v1273
      %v1276 = vsel %vm433, %v1248, 0
      %v1279 = vsel %vm433, %v1252, 0
      %v1282 = vsel %vm433, %v1256, 0
      %v1285 = vsel %vm433, %v1265, 0
      %v1288 = vsel %vm433, %v1274, 0
      %v1291 = vsel %vm449, %v1240, 0
      %1293 = vmatprep.subr.bf16.mxu0 0
      %1294 = vmatpush1.bf16.msra.mxu0 0
      %1295 = vmatprep.subr.bf16.mxu0 0
      %1296 = vmatpush1.bf16.msra.mxu0 0
      %1297 = vmatprep.subr.bf16.mxu0 0
      %1298 = vmatpush1.bf16.msra.mxu0 0
      %1299 = vmatprep.subr.bf16.mxu0 0
      %1300 = vmatpush1.bf16.msra.mxu0 0
      %1301 = vmatprep.subr.bf16.mxu0 0
      %1302 = vmatpush1.bf16.msra.mxu0 0
      %1303 = vmatprep.subr.bf16.mxu0 0
      %1304 = vmatpush1.bf16.msra.mxu0 0
      %1305 = vmatprep.subr.bf16.mxu0 0
      %1306 = vmatpush1.bf16.msra.mxu0 0
      %1307 = vmatprep.subr.bf16.mxu0 0
      %1308 = vmatpush1.bf16.msra.mxu0 %v1291
      %1309 = vmatprep.subr.bf16.mxu0 0
      %1310 = vmatpush2.bf16.msra.mxu0 0
      %1311 = vmatprep.subr.bf16.mxu0 0
      %1312 = vmatpush2.bf16.msra.mxu0 0
      %1313 = vmatprep.subr.bf16.mxu0 0
      %1314 = vmatpush2.bf16.msra.mxu0 0
      %1315 = vmatprep.subr.bf16.mxu0 0
      %1316 = vmatpush2.bf16.msra.mxu0 0
      %1317 = vmatprep.subr.bf16.mxu0 0
      %1318 = vmatpush2.bf16.msra.mxu0 0
      %1319 = vmatprep.subr.bf16.mxu0 0
      %1320 = vmatpush2.bf16.msra.mxu0 0
      %1321 = vmatprep.subr.bf16.mxu0 0
      %1322 = vmatpush2.bf16.msra.mxu0 0
      %1323 = vmatprep.subr.bf16.mxu0 0
      %1324 = vmatpush2.bf16.msra.mxu0 0
      %1325 = vmatprep.mubr.bf16.mxu0 0
      %1326 = vmatmul.mubr.bf16.gmra.mxu0 %v1276
      %v1327 = vpop.f32.mrf.mxu0
      %v1328 = vadd.f32 0.0, %v1327
      %v1329 = vpop.f32.mrf.mxu0
      %v1330 = vpop.f32.mrf.mxu0
      %v1331 = vadd.f32 0.0, %v1330
      %v1332 = vpop.f32.mrf.mxu0
      %1333 = vmatprep.mubr.bf16.mxu0 0
      %1334 = vmatmul.mubr.bf16.gmra.mxu0 %v1279
      %v1335 = vpop.f32.mrf.mxu0
      %v1336 = vadd.f32 0.0, %v1335
      %v1337 = vpop.f32.mrf.mxu0
      %v1338 = vpop.f32.mrf.mxu0
      %v1339 = vadd.f32 0.0, %v1338
      %v1340 = vpop.f32.mrf.mxu0
      %1341 = vmatprep.mubr.bf16.mxu0 0
      %1342 = vmatmul.mubr.bf16.gmra.mxu0 %v1282
      %v1343 = vpop.f32.mrf.mxu0
      %v1344 = vadd.f32 0.0, %v1343
      %v1345 = vpop.f32.mrf.mxu0
      %v1346 = vpop.f32.mrf.mxu0
      %v1347 = vadd.f32 0.0, %v1346
      %v1348 = vpop.f32.mrf.mxu0
      %1349 = vmatprep.mubr.bf16.mxu0 0
      %1350 = vmatmul.mubr.bf16.gmra.mxu0 %v1285
      %v1351 = vpop.f32.mrf.mxu0
      %v1352 = vadd.f32 0.0, %v1351
      %v1353 = vpop.f32.mrf.mxu0
      %v1354 = vpop.f32.mrf.mxu0
      %v1355 = vadd.f32 0.0, %v1354
      %v1356 = vpop.f32.mrf.mxu0
      %1357 = vmatprep.mubr.bf16.mxu0 0
      %1358 = vmatmul.mubr.bf16.gmra.mxu0 %v1288
      %v1359 = vpop.f32.mrf.mxu0
      %v1360 = vadd.f32 0.0, %v1359
      %v1361 = vpop.f32.mrf.mxu0
      %v1362 = vpop.f32.mrf.mxu0
      %v1363 = vadd.f32 0.0, %v1362
      %v1364 = vpop.f32.mrf.mxu0
      %1365 = vdwg.mxu0
      %v1366 = vadd.f32 %v1229, %v1328
      %v1367 = vadd.f32 %v1230, %v1331
      %v1368 = vadd.f32 %v1231, %v1336
      %v1369 = vadd.f32 %v1232, %v1339
      %v1370 = vadd.f32 %v1233, %v1344
      %v1371 = vadd.f32 %v1234, %v1347
      %v1372 = vadd.f32 %v1235, %v1352
      %v1373 = vadd.f32 %v1236, %v1355
      %v1374 = vadd.f32 %v1237, %v1360
      %v1375 = vadd.f32 %v1238, %v1363
      %s1376 = scalar_lea.vmem %s3, 32
      %v1377 = vld [vmem:[%s1376] sm:$0xf]
      %vm1378 = vcmask 1044480
      %v1379 = vrot.slane %v383, 3
      %v1380 = vrot.slane %v384, 3
      %v1381 = vsel %vm1378, %v1379, %v1380
      %v1382 = vrot.slane %v385, 3
      %v1383 = vsel %vm1378, %v1380, %v1382
      %v1384 = vrot.slane %v386, 3
      %v1385 = vsel %vm1378, %v1382, %v1384
      %v1386 = vrot.slane %v1125, 3
      %v1387 = vsel %vm1378, %v1384, %v1386
      %v1388 = vrot.slane %v1126, 3
      %v1389 = vsel %vm1378, %v1386, %v1388
      %v1391 = vsel %vm433, %v1381, 0
      %v1394 = vsel %vm433, %v1383, 0
      %v1397 = vsel %vm433, %v1385, 0
      %v1400 = vsel %vm433, %v1387, 0
      %v1403 = vsel %vm433, %v1389, 0
      %v1406 = vsel %vm449, %v1377, 0
      %1408 = vmatprep.subr.bf16.mxu0 0
      %1409 = vmatpush1.bf16.msra.mxu0 0
      %1410 = vmatprep.subr.bf16.mxu0 0
      %1411 = vmatpush1.bf16.msra.mxu0 0
      %1412 = vmatprep.subr.bf16.mxu0 0
      %1413 = vmatpush1.bf16.msra.mxu0 0
      %1414 = vmatprep.subr.bf16.mxu0 0
      %1415 = vmatpush1.bf16.msra.mxu0 0
      %1416 = vmatprep.subr.bf16.mxu0 0
      %1417 = vmatpush1.bf16.msra.mxu0 0
      %1418 = vmatprep.subr.bf16.mxu0 0
      %1419 = vmatpush1.bf16.msra.mxu0 0
      %1420 = vmatprep.subr.bf16.mxu0 0
      %1421 = vmatpush1.bf16.msra.mxu0 0
      %1422 = vmatprep.subr.bf16.mxu0 0
      %1423 = vmatpush1.bf16.msra.mxu0 %v1406
      %1424 = vmatprep.subr.bf16.mxu0 0
      %1425 = vmatpush2.bf16.msra.mxu0 0
      %1426 = vmatprep.subr.bf16.mxu0 0
      %1427 = vmatpush2.bf16.msra.mxu0 0
      %1428 = vmatprep.subr.bf16.mxu0 0
      %1429 = vmatpush2.bf16.msra.mxu0 0
      %1430 = vmatprep.subr.bf16.mxu0 0
      %1431 = vmatpush2.bf16.msra.mxu0 0
      %1432 = vmatprep.subr.bf16.mxu0 0
      %1433 = vmatpush2.bf16.msra.mxu0 0
      %1434 = vmatprep.subr.bf16.mxu0 0
      %1435 = vmatpush2.bf16.msra.mxu0 0
      %1436 = vmatprep.subr.bf16.mxu0 0
      %1437 = vmatpush2.bf16.msra.mxu0 0
      %1438 = vmatprep.subr.bf16.mxu0 0
      %1439 = vmatpush2.bf16.msra.mxu0 0
      %1440 = vmatprep.mubr.bf16.mxu0 0
      %1441 = vmatmul.mubr.bf16.gmra.mxu0 %v1391
      %v1442 = vpop.f32.mrf.mxu0
      %v1443 = vadd.f32 0.0, %v1442
      %v1444 = vpop.f32.mrf.mxu0
      %v1445 = vpop.f32.mrf.mxu0
      %v1446 = vadd.f32 0.0, %v1445
      %v1447 = vpop.f32.mrf.mxu0
      %1448 = vmatprep.mubr.bf16.mxu0 0
      %1449 = vmatmul.mubr.bf16.gmra.mxu0 %v1394
      %v1450 = vpop.f32.mrf.mxu0
      %v1451 = vadd.f32 0.0, %v1450
      %v1452 = vpop.f32.mrf.mxu0
      %v1453 = vpop.f32.mrf.mxu0
      %v1454 = vadd.f32 0.0, %v1453
      %v1455 = vpop.f32.mrf.mxu0
      %1456 = vmatprep.mubr.bf16.mxu0 0
      %1457 = vmatmul.mubr.bf16.gmra.mxu0 %v1397
      %v1458 = vpop.f32.mrf.mxu0
      %v1459 = vadd.f32 0.0, %v1458
      %v1460 = vpop.f32.mrf.mxu0
      %v1461 = vpop.f32.mrf.mxu0
      %v1462 = vadd.f32 0.0, %v1461
      %v1463 = vpop.f32.mrf.mxu0
      %1464 = vmatprep.mubr.bf16.mxu0 0
      %1465 = vmatmul.mubr.bf16.gmra.mxu0 %v1400
      %v1466 = vpop.f32.mrf.mxu0
      %v1467 = vadd.f32 0.0, %v1466
      %v1468 = vpop.f32.mrf.mxu0
      %v1469 = vpop.f32.mrf.mxu0
      %v1470 = vadd.f32 0.0, %v1469
      %v1471 = vpop.f32.mrf.mxu0
      %1472 = vmatprep.mubr.bf16.mxu0 0
      %1473 = vmatmul.mubr.bf16.gmra.mxu0 %v1403
      %v1474 = vpop.f32.mrf.mxu0
      %v1475 = vadd.f32 0.0, %v1474
      %v1476 = vpop.f32.mrf.mxu0
      %v1477 = vpop.f32.mrf.mxu0
      %v1478 = vadd.f32 0.0, %v1477
      %v1479 = vpop.f32.mrf.mxu0
      %1480 = vdwg.mxu0
      %v1481 = vadd.f32 %v1366, %v1443
      %v1482 = vadd.f32 %v1367, %v1446
      %v1483 = vadd.f32 %v1368, %v1451
      %v1484 = vadd.f32 %v1369, %v1454
      %v1485 = vadd.f32 %v1370, %v1459
      %v1486 = vadd.f32 %v1371, %v1462
      %v1487 = vadd.f32 %v1372, %v1467
      %v1488 = vadd.f32 %v1373, %v1470
      %v1489 = vadd.f32 %v1374, %v1475
      %v1490 = vadd.f32 %v1375, %v1478
      %v1491 = vld [vmem:[%s321] sm:$0xf]
      %v1492 = vld [vmem:[%s321 + $0x4] sm:$0xf]
      %v1493 = vld [vmem:[%s321 + $0x8] sm:$0xf]
      %v1494 = vld [vmem:[%s321 + $0xc] sm:$0xf]
      %v1495 = vld [vmem:[%s321 + $0x10] sm:$0xf]
      %v1496 = vld [vmem:[%s321 + $0x14] sm:$0xf]
      %v1497 = vld [vmem:[%s321 + $0x18] sm:$0xf]
      %v1498 = vld [vmem:[%s321 + $0x1c] sm:$0xf]
      %v1499 = vld [vmem:[%s321 + $0x20] sm:$0xf]
      %v1500 = vld [vmem:[%s321 + $0x24] sm:$0xf]
      %v1501 = vld [vmem:[%s321 + $0x28] sm:$0xf]
      %v1502 = vld [vmem:[%s321 + $0x2c] sm:$0xf]
      %v1503 = vld [vmem:[%s321 + $0x30] sm:$0xf]
      %s1504 = scalar_lea.vmem %s3, 36
      %v1505 = vld [vmem:[%s1504] sm:$0xf]
      %v1516 = vunpack.c.l.b16 %v1491
      %v1517 = vunpack.c.l.b16 %v1492
      %v1518 = vunpack.c.l.b16 %v1493
      %v1519 = vunpack.c.l.b16 %v1494
      %v1520 = vunpack.c.l.b16 %v1495
      %v1521 = vunpack.c.l.b16 %v1496
      %v1522 = vunpack.c.l.b16 %v1497
      %v1523 = vunpack.c.l.b16 %v1498
      %v1524 = vunpack.c.l.b16 %v1499
      %v1525 = vunpack.c.l.b16 %v1500
      %v1526 = vpack.c.b16 %v1517, %v1516
      %v1527 = vpack.c.b16 %v1519, %v1518
      %v1528 = vpack.c.b16 %v1521, %v1520
      %v1529 = vpack.c.b16 %v1523, %v1522
      %v1530 = vpack.c.b16 %v1525, %v1524
      %v1532 = vsel %vm433, %v1526, 0
      %v1535 = vsel %vm433, %v1527, 0
      %v1538 = vsel %vm433, %v1528, 0
      %v1541 = vsel %vm433, %v1529, 0
      %v1544 = vsel %vm433, %v1530, 0
      %v1547 = vsel %vm449, %v1505, 0
      %1549 = vmatprep.subr.bf16.mxu0 0
      %1550 = vmatpush1.bf16.msra.mxu0 0
      %1551 = vmatprep.subr.bf16.mxu0 0
      %1552 = vmatpush1.bf16.msra.mxu0 0
      %1553 = vmatprep.subr.bf16.mxu0 0
      %1554 = vmatpush1.bf16.msra.mxu0 0
      %1555 = vmatprep.subr.bf16.mxu0 0
      %1556 = vmatpush1.bf16.msra.mxu0 0
      %1557 = vmatprep.subr.bf16.mxu0 0
      %1558 = vmatpush1.bf16.msra.mxu0 0
      %1559 = vmatprep.subr.bf16.mxu0 0
      %1560 = vmatpush1.bf16.msra.mxu0 0
      %1561 = vmatprep.subr.bf16.mxu0 0
      %1562 = vmatpush1.bf16.msra.mxu0 0
      %1563 = vmatprep.subr.bf16.mxu0 0
      %1564 = vmatpush1.bf16.msra.mxu0 %v1547
      %1565 = vmatprep.subr.bf16.mxu0 0
      %1566 = vmatpush2.bf16.msra.mxu0 0
      %1567 = vmatprep.subr.bf16.mxu0 0
      %1568 = vmatpush2.bf16.msra.mxu0 0
      %1569 = vmatprep.subr.bf16.mxu0 0
      %1570 = vmatpush2.bf16.msra.mxu0 0
      %1571 = vmatprep.subr.bf16.mxu0 0
      %1572 = vmatpush2.bf16.msra.mxu0 0
      %1573 = vmatprep.subr.bf16.mxu0 0
      %1574 = vmatpush2.bf16.msra.mxu0 0
      %1575 = vmatprep.subr.bf16.mxu0 0
      %1576 = vmatpush2.bf16.msra.mxu0 0
      %1577 = vmatprep.subr.bf16.mxu0 0
      %1578 = vmatpush2.bf16.msra.mxu0 0
      %1579 = vmatprep.subr.bf16.mxu0 0
      %1580 = vmatpush2.bf16.msra.mxu0 0
      %1581 = vmatprep.mubr.bf16.mxu0 0
      %1582 = vmatmul.mubr.bf16.gmra.mxu0 %v1532
      %v1583 = vpop.f32.mrf.mxu0
      %v1584 = vadd.f32 0.0, %v1583
      %v1585 = vpop.f32.mrf.mxu0
      %v1586 = vpop.f32.mrf.mxu0
      %v1587 = vadd.f32 0.0, %v1586
      %v1588 = vpop.f32.mrf.mxu0
      %1589 = vmatprep.mubr.bf16.mxu0 0
      %1590 = vmatmul.mubr.bf16.gmra.mxu0 %v1535
      %v1591 = vpop.f32.mrf.mxu0
      %v1592 = vadd.f32 0.0, %v1591
      %v1593 = vpop.f32.mrf.mxu0
      %v1594 = vpop.f32.mrf.mxu0
      %v1595 = vadd.f32 0.0, %v1594
      %v1596 = vpop.f32.mrf.mxu0
      %1597 = vmatprep.mubr.bf16.mxu0 0
      %1598 = vmatmul.mubr.bf16.gmra.mxu0 %v1538
      %v1599 = vpop.f32.mrf.mxu0
      %v1600 = vadd.f32 0.0, %v1599
      %v1601 = vpop.f32.mrf.mxu0
      %v1602 = vpop.f32.mrf.mxu0
      %v1603 = vadd.f32 0.0, %v1602
      %v1604 = vpop.f32.mrf.mxu0
      %1605 = vmatprep.mubr.bf16.mxu0 0
      %1606 = vmatmul.mubr.bf16.gmra.mxu0 %v1541
      %v1607 = vpop.f32.mrf.mxu0
      %v1608 = vadd.f32 0.0, %v1607
      %v1609 = vpop.f32.mrf.mxu0
      %v1610 = vpop.f32.mrf.mxu0
      %v1611 = vadd.f32 0.0, %v1610
      %v1612 = vpop.f32.mrf.mxu0
      %1613 = vmatprep.mubr.bf16.mxu0 0
      %1614 = vmatmul.mubr.bf16.gmra.mxu0 %v1544
      %v1615 = vpop.f32.mrf.mxu0
      %v1616 = vadd.f32 0.0, %v1615
      %v1617 = vpop.f32.mrf.mxu0
      %v1618 = vpop.f32.mrf.mxu0
      %v1619 = vadd.f32 0.0, %v1618
      %v1620 = vpop.f32.mrf.mxu0
      %1621 = vdwg.mxu0
      %v1622 = vadd.f32 %v1481, %v1584
      %v1623 = vadd.f32 %v1482, %v1587
      %v1624 = vadd.f32 %v1483, %v1592
      %v1625 = vadd.f32 %v1484, %v1595
      %v1626 = vadd.f32 %v1485, %v1600
      %v1627 = vadd.f32 %v1486, %v1603
      %v1628 = vadd.f32 %v1487, %v1608
      %v1629 = vadd.f32 %v1488, %v1611
      %v1630 = vadd.f32 %v1489, %v1616
      %v1631 = vadd.f32 %v1490, %v1619
      %s1632 = scalar_lea.vmem %s3, 40
      %v1633 = vld [vmem:[%s1632] sm:$0xf]
      %v1635 = vunpack.c.l.b16 %v1501
      %v1636 = vpack.c.b16 %v1635, %v1635
      %v1637 = vshrl.u32 %v1526, 16
      %v1639 = vshll.u32 %v1526, 16
      %v1641 = vrot.slane %v1639, 1
      %v1642 = vor.u32 %v1637, %v1641
      %v1643 = vshll.u32 %v1527, 16
      %v1645 = vrot.slane %v1643, 1
      %v1646 = vsel %vm388, %v1642, %v1645
      %v1647 = vshrl.u32 %v1527, 16
      %v1649 = vor.u32 %v1647, %v1645
      %v1650 = vshll.u32 %v1528, 16
      %v1652 = vrot.slane %v1650, 1
      %v1653 = vsel %vm388, %v1649, %v1652
      %v1654 = vshrl.u32 %v1528, 16
      %v1656 = vor.u32 %v1654, %v1652
      %v1657 = vshll.u32 %v1529, 16
      %v1659 = vrot.slane %v1657, 1
      %v1660 = vsel %vm388, %v1656, %v1659
      %v1661 = vshrl.u32 %v1529, 16
      %v1663 = vor.u32 %v1661, %v1659
      %v1664 = vshll.u32 %v1530, 16
      %v1666 = vrot.slane %v1664, 1
      %v1667 = vsel %vm388, %v1663, %v1666
      %v1668 = vshrl.u32 %v1530, 16
      %v1670 = vor.u32 %v1668, %v1666
      %v1672 = vshll.u32 %v1636, 16
      %v1674 = vrot.slane %v1672, 1
      %v1675 = vsel %vm388, %v1670, %v1674
      %v1677 = vsel %vm433, %v1646, 0
      %v1680 = vsel %vm433, %v1653, 0
      %v1683 = vsel %vm433, %v1660, 0
      %v1686 = vsel %vm433, %v1667, 0
      %v1689 = vsel %vm433, %v1675, 0
      %v1692 = vsel %vm449, %v1633, 0
      %1694 = vmatprep.subr.bf16.mxu0 0
      %1695 = vmatpush1.bf16.msra.mxu0 0
      %1696 = vmatprep.subr.bf16.mxu0 0
      %1697 = vmatpush1.bf16.msra.mxu0 0
      %1698 = vmatprep.subr.bf16.mxu0 0
      %1699 = vmatpush1.bf16.msra.mxu0 0
      %1700 = vmatprep.subr.bf16.mxu0 0
      %1701 = vmatpush1.bf16.msra.mxu0 0
      %1702 = vmatprep.subr.bf16.mxu0 0
      %1703 = vmatpush1.bf16.msra.mxu0 0
      %1704 = vmatprep.subr.bf16.mxu0 0
      %1705 = vmatpush1.bf16.msra.mxu0 0
      %1706 = vmatprep.subr.bf16.mxu0 0
      %1707 = vmatpush1.bf16.msra.mxu0 0
      %1708 = vmatprep.subr.bf16.mxu0 0
      %1709 = vmatpush1.bf16.msra.mxu0 %v1692
      %1710 = vmatprep.subr.bf16.mxu0 0
      %1711 = vmatpush2.bf16.msra.mxu0 0
      %1712 = vmatprep.subr.bf16.mxu0 0
      %1713 = vmatpush2.bf16.msra.mxu0 0
      %1714 = vmatprep.subr.bf16.mxu0 0
      %1715 = vmatpush2.bf16.msra.mxu0 0
      %1716 = vmatprep.subr.bf16.mxu0 0
      %1717 = vmatpush2.bf16.msra.mxu0 0
      %1718 = vmatprep.subr.bf16.mxu0 0
      %1719 = vmatpush2.bf16.msra.mxu0 0
      %1720 = vmatprep.subr.bf16.mxu0 0
      %1721 = vmatpush2.bf16.msra.mxu0 0
      %1722 = vmatprep.subr.bf16.mxu0 0
      %1723 = vmatpush2.bf16.msra.mxu0 0
      %1724 = vmatprep.subr.bf16.mxu0 0
      %1725 = vmatpush2.bf16.msra.mxu0 0
      %1726 = vmatprep.mubr.bf16.mxu0 0
      %1727 = vmatmul.mubr.bf16.gmra.mxu0 %v1677
      %v1728 = vpop.f32.mrf.mxu0
      %v1729 = vadd.f32 0.0, %v1728
      %v1730 = vpop.f32.mrf.mxu0
      %v1731 = vpop.f32.mrf.mxu0
      %v1732 = vadd.f32 0.0, %v1731
      %v1733 = vpop.f32.mrf.mxu0
      %1734 = vmatprep.mubr.bf16.mxu0 0
      %1735 = vmatmul.mubr.bf16.gmra.mxu0 %v1680
      %v1736 = vpop.f32.mrf.mxu0
      %v1737 = vadd.f32 0.0, %v1736
      %v1738 = vpop.f32.mrf.mxu0
      %v1739 = vpop.f32.mrf.mxu0
      %v1740 = vadd.f32 0.0, %v1739
      %v1741 = vpop.f32.mrf.mxu0
      %1742 = vmatprep.mubr.bf16.mxu0 0
      %1743 = vmatmul.mubr.bf16.gmra.mxu0 %v1683
      %v1744 = vpop.f32.mrf.mxu0
      %v1745 = vadd.f32 0.0, %v1744
      %v1746 = vpop.f32.mrf.mxu0
      %v1747 = vpop.f32.mrf.mxu0
      %v1748 = vadd.f32 0.0, %v1747
      %v1749 = vpop.f32.mrf.mxu0
      %1750 = vmatprep.mubr.bf16.mxu0 0
      %1751 = vmatmul.mubr.bf16.gmra.mxu0 %v1686
      %v1752 = vpop.f32.mrf.mxu0
      %v1753 = vadd.f32 0.0, %v1752
      %v1754 = vpop.f32.mrf.mxu0
      %v1755 = vpop.f32.mrf.mxu0
      %v1756 = vadd.f32 0.0, %v1755
      %v1757 = vpop.f32.mrf.mxu0
      %1758 = vmatprep.mubr.bf16.mxu0 0
      %1759 = vmatmul.mubr.bf16.gmra.mxu0 %v1689
      %v1760 = vpop.f32.mrf.mxu0
      %v1761 = vadd.f32 0.0, %v1760
      %v1762 = vpop.f32.mrf.mxu0
      %v1763 = vpop.f32.mrf.mxu0
      %v1764 = vadd.f32 0.0, %v1763
      %v1765 = vpop.f32.mrf.mxu0
      %1766 = vdwg.mxu0
      %v1767 = vadd.f32 %v1622, %v1729
      %v1768 = vadd.f32 %v1623, %v1732
      %v1769 = vadd.f32 %v1624, %v1737
      %v1770 = vadd.f32 %v1625, %v1740
      %v1771 = vadd.f32 %v1626, %v1745
      %v1772 = vadd.f32 %v1627, %v1748
      %v1773 = vadd.f32 %v1628, %v1753
      %v1774 = vadd.f32 %v1629, %v1756
      %v1775 = vadd.f32 %v1630, %v1761
      %v1776 = vadd.f32 %v1631, %v1764
      %s1777 = scalar_lea.vmem %s3, 44
      %v1778 = vld [vmem:[%s1777] sm:$0xf]
      %v1779 = vrot.slane %v1526, 1
      %v1780 = vrot.slane %v1527, 1
      %v1781 = vsel %vm614, %v1779, %v1780
      %v1782 = vrot.slane %v1528, 1
      %v1783 = vsel %vm614, %v1780, %v1782
      %v1784 = vrot.slane %v1529, 1
      %v1785 = vsel %vm614, %v1782, %v1784
      %v1786 = vrot.slane %v1530, 1
      %v1787 = vsel %vm614, %v1784, %v1786
      %v1788 = vrot.slane %v1636, 1
      %v1789 = vsel %vm614, %v1786, %v1788
      %v1791 = vsel %vm433, %v1781, 0
      %v1794 = vsel %vm433, %v1783, 0
      %v1797 = vsel %vm433, %v1785, 0
      %v1800 = vsel %vm433, %v1787, 0
      %v1803 = vsel %vm433, %v1789, 0
      %v1806 = vsel %vm449, %v1778, 0
      %1808 = vmatprep.subr.bf16.mxu0 0
      %1809 = vmatpush1.bf16.msra.mxu0 0
      %1810 = vmatprep.subr.bf16.mxu0 0
      %1811 = vmatpush1.bf16.msra.mxu0 0
      %1812 = vmatprep.subr.bf16.mxu0 0
      %1813 = vmatpush1.bf16.msra.mxu0 0
      %1814 = vmatprep.subr.bf16.mxu0 0
      %1815 = vmatpush1.bf16.msra.mxu0 0
      %1816 = vmatprep.subr.bf16.mxu0 0
      %1817 = vmatpush1.bf16.msra.mxu0 0
      %1818 = vmatprep.subr.bf16.mxu0 0
      %1819 = vmatpush1.bf16.msra.mxu0 0
      %1820 = vmatprep.subr.bf16.mxu0 0
      %1821 = vmatpush1.bf16.msra.mxu0 0
      %1822 = vmatprep.subr.bf16.mxu0 0
      %1823 = vmatpush1.bf16.msra.mxu0 %v1806
      %1824 = vmatprep.subr.bf16.mxu0 0
      %1825 = vmatpush2.bf16.msra.mxu0 0
      %1826 = vmatprep.subr.bf16.mxu0 0
      %1827 = vmatpush2.bf16.msra.mxu0 0
      %1828 = vmatprep.subr.bf16.mxu0 0
      %1829 = vmatpush2.bf16.msra.mxu0 0
      %1830 = vmatprep.subr.bf16.mxu0 0
      %1831 = vmatpush2.bf16.msra.mxu0 0
      %1832 = vmatprep.subr.bf16.mxu0 0
      %1833 = vmatpush2.bf16.msra.mxu0 0
      %1834 = vmatprep.subr.bf16.mxu0 0
      %1835 = vmatpush2.bf16.msra.mxu0 0
      %1836 = vmatprep.subr.bf16.mxu0 0
      %1837 = vmatpush2.bf16.msra.mxu0 0
      %1838 = vmatprep.subr.bf16.mxu0 0
      %1839 = vmatpush2.bf16.msra.mxu0 0
      %1840 = vmatprep.mubr.bf16.mxu0 0
      %1841 = vmatmul.mubr.bf16.gmra.mxu0 %v1791
      %v1842 = vpop.f32.mrf.mxu0
      %v1843 = vadd.f32 0.0, %v1842
      %v1844 = vpop.f32.mrf.mxu0
      %v1845 = vpop.f32.mrf.mxu0
      %v1846 = vadd.f32 0.0, %v1845
      %v1847 = vpop.f32.mrf.mxu0
      %1848 = vmatprep.mubr.bf16.mxu0 0
      %1849 = vmatmul.mubr.bf16.gmra.mxu0 %v1794
      %v1850 = vpop.f32.mrf.mxu0
      %v1851 = vadd.f32 0.0, %v1850
      %v1852 = vpop.f32.mrf.mxu0
      %v1853 = vpop.f32.mrf.mxu0
      %v1854 = vadd.f32 0.0, %v1853
      %v1855 = vpop.f32.mrf.mxu0
      %1856 = vmatprep.mubr.bf16.mxu0 0
      %1857 = vmatmul.mubr.bf16.gmra.mxu0 %v1797
      %v1858 = vpop.f32.mrf.mxu0
      %v1859 = vadd.f32 0.0, %v1858
      %v1860 = vpop.f32.mrf.mxu0
      %v1861 = vpop.f32.mrf.mxu0
      %v1862 = vadd.f32 0.0, %v1861
      %v1863 = vpop.f32.mrf.mxu0
      %1864 = vmatprep.mubr.bf16.mxu0 0
      %1865 = vmatmul.mubr.bf16.gmra.mxu0 %v1800
      %v1866 = vpop.f32.mrf.mxu0
      %v1867 = vadd.f32 0.0, %v1866
      %v1868 = vpop.f32.mrf.mxu0
      %v1869 = vpop.f32.mrf.mxu0
      %v1870 = vadd.f32 0.0, %v1869
      %v1871 = vpop.f32.mrf.mxu0
      %1872 = vmatprep.mubr.bf16.mxu0 0
      %1873 = vmatmul.mubr.bf16.gmra.mxu0 %v1803
      %v1874 = vpop.f32.mrf.mxu0
      %v1875 = vadd.f32 0.0, %v1874
      %v1876 = vpop.f32.mrf.mxu0
      %v1877 = vpop.f32.mrf.mxu0
      %v1878 = vadd.f32 0.0, %v1877
      %v1879 = vpop.f32.mrf.mxu0
      %1880 = vdwg.mxu0
      %v1881 = vadd.f32 %v1767, %v1843
      %v1882 = vadd.f32 %v1768, %v1846
      %v1883 = vadd.f32 %v1769, %v1851
      %v1884 = vadd.f32 %v1770, %v1854
      %v1885 = vadd.f32 %v1771, %v1859
      %v1886 = vadd.f32 %v1772, %v1862
      %v1887 = vadd.f32 %v1773, %v1867
      %v1888 = vadd.f32 %v1774, %v1870
      %v1889 = vadd.f32 %v1775, %v1875
      %v1890 = vadd.f32 %v1776, %v1878
      %s1891 = scalar_lea.vmem %s3, 48
      %v1892 = vld [vmem:[%s1891] sm:$0xf]
      %v1894 = vunpack.c.l.b16 %v1502
      %v1895 = vpack.c.b16 %v1518, %v1517
      %v1896 = vpack.c.b16 %v1520, %v1519
      %v1897 = vpack.c.b16 %v1522, %v1521
      %v1898 = vpack.c.b16 %v1524, %v1523
      %v1899 = vpack.c.b16 %v1635, %v1525
      %v1900 = vpack.c.b16 %v1894, %v1894
      %v1901 = vrot.slane %v1895, 1
      %v1902 = vrot.slane %v1896, 1
      %v1903 = vsel %vm614, %v1901, %v1902
      %v1904 = vrot.slane %v1897, 1
      %v1905 = vsel %vm614, %v1902, %v1904
      %v1906 = vrot.slane %v1898, 1
      %v1907 = vsel %vm614, %v1904, %v1906
      %v1908 = vrot.slane %v1899, 1
      %v1909 = vsel %vm614, %v1906, %v1908
      %v1910 = vrot.slane %v1900, 1
      %v1911 = vsel %vm614, %v1908, %v1910
      %v1913 = vsel %vm433, %v1903, 0
      %v1916 = vsel %vm433, %v1905, 0
      %v1919 = vsel %vm433, %v1907, 0
      %v1922 = vsel %vm433, %v1909, 0
      %v1925 = vsel %vm433, %v1911, 0
      %v1928 = vsel %vm449, %v1892, 0
      %1930 = vmatprep.subr.bf16.mxu0 0
      %1931 = vmatpush1.bf16.msra.mxu0 0
      %1932 = vmatprep.subr.bf16.mxu0 0
      %1933 = vmatpush1.bf16.msra.mxu0 0
      %1934 = vmatprep.subr.bf16.mxu0 0
      %1935 = vmatpush1.bf16.msra.mxu0 0
      %1936 = vmatprep.subr.bf16.mxu0 0
      %1937 = vmatpush1.bf16.msra.mxu0 0
      %1938 = vmatprep.subr.bf16.mxu0 0
      %1939 = vmatpush1.bf16.msra.mxu0 0
      %1940 = vmatprep.subr.bf16.mxu0 0
      %1941 = vmatpush1.bf16.msra.mxu0 0
      %1942 = vmatprep.subr.bf16.mxu0 0
      %1943 = vmatpush1.bf16.msra.mxu0 0
      %1944 = vmatprep.subr.bf16.mxu0 0
      %1945 = vmatpush1.bf16.msra.mxu0 %v1928
      %1946 = vmatprep.subr.bf16.mxu0 0
      %1947 = vmatpush2.bf16.msra.mxu0 0
      %1948 = vmatprep.subr.bf16.mxu0 0
      %1949 = vmatpush2.bf16.msra.mxu0 0
      %1950 = vmatprep.subr.bf16.mxu0 0
      %1951 = vmatpush2.bf16.msra.mxu0 0
      %1952 = vmatprep.subr.bf16.mxu0 0
      %1953 = vmatpush2.bf16.msra.mxu0 0
      %1954 = vmatprep.subr.bf16.mxu0 0
      %1955 = vmatpush2.bf16.msra.mxu0 0
      %1956 = vmatprep.subr.bf16.mxu0 0
      %1957 = vmatpush2.bf16.msra.mxu0 0
      %1958 = vmatprep.subr.bf16.mxu0 0
      %1959 = vmatpush2.bf16.msra.mxu0 0
      %1960 = vmatprep.subr.bf16.mxu0 0
      %1961 = vmatpush2.bf16.msra.mxu0 0
      %1962 = vmatprep.mubr.bf16.mxu0 0
      %1963 = vmatmul.mubr.bf16.gmra.mxu0 %v1913
      %v1964 = vpop.f32.mrf.mxu0
      %v1965 = vadd.f32 0.0, %v1964
      %v1966 = vpop.f32.mrf.mxu0
      %v1967 = vpop.f32.mrf.mxu0
      %v1968 = vadd.f32 0.0, %v1967
      %v1969 = vpop.f32.mrf.mxu0
      %1970 = vmatprep.mubr.bf16.mxu0 0
      %1971 = vmatmul.mubr.bf16.gmra.mxu0 %v1916
      %v1972 = vpop.f32.mrf.mxu0
      %v1973 = vadd.f32 0.0, %v1972
      %v1974 = vpop.f32.mrf.mxu0
      %v1975 = vpop.f32.mrf.mxu0
      %v1976 = vadd.f32 0.0, %v1975
      %v1977 = vpop.f32.mrf.mxu0
      %1978 = vmatprep.mubr.bf16.mxu0 0
      %1979 = vmatmul.mubr.bf16.gmra.mxu0 %v1919
      %v1980 = vpop.f32.mrf.mxu0
      %v1981 = vadd.f32 0.0, %v1980
      %v1982 = vpop.f32.mrf.mxu0
      %v1983 = vpop.f32.mrf.mxu0
      %v1984 = vadd.f32 0.0, %v1983
      %v1985 = vpop.f32.mrf.mxu0
      %1986 = vmatprep.mubr.bf16.mxu0 0
      %1987 = vmatmul.mubr.bf16.gmra.mxu0 %v1922
      %v1988 = vpop.f32.mrf.mxu0
      %v1989 = vadd.f32 0.0, %v1988
      %v1990 = vpop.f32.mrf.mxu0
      %v1991 = vpop.f32.mrf.mxu0
      %v1992 = vadd.f32 0.0, %v1991
      %v1993 = vpop.f32.mrf.mxu0
      %1994 = vmatprep.mubr.bf16.mxu0 0
      %1995 = vmatmul.mubr.bf16.gmra.mxu0 %v1925
      %v1996 = vpop.f32.mrf.mxu0
      %v1997 = vadd.f32 0.0, %v1996
      %v1998 = vpop.f32.mrf.mxu0
      %v1999 = vpop.f32.mrf.mxu0
      %v2000 = vadd.f32 0.0, %v1999
      %v2001 = vpop.f32.mrf.mxu0
      %2002 = vdwg.mxu0
      %v2003 = vadd.f32 %v1881, %v1965
      %v2004 = vadd.f32 %v1882, %v1968
      %v2005 = vadd.f32 %v1883, %v1973
      %v2006 = vadd.f32 %v1884, %v1976
      %v2007 = vadd.f32 %v1885, %v1981
      %v2008 = vadd.f32 %v1886, %v1984
      %v2009 = vadd.f32 %v1887, %v1989
      %v2010 = vadd.f32 %v1888, %v1992
      %v2011 = vadd.f32 %v1889, %v1997
      %v2012 = vadd.f32 %v1890, %v2000
      %s2013 = scalar_lea.vmem %s3, 52
      %v2014 = vld [vmem:[%s2013] sm:$0xf]
      %v2016 = vshrl.u32 %v1895, 16
      %v2018 = vrot.slane %v2016, 1
      %v2019 = vshll.u32 %v1895, 16
      %v2021 = vrot.slane %v2019, 2
      %v2022 = vor.u32 %v2018, %v2021
      %v2024 = vshrl.u32 %v1896, 16
      %v2026 = vrot.slane %v2024, 1
      %v2027 = vshll.u32 %v1896, 16
      %v2029 = vrot.slane %v2027, 2
      %v2030 = vor.u32 %v2026, %v2029
      %v2031 = vsel %vm851, %v2022, %v2030
      %v2033 = vshrl.u32 %v1897, 16
      %v2035 = vrot.slane %v2033, 1
      %v2036 = vshll.u32 %v1897, 16
      %v2038 = vrot.slane %v2036, 2
      %v2039 = vor.u32 %v2035, %v2038
      %v2040 = vsel %vm851, %v2030, %v2039
      %v2042 = vshrl.u32 %v1898, 16
      %v2044 = vrot.slane %v2042, 1
      %v2045 = vshll.u32 %v1898, 16
      %v2047 = vrot.slane %v2045, 2
      %v2048 = vor.u32 %v2044, %v2047
      %v2049 = vsel %vm851, %v2039, %v2048
      %v2051 = vshrl.u32 %v1899, 16
      %v2053 = vrot.slane %v2051, 1
      %v2054 = vshll.u32 %v1899, 16
      %v2056 = vrot.slane %v2054, 2
      %v2057 = vor.u32 %v2053, %v2056
      %v2058 = vsel %vm851, %v2048, %v2057
      %v2060 = vshrl.u32 %v1900, 16
      %v2062 = vrot.slane %v2060, 1
      %v2063 = vshll.u32 %v1900, 16
      %v2065 = vrot.slane %v2063, 2
      %v2066 = vor.u32 %v2062, %v2065
      %v2067 = vsel %vm851, %v2057, %v2066
      %v2069 = vsel %vm433, %v2031, 0
      %v2072 = vsel %vm433, %v2040, 0
      %v2075 = vsel %vm433, %v2049, 0
      %v2078 = vsel %vm433, %v2058, 0
      %v2081 = vsel %vm433, %v2067, 0
      %v2084 = vsel %vm449, %v2014, 0
      %2086 = vmatprep.subr.bf16.mxu0 0
      %2087 = vmatpush1.bf16.msra.mxu0 0
      %2088 = vmatprep.subr.bf16.mxu0 0
      %2089 = vmatpush1.bf16.msra.mxu0 0
      %2090 = vmatprep.subr.bf16.mxu0 0
      %2091 = vmatpush1.bf16.msra.mxu0 0
      %2092 = vmatprep.subr.bf16.mxu0 0
      %2093 = vmatpush1.bf16.msra.mxu0 0
      %2094 = vmatprep.subr.bf16.mxu0 0
      %2095 = vmatpush1.bf16.msra.mxu0 0
      %2096 = vmatprep.subr.bf16.mxu0 0
      %2097 = vmatpush1.bf16.msra.mxu0 0
      %2098 = vmatprep.subr.bf16.mxu0 0
      %2099 = vmatpush1.bf16.msra.mxu0 0
      %2100 = vmatprep.subr.bf16.mxu0 0
      %2101 = vmatpush1.bf16.msra.mxu0 %v2084
      %2102 = vmatprep.subr.bf16.mxu0 0
      %2103 = vmatpush2.bf16.msra.mxu0 0
      %2104 = vmatprep.subr.bf16.mxu0 0
      %2105 = vmatpush2.bf16.msra.mxu0 0
      %2106 = vmatprep.subr.bf16.mxu0 0
      %2107 = vmatpush2.bf16.msra.mxu0 0
      %2108 = vmatprep.subr.bf16.mxu0 0
      %2109 = vmatpush2.bf16.msra.mxu0 0
      %2110 = vmatprep.subr.bf16.mxu0 0
      %2111 = vmatpush2.bf16.msra.mxu0 0
      %2112 = vmatprep.subr.bf16.mxu0 0
      %2113 = vmatpush2.bf16.msra.mxu0 0
      %2114 = vmatprep.subr.bf16.mxu0 0
      %2115 = vmatpush2.bf16.msra.mxu0 0
      %2116 = vmatprep.subr.bf16.mxu0 0
      %2117 = vmatpush2.bf16.msra.mxu0 0
      %2118 = vmatprep.mubr.bf16.mxu0 0
      %2119 = vmatmul.mubr.bf16.gmra.mxu0 %v2069
      %v2120 = vpop.f32.mrf.mxu0
      %v2121 = vadd.f32 0.0, %v2120
      %v2122 = vpop.f32.mrf.mxu0
      %v2123 = vpop.f32.mrf.mxu0
      %v2124 = vadd.f32 0.0, %v2123
      %v2125 = vpop.f32.mrf.mxu0
      %2126 = vmatprep.mubr.bf16.mxu0 0
      %2127 = vmatmul.mubr.bf16.gmra.mxu0 %v2072
      %v2128 = vpop.f32.mrf.mxu0
      %v2129 = vadd.f32 0.0, %v2128
      %v2130 = vpop.f32.mrf.mxu0
      %v2131 = vpop.f32.mrf.mxu0
      %v2132 = vadd.f32 0.0, %v2131
      %v2133 = vpop.f32.mrf.mxu0
      %2134 = vmatprep.mubr.bf16.mxu0 0
      %2135 = vmatmul.mubr.bf16.gmra.mxu0 %v2075
      %v2136 = vpop.f32.mrf.mxu0
      %v2137 = vadd.f32 0.0, %v2136
      %v2138 = vpop.f32.mrf.mxu0
      %v2139 = vpop.f32.mrf.mxu0
      %v2140 = vadd.f32 0.0, %v2139
      %v2141 = vpop.f32.mrf.mxu0
      %2142 = vmatprep.mubr.bf16.mxu0 0
      %2143 = vmatmul.mubr.bf16.gmra.mxu0 %v2078
      %v2144 = vpop.f32.mrf.mxu0
      %v2145 = vadd.f32 0.0, %v2144
      %v2146 = vpop.f32.mrf.mxu0
      %v2147 = vpop.f32.mrf.mxu0
      %v2148 = vadd.f32 0.0, %v2147
      %v2149 = vpop.f32.mrf.mxu0
      %2150 = vmatprep.mubr.bf16.mxu0 0
      %2151 = vmatmul.mubr.bf16.gmra.mxu0 %v2081
      %v2152 = vpop.f32.mrf.mxu0
      %v2153 = vadd.f32 0.0, %v2152
      %v2154 = vpop.f32.mrf.mxu0
      %v2155 = vpop.f32.mrf.mxu0
      %v2156 = vadd.f32 0.0, %v2155
      %v2157 = vpop.f32.mrf.mxu0
      %2158 = vdwg.mxu0
      %v2159 = vadd.f32 %v2003, %v2121
      %v2160 = vadd.f32 %v2004, %v2124
      %v2161 = vadd.f32 %v2005, %v2129
      %v2162 = vadd.f32 %v2006, %v2132
      %v2163 = vadd.f32 %v2007, %v2137
      %v2164 = vadd.f32 %v2008, %v2140
      %v2165 = vadd.f32 %v2009, %v2145
      %v2166 = vadd.f32 %v2010, %v2148
      %v2167 = vadd.f32 %v2011, %v2153
      %v2168 = vadd.f32 %v2012, %v2156
      %s2169 = scalar_lea.vmem %s3, 56
      %v2170 = vld [vmem:[%s2169] sm:$0xf]
      %v2171 = vrot.slane %v1895, 2
      %v2172 = vrot.slane %v1896, 2
      %v2173 = vsel %vm1008, %v2171, %v2172
      %v2174 = vrot.slane %v1897, 2
      %v2175 = vsel %vm1008, %v2172, %v2174
      %v2176 = vrot.slane %v1898, 2
      %v2177 = vsel %vm1008, %v2174, %v2176
      %v2178 = vrot.slane %v1899, 2
      %v2179 = vsel %vm1008, %v2176, %v2178
      %v2180 = vrot.slane %v1900, 2
      %v2181 = vsel %vm1008, %v2178, %v2180
      %v2183 = vsel %vm433, %v2173, 0
      %v2186 = vsel %vm433, %v2175, 0
      %v2189 = vsel %vm433, %v2177, 0
      %v2192 = vsel %vm433, %v2179, 0
      %v2195 = vsel %vm433, %v2181, 0
      %v2198 = vsel %vm449, %v2170, 0
      %2200 = vmatprep.subr.bf16.mxu0 0
      %2201 = vmatpush1.bf16.msra.mxu0 0
      %2202 = vmatprep.subr.bf16.mxu0 0
      %2203 = vmatpush1.bf16.msra.mxu0 0
      %2204 = vmatprep.subr.bf16.mxu0 0
      %2205 = vmatpush1.bf16.msra.mxu0 0
      %2206 = vmatprep.subr.bf16.mxu0 0
      %2207 = vmatpush1.bf16.msra.mxu0 0
      %2208 = vmatprep.subr.bf16.mxu0 0
      %2209 = vmatpush1.bf16.msra.mxu0 0
      %2210 = vmatprep.subr.bf16.mxu0 0
      %2211 = vmatpush1.bf16.msra.mxu0 0
      %2212 = vmatprep.subr.bf16.mxu0 0
      %2213 = vmatpush1.bf16.msra.mxu0 0
      %2214 = vmatprep.subr.bf16.mxu0 0
      %2215 = vmatpush1.bf16.msra.mxu0 %v2198
      %2216 = vmatprep.subr.bf16.mxu0 0
      %2217 = vmatpush2.bf16.msra.mxu0 0
      %2218 = vmatprep.subr.bf16.mxu0 0
      %2219 = vmatpush2.bf16.msra.mxu0 0
      %2220 = vmatprep.subr.bf16.mxu0 0
      %2221 = vmatpush2.bf16.msra.mxu0 0
      %2222 = vmatprep.subr.bf16.mxu0 0
      %2223 = vmatpush2.bf16.msra.mxu0 0
      %2224 = vmatprep.subr.bf16.mxu0 0
      %2225 = vmatpush2.bf16.msra.mxu0 0
      %2226 = vmatprep.subr.bf16.mxu0 0
      %2227 = vmatpush2.bf16.msra.mxu0 0
      %2228 = vmatprep.subr.bf16.mxu0 0
      %2229 = vmatpush2.bf16.msra.mxu0 0
      %2230 = vmatprep.subr.bf16.mxu0 0
      %2231 = vmatpush2.bf16.msra.mxu0 0
      %2232 = vmatprep.mubr.bf16.mxu0 0
      %2233 = vmatmul.mubr.bf16.gmra.mxu0 %v2183
      %v2234 = vpop.f32.mrf.mxu0
      %v2235 = vadd.f32 0.0, %v2234
      %v2236 = vpop.f32.mrf.mxu0
      %v2237 = vpop.f32.mrf.mxu0
      %v2238 = vadd.f32 0.0, %v2237
      %v2239 = vpop.f32.mrf.mxu0
      %2240 = vmatprep.mubr.bf16.mxu0 0
      %2241 = vmatmul.mubr.bf16.gmra.mxu0 %v2186
      %v2242 = vpop.f32.mrf.mxu0
      %v2243 = vadd.f32 0.0, %v2242
      %v2244 = vpop.f32.mrf.mxu0
      %v2245 = vpop.f32.mrf.mxu0
      %v2246 = vadd.f32 0.0, %v2245
      %v2247 = vpop.f32.mrf.mxu0
      %2248 = vmatprep.mubr.bf16.mxu0 0
      %2249 = vmatmul.mubr.bf16.gmra.mxu0 %v2189
      %v2250 = vpop.f32.mrf.mxu0
      %v2251 = vadd.f32 0.0, %v2250
      %v2252 = vpop.f32.mrf.mxu0
      %v2253 = vpop.f32.mrf.mxu0
      %v2254 = vadd.f32 0.0, %v2253
      %v2255 = vpop.f32.mrf.mxu0
      %2256 = vmatprep.mubr.bf16.mxu0 0
      %2257 = vmatmul.mubr.bf16.gmra.mxu0 %v2192
      %v2258 = vpop.f32.mrf.mxu0
      %v2259 = vadd.f32 0.0, %v2258
      %v2260 = vpop.f32.mrf.mxu0
      %v2261 = vpop.f32.mrf.mxu0
      %v2262 = vadd.f32 0.0, %v2261
      %v2263 = vpop.f32.mrf.mxu0
      %2264 = vmatprep.mubr.bf16.mxu0 0
      %2265 = vmatmul.mubr.bf16.gmra.mxu0 %v2195
      %v2266 = vpop.f32.mrf.mxu0
      %v2267 = vadd.f32 0.0, %v2266
      %v2268 = vpop.f32.mrf.mxu0
      %v2269 = vpop.f32.mrf.mxu0
      %v2270 = vadd.f32 0.0, %v2269
      %v2271 = vpop.f32.mrf.mxu0
      %2272 = vdwg.mxu0
      %v2273 = vadd.f32 %v2159, %v2235
      %v2274 = vadd.f32 %v2160, %v2238
      %v2275 = vadd.f32 %v2161, %v2243
      %v2276 = vadd.f32 %v2162, %v2246
      %v2277 = vadd.f32 %v2163, %v2251
      %v2278 = vadd.f32 %v2164, %v2254
      %v2279 = vadd.f32 %v2165, %v2259
      %v2280 = vadd.f32 %v2166, %v2262
      %v2281 = vadd.f32 %v2167, %v2267
      %v2282 = vadd.f32 %v2168, %v2270
      %s2283 = scalar_lea.vmem %s3, 60
      %v2284 = vld [vmem:[%s2283] sm:$0xf]
      %v2286 = vunpack.c.l.b16 %v1503
      %v2287 = vpack.c.b16 %v1894, %v1635
      %v2288 = vpack.c.b16 %v2286, %v2286
      %v2289 = vrot.slane %v1527, 2
      %v2290 = vrot.slane %v1528, 2
      %v2291 = vsel %vm1008, %v2289, %v2290
      %v2292 = vrot.slane %v1529, 2
      %v2293 = vsel %vm1008, %v2290, %v2292
      %v2294 = vrot.slane %v1530, 2
      %v2295 = vsel %vm1008, %v2292, %v2294
      %v2296 = vrot.slane %v2287, 2
      %v2297 = vsel %vm1008, %v2294, %v2296
      %v2298 = vrot.slane %v2288, 2
      %v2299 = vsel %vm1008, %v2296, %v2298
      %v2301 = vsel %vm433, %v2291, 0
      %v2304 = vsel %vm433, %v2293, 0
      %v2307 = vsel %vm433, %v2295, 0
      %v2310 = vsel %vm433, %v2297, 0
      %v2313 = vsel %vm433, %v2299, 0
      %v2316 = vsel %vm449, %v2284, 0
      %2318 = vmatprep.subr.bf16.mxu0 0
      %2319 = vmatpush1.bf16.msra.mxu0 0
      %2320 = vmatprep.subr.bf16.mxu0 0
      %2321 = vmatpush1.bf16.msra.mxu0 0
      %2322 = vmatprep.subr.bf16.mxu0 0
      %2323 = vmatpush1.bf16.msra.mxu0 0
      %2324 = vmatprep.subr.bf16.mxu0 0
      %2325 = vmatpush1.bf16.msra.mxu0 0
      %2326 = vmatprep.subr.bf16.mxu0 0
      %2327 = vmatpush1.bf16.msra.mxu0 0
      %2328 = vmatprep.subr.bf16.mxu0 0
      %2329 = vmatpush1.bf16.msra.mxu0 0
      %2330 = vmatprep.subr.bf16.mxu0 0
      %2331 = vmatpush1.bf16.msra.mxu0 0
      %2332 = vmatprep.subr.bf16.mxu0 0
      %2333 = vmatpush1.bf16.msra.mxu0 %v2316
      %2334 = vmatprep.subr.bf16.mxu0 0
      %2335 = vmatpush2.bf16.msra.mxu0 0
      %2336 = vmatprep.subr.bf16.mxu0 0
      %2337 = vmatpush2.bf16.msra.mxu0 0
      %2338 = vmatprep.subr.bf16.mxu0 0
      %2339 = vmatpush2.bf16.msra.mxu0 0
      %2340 = vmatprep.subr.bf16.mxu0 0
      %2341 = vmatpush2.bf16.msra.mxu0 0
      %2342 = vmatprep.subr.bf16.mxu0 0
      %2343 = vmatpush2.bf16.msra.mxu0 0
      %2344 = vmatprep.subr.bf16.mxu0 0
      %2345 = vmatpush2.bf16.msra.mxu0 0
      %2346 = vmatprep.subr.bf16.mxu0 0
      %2347 = vmatpush2.bf16.msra.mxu0 0
      %2348 = vmatprep.subr.bf16.mxu0 0
      %2349 = vmatpush2.bf16.msra.mxu0 0
      %2350 = vmatprep.mubr.bf16.mxu0 0
      %2351 = vmatmul.mubr.bf16.gmra.mxu0 %v2301
      %v2352 = vpop.f32.mrf.mxu0
      %v2353 = vadd.f32 0.0, %v2352
      %v2354 = vpop.f32.mrf.mxu0
      %v2355 = vpop.f32.mrf.mxu0
      %v2356 = vadd.f32 0.0, %v2355
      %v2357 = vpop.f32.mrf.mxu0
      %2358 = vmatprep.mubr.bf16.mxu0 0
      %2359 = vmatmul.mubr.bf16.gmra.mxu0 %v2304
      %v2360 = vpop.f32.mrf.mxu0
      %v2361 = vadd.f32 0.0, %v2360
      %v2362 = vpop.f32.mrf.mxu0
      %v2363 = vpop.f32.mrf.mxu0
      %v2364 = vadd.f32 0.0, %v2363
      %v2365 = vpop.f32.mrf.mxu0
      %2366 = vmatprep.mubr.bf16.mxu0 0
      %2367 = vmatmul.mubr.bf16.gmra.mxu0 %v2307
      %v2368 = vpop.f32.mrf.mxu0
      %v2369 = vadd.f32 0.0, %v2368
      %v2370 = vpop.f32.mrf.mxu0
      %v2371 = vpop.f32.mrf.mxu0
      %v2372 = vadd.f32 0.0, %v2371
      %v2373 = vpop.f32.mrf.mxu0
      %2374 = vmatprep.mubr.bf16.mxu0 0
      %2375 = vmatmul.mubr.bf16.gmra.mxu0 %v2310
      %v2376 = vpop.f32.mrf.mxu0
      %v2377 = vadd.f32 0.0, %v2376
      %v2378 = vpop.f32.mrf.mxu0
      %v2379 = vpop.f32.mrf.mxu0
      %v2380 = vadd.f32 0.0, %v2379
      %v2381 = vpop.f32.mrf.mxu0
      %2382 = vmatprep.mubr.bf16.mxu0 0
      %2383 = vmatmul.mubr.bf16.gmra.mxu0 %v2313
      %v2384 = vpop.f32.mrf.mxu0
      %v2385 = vadd.f32 0.0, %v2384
      %v2386 = vpop.f32.mrf.mxu0
      %v2387 = vpop.f32.mrf.mxu0
      %v2388 = vadd.f32 0.0, %v2387
      %v2389 = vpop.f32.mrf.mxu0
      %2390 = vdwg.mxu0
      %v2391 = vadd.f32 %v2273, %v2353
      %v2392 = vadd.f32 %v2274, %v2356
      %v2393 = vadd.f32 %v2275, %v2361
      %v2394 = vadd.f32 %v2276, %v2364
      %v2395 = vadd.f32 %v2277, %v2369
      %v2396 = vadd.f32 %v2278, %v2372
      %v2397 = vadd.f32 %v2279, %v2377
      %v2398 = vadd.f32 %v2280, %v2380
      %v2399 = vadd.f32 %v2281, %v2385
      %v2400 = vadd.f32 %v2282, %v2388
      %s2401 = scalar_lea.vmem %s3, 64
      %v2402 = vld [vmem:[%s2401] sm:$0xf]
      %v2403 = vrot.slane %v1647, 2
      %v2404 = vrot.slane %v1643, 3
      %v2405 = vor.u32 %v2403, %v2404
      %v2406 = vrot.slane %v1654, 2
      %v2407 = vrot.slane %v1650, 3
      %v2408 = vor.u32 %v2406, %v2407
      %v2409 = vsel %vm1241, %v2405, %v2408
      %v2410 = vrot.slane %v1661, 2
      %v2411 = vrot.slane %v1657, 3
      %v2412 = vor.u32 %v2410, %v2411
      %v2413 = vsel %vm1241, %v2408, %v2412
      %v2414 = vrot.slane %v1668, 2
      %v2415 = vrot.slane %v1664, 3
      %v2416 = vor.u32 %v2414, %v2415
      %v2417 = vsel %vm1241, %v2412, %v2416
      %v2419 = vshrl.u32 %v2287, 16
      %v2421 = vrot.slane %v2419, 2
      %v2422 = vshll.u32 %v2287, 16
      %v2424 = vrot.slane %v2422, 3
      %v2425 = vor.u32 %v2421, %v2424
      %v2426 = vsel %vm1241, %v2416, %v2425
      %v2428 = vshrl.u32 %v2288, 16
      %v2430 = vrot.slane %v2428, 2
      %v2431 = vshll.u32 %v2288, 16
      %v2433 = vrot.slane %v2431, 3
      %v2434 = vor.u32 %v2430, %v2433
      %v2435 = vsel %vm1241, %v2425, %v2434
      %v2437 = vsel %vm433, %v2409, 0
      %v2440 = vsel %vm433, %v2413, 0
      %v2443 = vsel %vm433, %v2417, 0
      %v2446 = vsel %vm433, %v2426, 0
      %v2449 = vsel %vm433, %v2435, 0
      %v2452 = vsel %vm449, %v2402, 0
      %2454 = vmatprep.subr.bf16.mxu0 0
      %2455 = vmatpush1.bf16.msra.mxu0 0
      %2456 = vmatprep.subr.bf16.mxu0 0
      %2457 = vmatpush1.bf16.msra.mxu0 0
      %2458 = vmatprep.subr.bf16.mxu0 0
      %2459 = vmatpush1.bf16.msra.mxu0 0
      %2460 = vmatprep.subr.bf16.mxu0 0
      %2461 = vmatpush1.bf16.msra.mxu0 0
      %2462 = vmatprep.subr.bf16.mxu0 0
      %2463 = vmatpush1.bf16.msra.mxu0 0
      %2464 = vmatprep.subr.bf16.mxu0 0
      %2465 = vmatpush1.bf16.msra.mxu0 0
      %2466 = vmatprep.subr.bf16.mxu0 0
      %2467 = vmatpush1.bf16.msra.mxu0 0
      %2468 = vmatprep.subr.bf16.mxu0 0
      %2469 = vmatpush1.bf16.msra.mxu0 %v2452
      %2470 = vmatprep.subr.bf16.mxu0 0
      %2471 = vmatpush2.bf16.msra.mxu0 0
      %2472 = vmatprep.subr.bf16.mxu0 0
      %2473 = vmatpush2.bf16.msra.mxu0 0
      %2474 = vmatprep.subr.bf16.mxu0 0
      %2475 = vmatpush2.bf16.msra.mxu0 0
      %2476 = vmatprep.subr.bf16.mxu0 0
      %2477 = vmatpush2.bf16.msra.mxu0 0
      %2478 = vmatprep.subr.bf16.mxu0 0
      %2479 = vmatpush2.bf16.msra.mxu0 0
      %2480 = vmatprep.subr.bf16.mxu0 0
      %2481 = vmatpush2.bf16.msra.mxu0 0
      %2482 = vmatprep.subr.bf16.mxu0 0
      %2483 = vmatpush2.bf16.msra.mxu0 0
      %2484 = vmatprep.subr.bf16.mxu0 0
      %2485 = vmatpush2.bf16.msra.mxu0 0
      %2486 = vmatprep.mubr.bf16.mxu0 0
      %2487 = vmatmul.mubr.bf16.gmra.mxu0 %v2437
      %v2488 = vpop.f32.mrf.mxu0
      %v2489 = vadd.f32 0.0, %v2488
      %v2490 = vpop.f32.mrf.mxu0
      %v2491 = vpop.f32.mrf.mxu0
      %v2492 = vadd.f32 0.0, %v2491
      %v2493 = vpop.f32.mrf.mxu0
      %2494 = vmatprep.mubr.bf16.mxu0 0
      %2495 = vmatmul.mubr.bf16.gmra.mxu0 %v2440
      %v2496 = vpop.f32.mrf.mxu0
      %v2497 = vadd.f32 0.0, %v2496
      %v2498 = vpop.f32.mrf.mxu0
      %v2499 = vpop.f32.mrf.mxu0
      %v2500 = vadd.f32 0.0, %v2499
      %v2501 = vpop.f32.mrf.mxu0
      %2502 = vmatprep.mubr.bf16.mxu0 0
      %2503 = vmatmul.mubr.bf16.gmra.mxu0 %v2443
      %v2504 = vpop.f32.mrf.mxu0
      %v2505 = vadd.f32 0.0, %v2504
      %v2506 = vpop.f32.mrf.mxu0
      %v2507 = vpop.f32.mrf.mxu0
      %v2508 = vadd.f32 0.0, %v2507
      %v2509 = vpop.f32.mrf.mxu0
      %2510 = vmatprep.mubr.bf16.mxu0 0
      %2511 = vmatmul.mubr.bf16.gmra.mxu0 %v2446
      %v2512 = vpop.f32.mrf.mxu0
      %v2513 = vadd.f32 0.0, %v2512
      %v2514 = vpop.f32.mrf.mxu0
      %v2515 = vpop.f32.mrf.mxu0
      %v2516 = vadd.f32 0.0, %v2515
      %v2517 = vpop.f32.mrf.mxu0
      %2518 = vmatprep.mubr.bf16.mxu0 0
      %2519 = vmatmul.mubr.bf16.gmra.mxu0 %v2449
      %v2520 = vpop.f32.mrf.mxu0
      %v2521 = vadd.f32 0.0, %v2520
      %v2522 = vpop.f32.mrf.mxu0
      %v2523 = vpop.f32.mrf.mxu0
      %v2524 = vadd.f32 0.0, %v2523
      %v2525 = vpop.f32.mrf.mxu0
      %2526 = vdwg.mxu0
      %v2527 = vadd.f32 %v2391, %v2489
      %v2528 = vadd.f32 %v2392, %v2492
      %v2529 = vadd.f32 %v2393, %v2497
      %v2530 = vadd.f32 %v2394, %v2500
      %v2531 = vadd.f32 %v2395, %v2505
      %v2532 = vadd.f32 %v2396, %v2508
      %v2533 = vadd.f32 %v2397, %v2513
      %v2534 = vadd.f32 %v2398, %v2516
      %v2535 = vadd.f32 %v2399, %v2521
      %v2536 = vadd.f32 %v2400, %v2524
      %s2537 = scalar_lea.vmem %s3, 68
      %v2538 = vld [vmem:[%s2537] sm:$0xf]
      %v2539 = vrot.slane %v1527, 3
      %v2540 = vrot.slane %v1528, 3
      %v2541 = vsel %vm1378, %v2539, %v2540
      %v2542 = vrot.slane %v1529, 3
      %v2543 = vsel %vm1378, %v2540, %v2542
      %v2544 = vrot.slane %v1530, 3
      %v2545 = vsel %vm1378, %v2542, %v2544
      %v2546 = vrot.slane %v2287, 3
      %v2547 = vsel %vm1378, %v2544, %v2546
      %v2548 = vrot.slane %v2288, 3
      %v2549 = vsel %vm1378, %v2546, %v2548
      %v2551 = vsel %vm433, %v2541, 0
      %v2554 = vsel %vm433, %v2543, 0
      %v2557 = vsel %vm433, %v2545, 0
      %v2560 = vsel %vm433, %v2547, 0
      %v2563 = vsel %vm433, %v2549, 0
      %v2566 = vsel %vm449, %v2538, 0
      %2568 = vmatprep.subr.bf16.mxu0 0
      %2569 = vmatpush1.bf16.msra.mxu0 0
      %2570 = vmatprep.subr.bf16.mxu0 0
      %2571 = vmatpush1.bf16.msra.mxu0 0
      %2572 = vmatprep.subr.bf16.mxu0 0
      %2573 = vmatpush1.bf16.msra.mxu0 0
      %2574 = vmatprep.subr.bf16.mxu0 0
      %2575 = vmatpush1.bf16.msra.mxu0 0
      %2576 = vmatprep.subr.bf16.mxu0 0
      %2577 = vmatpush1.bf16.msra.mxu0 0
      %2578 = vmatprep.subr.bf16.mxu0 0
      %2579 = vmatpush1.bf16.msra.mxu0 0
      %2580 = vmatprep.subr.bf16.mxu0 0
      %2581 = vmatpush1.bf16.msra.mxu0 0
      %2582 = vmatprep.subr.bf16.mxu0 0
      %2583 = vmatpush1.bf16.msra.mxu0 %v2566
      %2584 = vmatprep.subr.bf16.mxu0 0
      %2585 = vmatpush2.bf16.msra.mxu0 0
      %2586 = vmatprep.subr.bf16.mxu0 0
      %2587 = vmatpush2.bf16.msra.mxu0 0
      %2588 = vmatprep.subr.bf16.mxu0 0
      %2589 = vmatpush2.bf16.msra.mxu0 0
      %2590 = vmatprep.subr.bf16.mxu0 0
      %2591 = vmatpush2.bf16.msra.mxu0 0
      %2592 = vmatprep.subr.bf16.mxu0 0
      %2593 = vmatpush2.bf16.msra.mxu0 0
      %2594 = vmatprep.subr.bf16.mxu0 0
      %2595 = vmatpush2.bf16.msra.mxu0 0
      %2596 = vmatprep.subr.bf16.mxu0 0
      %2597 = vmatpush2.bf16.msra.mxu0 0
      %2598 = vmatprep.subr.bf16.mxu0 0
      %2599 = vmatpush2.bf16.msra.mxu0 0
      %2600 = vmatprep.mubr.bf16.mxu0 0
      %2601 = vmatmul.mubr.bf16.gmra.mxu0 %v2551
      %v2602 = vpop.f32.mrf.mxu0
      %v2603 = vadd.f32 0.0, %v2602
      %v2604 = vpop.f32.mrf.mxu0
      %v2605 = vpop.f32.mrf.mxu0
      %v2606 = vadd.f32 0.0, %v2605
      %v2607 = vpop.f32.mrf.mxu0
      %2608 = vmatprep.mubr.bf16.mxu0 0
      %2609 = vmatmul.mubr.bf16.gmra.mxu0 %v2554
      %v2610 = vpop.f32.mrf.mxu0
      %v2611 = vadd.f32 0.0, %v2610
      %v2612 = vpop.f32.mrf.mxu0
      %v2613 = vpop.f32.mrf.mxu0
      %v2614 = vadd.f32 0.0, %v2613
      %v2615 = vpop.f32.mrf.mxu0
      %2616 = vmatprep.mubr.bf16.mxu0 0
      %2617 = vmatmul.mubr.bf16.gmra.mxu0 %v2557
      %v2618 = vpop.f32.mrf.mxu0
      %v2619 = vadd.f32 0.0, %v2618
      %v2620 = vpop.f32.mrf.mxu0
      %v2621 = vpop.f32.mrf.mxu0
      %v2622 = vadd.f32 0.0, %v2621
      %v2623 = vpop.f32.mrf.mxu0
      %2624 = vmatprep.mubr.bf16.mxu0 0
      %2625 = vmatmul.mubr.bf16.gmra.mxu0 %v2560
      %v2626 = vpop.f32.mrf.mxu0
      %v2627 = vadd.f32 0.0, %v2626
      %v2628 = vpop.f32.mrf.mxu0
      %v2629 = vpop.f32.mrf.mxu0
      %v2630 = vadd.f32 0.0, %v2629
      %v2631 = vpop.f32.mrf.mxu0
      %2632 = vmatprep.mubr.bf16.mxu0 0
      %2633 = vmatmul.mubr.bf16.gmra.mxu0 %v2563
      %v2634 = vpop.f32.mrf.mxu0
      %v2635 = vadd.f32 0.0, %v2634
      %v2636 = vpop.f32.mrf.mxu0
      %v2637 = vpop.f32.mrf.mxu0
      %v2638 = vadd.f32 0.0, %v2637
      %v2639 = vpop.f32.mrf.mxu0
      %2640 = vdwg.mxu0
      %v2641 = vadd.f32 %v2527, %v2603
      %v2642 = vadd.f32 %v2528, %v2606
      %v2643 = vadd.f32 %v2529, %v2611
      %v2644 = vadd.f32 %v2530, %v2614
      %v2645 = vadd.f32 %v2531, %v2619
      %v2646 = vadd.f32 %v2532, %v2622
      %v2647 = vadd.f32 %v2533, %v2627
      %v2648 = vadd.f32 %v2534, %v2630
      %v2649 = vadd.f32 %v2535, %v2635
      %v2650 = vadd.f32 %v2536, %v2638
      %v2651 = vld [vmem:[%s332] sm:$0xf]
      %v2652 = vld [vmem:[%s332 + $0x4] sm:$0xf]
      %v2653 = vld [vmem:[%s332 + $0x8] sm:$0xf]
      %v2654 = vld [vmem:[%s332 + $0xc] sm:$0xf]
      %v2655 = vld [vmem:[%s332 + $0x10] sm:$0xf]
      %v2656 = vld [vmem:[%s332 + $0x14] sm:$0xf]
      %v2657 = vld [vmem:[%s332 + $0x18] sm:$0xf]
      %v2658 = vld [vmem:[%s332 + $0x1c] sm:$0xf]
      %v2659 = vld [vmem:[%s332 + $0x20] sm:$0xf]
      %v2660 = vld [vmem:[%s332 + $0x24] sm:$0xf]
      %v2661 = vld [vmem:[%s332 + $0x28] sm:$0xf]
      %v2662 = vld [vmem:[%s332 + $0x2c] sm:$0xf]
      %v2663 = vld [vmem:[%s332 + $0x30] sm:$0xf]
      %s2664 = scalar_lea.vmem %s3, 72
      %v2665 = vld [vmem:[%s2664] sm:$0xf]
      %v2676 = vunpack.c.l.b16 %v2651
      %v2677 = vunpack.c.l.b16 %v2652
      %v2678 = vunpack.c.l.b16 %v2653
      %v2679 = vunpack.c.l.b16 %v2654
      %v2680 = vunpack.c.l.b16 %v2655
      %v2681 = vunpack.c.l.b16 %v2656
      %v2682 = vunpack.c.l.b16 %v2657
      %v2683 = vunpack.c.l.b16 %v2658
      %v2684 = vunpack.c.l.b16 %v2659
      %v2685 = vunpack.c.l.b16 %v2660
      %v2686 = vpack.c.b16 %v2677, %v2676
      %v2687 = vpack.c.b16 %v2679, %v2678
      %v2688 = vpack.c.b16 %v2681, %v2680
      %v2689 = vpack.c.b16 %v2683, %v2682
      %v2690 = vpack.c.b16 %v2685, %v2684
      %v2692 = vsel %vm433, %v2686, 0
      %v2695 = vsel %vm433, %v2687, 0
      %v2698 = vsel %vm433, %v2688, 0
      %v2701 = vsel %vm433, %v2689, 0
      %v2704 = vsel %vm433, %v2690, 0
      %v2707 = vsel %vm449, %v2665, 0
      %2709 = vmatprep.subr.bf16.mxu0 0
      %2710 = vmatpush1.bf16.msra.mxu0 0
      %2711 = vmatprep.subr.bf16.mxu0 0
      %2712 = vmatpush1.bf16.msra.mxu0 0
      %2713 = vmatprep.subr.bf16.mxu0 0
      %2714 = vmatpush1.bf16.msra.mxu0 0
      %2715 = vmatprep.subr.bf16.mxu0 0
      %2716 = vmatpush1.bf16.msra.mxu0 0
      %2717 = vmatprep.subr.bf16.mxu0 0
      %2718 = vmatpush1.bf16.msra.mxu0 0
      %2719 = vmatprep.subr.bf16.mxu0 0
      %2720 = vmatpush1.bf16.msra.mxu0 0
      %2721 = vmatprep.subr.bf16.mxu0 0
      %2722 = vmatpush1.bf16.msra.mxu0 0
      %2723 = vmatprep.subr.bf16.mxu0 0
      %2724 = vmatpush1.bf16.msra.mxu0 %v2707
      %2725 = vmatprep.subr.bf16.mxu0 0
      %2726 = vmatpush2.bf16.msra.mxu0 0
      %2727 = vmatprep.subr.bf16.mxu0 0
      %2728 = vmatpush2.bf16.msra.mxu0 0
      %2729 = vmatprep.subr.bf16.mxu0 0
      %2730 = vmatpush2.bf16.msra.mxu0 0
      %2731 = vmatprep.subr.bf16.mxu0 0
      %2732 = vmatpush2.bf16.msra.mxu0 0
      %2733 = vmatprep.subr.bf16.mxu0 0
      %2734 = vmatpush2.bf16.msra.mxu0 0
      %2735 = vmatprep.subr.bf16.mxu0 0
      %2736 = vmatpush2.bf16.msra.mxu0 0
      %2737 = vmatprep.subr.bf16.mxu0 0
      %2738 = vmatpush2.bf16.msra.mxu0 0
      %2739 = vmatprep.subr.bf16.mxu0 0
      %2740 = vmatpush2.bf16.msra.mxu0 0
      %2741 = vmatprep.mubr.bf16.mxu0 0
      %2742 = vmatmul.mubr.bf16.gmra.mxu0 %v2692
      %v2743 = vpop.f32.mrf.mxu0
      %v2744 = vadd.f32 0.0, %v2743
      %v2745 = vpop.f32.mrf.mxu0
      %v2746 = vpop.f32.mrf.mxu0
      %v2747 = vadd.f32 0.0, %v2746
      %v2748 = vpop.f32.mrf.mxu0
      %2749 = vmatprep.mubr.bf16.mxu0 0
      %2750 = vmatmul.mubr.bf16.gmra.mxu0 %v2695
      %v2751 = vpop.f32.mrf.mxu0
      %v2752 = vadd.f32 0.0, %v2751
      %v2753 = vpop.f32.mrf.mxu0
      %v2754 = vpop.f32.mrf.mxu0
      %v2755 = vadd.f32 0.0, %v2754
      %v2756 = vpop.f32.mrf.mxu0
      %2757 = vmatprep.mubr.bf16.mxu0 0
      %2758 = vmatmul.mubr.bf16.gmra.mxu0 %v2698
      %v2759 = vpop.f32.mrf.mxu0
      %v2760 = vadd.f32 0.0, %v2759
      %v2761 = vpop.f32.mrf.mxu0
      %v2762 = vpop.f32.mrf.mxu0
      %v2763 = vadd.f32 0.0, %v2762
      %v2764 = vpop.f32.mrf.mxu0
      %2765 = vmatprep.mubr.bf16.mxu0 0
      %2766 = vmatmul.mubr.bf16.gmra.mxu0 %v2701
      %v2767 = vpop.f32.mrf.mxu0
      %v2768 = vadd.f32 0.0, %v2767
      %v2769 = vpop.f32.mrf.mxu0
      %v2770 = vpop.f32.mrf.mxu0
      %v2771 = vadd.f32 0.0, %v2770
      %v2772 = vpop.f32.mrf.mxu0
      %2773 = vmatprep.mubr.bf16.mxu0 0
      %2774 = vmatmul.mubr.bf16.gmra.mxu0 %v2704
      %v2775 = vpop.f32.mrf.mxu0
      %v2776 = vadd.f32 0.0, %v2775
      %v2777 = vpop.f32.mrf.mxu0
      %v2778 = vpop.f32.mrf.mxu0
      %v2779 = vadd.f32 0.0, %v2778
      %v2780 = vpop.f32.mrf.mxu0
      %2781 = vdwg.mxu0
      %v2782 = vadd.f32 %v2641, %v2744
      %v2783 = vadd.f32 %v2642, %v2747
      %v2784 = vadd.f32 %v2643, %v2752
      %v2785 = vadd.f32 %v2644, %v2755
      %v2786 = vadd.f32 %v2645, %v2760
      %v2787 = vadd.f32 %v2646, %v2763
      %v2788 = vadd.f32 %v2647, %v2768
      %v2789 = vadd.f32 %v2648, %v2771
      %v2790 = vadd.f32 %v2649, %v2776
      %v2791 = vadd.f32 %v2650, %v2779
      %s2792 = scalar_lea.vmem %s3, 76
      %v2793 = vld [vmem:[%s2792] sm:$0xf]
      %v2795 = vunpack.c.l.b16 %v2661
      %v2796 = vpack.c.b16 %v2795, %v2795
      %v2797 = vshrl.u32 %v2686, 16
      %v2799 = vshll.u32 %v2686, 16
      %v2801 = vrot.slane %v2799, 1
      %v2802 = vor.u32 %v2797, %v2801
      %v2803 = vshll.u32 %v2687, 16
      %v2805 = vrot.slane %v2803, 1
      %v2806 = vsel %vm388, %v2802, %v2805
      %v2807 = vshrl.u32 %v2687, 16
      %v2809 = vor.u32 %v2807, %v2805
      %v2810 = vshll.u32 %v2688, 16
      %v2812 = vrot.slane %v2810, 1
      %v2813 = vsel %vm388, %v2809, %v2812
      %v2814 = vshrl.u32 %v2688, 16
      %v2816 = vor.u32 %v2814, %v2812
      %v2817 = vshll.u32 %v2689, 16
      %v2819 = vrot.slane %v2817, 1
      %v2820 = vsel %vm388, %v2816, %v2819
      %v2821 = vshrl.u32 %v2689, 16
      %v2823 = vor.u32 %v2821, %v2819
      %v2824 = vshll.u32 %v2690, 16
      %v2826 = vrot.slane %v2824, 1
      %v2827 = vsel %vm388, %v2823, %v2826
      %v2828 = vshrl.u32 %v2690, 16
      %v2830 = vor.u32 %v2828, %v2826
      %v2832 = vshll.u32 %v2796, 16
      %v2834 = vrot.slane %v2832, 1
      %v2835 = vsel %vm388, %v2830, %v2834
      %v2837 = vsel %vm433, %v2806, 0
      %v2840 = vsel %vm433, %v2813, 0
      %v2843 = vsel %vm433, %v2820, 0
      %v2846 = vsel %vm433, %v2827, 0
      %v2849 = vsel %vm433, %v2835, 0
      %v2852 = vsel %vm449, %v2793, 0
      %2854 = vmatprep.subr.bf16.mxu0 0
      %2855 = vmatpush1.bf16.msra.mxu0 0
      %2856 = vmatprep.subr.bf16.mxu0 0
      %2857 = vmatpush1.bf16.msra.mxu0 0
      %2858 = vmatprep.subr.bf16.mxu0 0
      %2859 = vmatpush1.bf16.msra.mxu0 0
      %2860 = vmatprep.subr.bf16.mxu0 0
      %2861 = vmatpush1.bf16.msra.mxu0 0
      %2862 = vmatprep.subr.bf16.mxu0 0
      %2863 = vmatpush1.bf16.msra.mxu0 0
      %2864 = vmatprep.subr.bf16.mxu0 0
      %2865 = vmatpush1.bf16.msra.mxu0 0
      %2866 = vmatprep.subr.bf16.mxu0 0
      %2867 = vmatpush1.bf16.msra.mxu0 0
      %2868 = vmatprep.subr.bf16.mxu0 0
      %2869 = vmatpush1.bf16.msra.mxu0 %v2852
      %2870 = vmatprep.subr.bf16.mxu0 0
      %2871 = vmatpush2.bf16.msra.mxu0 0
      %2872 = vmatprep.subr.bf16.mxu0 0
      %2873 = vmatpush2.bf16.msra.mxu0 0
      %2874 = vmatprep.subr.bf16.mxu0 0
      %2875 = vmatpush2.bf16.msra.mxu0 0
      %2876 = vmatprep.subr.bf16.mxu0 0
      %2877 = vmatpush2.bf16.msra.mxu0 0
      %2878 = vmatprep.subr.bf16.mxu0 0
      %2879 = vmatpush2.bf16.msra.mxu0 0
      %2880 = vmatprep.subr.bf16.mxu0 0
      %2881 = vmatpush2.bf16.msra.mxu0 0
      %2882 = vmatprep.subr.bf16.mxu0 0
      %2883 = vmatpush2.bf16.msra.mxu0 0
      %2884 = vmatprep.subr.bf16.mxu0 0
      %2885 = vmatpush2.bf16.msra.mxu0 0
      %2886 = vmatprep.mubr.bf16.mxu0 0
      %2887 = vmatmul.mubr.bf16.gmra.mxu0 %v2837
      %v2888 = vpop.f32.mrf.mxu0
      %v2889 = vadd.f32 0.0, %v2888
      %v2890 = vpop.f32.mrf.mxu0
      %v2891 = vpop.f32.mrf.mxu0
      %v2892 = vadd.f32 0.0, %v2891
      %v2893 = vpop.f32.mrf.mxu0
      %2894 = vmatprep.mubr.bf16.mxu0 0
      %2895 = vmatmul.mubr.bf16.gmra.mxu0 %v2840
      %v2896 = vpop.f32.mrf.mxu0
      %v2897 = vadd.f32 0.0, %v2896
      %v2898 = vpop.f32.mrf.mxu0
      %v2899 = vpop.f32.mrf.mxu0
      %v2900 = vadd.f32 0.0, %v2899
      %v2901 = vpop.f32.mrf.mxu0
      %2902 = vmatprep.mubr.bf16.mxu0 0
      %2903 = vmatmul.mubr.bf16.gmra.mxu0 %v2843
      %v2904 = vpop.f32.mrf.mxu0
      %v2905 = vadd.f32 0.0, %v2904
      %v2906 = vpop.f32.mrf.mxu0
      %v2907 = vpop.f32.mrf.mxu0
      %v2908 = vadd.f32 0.0, %v2907
      %v2909 = vpop.f32.mrf.mxu0
      %2910 = vmatprep.mubr.bf16.mxu0 0
      %2911 = vmatmul.mubr.bf16.gmra.mxu0 %v2846
      %v2912 = vpop.f32.mrf.mxu0
      %v2913 = vadd.f32 0.0, %v2912
      %v2914 = vpop.f32.mrf.mxu0
      %v2915 = vpop.f32.mrf.mxu0
      %v2916 = vadd.f32 0.0, %v2915
      %v2917 = vpop.f32.mrf.mxu0
      %2918 = vmatprep.mubr.bf16.mxu0 0
      %2919 = vmatmul.mubr.bf16.gmra.mxu0 %v2849
      %v2920 = vpop.f32.mrf.mxu0
      %v2921 = vadd.f32 0.0, %v2920
      %v2922 = vpop.f32.mrf.mxu0
      %v2923 = vpop.f32.mrf.mxu0
      %v2924 = vadd.f32 0.0, %v2923
      %v2925 = vpop.f32.mrf.mxu0
      %2926 = vdwg.mxu0
      %v2927 = vadd.f32 %v2782, %v2889
      %v2928 = vadd.f32 %v2783, %v2892
      %v2929 = vadd.f32 %v2784, %v2897
      %v2930 = vadd.f32 %v2785, %v2900
      %v2931 = vadd.f32 %v2786, %v2905
      %v2932 = vadd.f32 %v2787, %v2908
      %v2933 = vadd.f32 %v2788, %v2913
      %v2934 = vadd.f32 %v2789, %v2916
      %v2935 = vadd.f32 %v2790, %v2921
      %v2936 = vadd.f32 %v2791, %v2924
      %s2937 = scalar_lea.vmem %s3, 80
      %v2938 = vld [vmem:[%s2937] sm:$0xf]
      %v2939 = vrot.slane %v2686, 1
      %v2940 = vrot.slane %v2687, 1
      %v2941 = vsel %vm614, %v2939, %v2940
      %v2942 = vrot.slane %v2688, 1
      %v2943 = vsel %vm614, %v2940, %v2942
      %v2944 = vrot.slane %v2689, 1
      %v2945 = vsel %vm614, %v2942, %v2944
      %v2946 = vrot.slane %v2690, 1
      %v2947 = vsel %vm614, %v2944, %v2946
      %v2948 = vrot.slane %v2796, 1
      %v2949 = vsel %vm614, %v2946, %v2948
      %v2951 = vsel %vm433, %v2941, 0
      %v2954 = vsel %vm433, %v2943, 0
      %v2957 = vsel %vm433, %v2945, 0
      %v2960 = vsel %vm433, %v2947, 0
      %v2963 = vsel %vm433, %v2949, 0
      %v2966 = vsel %vm449, %v2938, 0
      %2968 = vmatprep.subr.bf16.mxu0 0
      %2969 = vmatpush1.bf16.msra.mxu0 0
      %2970 = vmatprep.subr.bf16.mxu0 0
      %2971 = vmatpush1.bf16.msra.mxu0 0
      %2972 = vmatprep.subr.bf16.mxu0 0
      %2973 = vmatpush1.bf16.msra.mxu0 0
      %2974 = vmatprep.subr.bf16.mxu0 0
      %2975 = vmatpush1.bf16.msra.mxu0 0
      %2976 = vmatprep.subr.bf16.mxu0 0
      %2977 = vmatpush1.bf16.msra.mxu0 0
      %2978 = vmatprep.subr.bf16.mxu0 0
      %2979 = vmatpush1.bf16.msra.mxu0 0
      %2980 = vmatprep.subr.bf16.mxu0 0
      %2981 = vmatpush1.bf16.msra.mxu0 0
      %2982 = vmatprep.subr.bf16.mxu0 0
      %2983 = vmatpush1.bf16.msra.mxu0 %v2966
      %2984 = vmatprep.subr.bf16.mxu0 0
      %2985 = vmatpush2.bf16.msra.mxu0 0
      %2986 = vmatprep.subr.bf16.mxu0 0
      %2987 = vmatpush2.bf16.msra.mxu0 0
      %2988 = vmatprep.subr.bf16.mxu0 0
      %2989 = vmatpush2.bf16.msra.mxu0 0
      %2990 = vmatprep.subr.bf16.mxu0 0
      %2991 = vmatpush2.bf16.msra.mxu0 0
      %2992 = vmatprep.subr.bf16.mxu0 0
      %2993 = vmatpush2.bf16.msra.mxu0 0
      %2994 = vmatprep.subr.bf16.mxu0 0
      %2995 = vmatpush2.bf16.msra.mxu0 0
      %2996 = vmatprep.subr.bf16.mxu0 0
      %2997 = vmatpush2.bf16.msra.mxu0 0
      %2998 = vmatprep.subr.bf16.mxu0 0
      %2999 = vmatpush2.bf16.msra.mxu0 0
      %3000 = vmatprep.mubr.bf16.mxu0 0
      %3001 = vmatmul.mubr.bf16.gmra.mxu0 %v2951
      %v3002 = vpop.f32.mrf.mxu0
      %v3003 = vadd.f32 0.0, %v3002
      %v3004 = vpop.f32.mrf.mxu0
      %v3005 = vpop.f32.mrf.mxu0
      %v3006 = vadd.f32 0.0, %v3005
      %v3007 = vpop.f32.mrf.mxu0
      %3008 = vmatprep.mubr.bf16.mxu0 0
      %3009 = vmatmul.mubr.bf16.gmra.mxu0 %v2954
      %v3010 = vpop.f32.mrf.mxu0
      %v3011 = vadd.f32 0.0, %v3010
      %v3012 = vpop.f32.mrf.mxu0
      %v3013 = vpop.f32.mrf.mxu0
      %v3014 = vadd.f32 0.0, %v3013
      %v3015 = vpop.f32.mrf.mxu0
      %3016 = vmatprep.mubr.bf16.mxu0 0
      %3017 = vmatmul.mubr.bf16.gmra.mxu0 %v2957
      %v3018 = vpop.f32.mrf.mxu0
      %v3019 = vadd.f32 0.0, %v3018
      %v3020 = vpop.f32.mrf.mxu0
      %v3021 = vpop.f32.mrf.mxu0
      %v3022 = vadd.f32 0.0, %v3021
      %v3023 = vpop.f32.mrf.mxu0
      %3024 = vmatprep.mubr.bf16.mxu0 0
      %3025 = vmatmul.mubr.bf16.gmra.mxu0 %v2960
      %v3026 = vpop.f32.mrf.mxu0
      %v3027 = vadd.f32 0.0, %v3026
      %v3028 = vpop.f32.mrf.mxu0
      %v3029 = vpop.f32.mrf.mxu0
      %v3030 = vadd.f32 0.0, %v3029
      %v3031 = vpop.f32.mrf.mxu0
      %3032 = vmatprep.mubr.bf16.mxu0 0
      %3033 = vmatmul.mubr.bf16.gmra.mxu0 %v2963
      %v3034 = vpop.f32.mrf.mxu0
      %v3035 = vadd.f32 0.0, %v3034
      %v3036 = vpop.f32.mrf.mxu0
      %v3037 = vpop.f32.mrf.mxu0
      %v3038 = vadd.f32 0.0, %v3037
      %v3039 = vpop.f32.mrf.mxu0
      %3040 = vdwg.mxu0
      %v3041 = vadd.f32 %v2927, %v3003
      %v3042 = vadd.f32 %v2928, %v3006
      %v3043 = vadd.f32 %v2929, %v3011
      %v3044 = vadd.f32 %v2930, %v3014
      %v3045 = vadd.f32 %v2931, %v3019
      %v3046 = vadd.f32 %v2932, %v3022
      %v3047 = vadd.f32 %v2933, %v3027
      %v3048 = vadd.f32 %v2934, %v3030
      %v3049 = vadd.f32 %v2935, %v3035
      %v3050 = vadd.f32 %v2936, %v3038
      %s3051 = scalar_lea.vmem %s3, 84
      %v3052 = vld [vmem:[%s3051] sm:$0xf]
      %v3054 = vunpack.c.l.b16 %v2662
      %v3055 = vpack.c.b16 %v2678, %v2677
      %v3056 = vpack.c.b16 %v2680, %v2679
      %v3057 = vpack.c.b16 %v2682, %v2681
      %v3058 = vpack.c.b16 %v2684, %v2683
      %v3059 = vpack.c.b16 %v2795, %v2685
      %v3060 = vpack.c.b16 %v3054, %v3054
      %v3061 = vrot.slane %v3055, 1
      %v3062 = vrot.slane %v3056, 1
      %v3063 = vsel %vm614, %v3061, %v3062
      %v3064 = vrot.slane %v3057, 1
      %v3065 = vsel %vm614, %v3062, %v3064
      %v3066 = vrot.slane %v3058, 1
      %v3067 = vsel %vm614, %v3064, %v3066
      %v3068 = vrot.slane %v3059, 1
      %v3069 = vsel %vm614, %v3066, %v3068
      %v3070 = vrot.slane %v3060, 1
      %v3071 = vsel %vm614, %v3068, %v3070
      %v3073 = vsel %vm433, %v3063, 0
      %v3076 = vsel %vm433, %v3065, 0
      %v3079 = vsel %vm433, %v3067, 0
      %v3082 = vsel %vm433, %v3069, 0
      %v3085 = vsel %vm433, %v3071, 0
      %v3088 = vsel %vm449, %v3052, 0
      %3090 = vmatprep.subr.bf16.mxu0 0
      %3091 = vmatpush1.bf16.msra.mxu0 0
      %3092 = vmatprep.subr.bf16.mxu0 0
      %3093 = vmatpush1.bf16.msra.mxu0 0
      %3094 = vmatprep.subr.bf16.mxu0 0
      %3095 = vmatpush1.bf16.msra.mxu0 0
      %3096 = vmatprep.subr.bf16.mxu0 0
      %3097 = vmatpush1.bf16.msra.mxu0 0
      %3098 = vmatprep.subr.bf16.mxu0 0
      %3099 = vmatpush1.bf16.msra.mxu0 0
      %3100 = vmatprep.subr.bf16.mxu0 0
      %3101 = vmatpush1.bf16.msra.mxu0 0
      %3102 = vmatprep.subr.bf16.mxu0 0
      %3103 = vmatpush1.bf16.msra.mxu0 0
      %3104 = vmatprep.subr.bf16.mxu0 0
      %3105 = vmatpush1.bf16.msra.mxu0 %v3088
      %3106 = vmatprep.subr.bf16.mxu0 0
      %3107 = vmatpush2.bf16.msra.mxu0 0
      %3108 = vmatprep.subr.bf16.mxu0 0
      %3109 = vmatpush2.bf16.msra.mxu0 0
      %3110 = vmatprep.subr.bf16.mxu0 0
      %3111 = vmatpush2.bf16.msra.mxu0 0
      %3112 = vmatprep.subr.bf16.mxu0 0
      %3113 = vmatpush2.bf16.msra.mxu0 0
      %3114 = vmatprep.subr.bf16.mxu0 0
      %3115 = vmatpush2.bf16.msra.mxu0 0
      %3116 = vmatprep.subr.bf16.mxu0 0
      %3117 = vmatpush2.bf16.msra.mxu0 0
      %3118 = vmatprep.subr.bf16.mxu0 0
      %3119 = vmatpush2.bf16.msra.mxu0 0
      %3120 = vmatprep.subr.bf16.mxu0 0
      %3121 = vmatpush2.bf16.msra.mxu0 0
      %3122 = vmatprep.mubr.bf16.mxu0 0
      %3123 = vmatmul.mubr.bf16.gmra.mxu0 %v3073
      %v3124 = vpop.f32.mrf.mxu0
      %v3125 = vadd.f32 0.0, %v3124
      %v3126 = vpop.f32.mrf.mxu0
      %v3127 = vpop.f32.mrf.mxu0
      %v3128 = vadd.f32 0.0, %v3127
      %v3129 = vpop.f32.mrf.mxu0
      %3130 = vmatprep.mubr.bf16.mxu0 0
      %3131 = vmatmul.mubr.bf16.gmra.mxu0 %v3076
      %v3132 = vpop.f32.mrf.mxu0
      %v3133 = vadd.f32 0.0, %v3132
      %v3134 = vpop.f32.mrf.mxu0
      %v3135 = vpop.f32.mrf.mxu0
      %v3136 = vadd.f32 0.0, %v3135
      %v3137 = vpop.f32.mrf.mxu0
      %3138 = vmatprep.mubr.bf16.mxu0 0
      %3139 = vmatmul.mubr.bf16.gmra.mxu0 %v3079
      %v3140 = vpop.f32.mrf.mxu0
      %v3141 = vadd.f32 0.0, %v3140
      %v3142 = vpop.f32.mrf.mxu0
      %v3143 = vpop.f32.mrf.mxu0
      %v3144 = vadd.f32 0.0, %v3143
      %v3145 = vpop.f32.mrf.mxu0
      %3146 = vmatprep.mubr.bf16.mxu0 0
      %3147 = vmatmul.mubr.bf16.gmra.mxu0 %v3082
      %v3148 = vpop.f32.mrf.mxu0
      %v3149 = vadd.f32 0.0, %v3148
      %v3150 = vpop.f32.mrf.mxu0
      %v3151 = vpop.f32.mrf.mxu0
      %v3152 = vadd.f32 0.0, %v3151
      %v3153 = vpop.f32.mrf.mxu0
      %3154 = vmatprep.mubr.bf16.mxu0 0
      %3155 = vmatmul.mubr.bf16.gmra.mxu0 %v3085
      %v3156 = vpop.f32.mrf.mxu0
      %v3157 = vadd.f32 0.0, %v3156
      %v3158 = vpop.f32.mrf.mxu0
      %v3159 = vpop.f32.mrf.mxu0
      %v3160 = vadd.f32 0.0, %v3159
      %v3161 = vpop.f32.mrf.mxu0
      %3162 = vdwg.mxu0
      %v3163 = vadd.f32 %v3041, %v3125
      %v3164 = vadd.f32 %v3042, %v3128
      %v3165 = vadd.f32 %v3043, %v3133
      %v3166 = vadd.f32 %v3044, %v3136
      %v3167 = vadd.f32 %v3045, %v3141
      %v3168 = vadd.f32 %v3046, %v3144
      %v3169 = vadd.f32 %v3047, %v3149
      %v3170 = vadd.f32 %v3048, %v3152
      %v3171 = vadd.f32 %v3049, %v3157
      %v3172 = vadd.f32 %v3050, %v3160
      %s3173 = scalar_lea.vmem %s3, 88
      %v3174 = vld [vmem:[%s3173] sm:$0xf]
      %v3176 = vshrl.u32 %v3055, 16
      %v3178 = vrot.slane %v3176, 1
      %v3179 = vshll.u32 %v3055, 16
      %v3181 = vrot.slane %v3179, 2
      %v3182 = vor.u32 %v3178, %v3181
      %v3184 = vshrl.u32 %v3056, 16
      %v3186 = vrot.slane %v3184, 1
      %v3187 = vshll.u32 %v3056, 16
      %v3189 = vrot.slane %v3187, 2
      %v3190 = vor.u32 %v3186, %v3189
      %v3191 = vsel %vm851, %v3182, %v3190
      %v3193 = vshrl.u32 %v3057, 16
      %v3195 = vrot.slane %v3193, 1
      %v3196 = vshll.u32 %v3057, 16
      %v3198 = vrot.slane %v3196, 2
      %v3199 = vor.u32 %v3195, %v3198
      %v3200 = vsel %vm851, %v3190, %v3199
      %v3202 = vshrl.u32 %v3058, 16
      %v3204 = vrot.slane %v3202, 1
      %v3205 = vshll.u32 %v3058, 16
      %v3207 = vrot.slane %v3205, 2
      %v3208 = vor.u32 %v3204, %v3207
      %v3209 = vsel %vm851, %v3199, %v3208
      %v3211 = vshrl.u32 %v3059, 16
      %v3213 = vrot.slane %v3211, 1
      %v3214 = vshll.u32 %v3059, 16
      %v3216 = vrot.slane %v3214, 2
      %v3217 = vor.u32 %v3213, %v3216
      %v3218 = vsel %vm851, %v3208, %v3217
      %v3220 = vshrl.u32 %v3060, 16
      %v3222 = vrot.slane %v3220, 1
      %v3223 = vshll.u32 %v3060, 16
      %v3225 = vrot.slane %v3223, 2
      %v3226 = vor.u32 %v3222, %v3225
      %v3227 = vsel %vm851, %v3217, %v3226
      %v3229 = vsel %vm433, %v3191, 0
      %v3232 = vsel %vm433, %v3200, 0
      %v3235 = vsel %vm433, %v3209, 0
      %v3238 = vsel %vm433, %v3218, 0
      %v3241 = vsel %vm433, %v3227, 0
      %v3244 = vsel %vm449, %v3174, 0
      %3246 = vmatprep.subr.bf16.mxu0 0
      %3247 = vmatpush1.bf16.msra.mxu0 0
      %3248 = vmatprep.subr.bf16.mxu0 0
      %3249 = vmatpush1.bf16.msra.mxu0 0
      %3250 = vmatprep.subr.bf16.mxu0 0
      %3251 = vmatpush1.bf16.msra.mxu0 0
      %3252 = vmatprep.subr.bf16.mxu0 0
      %3253 = vmatpush1.bf16.msra.mxu0 0
      %3254 = vmatprep.subr.bf16.mxu0 0
      %3255 = vmatpush1.bf16.msra.mxu0 0
      %3256 = vmatprep.subr.bf16.mxu0 0
      %3257 = vmatpush1.bf16.msra.mxu0 0
      %3258 = vmatprep.subr.bf16.mxu0 0
      %3259 = vmatpush1.bf16.msra.mxu0 0
      %3260 = vmatprep.subr.bf16.mxu0 0
      %3261 = vmatpush1.bf16.msra.mxu0 %v3244
      %3262 = vmatprep.subr.bf16.mxu0 0
      %3263 = vmatpush2.bf16.msra.mxu0 0
      %3264 = vmatprep.subr.bf16.mxu0 0
      %3265 = vmatpush2.bf16.msra.mxu0 0
      %3266 = vmatprep.subr.bf16.mxu0 0
      %3267 = vmatpush2.bf16.msra.mxu0 0
      %3268 = vmatprep.subr.bf16.mxu0 0
      %3269 = vmatpush2.bf16.msra.mxu0 0
      %3270 = vmatprep.subr.bf16.mxu0 0
      %3271 = vmatpush2.bf16.msra.mxu0 0
      %3272 = vmatprep.subr.bf16.mxu0 0
      %3273 = vmatpush2.bf16.msra.mxu0 0
      %3274 = vmatprep.subr.bf16.mxu0 0
      %3275 = vmatpush2.bf16.msra.mxu0 0
      %3276 = vmatprep.subr.bf16.mxu0 0
      %3277 = vmatpush2.bf16.msra.mxu0 0
      %3278 = vmatprep.mubr.bf16.mxu0 0
      %3279 = vmatmul.mubr.bf16.gmra.mxu0 %v3229
      %v3280 = vpop.f32.mrf.mxu0
      %v3281 = vadd.f32 0.0, %v3280
      %v3282 = vpop.f32.mrf.mxu0
      %v3283 = vpop.f32.mrf.mxu0
      %v3284 = vadd.f32 0.0, %v3283
      %v3285 = vpop.f32.mrf.mxu0
      %3286 = vmatprep.mubr.bf16.mxu0 0
      %3287 = vmatmul.mubr.bf16.gmra.mxu0 %v3232
      %v3288 = vpop.f32.mrf.mxu0
      %v3289 = vadd.f32 0.0, %v3288
      %v3290 = vpop.f32.mrf.mxu0
      %v3291 = vpop.f32.mrf.mxu0
      %v3292 = vadd.f32 0.0, %v3291
      %v3293 = vpop.f32.mrf.mxu0
      %3294 = vmatprep.mubr.bf16.mxu0 0
      %3295 = vmatmul.mubr.bf16.gmra.mxu0 %v3235
      %v3296 = vpop.f32.mrf.mxu0
      %v3297 = vadd.f32 0.0, %v3296
      %v3298 = vpop.f32.mrf.mxu0
      %v3299 = vpop.f32.mrf.mxu0
      %v3300 = vadd.f32 0.0, %v3299
      %v3301 = vpop.f32.mrf.mxu0
      %3302 = vmatprep.mubr.bf16.mxu0 0
      %3303 = vmatmul.mubr.bf16.gmra.mxu0 %v3238
      %v3304 = vpop.f32.mrf.mxu0
      %v3305 = vadd.f32 0.0, %v3304
      %v3306 = vpop.f32.mrf.mxu0
      %v3307 = vpop.f32.mrf.mxu0
      %v3308 = vadd.f32 0.0, %v3307
      %v3309 = vpop.f32.mrf.mxu0
      %3310 = vmatprep.mubr.bf16.mxu0 0
      %3311 = vmatmul.mubr.bf16.gmra.mxu0 %v3241
      %v3312 = vpop.f32.mrf.mxu0
      %v3313 = vadd.f32 0.0, %v3312
      %v3314 = vpop.f32.mrf.mxu0
      %v3315 = vpop.f32.mrf.mxu0
      %v3316 = vadd.f32 0.0, %v3315
      %v3317 = vpop.f32.mrf.mxu0
      %3318 = vdwg.mxu0
      %v3319 = vadd.f32 %v3163, %v3281
      %v3320 = vadd.f32 %v3164, %v3284
      %v3321 = vadd.f32 %v3165, %v3289
      %v3322 = vadd.f32 %v3166, %v3292
      %v3323 = vadd.f32 %v3167, %v3297
      %v3324 = vadd.f32 %v3168, %v3300
      %v3325 = vadd.f32 %v3169, %v3305
      %v3326 = vadd.f32 %v3170, %v3308
      %v3327 = vadd.f32 %v3171, %v3313
      %v3328 = vadd.f32 %v3172, %v3316
      %s3329 = scalar_lea.vmem %s3, 92
      %v3330 = vld [vmem:[%s3329] sm:$0xf]
      %v3331 = vrot.slane %v3055, 2
      %v3332 = vrot.slane %v3056, 2
      %v3333 = vsel %vm1008, %v3331, %v3332
      %v3334 = vrot.slane %v3057, 2
      %v3335 = vsel %vm1008, %v3332, %v3334
      %v3336 = vrot.slane %v3058, 2
      %v3337 = vsel %vm1008, %v3334, %v3336
      %v3338 = vrot.slane %v3059, 2
      %v3339 = vsel %vm1008, %v3336, %v3338
      %v3340 = vrot.slane %v3060, 2
      %v3341 = vsel %vm1008, %v3338, %v3340
      %v3343 = vsel %vm433, %v3333, 0
      %v3346 = vsel %vm433, %v3335, 0
      %v3349 = vsel %vm433, %v3337, 0
      %v3352 = vsel %vm433, %v3339, 0
      %v3355 = vsel %vm433, %v3341, 0
      %v3358 = vsel %vm449, %v3330, 0
      %3360 = vmatprep.subr.bf16.mxu0 0
      %3361 = vmatpush1.bf16.msra.mxu0 0
      %3362 = vmatprep.subr.bf16.mxu0 0
      %3363 = vmatpush1.bf16.msra.mxu0 0
      %3364 = vmatprep.subr.bf16.mxu0 0
      %3365 = vmatpush1.bf16.msra.mxu0 0
      %3366 = vmatprep.subr.bf16.mxu0 0
      %3367 = vmatpush1.bf16.msra.mxu0 0
      %3368 = vmatprep.subr.bf16.mxu0 0
      %3369 = vmatpush1.bf16.msra.mxu0 0
      %3370 = vmatprep.subr.bf16.mxu0 0
      %3371 = vmatpush1.bf16.msra.mxu0 0
      %3372 = vmatprep.subr.bf16.mxu0 0
      %3373 = vmatpush1.bf16.msra.mxu0 0
      %3374 = vmatprep.subr.bf16.mxu0 0
      %3375 = vmatpush1.bf16.msra.mxu0 %v3358
      %3376 = vmatprep.subr.bf16.mxu0 0
      %3377 = vmatpush2.bf16.msra.mxu0 0
      %3378 = vmatprep.subr.bf16.mxu0 0
      %3379 = vmatpush2.bf16.msra.mxu0 0
      %3380 = vmatprep.subr.bf16.mxu0 0
      %3381 = vmatpush2.bf16.msra.mxu0 0
      %3382 = vmatprep.subr.bf16.mxu0 0
      %3383 = vmatpush2.bf16.msra.mxu0 0
      %3384 = vmatprep.subr.bf16.mxu0 0
      %3385 = vmatpush2.bf16.msra.mxu0 0
      %3386 = vmatprep.subr.bf16.mxu0 0
      %3387 = vmatpush2.bf16.msra.mxu0 0
      %3388 = vmatprep.subr.bf16.mxu0 0
      %3389 = vmatpush2.bf16.msra.mxu0 0
      %3390 = vmatprep.subr.bf16.mxu0 0
      %3391 = vmatpush2.bf16.msra.mxu0 0
      %3392 = vmatprep.mubr.bf16.mxu0 0
      %3393 = vmatmul.mubr.bf16.gmra.mxu0 %v3343
      %v3394 = vpop.f32.mrf.mxu0
      %v3395 = vadd.f32 0.0, %v3394
      %v3396 = vpop.f32.mrf.mxu0
      %v3397 = vpop.f32.mrf.mxu0
      %v3398 = vadd.f32 0.0, %v3397
      %v3399 = vpop.f32.mrf.mxu0
      %3400 = vmatprep.mubr.bf16.mxu0 0
      %3401 = vmatmul.mubr.bf16.gmra.mxu0 %v3346
      %v3402 = vpop.f32.mrf.mxu0
      %v3403 = vadd.f32 0.0, %v3402
      %v3404 = vpop.f32.mrf.mxu0
      %v3405 = vpop.f32.mrf.mxu0
      %v3406 = vadd.f32 0.0, %v3405
      %v3407 = vpop.f32.mrf.mxu0
      %3408 = vmatprep.mubr.bf16.mxu0 0
      %3409 = vmatmul.mubr.bf16.gmra.mxu0 %v3349
      %v3410 = vpop.f32.mrf.mxu0
      %v3411 = vadd.f32 0.0, %v3410
      %v3412 = vpop.f32.mrf.mxu0
      %v3413 = vpop.f32.mrf.mxu0
      %v3414 = vadd.f32 0.0, %v3413
      %v3415 = vpop.f32.mrf.mxu0
      %3416 = vmatprep.mubr.bf16.mxu0 0
      %3417 = vmatmul.mubr.bf16.gmra.mxu0 %v3352
      %v3418 = vpop.f32.mrf.mxu0
      %v3419 = vadd.f32 0.0, %v3418
      %v3420 = vpop.f32.mrf.mxu0
      %v3421 = vpop.f32.mrf.mxu0
      %v3422 = vadd.f32 0.0, %v3421
      %v3423 = vpop.f32.mrf.mxu0
      %3424 = vmatprep.mubr.bf16.mxu0 0
      %3425 = vmatmul.mubr.bf16.gmra.mxu0 %v3355
      %v3426 = vpop.f32.mrf.mxu0
      %v3427 = vadd.f32 0.0, %v3426
      %v3428 = vpop.f32.mrf.mxu0
      %v3429 = vpop.f32.mrf.mxu0
      %v3430 = vadd.f32 0.0, %v3429
      %v3431 = vpop.f32.mrf.mxu0
      %3432 = vdwg.mxu0
      %v3433 = vadd.f32 %v3319, %v3395
      %v3434 = vadd.f32 %v3320, %v3398
      %v3435 = vadd.f32 %v3321, %v3403
      %v3436 = vadd.f32 %v3322, %v3406
      %v3437 = vadd.f32 %v3323, %v3411
      %v3438 = vadd.f32 %v3324, %v3414
      %v3439 = vadd.f32 %v3325, %v3419
      %v3440 = vadd.f32 %v3326, %v3422
      %v3441 = vadd.f32 %v3327, %v3427
      %v3442 = vadd.f32 %v3328, %v3430
      %s3443 = scalar_lea.vmem %s3, 96
      %v3444 = vld [vmem:[%s3443] sm:$0xf]
      %v3446 = vunpack.c.l.b16 %v2663
      %v3447 = vpack.c.b16 %v3054, %v2795
      %v3448 = vpack.c.b16 %v3446, %v3446
      %v3449 = vrot.slane %v2687, 2
      %v3450 = vrot.slane %v2688, 2
      %v3451 = vsel %vm1008, %v3449, %v3450
      %v3452 = vrot.slane %v2689, 2
      %v3453 = vsel %vm1008, %v3450, %v3452
      %v3454 = vrot.slane %v2690, 2
      %v3455 = vsel %vm1008, %v3452, %v3454
      %v3456 = vrot.slane %v3447, 2
      %v3457 = vsel %vm1008, %v3454, %v3456
      %v3458 = vrot.slane %v3448, 2
      %v3459 = vsel %vm1008, %v3456, %v3458
      %v3461 = vsel %vm433, %v3451, 0
      %v3464 = vsel %vm433, %v3453, 0
      %v3467 = vsel %vm433, %v3455, 0
      %v3470 = vsel %vm433, %v3457, 0
      %v3473 = vsel %vm433, %v3459, 0
      %v3476 = vsel %vm449, %v3444, 0
      %3478 = vmatprep.subr.bf16.mxu0 0
      %3479 = vmatpush1.bf16.msra.mxu0 0
      %3480 = vmatprep.subr.bf16.mxu0 0
      %3481 = vmatpush1.bf16.msra.mxu0 0
      %3482 = vmatprep.subr.bf16.mxu0 0
      %3483 = vmatpush1.bf16.msra.mxu0 0
      %3484 = vmatprep.subr.bf16.mxu0 0
      %3485 = vmatpush1.bf16.msra.mxu0 0
      %3486 = vmatprep.subr.bf16.mxu0 0
      %3487 = vmatpush1.bf16.msra.mxu0 0
      %3488 = vmatprep.subr.bf16.mxu0 0
      %3489 = vmatpush1.bf16.msra.mxu0 0
      %3490 = vmatprep.subr.bf16.mxu0 0
      %3491 = vmatpush1.bf16.msra.mxu0 0
      %3492 = vmatprep.subr.bf16.mxu0 0
      %3493 = vmatpush1.bf16.msra.mxu0 %v3476
      %3494 = vmatprep.subr.bf16.mxu0 0
      %3495 = vmatpush2.bf16.msra.mxu0 0
      %3496 = vmatprep.subr.bf16.mxu0 0
      %3497 = vmatpush2.bf16.msra.mxu0 0
      %3498 = vmatprep.subr.bf16.mxu0 0
      %3499 = vmatpush2.bf16.msra.mxu0 0
      %3500 = vmatprep.subr.bf16.mxu0 0
      %3501 = vmatpush2.bf16.msra.mxu0 0
      %3502 = vmatprep.subr.bf16.mxu0 0
      %3503 = vmatpush2.bf16.msra.mxu0 0
      %3504 = vmatprep.subr.bf16.mxu0 0
      %3505 = vmatpush2.bf16.msra.mxu0 0
      %3506 = vmatprep.subr.bf16.mxu0 0
      %3507 = vmatpush2.bf16.msra.mxu0 0
      %3508 = vmatprep.subr.bf16.mxu0 0
      %3509 = vmatpush2.bf16.msra.mxu0 0
      %3510 = vmatprep.mubr.bf16.mxu0 0
      %3511 = vmatmul.mubr.bf16.gmra.mxu0 %v3461
      %v3512 = vpop.f32.mrf.mxu0
      %v3513 = vadd.f32 0.0, %v3512
      %v3514 = vpop.f32.mrf.mxu0
      %v3515 = vpop.f32.mrf.mxu0
      %v3516 = vadd.f32 0.0, %v3515
      %v3517 = vpop.f32.mrf.mxu0
      %3518 = vmatprep.mubr.bf16.mxu0 0
      %3519 = vmatmul.mubr.bf16.gmra.mxu0 %v3464
      %v3520 = vpop.f32.mrf.mxu0
      %v3521 = vadd.f32 0.0, %v3520
      %v3522 = vpop.f32.mrf.mxu0
      %v3523 = vpop.f32.mrf.mxu0
      %v3524 = vadd.f32 0.0, %v3523
      %v3525 = vpop.f32.mrf.mxu0
      %3526 = vmatprep.mubr.bf16.mxu0 0
      %3527 = vmatmul.mubr.bf16.gmra.mxu0 %v3467
      %v3528 = vpop.f32.mrf.mxu0
      %v3529 = vadd.f32 0.0, %v3528
      %v3530 = vpop.f32.mrf.mxu0
      %v3531 = vpop.f32.mrf.mxu0
      %v3532 = vadd.f32 0.0, %v3531
      %v3533 = vpop.f32.mrf.mxu0
      %3534 = vmatprep.mubr.bf16.mxu0 0
      %3535 = vmatmul.mubr.bf16.gmra.mxu0 %v3470
      %v3536 = vpop.f32.mrf.mxu0
      %v3537 = vadd.f32 0.0, %v3536
      %v3538 = vpop.f32.mrf.mxu0
      %v3539 = vpop.f32.mrf.mxu0
      %v3540 = vadd.f32 0.0, %v3539
      %v3541 = vpop.f32.mrf.mxu0
      %3542 = vmatprep.mubr.bf16.mxu0 0
      %3543 = vmatmul.mubr.bf16.gmra.mxu0 %v3473
      %v3544 = vpop.f32.mrf.mxu0
      %v3545 = vadd.f32 0.0, %v3544
      %v3546 = vpop.f32.mrf.mxu0
      %v3547 = vpop.f32.mrf.mxu0
      %v3548 = vadd.f32 0.0, %v3547
      %v3549 = vpop.f32.mrf.mxu0
      %3550 = vdwg.mxu0
      %v3551 = vadd.f32 %v3433, %v3513
      %v3552 = vadd.f32 %v3434, %v3516
      %v3553 = vadd.f32 %v3435, %v3521
      %v3554 = vadd.f32 %v3436, %v3524
      %v3555 = vadd.f32 %v3437, %v3529
      %v3556 = vadd.f32 %v3438, %v3532
      %v3557 = vadd.f32 %v3439, %v3537
      %v3558 = vadd.f32 %v3440, %v3540
      %v3559 = vadd.f32 %v3441, %v3545
      %v3560 = vadd.f32 %v3442, %v3548
      %s3561 = scalar_lea.vmem %s3, 100
      %v3562 = vld [vmem:[%s3561] sm:$0xf]
      %v3563 = vrot.slane %v2807, 2
      %v3564 = vrot.slane %v2803, 3
      %v3565 = vor.u32 %v3563, %v3564
      %v3566 = vrot.slane %v2814, 2
      %v3567 = vrot.slane %v2810, 3
      %v3568 = vor.u32 %v3566, %v3567
      %v3569 = vsel %vm1241, %v3565, %v3568
      %v3570 = vrot.slane %v2821, 2
      %v3571 = vrot.slane %v2817, 3
      %v3572 = vor.u32 %v3570, %v3571
      %v3573 = vsel %vm1241, %v3568, %v3572
      %v3574 = vrot.slane %v2828, 2
      %v3575 = vrot.slane %v2824, 3
      %v3576 = vor.u32 %v3574, %v3575
      %v3577 = vsel %vm1241, %v3572, %v3576
      %v3579 = vshrl.u32 %v3447, 16
      %v3581 = vrot.slane %v3579, 2
      %v3582 = vshll.u32 %v3447, 16
      %v3584 = vrot.slane %v3582, 3
      %v3585 = vor.u32 %v3581, %v3584
      %v3586 = vsel %vm1241, %v3576, %v3585
      %v3588 = vshrl.u32 %v3448, 16
      %v3590 = vrot.slane %v3588, 2
      %v3591 = vshll.u32 %v3448, 16
      %v3593 = vrot.slane %v3591, 3
      %v3594 = vor.u32 %v3590, %v3593
      %v3595 = vsel %vm1241, %v3585, %v3594
      %v3597 = vsel %vm433, %v3569, 0
      %v3600 = vsel %vm433, %v3573, 0
      %v3603 = vsel %vm433, %v3577, 0
      %v3606 = vsel %vm433, %v3586, 0
      %v3609 = vsel %vm433, %v3595, 0
      %v3612 = vsel %vm449, %v3562, 0
      %3614 = vmatprep.subr.bf16.mxu0 0
      %3615 = vmatpush1.bf16.msra.mxu0 0
      %3616 = vmatprep.subr.bf16.mxu0 0
      %3617 = vmatpush1.bf16.msra.mxu0 0
      %3618 = vmatprep.subr.bf16.mxu0 0
      %3619 = vmatpush1.bf16.msra.mxu0 0
      %3620 = vmatprep.subr.bf16.mxu0 0
      %3621 = vmatpush1.bf16.msra.mxu0 0
      %3622 = vmatprep.subr.bf16.mxu0 0
      %3623 = vmatpush1.bf16.msra.mxu0 0
      %3624 = vmatprep.subr.bf16.mxu0 0
      %3625 = vmatpush1.bf16.msra.mxu0 0
      %3626 = vmatprep.subr.bf16.mxu0 0
      %3627 = vmatpush1.bf16.msra.mxu0 0
      %3628 = vmatprep.subr.bf16.mxu0 0
      %3629 = vmatpush1.bf16.msra.mxu0 %v3612
      %3630 = vmatprep.subr.bf16.mxu0 0
      %3631 = vmatpush2.bf16.msra.mxu0 0
      %3632 = vmatprep.subr.bf16.mxu0 0
      %3633 = vmatpush2.bf16.msra.mxu0 0
      %3634 = vmatprep.subr.bf16.mxu0 0
      %3635 = vmatpush2.bf16.msra.mxu0 0
      %3636 = vmatprep.subr.bf16.mxu0 0
      %3637 = vmatpush2.bf16.msra.mxu0 0
      %3638 = vmatprep.subr.bf16.mxu0 0
      %3639 = vmatpush2.bf16.msra.mxu0 0
      %3640 = vmatprep.subr.bf16.mxu0 0
      %3641 = vmatpush2.bf16.msra.mxu0 0
      %3642 = vmatprep.subr.bf16.mxu0 0
      %3643 = vmatpush2.bf16.msra.mxu0 0
      %3644 = vmatprep.subr.bf16.mxu0 0
      %3645 = vmatpush2.bf16.msra.mxu0 0
      %3646 = vmatprep.mubr.bf16.mxu0 0
      %3647 = vmatmul.mubr.bf16.gmra.mxu0 %v3597
      %v3648 = vpop.f32.mrf.mxu0
      %v3649 = vadd.f32 0.0, %v3648
      %v3650 = vpop.f32.mrf.mxu0
      %v3651 = vpop.f32.mrf.mxu0
      %v3652 = vadd.f32 0.0, %v3651
      %v3653 = vpop.f32.mrf.mxu0
      %3654 = vmatprep.mubr.bf16.mxu0 0
      %3655 = vmatmul.mubr.bf16.gmra.mxu0 %v3600
      %v3656 = vpop.f32.mrf.mxu0
      %v3657 = vadd.f32 0.0, %v3656
      %v3658 = vpop.f32.mrf.mxu0
      %v3659 = vpop.f32.mrf.mxu0
      %v3660 = vadd.f32 0.0, %v3659
      %v3661 = vpop.f32.mrf.mxu0
      %3662 = vmatprep.mubr.bf16.mxu0 0
      %3663 = vmatmul.mubr.bf16.gmra.mxu0 %v3603
      %v3664 = vpop.f32.mrf.mxu0
      %v3665 = vadd.f32 0.0, %v3664
      %v3666 = vpop.f32.mrf.mxu0
      %v3667 = vpop.f32.mrf.mxu0
      %v3668 = vadd.f32 0.0, %v3667
      %v3669 = vpop.f32.mrf.mxu0
      %3670 = vmatprep.mubr.bf16.mxu0 0
      %3671 = vmatmul.mubr.bf16.gmra.mxu0 %v3606
      %v3672 = vpop.f32.mrf.mxu0
      %v3673 = vadd.f32 0.0, %v3672
      %v3674 = vpop.f32.mrf.mxu0
      %v3675 = vpop.f32.mrf.mxu0
      %v3676 = vadd.f32 0.0, %v3675
      %v3677 = vpop.f32.mrf.mxu0
      %3678 = vmatprep.mubr.bf16.mxu0 0
      %3679 = vmatmul.mubr.bf16.gmra.mxu0 %v3609
      %v3680 = vpop.f32.mrf.mxu0
      %v3681 = vadd.f32 0.0, %v3680
      %v3682 = vpop.f32.mrf.mxu0
      %v3683 = vpop.f32.mrf.mxu0
      %v3684 = vadd.f32 0.0, %v3683
      %v3685 = vpop.f32.mrf.mxu0
      %3686 = vdwg.mxu0
      %v3687 = vadd.f32 %v3551, %v3649
      %v3688 = vadd.f32 %v3552, %v3652
      %v3689 = vadd.f32 %v3553, %v3657
      %v3690 = vadd.f32 %v3554, %v3660
      %v3691 = vadd.f32 %v3555, %v3665
      %v3692 = vadd.f32 %v3556, %v3668
      %v3693 = vadd.f32 %v3557, %v3673
      %v3694 = vadd.f32 %v3558, %v3676
      %v3695 = vadd.f32 %v3559, %v3681
      %v3696 = vadd.f32 %v3560, %v3684
      %s3697 = scalar_lea.vmem %s3, 104
      %v3698 = vld [vmem:[%s3697] sm:$0xf]
      %v3699 = vrot.slane %v2687, 3
      %v3700 = vrot.slane %v2688, 3
      %v3701 = vsel %vm1378, %v3699, %v3700
      %v3702 = vrot.slane %v2689, 3
      %v3703 = vsel %vm1378, %v3700, %v3702
      %v3704 = vrot.slane %v2690, 3
      %v3705 = vsel %vm1378, %v3702, %v3704
      %v3706 = vrot.slane %v3447, 3
      %v3707 = vsel %vm1378, %v3704, %v3706
      %v3708 = vrot.slane %v3448, 3
      %v3709 = vsel %vm1378, %v3706, %v3708
      %v3711 = vsel %vm433, %v3701, 0
      %v3714 = vsel %vm433, %v3703, 0
      %v3717 = vsel %vm433, %v3705, 0
      %v3720 = vsel %vm433, %v3707, 0
      %v3723 = vsel %vm433, %v3709, 0
      %v3726 = vsel %vm449, %v3698, 0
      %3728 = vmatprep.subr.bf16.mxu0 0
      %3729 = vmatpush1.bf16.msra.mxu0 0
      %3730 = vmatprep.subr.bf16.mxu0 0
      %3731 = vmatpush1.bf16.msra.mxu0 0
      %3732 = vmatprep.subr.bf16.mxu0 0
      %3733 = vmatpush1.bf16.msra.mxu0 0
      %3734 = vmatprep.subr.bf16.mxu0 0
      %3735 = vmatpush1.bf16.msra.mxu0 0
      %3736 = vmatprep.subr.bf16.mxu0 0
      %3737 = vmatpush1.bf16.msra.mxu0 0
      %3738 = vmatprep.subr.bf16.mxu0 0
      %3739 = vmatpush1.bf16.msra.mxu0 0
      %3740 = vmatprep.subr.bf16.mxu0 0
      %3741 = vmatpush1.bf16.msra.mxu0 0
      %3742 = vmatprep.subr.bf16.mxu0 0
      %3743 = vmatpush1.bf16.msra.mxu0 %v3726
      %3744 = vmatprep.subr.bf16.mxu0 0
      %3745 = vmatpush2.bf16.msra.mxu0 0
      %3746 = vmatprep.subr.bf16.mxu0 0
      %3747 = vmatpush2.bf16.msra.mxu0 0
      %3748 = vmatprep.subr.bf16.mxu0 0
      %3749 = vmatpush2.bf16.msra.mxu0 0
      %3750 = vmatprep.subr.bf16.mxu0 0
      %3751 = vmatpush2.bf16.msra.mxu0 0
      %3752 = vmatprep.subr.bf16.mxu0 0
      %3753 = vmatpush2.bf16.msra.mxu0 0
      %3754 = vmatprep.subr.bf16.mxu0 0
      %3755 = vmatpush2.bf16.msra.mxu0 0
      %3756 = vmatprep.subr.bf16.mxu0 0
      %3757 = vmatpush2.bf16.msra.mxu0 0
      %3758 = vmatprep.subr.bf16.mxu0 0
      %3759 = vmatpush2.bf16.msra.mxu0 0
      %3760 = vmatprep.mubr.bf16.mxu0 0
      %3761 = vmatmul.mubr.bf16.gmra.mxu0 %v3711
      %v3762 = vpop.f32.mrf.mxu0
      %v3763 = vadd.f32 0.0, %v3762
      %v3764 = vpop.f32.mrf.mxu0
      %v3765 = vpop.f32.mrf.mxu0
      %v3766 = vadd.f32 0.0, %v3765
      %v3767 = vpop.f32.mrf.mxu0
      %3768 = vmatprep.mubr.bf16.mxu0 0
      %3769 = vmatmul.mubr.bf16.gmra.mxu0 %v3714
      %v3770 = vpop.f32.mrf.mxu0
      %v3771 = vadd.f32 0.0, %v3770
      %v3772 = vpop.f32.mrf.mxu0
      %v3773 = vpop.f32.mrf.mxu0
      %v3774 = vadd.f32 0.0, %v3773
      %v3775 = vpop.f32.mrf.mxu0
      %3776 = vmatprep.mubr.bf16.mxu0 0
      %3777 = vmatmul.mubr.bf16.gmra.mxu0 %v3717
      %v3778 = vpop.f32.mrf.mxu0
      %v3779 = vadd.f32 0.0, %v3778
      %v3780 = vpop.f32.mrf.mxu0
      %v3781 = vpop.f32.mrf.mxu0
      %v3782 = vadd.f32 0.0, %v3781
      %v3783 = vpop.f32.mrf.mxu0
      %3784 = vmatprep.mubr.bf16.mxu0 0
      %3785 = vmatmul.mubr.bf16.gmra.mxu0 %v3720
      %v3786 = vpop.f32.mrf.mxu0
      %v3787 = vadd.f32 0.0, %v3786
      %v3788 = vpop.f32.mrf.mxu0
      %v3789 = vpop.f32.mrf.mxu0
      %v3790 = vadd.f32 0.0, %v3789
      %v3791 = vpop.f32.mrf.mxu0
      %3792 = vmatprep.mubr.bf16.mxu0 0
      %3793 = vmatmul.mubr.bf16.gmra.mxu0 %v3723
      %v3794 = vpop.f32.mrf.mxu0
      %v3795 = vadd.f32 0.0, %v3794
      %v3796 = vpop.f32.mrf.mxu0
      %v3797 = vpop.f32.mrf.mxu0
      %v3798 = vadd.f32 0.0, %v3797
      %v3799 = vpop.f32.mrf.mxu0
      %3800 = vdwg.mxu0
      %v3801 = vadd.f32 %v3687, %v3763
      %v3802 = vadd.f32 %v3688, %v3766
      %v3803 = vadd.f32 %v3689, %v3771
      %v3804 = vadd.f32 %v3690, %v3774
      %v3805 = vadd.f32 %v3691, %v3779
      %v3806 = vadd.f32 %v3692, %v3782
      %v3807 = vadd.f32 %v3693, %v3787
      %v3808 = vadd.f32 %v3694, %v3790
      %v3809 = vadd.f32 %v3695, %v3795
      %v3810 = vadd.f32 %v3696, %v3798
      %v3811 = vld [vmem:[%s4] sm:$0x1]
      %v3813 = vlaneseq
      %v3814 = vshrl.u32 %v3813, 7
      %v3815 = vsub.s32 0, %v3814
      %v3816 = vrot.slane %v3811, %v3815
      %v3818 = vadd.f32 %v3801, %v3816
      %v3819 = vadd.f32 %v3802, %v3816
      %v3820 = vadd.f32 %v3803, %v3816
      %v3821 = vadd.f32 %v3804, %v3816
      %v3822 = vadd.f32 %v3805, %v3816
      %v3823 = vadd.f32 %v3806, %v3816
      %v3824 = vadd.f32 %v3807, %v3816
      %v3825 = vadd.f32 %v3808, %v3816
      %v3826 = vadd.f32 %v3809, %v3816
      %v3827 = vadd.f32 %v3810, %v3816
      %v3828 = vmax.f32 %v3818, 0.0
      %v3829 = vmax.f32 %v3819, 0.0
      %v3830 = vmax.f32 %v3820, 0.0
      %v3831 = vmax.f32 %v3821, 0.0
      %v3832 = vmax.f32 %v3822, 0.0
      %v3833 = vmax.f32 %v3823, 0.0
      %v3834 = vmax.f32 %v3824, 0.0
      %v3835 = vmax.f32 %v3825, 0.0
      %v3836 = vmax.f32 %v3826, 0.0
      %v3837 = vmax.f32 %v3827, 0.0
      %3838 = vst [vmem:[%s342] sm:$0xff] %v3828
      %3839 = vst [vmem:[%s342 + $0x8] sm:$0xff] %v3829
      %3840 = vst [vmem:[%s342 + $0x10] sm:$0xff] %v3830
      %3841 = vst [vmem:[%s342 + $0x18] sm:$0xff] %v3831
      %3842 = vst [vmem:[%s342 + $0x20] sm:$0xff] %v3832
      %3843 = vst [vmem:[%s342 + $0x28] sm:$0xff] %v3833
      %3844 = vst [vmem:[%s342 + $0x30] sm:$0xff] %v3834
      %3845 = vst [vmem:[%s342 + $0x38] sm:$0xff] %v3835
      %3846 = vst [vmem:[%s342 + $0x40] sm:$0xff] %v3836
      %3847 = vst [vmem:[%s342 + $0x48] sm:$0xff] %v3837
      %p3848 = scmp.lt.s32.totalorder %s20, 1
      %s3849 = scalar_select %p3848, %s20, 1
      %p3850 = scmp.lt.s32.totalorder %s21, 7
      %s3851 = scalar_select %p3850, %s21, 7
      %s3852 = smul.addr %s3851, 10
      %s3853 = smul.addr %s3849, 80
      %s3854 = sadd.s32 %s3852, %s3853
      %s3855 = smul.addr %s3854, 8
      %s3856 = scalar_lea.vmem %s5, %s3855
      // Predicated region
      $region41: #{_conv_block_3d_impl.3} parent=39 // pred_check
        %p3857 = pneg %p178
      $region42: #{_conv_block_3d_impl.3} parent=39 // pred_check_branch
        %3859 = sbr.rel (%p3857) target = $region44
      $region43: #{_conv_block_3d_impl.3} parent=39 // pred_region
        _
      $region44: #{_conv_block_3d_impl.3} parent=39 // pred_fallthru
        _
    $region40: #{_conv_block_3d_impl.3} parent=5 // pred_fallthru
      _
    %p3860 = scmp.le.s32.totalorder 2, %s11
    // Predicated region
    $region45: #{_conv_block_3d_impl.3} parent=5 // pred_check
      %p3861 = pneg %p3860
    $region46: #{_conv_block_3d_impl.3} parent=5 // pred_check_branch
      %3863 = sbr.rel (%p3861) target = $region48
    $region47: #{_conv_block_3d_impl.3} parent=5 // pred_region
      %s3864 = ssub.s32 %s11, 2
      // Predicated region
      $region49: #{_conv_block_3d_impl.3} parent=47 // pred_check
        %p3865 = pneg %p184
      $region50: #{_conv_block_3d_impl.3} parent=47 // pred_check_branch
        %3867 = sbr.rel (%p3865) target = $region52
      $region51: #{_conv_block_3d_impl.3} parent=47 // pred_region
        %p3868 = scmp.lt.s32.totalorder %s22, 1
        %s3869 = scalar_select %p3868, %s22, 1
        %p3870 = scmp.lt.s32.totalorder %s23, 7
        %s3871 = scalar_select %p3870, %s23, 7
        %s3872 = smul.addr %s3871, 10
        %s3873 = smul.addr %s3869, 80
        %s3874 = sadd.s32 %s3872, %s3873
        %s3875 = smul.addr %s3874, 8
        %s3876 = scalar_lea.vmem %s5, %s3875
      $region52: #{_conv_block_3d_impl.3} parent=47 // pred_fallthru
        _
    $region48: #{_conv_block_3d_impl.3} parent=5 // pred_fallthru
      _
  $region6: #{_conv_block_3d_impl.3} parent=0 // loop_footer
    %s15 = sadd.s32 1, %s11
  $region7: #{_conv_block_3d_impl.3} parent=0 // loop_footer_branch
    %10 = sbr.rel target = $region3
  $region8: #{_conv_block_3d_impl.3} parent=0 // loop_exit
    _

</llo_original>
